<compile_context>
chip_gen: v5e
topology: v5e:2x2
jax: 0.10.0
libtpu: 0.0.40
codegen_flags: <defaults>
</compile_context>

<pallas_src>
import jax
import jax.numpy as jnp
from jax import lax
from jax.experimental import pallas as pl
from jax.experimental.pallas import tpu as pltpu

EPS = 1e-5


def _make_fused_kernel(H, W):
    HW = H * W

    def kernel(xp_ref, xres_ref,
               w1_ref, s1_ref, b1_ref,
               w2_ref, s2_ref, b2_ref,
               w3_ref, s3_ref, b3_ref,
               w4_ref, b4_ref,
               o_ref,
               a1p_ref, a2p_ref):
        # Zero the padded activation scratch (borders stay zero; interiors are
        # overwritten below).  Done unconditionally so it is safe when the grid
        # is split across TensorCores.
        a1p_ref[...] = jnp.zeros_like(a1p_ref)
        a2p_ref[...] = jnp.zeros_like(a2p_ref)

        # ---- layer 1: 5x5 conv, 1 -> 32, pad=2 (VPU: 25 broadcast FMAs) ----
        acc1 = jnp.zeros((H, W, 32), jnp.float32)
        for dh in range(5):
            for dw in range(5):
                patch = xp_ref[0, dh:dh + H, dw:dw + W, :]      # (H, W, 1)
                acc1 = acc1 + patch * w1_ref[dh, dw]             # (1, 32) bcast
        y1 = jnp.maximum(acc1 * s1_ref[...] + b1_ref[...], 0.0)  # fused bias+BN
        a1p_ref[1:1 + H, 1:1 + W, :] = y1                        # write interior

        # ---- layer 2: 3x3 conv, 32 -> 64, pad=1 (single im2col matmul K=288) ----
        p2 = jnp.concatenate(
            [a1p_ref[dh:dh + H, dw:dw + W, :].reshape(HW, 32)
             for dh in range(3) for dw in range(3)], axis=1)     # (HW, 288)
        acc2 = jnp.dot(p2, w2_ref[...], preferred_element_type=jnp.float32)
        y2 = jnp.maximum(acc2 * s2_ref[...] + b2_ref[...], 0.0)  # (HW, 64)
        a2p_ref[1:1 + H, 1:1 + W, :] = y2.reshape(H, W, 64)

        # ---- layer 3: 3x3 conv, 64 -> 32, pad=1 (single im2col matmul K=576) ----
        p3 = jnp.concatenate(
            [a2p_ref[dh:dh + H, dw:dw + W, :].reshape(HW, 64)
             for dh in range(3) for dw in range(3)], axis=1)     # (HW, 576)
        acc3 = jnp.dot(p3, w3_ref[...], preferred_element_type=jnp.float32)
        y3 = jnp.maximum(acc3 * s3_ref[...] + b3_ref[...], 0.0)  # (HW, 32)

        # ---- layer 4: 1x1 conv 32 -> 1, tanh, residual (lane-dense output) ----
        z = jnp.dot(w4_ref[...], y3.T,
                    preferred_element_type=jnp.float32)          # (1, HW)
        out = jnp.tanh(z + b4_ref[...]) + xres_ref[0]            # (1, HW)
        o_ref[0] = out

    return kernel


def simple_hic_align_pallas(x_nchw, P):
    """Full forward pass. x_nchw: (N, 1, H, W) f32 -> (N, 1, H, W) f32."""
    N, C, H, W = x_nchw.shape
    assert C == 1
    Hp, Wp = H + 4, W + 4

    x2d = x_nchw.reshape(N, H, W)
    xp = jnp.pad(x2d, ((0, 0), (2, 2), (2, 2)))[..., None]   # (N, H+4, W+4, 1)
    xres = x2d.reshape(N, 1, H * W)                          # lane-dense residual

    kern = _make_fused_kernel(H, W)

    out = pl.pallas_call(
        kern,
        out_shape=jax.ShapeDtypeStruct((N, 1, H * W), jnp.float32),
        grid=(N,),
        in_specs=[
            pl.BlockSpec((1, Hp, Wp, 1), lambda n: (n, 0, 0, 0)),   # padded x
            pl.BlockSpec((1, 1, H * W), lambda n: (n, 0, 0)),       # residual
            pl.BlockSpec((5, 5, 1, 32), lambda n: (0, 0, 0, 0)),    # w1
            pl.BlockSpec((1, 32), lambda n: (0, 0)),                # s1
            pl.BlockSpec((1, 32), lambda n: (0, 0)),                # b1
            pl.BlockSpec((288, 64), lambda n: (0, 0)),              # w2 (im2col)
            pl.BlockSpec((1, 64), lambda n: (0, 0)),                # s2
            pl.BlockSpec((1, 64), lambda n: (0, 0)),                # b2
            pl.BlockSpec((576, 32), lambda n: (0, 0)),              # w3 (im2col)
            pl.BlockSpec((1, 32), lambda n: (0, 0)),                # s3
            pl.BlockSpec((1, 32), lambda n: (0, 0)),                # b3
            pl.BlockSpec((1, 32), lambda n: (0, 0)),                # w4
            pl.BlockSpec((1, 1), lambda n: (0, 0)),                 # b4
        ],
        out_specs=pl.BlockSpec((1, 1, H * W), lambda n: (n, 0, 0)),
        scratch_shapes=[
            pltpu.VMEM((H + 2, W + 2, 32), jnp.float32),   # padded act after L1
            pltpu.VMEM((H + 2, W + 2, 64), jnp.float32),   # padded act after L2
        ],
        compiler_params=pltpu.CompilerParams(
            dimension_semantics=("parallel",)),
    )(xp, xres, P["w1"], P["s1"], P["b1"], P["w2"], P["s2"], P["b2"],
      P["w3"], P["s3"], P["b3"], P["w4"], P["b4"])

    return out.reshape(N, 1, H, W)


# ---------------------------------------------------------------------------
# Deterministic parameter construction (PyTorch shapes) + BN folding
# ---------------------------------------------------------------------------
def make_params():
    key = jax.random.PRNGKey(0)
    ks = jax.random.split(key, 20)

    def winit(k, shape, fan_in):
        return jax.random.normal(k, shape, jnp.float32) * (1.0 / jnp.sqrt(fan_in))

    raw = {}
    # conv weights in PyTorch OIHW layout, biases per out-channel
    raw["w1_pt"] = winit(ks[0], (32, 1, 5, 5), 1 * 5 * 5)
    raw["cb1"] = jax.random.normal(ks[1], (32,), jnp.float32) * 0.05
    raw["w2_pt"] = winit(ks[2], (64, 32, 3, 3), 32 * 3 * 3)
    raw["cb2"] = jax.random.normal(ks[3], (64,), jnp.float32) * 0.05
    raw["w3_pt"] = winit(ks[4], (32, 64, 3, 3), 64 * 3 * 3)
    raw["cb3"] = jax.random.normal(ks[5], (32,), jnp.float32) * 0.05
    raw["w4_pt"] = winit(ks[6], (1, 32, 1, 1), 32 * 1 * 1)
    raw["cb4"] = jax.random.normal(ks[7], (1,), jnp.float32) * 0.05

    # batchnorm params (eval-mode running statistics)
    def bn_params(k, c):
        k1, k2, k3, k4 = jax.random.split(k, 4)
        gamma = 1.0 + 0.1 * jax.random.normal(k1, (c,), jnp.float32)
        beta = 0.1 * jax.random.normal(k2, (c,), jnp.float32)
        mean = 0.1 * jax.random.normal(k3, (c,), jnp.float32)
        var = 0.5 + jax.random.uniform(k4, (c,), jnp.float32)  # > 0
        return gamma, beta, mean, var

    raw["g1"], raw["be1"], raw["m1"], raw["v1"] = bn_params(ks[8], 32)
    raw["g2"], raw["be2"], raw["m2"], raw["v2"] = bn_params(ks[9], 64)
    raw["g3"], raw["be3"], raw["m3"], raw["v3"] = bn_params(ks[10], 32)

    # Fold:  bn(conv(x)+b) = s*conv(x) + [s*(b - mean) + beta],  s = gamma/sqrt(var+eps)
    def fold(w_pt, cb, gamma, beta, mean, var):
        s = gamma / jnp.sqrt(var + EPS)
        shift = s * (cb - mean) + beta
        w = jnp.transpose(w_pt, (2, 3, 1, 0))  # OIHW -> (KH, KW, Cin, Cout)
        return w, s.reshape(1, -1), shift.reshape(1, -1)

    P = {}
    w1, P["s1"], P["b1"] = fold(raw["w1_pt"], raw["cb1"], raw["g1"], raw["be1"], raw["m1"], raw["v1"])
    w2, P["s2"], P["b2"] = fold(raw["w2_pt"], raw["cb2"], raw["g2"], raw["be2"], raw["m2"], raw["v2"])
    w3, P["s3"], P["b3"] = fold(raw["w3_pt"], raw["cb3"], raw["g3"], raw["be3"], raw["m3"], raw["v3"])
    P["w1"] = w1                                  # (5, 5, 1, 32)
    P["w2"] = w2.reshape(9 * 32, 64)              # im2col layout: row = dh*96+dw*32+cin
    P["w3"] = w3.reshape(9 * 64, 32)              # im2col layout: row = dh*192+dw*64+cin
    P["w4"] = raw["w4_pt"].reshape(1, 32)         # (1, 32)
    P["b4"] = raw["cb4"].reshape(1, 1)            # (1, 1)
    return raw, P


# ---------------------------------------------------------------------------
# Pure-JAX reference (NCHW, mirrors the PyTorch forward with eval-mode BN)
# ---------------------------------------------------------------------------
def ref_forward(x, R):
    def conv(x, w, b, pad):
        y = lax.conv_general_dilated(
            x, w, window_strides=(1, 1), padding=[(pad, pad), (pad, pad)],
            dimension_numbers=("NCHW", "OIHW", "NCHW"))
        return y + b[None, :, None, None]

    def bn(x, g, be, m, v):
        return (g[None, :, None, None] * (x - m[None, :, None, None])
                / jnp.sqrt(v[None, :, None, None] + EPS) + be[None, :, None, None])

    r = x
    h = jax.nn.relu(bn(conv(x, R["w1_pt"], R["cb1"], 2), R["g1"], R["be1"], R["m1"], R["v1"]))
    h = jax.nn.relu(bn(conv(h, R["w2_pt"], R["cb2"], 1), R["g2"], R["be2"], R["m2"], R["v2"]))
    h = jax.nn.relu(bn(conv(h, R["w3_pt"], R["cb3"], 1), R["g3"], R["be3"], R["m3"], R["v3"]))
    h = jnp.tanh(conv(h, R["w4_pt"], R["cb4"], 0))
    return r + h


if __name__ == "__main__":
    raw, P = make_params()

    N, C, H, W = 2, 1, 16, 16
    x = jax.random.normal(jax.random.PRNGKey(0), (N, C, H, W), jnp.float32)

    fwd = jax.jit(simple_hic_align_pallas)
    out = jax.block_until_ready(fwd(x, P))

    ref = jax.block_until_ready(ref_forward(x, raw))
    assert out.shape == (N, C, H, W)
    err = float(jnp.max(jnp.abs(out - ref)))
    assert err < 1e-4, err

    print("KERNEL_OK")
</pallas_src>

<mosaic_0001>
module attributes {stable_mosaic.version = 11 : i64} {
  func.func @kernel(%arg0: i32, %arg1: memref<1x20x20x1xf32, #tpu.memory_space<vmem>>, %arg2: memref<1x1x256xf32, #tpu.memory_space<vmem>>, %arg3: memref<5x5x1x32xf32, #tpu.memory_space<vmem>>, %arg4: memref<1x32xf32, #tpu.memory_space<vmem>>, %arg5: memref<1x32xf32, #tpu.memory_space<vmem>>, %arg6: memref<288x64xf32, #tpu.memory_space<vmem>>, %arg7: memref<1x64xf32, #tpu.memory_space<vmem>>, %arg8: memref<1x64xf32, #tpu.memory_space<vmem>>, %arg9: memref<576x32xf32, #tpu.memory_space<vmem>>, %arg10: memref<1x32xf32, #tpu.memory_space<vmem>>, %arg11: memref<1x32xf32, #tpu.memory_space<vmem>>, %arg12: memref<1x32xf32, #tpu.memory_space<vmem>>, %arg13: memref<1x1xf32, #tpu.memory_space<vmem>>, %arg14: memref<1x1x256xf32, #tpu.memory_space<vmem>>, %arg15: memref<18x18x32xf32, #tpu.memory_space<vmem>>, %arg16: memref<18x18x64xf32, #tpu.memory_space<vmem>>) attributes {dimension_semantics = [#tpu.dimension_semantics<parallel>], iteration_bounds = array<i64: 2>, scalar_prefetch = 0 : i64, scratch_operands = 2 : i64, tpu.core_type = #tpu.core_type<tc>, window_params = [{transform_indices = @transform_0, window_bounds = array<i64: 1, 20, 20, 1>}, {transform_indices = @transform_1, window_bounds = array<i64: 1, 1, 256>}, {pipeline_mode = #tpu.pipeline_mode<synchronous>, transform_indices = @transform_2, window_bounds = array<i64: 5, 5, 1, 32>}, {pipeline_mode = #tpu.pipeline_mode<synchronous>, transform_indices = @transform_3, window_bounds = array<i64: 1, 32>}, {pipeline_mode = #tpu.pipeline_mode<synchronous>, transform_indices = @transform_4, window_bounds = array<i64: 1, 32>}, {pipeline_mode = #tpu.pipeline_mode<synchronous>, transform_indices = @transform_5, window_bounds = array<i64: 288, 64>}, {pipeline_mode = #tpu.pipeline_mode<synchronous>, transform_indices = @transform_6, window_bounds = array<i64: 1, 64>}, {pipeline_mode = #tpu.pipeline_mode<synchronous>, transform_indices = @transform_7, window_bounds = array<i64: 1, 64>}, {pipeline_mode = #tpu.pipeline_mode<synchronous>, transform_indices = @transform_8, window_bounds = array<i64: 576, 32>}, {pipeline_mode = #tpu.pipeline_mode<synchronous>, transform_indices = @transform_9, window_bounds = array<i64: 1, 32>}, {pipeline_mode = #tpu.pipeline_mode<synchronous>, transform_indices = @transform_10, window_bounds = array<i64: 1, 32>}, {pipeline_mode = #tpu.pipeline_mode<synchronous>, transform_indices = @transform_11, window_bounds = array<i64: 1, 32>}, {pipeline_mode = #tpu.pipeline_mode<synchronous>, transform_indices = @transform_12, window_bounds = array<i64: 1, 1>}, {transform_indices = @transform_13, window_bounds = array<i64: 1, 1, 256>}]} {
    %cst = arith.constant 0.000000e+00 : f32
    %0 = vector.broadcast %cst : f32 to vector<18x18x32xf32>
    %c0 = arith.constant 0 : index
    %c0_0 = arith.constant 0 : index
    %c0_1 = arith.constant 0 : index
    %1 = vector.load %arg15[%c0, %c0_0, %c0_1] : memref<18x18x32xf32, #tpu.memory_space<vmem>>, vector<18x18x32xf32>
    tpu.vector_store %arg15[%c0, %c0_0, %c0_1], %0 {strides = array<i32>} : memref<18x18x32xf32, #tpu.memory_space<vmem>>, vector<18x18x32xf32>,
    %cst_2 = arith.constant 0.000000e+00 : f32
    %2 = vector.broadcast %cst_2 : f32 to vector<18x18x64xf32>
    %c0_3 = arith.constant 0 : index
    %c0_4 = arith.constant 0 : index
    %c0_5 = arith.constant 0 : index
    %3 = vector.load %arg16[%c0_3, %c0_4, %c0_5] : memref<18x18x64xf32, #tpu.memory_space<vmem>>, vector<18x18x64xf32>
    tpu.vector_store %arg16[%c0_3, %c0_4, %c0_5], %2 {strides = array<i32>} : memref<18x18x64xf32, #tpu.memory_space<vmem>>, vector<18x18x64xf32>,
    %cst_6 = arith.constant 0.000000e+00 : f32
    %4 = vector.broadcast %cst_6 : f32 to vector<16x16x32xf32>
    %c0_7 = arith.constant 0 : index
    %c0_8 = arith.constant 0 : index
    %c0_9 = arith.constant 0 : index
    %c0_10 = arith.constant 0 : index
    %5 = vector.load %arg1[%c0_7, %c0_8, %c0_9, %c0_10] : memref<1x20x20x1xf32, #tpu.memory_space<vmem>>, vector<1x16x16x1xf32>
    %6 = vector.shape_cast %5 : vector<1x16x16x1xf32> to vector<16x16x1xf32>
    %c0_11 = arith.constant 0 : index
    %c0_12 = arith.constant 0 : index
    %c0_13 = arith.constant 0 : index
    %c0_14 = arith.constant 0 : index
    %7 = vector.load %arg3[%c0_11, %c0_12, %c0_13, %c0_14] : memref<5x5x1x32xf32, #tpu.memory_space<vmem>>, vector<1x1x1x32xf32>
    %8 = vector.shape_cast %7 : vector<1x1x1x32xf32> to vector<1x32xf32>
    %9 = vector.shape_cast %8 : vector<1x32xf32> to vector<1x1x32xf32>
    %10 = vector.broadcast %6 : vector<16x16x1xf32> to vector<16x16x32xf32>
    %11 = vector.broadcast %9 : vector<1x1x32xf32> to vector<16x16x32xf32>
    %12 = arith.mulf %10, %11 : vector<16x16x32xf32>
    %13 = arith.addf %4, %12 : vector<16x16x32xf32>
    %c0_15 = arith.constant 0 : index
    %c0_16 = arith.constant 0 : index
    %c1 = arith.constant 1 : index
    %c0_17 = arith.constant 0 : index
    %14 = vector.load %arg1[%c0_15, %c0_16, %c1, %c0_17] : memref<1x20x20x1xf32, #tpu.memory_space<vmem>>, vector<1x16x16x1xf32>
    %15 = vector.shape_cast %14 : vector<1x16x16x1xf32> to vector<16x16x1xf32>
    %c0_18 = arith.constant 0 : index
    %c1_19 = arith.constant 1 : index
    %c0_20 = arith.constant 0 : index
    %c0_21 = arith.constant 0 : index
    %16 = vector.load %arg3[%c0_18, %c1_19, %c0_20, %c0_21] : memref<5x5x1x32xf32, #tpu.memory_space<vmem>>, vector<1x1x1x32xf32>
    %17 = vector.shape_cast %16 : vector<1x1x1x32xf32> to vector<1x32xf32>
    %18 = vector.shape_cast %17 : vector<1x32xf32> to vector<1x1x32xf32>
    %19 = vector.broadcast %15 : vector<16x16x1xf32> to vector<16x16x32xf32>
    %20 = vector.broadcast %18 : vector<1x1x32xf32> to vector<16x16x32xf32>
    %21 = arith.mulf %19, %20 : vector<16x16x32xf32>
    %22 = arith.addf %13, %21 : vector<16x16x32xf32>
    %c0_22 = arith.constant 0 : index
    %c0_23 = arith.constant 0 : index
    %c2 = arith.constant 2 : index
    %c0_24 = arith.constant 0 : index
    %23 = vector.load %arg1[%c0_22, %c0_23, %c2, %c0_24] : memref<1x20x20x1xf32, #tpu.memory_space<vmem>>, vector<1x16x16x1xf32>
    %24 = vector.shape_cast %23 : vector<1x16x16x1xf32> to vector<16x16x1xf32>
    %c0_25 = arith.constant 0 : index
    %c2_26 = arith.constant 2 : index
    %c0_27 = arith.constant 0 : index
    %c0_28 = arith.constant 0 : index
    %25 = vector.load %arg3[%c0_25, %c2_26, %c0_27, %c0_28] : memref<5x5x1x32xf32, #tpu.memory_space<vmem>>, vector<1x1x1x32xf32>
    %26 = vector.shape_cast %25 : vector<1x1x1x32xf32> to vector<1x32xf32>
    %27 = vector.shape_cast %26 : vector<1x32xf32> to vector<1x1x32xf32>
    %28 = vector.broadcast %24 : vector<16x16x1xf32> to vector<16x16x32xf32>
    %29 = vector.broadcast %27 : vector<1x1x32xf32> to vector<16x16x32xf32>
    %30 = arith.mulf %28, %29 : vector<16x16x32xf32>
    %31 = arith.addf %22, %30 : vector<16x16x32xf32>
    %c0_29 = arith.constant 0 : index
    %c0_30 = arith.constant 0 : index
    %c3 = arith.constant 3 : index
    %c0_31 = arith.constant 0 : index
    %32 = vector.load %arg1[%c0_29, %c0_30, %c3, %c0_31] : memref<1x20x20x1xf32, #tpu.memory_space<vmem>>, vector<1x16x16x1xf32>
    %33 = vector.shape_cast %32 : vector<1x16x16x1xf32> to vector<16x16x1xf32>
    %c0_32 = arith.constant 0 : index
    %c3_33 = arith.constant 3 : index
    %c0_34 = arith.constant 0 : index
    %c0_35 = arith.constant 0 : index
    %34 = vector.load %arg3[%c0_32, %c3_33, %c0_34, %c0_35] : memref<5x5x1x32xf32, #tpu.memory_space<vmem>>, vector<1x1x1x32xf32>
    %35 = vector.shape_cast %34 : vector<1x1x1x32xf32> to vector<1x32xf32>
    %36 = vector.shape_cast %35 : vector<1x32xf32> to vector<1x1x32xf32>
    %37 = vector.broadcast %33 : vector<16x16x1xf32> to vector<16x16x32xf32>
    %38 = vector.broadcast %36 : vector<1x1x32xf32> to vector<16x16x32xf32>
    %39 = arith.mulf %37, %38 : vector<16x16x32xf32>
    %40 = arith.addf %31, %39 : vector<16x16x32xf32>
    %c0_36 = arith.constant 0 : index
    %c0_37 = arith.constant 0 : index
    %c4 = arith.constant 4 : index
    %c0_38 = arith.constant 0 : index
    %41 = vector.load %arg1[%c0_36, %c0_37, %c4, %c0_38] : memref<1x20x20x1xf32, #tpu.memory_space<vmem>>, vector<1x16x16x1xf32>
    %42 = vector.shape_cast %41 : vector<1x16x16x1xf32> to vector<16x16x1xf32>
    %c0_39 = arith.constant 0 : index
    %c4_40 = arith.constant 4 : index
    %c0_41 = arith.constant 0 : index
    %c0_42 = arith.constant 0 : index
    %43 = vector.load %arg3[%c0_39, %c4_40, %c0_41, %c0_42] : memref<5x5x1x32xf32, #tpu.memory_space<vmem>>, vector<1x1x1x32xf32>
    %44 = vector.shape_cast %43 : vector<1x1x1x32xf32> to vector<1x32xf32>
    %45 = vector.shape_cast %44 : vector<1x32xf32> to vector<1x1x32xf32>
    %46 = vector.broadcast %42 : vector<16x16x1xf32> to vector<16x16x32xf32>
    %47 = vector.broadcast %45 : vector<1x1x32xf32> to vector<16x16x32xf32>
    %48 = arith.mulf %46, %47 : vector<16x16x32xf32>
    %49 = arith.addf %40, %48 : vector<16x16x32xf32>
    %c0_43 = arith.constant 0 : index
    %c1_44 = arith.constant 1 : index
    %c0_45 = arith.constant 0 : index
    %c0_46 = arith.constant 0 : index
    %50 = vector.load %arg1[%c0_43, %c1_44, %c0_45, %c0_46] : memref<1x20x20x1xf32, #tpu.memory_space<vmem>>, vector<1x16x16x1xf32>
    %51 = vector.shape_cast %50 : vector<1x16x16x1xf32> to vector<16x16x1xf32>
    %c1_47 = arith.constant 1 : index
    %c0_48 = arith.constant 0 : index
    %c0_49 = arith.constant 0 : index
    %c0_50 = arith.constant 0 : index
    %52 = vector.load %arg3[%c1_47, %c0_48, %c0_49, %c0_50] : memref<5x5x1x32xf32, #tpu.memory_space<vmem>>, vector<1x1x1x32xf32>
    %53 = vector.shape_cast %52 : vector<1x1x1x32xf32> to vector<1x32xf32>
    %54 = vector.shape_cast %53 : vector<1x32xf32> to vector<1x1x32xf32>
    %55 = vector.broadcast %51 : vector<16x16x1xf32> to vector<16x16x32xf32>
    %56 = vector.broadcast %54 : vector<1x1x32xf32> to vector<16x16x32xf32>
    %57 = arith.mulf %55, %56 : vector<16x16x32xf32>
    %58 = arith.addf %49, %57 : vector<16x16x32xf32>
    %c0_51 = arith.constant 0 : index
    %c1_52 = arith.constant 1 : index
    %c1_53 = arith.constant 1 : index
    %c0_54 = arith.constant 0 : index
    %59 = vector.load %arg1[%c0_51, %c1_52, %c1_53, %c0_54] : memref<1x20x20x1xf32, #tpu.memory_space<vmem>>, vector<1x16x16x1xf32>
    %60 = vector.shape_cast %59 : vector<1x16x16x1xf32> to vector<16x16x1xf32>
    %c1_55 = arith.constant 1 : index
    %c1_56 = arith.constant 1 : index
    %c0_57 = arith.constant 0 : index
    %c0_58 = arith.constant 0 : index
    %61 = vector.load %arg3[%c1_55, %c1_56, %c0_57, %c0_58] : memref<5x5x1x32xf32, #tpu.memory_space<vmem>>, vector<1x1x1x32xf32>
    %62 = vector.shape_cast %61 : vector<1x1x1x32xf32> to vector<1x32xf32>
    %63 = vector.shape_cast %62 : vector<1x32xf32> to vector<1x1x32xf32>
    %64 = vector.broadcast %60 : vector<16x16x1xf32> to vector<16x16x32xf32>
    %65 = vector.broadcast %63 : vector<1x1x32xf32> to vector<16x16x32xf32>
    %66 = arith.mulf %64, %65 : vector<16x16x32xf32>
    %67 = arith.addf %58, %66 : vector<16x16x32xf32>
    %c0_59 = arith.constant 0 : index
    %c1_60 = arith.constant 1 : index
    %c2_61 = arith.constant 2 : index
    %c0_62 = arith.constant 0 : index
    %68 = vector.load %arg1[%c0_59, %c1_60, %c2_61, %c0_62] : memref<1x20x20x1xf32, #tpu.memory_space<vmem>>, vector<1x16x16x1xf32>
    %69 = vector.shape_cast %68 : vector<1x16x16x1xf32> to vector<16x16x1xf32>
    %c1_63 = arith.constant 1 : index
    %c2_64 = arith.constant 2 : index
    %c0_65 = arith.constant 0 : index
    %c0_66 = arith.constant 0 : index
    %70 = vector.load %arg3[%c1_63, %c2_64, %c0_65, %c0_66] : memref<5x5x1x32xf32, #tpu.memory_space<vmem>>, vector<1x1x1x32xf32>
    %71 = vector.shape_cast %70 : vector<1x1x1x32xf32> to vector<1x32xf32>
    %72 = vector.shape_cast %71 : vector<1x32xf32> to vector<1x1x32xf32>
    %73 = vector.broadcast %69 : vector<16x16x1xf32> to vector<16x16x32xf32>
    %74 = vector.broadcast %72 : vector<1x1x32xf32> to vector<16x16x32xf32>
    %75 = arith.mulf %73, %74 : vector<16x16x32xf32>
    %76 = arith.addf %67, %75 : vector<16x16x32xf32>
    %c0_67 = arith.constant 0 : index
    %c1_68 = arith.constant 1 : index
    %c3_69 = arith.constant 3 : index
    %c0_70 = arith.constant 0 : index
    %77 = vector.load %arg1[%c0_67, %c1_68, %c3_69, %c0_70] : memref<1x20x20x1xf32, #tpu.memory_space<vmem>>, vector<1x16x16x1xf32>
    %78 = vector.shape_cast %77 : vector<1x16x16x1xf32> to vector<16x16x1xf32>
    %c1_71 = arith.constant 1 : index
    %c3_72 = arith.constant 3 : index
    %c0_73 = arith.constant 0 : index
    %c0_74 = arith.constant 0 : index
    %79 = vector.load %arg3[%c1_71, %c3_72, %c0_73, %c0_74] : memref<5x5x1x32xf32, #tpu.memory_space<vmem>>, vector<1x1x1x32xf32>
    %80 = vector.shape_cast %79 : vector<1x1x1x32xf32> to vector<1x32xf32>
    %81 = vector.shape_cast %80 : vector<1x32xf32> to vector<1x1x32xf32>
    %82 = vector.broadcast %78 : vector<16x16x1xf32> to vector<16x16x32xf32>
    %83 = vector.broadcast %81 : vector<1x1x32xf32> to vector<16x16x32xf32>
    %84 = arith.mulf %82, %83 : vector<16x16x32xf32>
    %85 = arith.addf %76, %84 : vector<16x16x32xf32>
    %c0_75 = arith.constant 0 : index
    %c1_76 = arith.constant 1 : index
    %c4_77 = arith.constant 4 : index
    %c0_78 = arith.constant 0 : index
    %86 = vector.load %arg1[%c0_75, %c1_76, %c4_77, %c0_78] : memref<1x20x20x1xf32, #tpu.memory_space<vmem>>, vector<1x16x16x1xf32>
    %87 = vector.shape_cast %86 : vector<1x16x16x1xf32> to vector<16x16x1xf32>
    %c1_79 = arith.constant 1 : index
    %c4_80 = arith.constant 4 : index
    %c0_81 = arith.constant 0 : index
    %c0_82 = arith.constant 0 : index
    %88 = vector.load %arg3[%c1_79, %c4_80, %c0_81, %c0_82] : memref<5x5x1x32xf32, #tpu.memory_space<vmem>>, vector<1x1x1x32xf32>
    %89 = vector.shape_cast %88 : vector<1x1x1x32xf32> to vector<1x32xf32>
    %90 = vector.shape_cast %89 : vector<1x32xf32> to vector<1x1x32xf32>
    %91 = vector.broadcast %87 : vector<16x16x1xf32> to vector<16x16x32xf32>
    %92 = vector.broadcast %90 : vector<1x1x32xf32> to vector<16x16x32xf32>
    %93 = arith.mulf %91, %92 : vector<16x16x32xf32>
    %94 = arith.addf %85, %93 : vector<16x16x32xf32>
    %c0_83 = arith.constant 0 : index
    %c2_84 = arith.constant 2 : index
    %c0_85 = arith.constant 0 : index
    %c0_86 = arith.constant 0 : index
    %95 = vector.load %arg1[%c0_83, %c2_84, %c0_85, %c0_86] : memref<1x20x20x1xf32, #tpu.memory_space<vmem>>, vector<1x16x16x1xf32>
    %96 = vector.shape_cast %95 : vector<1x16x16x1xf32> to vector<16x16x1xf32>
    %c2_87 = arith.constant 2 : index
    %c0_88 = arith.constant 0 : index
    %c0_89 = arith.constant 0 : index
    %c0_90 = arith.constant 0 : index
    %97 = vector.load %arg3[%c2_87, %c0_88, %c0_89, %c0_90] : memref<5x5x1x32xf32, #tpu.memory_space<vmem>>, vector<1x1x1x32xf32>
    %98 = vector.shape_cast %97 : vector<1x1x1x32xf32> to vector<1x32xf32>
    %99 = vector.shape_cast %98 : vector<1x32xf32> to vector<1x1x32xf32>
    %100 = vector.broadcast %96 : vector<16x16x1xf32> to vector<16x16x32xf32>
    %101 = vector.broadcast %99 : vector<1x1x32xf32> to vector<16x16x32xf32>
    %102 = arith.mulf %100, %101 : vector<16x16x32xf32>
    %103 = arith.addf %94, %102 : vector<16x16x32xf32>
    %c0_91 = arith.constant 0 : index
    %c2_92 = arith.constant 2 : index
    %c1_93 = arith.constant 1 : index
    %c0_94 = arith.constant 0 : index
    %104 = vector.load %arg1[%c0_91, %c2_92, %c1_93, %c0_94] : memref<1x20x20x1xf32, #tpu.memory_space<vmem>>, vector<1x16x16x1xf32>
    %105 = vector.shape_cast %104 : vector<1x16x16x1xf32> to vector<16x16x1xf32>
    %c2_95 = arith.constant 2 : index
    %c1_96 = arith.constant 1 : index
    %c0_97 = arith.constant 0 : index
    %c0_98 = arith.constant 0 : index
    %106 = vector.load %arg3[%c2_95, %c1_96, %c0_97, %c0_98] : memref<5x5x1x32xf32, #tpu.memory_space<vmem>>, vector<1x1x1x32xf32>
    %107 = vector.shape_cast %106 : vector<1x1x1x32xf32> to vector<1x32xf32>
    %108 = vector.shape_cast %107 : vector<1x32xf32> to vector<1x1x32xf32>
    %109 = vector.broadcast %105 : vector<16x16x1xf32> to vector<16x16x32xf32>
    %110 = vector.broadcast %108 : vector<1x1x32xf32> to vector<16x16x32xf32>
    %111 = arith.mulf %109, %110 : vector<16x16x32xf32>
    %112 = arith.addf %103, %111 : vector<16x16x32xf32>
    %c0_99 = arith.constant 0 : index
    %c2_100 = arith.constant 2 : index
    %c2_101 = arith.constant 2 : index
    %c0_102 = arith.constant 0 : index
    %113 = vector.load %arg1[%c0_99, %c2_100, %c2_101, %c0_102] : memref<1x20x20x1xf32, #tpu.memory_space<vmem>>, vector<1x16x16x1xf32>
    %114 = vector.shape_cast %113 : vector<1x16x16x1xf32> to vector<16x16x1xf32>
    %c2_103 = arith.constant 2 : index
    %c2_104 = arith.constant 2 : index
    %c0_105 = arith.constant 0 : index
    %c0_106 = arith.constant 0 : index
    %115 = vector.load %arg3[%c2_103, %c2_104, %c0_105, %c0_106] : memref<5x5x1x32xf32, #tpu.memory_space<vmem>>, vector<1x1x1x32xf32>
    %116 = vector.shape_cast %115 : vector<1x1x1x32xf32> to vector<1x32xf32>
    %117 = vector.shape_cast %116 : vector<1x32xf32> to vector<1x1x32xf32>
    %118 = vector.broadcast %114 : vector<16x16x1xf32> to vector<16x16x32xf32>
    %119 = vector.broadcast %117 : vector<1x1x32xf32> to vector<16x16x32xf32>
    %120 = arith.mulf %118, %119 : vector<16x16x32xf32>
    %121 = arith.addf %112, %120 : vector<16x16x32xf32>
    %c0_107 = arith.constant 0 : index
    %c2_108 = arith.constant 2 : index
    %c3_109 = arith.constant 3 : index
    %c0_110 = arith.constant 0 : index
    %122 = vector.load %arg1[%c0_107, %c2_108, %c3_109, %c0_110] : memref<1x20x20x1xf32, #tpu.memory_space<vmem>>, vector<1x16x16x1xf32>
    %123 = vector.shape_cast %122 : vector<1x16x16x1xf32> to vector<16x16x1xf32>
    %c2_111 = arith.constant 2 : index
    %c3_112 = arith.constant 3 : index
    %c0_113 = arith.constant 0 : index
    %c0_114 = arith.constant 0 : index
    %124 = vector.load %arg3[%c2_111, %c3_112, %c0_113, %c0_114] : memref<5x5x1x32xf32, #tpu.memory_space<vmem>>, vector<1x1x1x32xf32>
    %125 = vector.shape_cast %124 : vector<1x1x1x32xf32> to vector<1x32xf32>
    %126 = vector.shape_cast %125 : vector<1x32xf32> to vector<1x1x32xf32>
    %127 = vector.broadcast %123 : vector<16x16x1xf32> to vector<16x16x32xf32>
    %128 = vector.broadcast %126 : vector<1x1x32xf32> to vector<16x16x32xf32>
    %129 = arith.mulf %127, %128 : vector<16x16x32xf32>
    %130 = arith.addf %121, %129 : vector<16x16x32xf32>
    %c0_115 = arith.constant 0 : index
    %c2_116 = arith.constant 2 : index
    %c4_117 = arith.constant 4 : index
    %c0_118 = arith.constant 0 : index
    %131 = vector.load %arg1[%c0_115, %c2_116, %c4_117, %c0_118] : memref<1x20x20x1xf32, #tpu.memory_space<vmem>>, vector<1x16x16x1xf32>
    %132 = vector.shape_cast %131 : vector<1x16x16x1xf32> to vector<16x16x1xf32>
    %c2_119 = arith.constant 2 : index
    %c4_120 = arith.constant 4 : index
    %c0_121 = arith.constant 0 : index
    %c0_122 = arith.constant 0 : index
    %133 = vector.load %arg3[%c2_119, %c4_120, %c0_121, %c0_122] : memref<5x5x1x32xf32, #tpu.memory_space<vmem>>, vector<1x1x1x32xf32>
    %134 = vector.shape_cast %133 : vector<1x1x1x32xf32> to vector<1x32xf32>
    %135 = vector.shape_cast %134 : vector<1x32xf32> to vector<1x1x32xf32>
    %136 = vector.broadcast %132 : vector<16x16x1xf32> to vector<16x16x32xf32>
    %137 = vector.broadcast %135 : vector<1x1x32xf32> to vector<16x16x32xf32>
    %138 = arith.mulf %136, %137 : vector<16x16x32xf32>
    %139 = arith.addf %130, %138 : vector<16x16x32xf32>
    %c0_123 = arith.constant 0 : index
    %c3_124 = arith.constant 3 : index
    %c0_125 = arith.constant 0 : index
    %c0_126 = arith.constant 0 : index
    %140 = vector.load %arg1[%c0_123, %c3_124, %c0_125, %c0_126] : memref<1x20x20x1xf32, #tpu.memory_space<vmem>>, vector<1x16x16x1xf32>
    %141 = vector.shape_cast %140 : vector<1x16x16x1xf32> to vector<16x16x1xf32>
    %c3_127 = arith.constant 3 : index
    %c0_128 = arith.constant 0 : index
    %c0_129 = arith.constant 0 : index
    %c0_130 = arith.constant 0 : index
    %142 = vector.load %arg3[%c3_127, %c0_128, %c0_129, %c0_130] : memref<5x5x1x32xf32, #tpu.memory_space<vmem>>, vector<1x1x1x32xf32>
    %143 = vector.shape_cast %142 : vector<1x1x1x32xf32> to vector<1x32xf32>
    %144 = vector.shape_cast %143 : vector<1x32xf32> to vector<1x1x32xf32>
    %145 = vector.broadcast %141 : vector<16x16x1xf32> to vector<16x16x32xf32>
    %146 = vector.broadcast %144 : vector<1x1x32xf32> to vector<16x16x32xf32>
    %147 = arith.mulf %145, %146 : vector<16x16x32xf32>
    %148 = arith.addf %139, %147 : vector<16x16x32xf32>
    %c0_131 = arith.constant 0 : index
    %c3_132 = arith.constant 3 : index
    %c1_133 = arith.constant 1 : index
    %c0_134 = arith.constant 0 : index
    %149 = vector.load %arg1[%c0_131, %c3_132, %c1_133, %c0_134] : memref<1x20x20x1xf32, #tpu.memory_space<vmem>>, vector<1x16x16x1xf32>
    %150 = vector.shape_cast %149 : vector<1x16x16x1xf32> to vector<16x16x1xf32>
    %c3_135 = arith.constant 3 : index
    %c1_136 = arith.constant 1 : index
    %c0_137 = arith.constant 0 : index
    %c0_138 = arith.constant 0 : index
    %151 = vector.load %arg3[%c3_135, %c1_136, %c0_137, %c0_138] : memref<5x5x1x32xf32, #tpu.memory_space<vmem>>, vector<1x1x1x32xf32>
    %152 = vector.shape_cast %151 : vector<1x1x1x32xf32> to vector<1x32xf32>
    %153 = vector.shape_cast %152 : vector<1x32xf32> to vector<1x1x32xf32>
    %154 = vector.broadcast %150 : vector<16x16x1xf32> to vector<16x16x32xf32>
    %155 = vector.broadcast %153 : vector<1x1x32xf32> to vector<16x16x32xf32>
    %156 = arith.mulf %154, %155 : vector<16x16x32xf32>
    %157 = arith.addf %148, %156 : vector<16x16x32xf32>
    %c0_139 = arith.constant 0 : index
    %c3_140 = arith.constant 3 : index
    %c2_141 = arith.constant 2 : index
    %c0_142 = arith.constant 0 : index
    %158 = vector.load %arg1[%c0_139, %c3_140, %c2_141, %c0_142] : memref<1x20x20x1xf32, #tpu.memory_space<vmem>>, vector<1x16x16x1xf32>
    %159 = vector.shape_cast %158 : vector<1x16x16x1xf32> to vector<16x16x1xf32>
    %c3_143 = arith.constant 3 : index
    %c2_144 = arith.constant 2 : index
    %c0_145 = arith.constant 0 : index
    %c0_146 = arith.constant 0 : index
    %160 = vector.load %arg3[%c3_143, %c2_144, %c0_145, %c0_146] : memref<5x5x1x32xf32, #tpu.memory_space<vmem>>, vector<1x1x1x32xf32>
    %161 = vector.shape_cast %160 : vector<1x1x1x32xf32> to vector<1x32xf32>
    %162 = vector.shape_cast %161 : vector<1x32xf32> to vector<1x1x32xf32>
    %163 = vector.broadcast %159 : vector<16x16x1xf32> to vector<16x16x32xf32>
    %164 = vector.broadcast %162 : vector<1x1x32xf32> to vector<16x16x32xf32>
    %165 = arith.mulf %163, %164 : vector<16x16x32xf32>
    %166 = arith.addf %157, %165 : vector<16x16x32xf32>
    %c0_147 = arith.constant 0 : index
    %c3_148 = arith.constant 3 : index
    %c3_149 = arith.constant 3 : index
    %c0_150 = arith.constant 0 : index
    %167 = vector.load %arg1[%c0_147, %c3_148, %c3_149, %c0_150] : memref<1x20x20x1xf32, #tpu.memory_space<vmem>>, vector<1x16x16x1xf32>
    %168 = vector.shape_cast %167 : vector<1x16x16x1xf32> to vector<16x16x1xf32>
    %c3_151 = arith.constant 3 : index
    %c3_152 = arith.constant 3 : index
    %c0_153 = arith.constant 0 : index
    %c0_154 = arith.constant 0 : index
    %169 = vector.load %arg3[%c3_151, %c3_152, %c0_153, %c0_154] : memref<5x5x1x32xf32, #tpu.memory_space<vmem>>, vector<1x1x1x32xf32>
    %170 = vector.shape_cast %169 : vector<1x1x1x32xf32> to vector<1x32xf32>
    %171 = vector.shape_cast %170 : vector<1x32xf32> to vector<1x1x32xf32>
    %172 = vector.broadcast %168 : vector<16x16x1xf32> to vector<16x16x32xf32>
    %173 = vector.broadcast %171 : vector<1x1x32xf32> to vector<16x16x32xf32>
    %174 = arith.mulf %172, %173 : vector<16x16x32xf32>
    %175 = arith.addf %166, %174 : vector<16x16x32xf32>
    %c0_155 = arith.constant 0 : index
    %c3_156 = arith.constant 3 : index
    %c4_157 = arith.constant 4 : index
    %c0_158 = arith.constant 0 : index
    %176 = vector.load %arg1[%c0_155, %c3_156, %c4_157, %c0_158] : memref<1x20x20x1xf32, #tpu.memory_space<vmem>>, vector<1x16x16x1xf32>
    %177 = vector.shape_cast %176 : vector<1x16x16x1xf32> to vector<16x16x1xf32>
    %c3_159 = arith.constant 3 : index
    %c4_160 = arith.constant 4 : index
    %c0_161 = arith.constant 0 : index
    %c0_162 = arith.constant 0 : index
    %178 = vector.load %arg3[%c3_159, %c4_160, %c0_161, %c0_162] : memref<5x5x1x32xf32, #tpu.memory_space<vmem>>, vector<1x1x1x32xf32>
    %179 = vector.shape_cast %178 : vector<1x1x1x32xf32> to vector<1x32xf32>
    %180 = vector.shape_cast %179 : vector<1x32xf32> to vector<1x1x32xf32>
    %181 = vector.broadcast %177 : vector<16x16x1xf32> to vector<16x16x32xf32>
    %182 = vector.broadcast %180 : vector<1x1x32xf32> to vector<16x16x32xf32>
    %183 = arith.mulf %181, %182 : vector<16x16x32xf32>
    %184 = arith.addf %175, %183 : vector<16x16x32xf32>
    %c0_163 = arith.constant 0 : index
    %c4_164 = arith.constant 4 : index
    %c0_165 = arith.constant 0 : index
    %c0_166 = arith.constant 0 : index
    %185 = vector.load %arg1[%c0_163, %c4_164, %c0_165, %c0_166] : memref<1x20x20x1xf32, #tpu.memory_space<vmem>>, vector<1x16x16x1xf32>
    %186 = vector.shape_cast %185 : vector<1x16x16x1xf32> to vector<16x16x1xf32>
    %c4_167 = arith.constant 4 : index
    %c0_168 = arith.constant 0 : index
    %c0_169 = arith.constant 0 : index
    %c0_170 = arith.constant 0 : index
    %187 = vector.load %arg3[%c4_167, %c0_168, %c0_169, %c0_170] : memref<5x5x1x32xf32, #tpu.memory_space<vmem>>, vector<1x1x1x32xf32>
    %188 = vector.shape_cast %187 : vector<1x1x1x32xf32> to vector<1x32xf32>
    %189 = vector.shape_cast %188 : vector<1x32xf32> to vector<1x1x32xf32>
    %190 = vector.broadcast %186 : vector<16x16x1xf32> to vector<16x16x32xf32>
    %191 = vector.broadcast %189 : vector<1x1x32xf32> to vector<16x16x32xf32>
    %192 = arith.mulf %190, %191 : vector<16x16x32xf32>
    %193 = arith.addf %184, %192 : vector<16x16x32xf32>
    %c0_171 = arith.constant 0 : index
    %c4_172 = arith.constant 4 : index
    %c1_173 = arith.constant 1 : index
    %c0_174 = arith.constant 0 : index
    %194 = vector.load %arg1[%c0_171, %c4_172, %c1_173, %c0_174] : memref<1x20x20x1xf32, #tpu.memory_space<vmem>>, vector<1x16x16x1xf32>
    %195 = vector.shape_cast %194 : vector<1x16x16x1xf32> to vector<16x16x1xf32>
    %c4_175 = arith.constant 4 : index
    %c1_176 = arith.constant 1 : index
    %c0_177 = arith.constant 0 : index
    %c0_178 = arith.constant 0 : index
    %196 = vector.load %arg3[%c4_175, %c1_176, %c0_177, %c0_178] : memref<5x5x1x32xf32, #tpu.memory_space<vmem>>, vector<1x1x1x32xf32>
    %197 = vector.shape_cast %196 : vector<1x1x1x32xf32> to vector<1x32xf32>
    %198 = vector.shape_cast %197 : vector<1x32xf32> to vector<1x1x32xf32>
    %199 = vector.broadcast %195 : vector<16x16x1xf32> to vector<16x16x32xf32>
    %200 = vector.broadcast %198 : vector<1x1x32xf32> to vector<16x16x32xf32>
    %201 = arith.mulf %199, %200 : vector<16x16x32xf32>
    %202 = arith.addf %193, %201 : vector<16x16x32xf32>
    %c0_179 = arith.constant 0 : index
    %c4_180 = arith.constant 4 : index
    %c2_181 = arith.constant 2 : index
    %c0_182 = arith.constant 0 : index
    %203 = vector.load %arg1[%c0_179, %c4_180, %c2_181, %c0_182] : memref<1x20x20x1xf32, #tpu.memory_space<vmem>>, vector<1x16x16x1xf32>
    %204 = vector.shape_cast %203 : vector<1x16x16x1xf32> to vector<16x16x1xf32>
    %c4_183 = arith.constant 4 : index
    %c2_184 = arith.constant 2 : index
    %c0_185 = arith.constant 0 : index
    %c0_186 = arith.constant 0 : index
    %205 = vector.load %arg3[%c4_183, %c2_184, %c0_185, %c0_186] : memref<5x5x1x32xf32, #tpu.memory_space<vmem>>, vector<1x1x1x32xf32>
    %206 = vector.shape_cast %205 : vector<1x1x1x32xf32> to vector<1x32xf32>
    %207 = vector.shape_cast %206 : vector<1x32xf32> to vector<1x1x32xf32>
    %208 = vector.broadcast %204 : vector<16x16x1xf32> to vector<16x16x32xf32>
    %209 = vector.broadcast %207 : vector<1x1x32xf32> to vector<16x16x32xf32>
    %210 = arith.mulf %208, %209 : vector<16x16x32xf32>
    %211 = arith.addf %202, %210 : vector<16x16x32xf32>
    %c0_187 = arith.constant 0 : index
    %c4_188 = arith.constant 4 : index
    %c3_189 = arith.constant 3 : index
    %c0_190 = arith.constant 0 : index
    %212 = vector.load %arg1[%c0_187, %c4_188, %c3_189, %c0_190] : memref<1x20x20x1xf32, #tpu.memory_space<vmem>>, vector<1x16x16x1xf32>
    %213 = vector.shape_cast %212 : vector<1x16x16x1xf32> to vector<16x16x1xf32>
    %c4_191 = arith.constant 4 : index
    %c3_192 = arith.constant 3 : index
    %c0_193 = arith.constant 0 : index
    %c0_194 = arith.constant 0 : index
    %214 = vector.load %arg3[%c4_191, %c3_192, %c0_193, %c0_194] : memref<5x5x1x32xf32, #tpu.memory_space<vmem>>, vector<1x1x1x32xf32>
    %215 = vector.shape_cast %214 : vector<1x1x1x32xf32> to vector<1x32xf32>
    %216 = vector.shape_cast %215 : vector<1x32xf32> to vector<1x1x32xf32>
    %217 = vector.broadcast %213 : vector<16x16x1xf32> to vector<16x16x32xf32>
    %218 = vector.broadcast %216 : vector<1x1x32xf32> to vector<16x16x32xf32>
    %219 = arith.mulf %217, %218 : vector<16x16x32xf32>
    %220 = arith.addf %211, %219 : vector<16x16x32xf32>
    %c0_195 = arith.constant 0 : index
    %c4_196 = arith.constant 4 : index
    %c4_197 = arith.constant 4 : index
    %c0_198 = arith.constant 0 : index
    %221 = vector.load %arg1[%c0_195, %c4_196, %c4_197, %c0_198] : memref<1x20x20x1xf32, #tpu.memory_space<vmem>>, vector<1x16x16x1xf32>
    %222 = vector.shape_cast %221 : vector<1x16x16x1xf32> to vector<16x16x1xf32>
    %c4_199 = arith.constant 4 : index
    %c4_200 = arith.constant 4 : index
    %c0_201 = arith.constant 0 : index
    %c0_202 = arith.constant 0 : index
    %223 = vector.load %arg3[%c4_199, %c4_200, %c0_201, %c0_202] : memref<5x5x1x32xf32, #tpu.memory_space<vmem>>, vector<1x1x1x32xf32>
    %224 = vector.shape_cast %223 : vector<1x1x1x32xf32> to vector<1x32xf32>
    %225 = vector.shape_cast %224 : vector<1x32xf32> to vector<1x1x32xf32>
    %226 = vector.broadcast %222 : vector<16x16x1xf32> to vector<16x16x32xf32>
    %227 = vector.broadcast %225 : vector<1x1x32xf32> to vector<16x16x32xf32>
    %228 = arith.mulf %226, %227 : vector<16x16x32xf32>
    %229 = arith.addf %220, %228 : vector<16x16x32xf32>
    %c0_203 = arith.constant 0 : index
    %c0_204 = arith.constant 0 : index
    %230 = vector.load %arg4[%c0_203, %c0_204] : memref<1x32xf32, #tpu.memory_space<vmem>>, vector<1x32xf32>
    %231 = vector.shape_cast %230 : vector<1x32xf32> to vector<1x1x32xf32>
    %232 = vector.broadcast %231 : vector<1x1x32xf32> to vector<16x16x32xf32>
    %233 = arith.mulf %229, %232 : vector<16x16x32xf32>
    %c0_205 = arith.constant 0 : index
    %c0_206 = arith.constant 0 : index
    %234 = vector.load %arg5[%c0_205, %c0_206] : memref<1x32xf32, #tpu.memory_space<vmem>>, vector<1x32xf32>
    %235 = vector.shape_cast %234 : vector<1x32xf32> to vector<1x1x32xf32>
    %236 = vector.broadcast %235 : vector<1x1x32xf32> to vector<16x16x32xf32>
    %237 = arith.addf %233, %236 : vector<16x16x32xf32>
    %cst_207 = arith.constant 0.000000e+00 : f32
    %238 = vector.broadcast %cst_207 : f32 to vector<16x16x32xf32>
    %239 = arith.maximumf %237, %238 : vector<16x16x32xf32>
    %c1_208 = arith.constant 1 : index
    %c1_209 = arith.constant 1 : index
    %c0_210 = arith.constant 0 : index
    %240 = vector.load %arg15[%c1_208, %c1_209, %c0_210] : memref<18x18x32xf32, #tpu.memory_space<vmem>>, vector<16x16x32xf32>
    tpu.vector_store %arg15[%c1_208, %c1_209, %c0_210], %239 {strides = array<i32>} : memref<18x18x32xf32, #tpu.memory_space<vmem>>, vector<16x16x32xf32>,
    %c0_211 = arith.constant 0 : index
    %c0_212 = arith.constant 0 : index
    %c0_213 = arith.constant 0 : index
    %241 = vector.load %arg15[%c0_211, %c0_212, %c0_213] : memref<18x18x32xf32, #tpu.memory_space<vmem>>, vector<16x16x32xf32>
    %242 = vector.shape_cast %241 : vector<16x16x32xf32> to vector<256x32xf32>
    %c0_214 = arith.constant 0 : index
    %c1_215 = arith.constant 1 : index
    %c0_216 = arith.constant 0 : index
    %243 = vector.load %arg15[%c0_214, %c1_215, %c0_216] : memref<18x18x32xf32, #tpu.memory_space<vmem>>, vector<16x16x32xf32>
    %244 = vector.shape_cast %243 : vector<16x16x32xf32> to vector<256x32xf32>
    %c0_217 = arith.constant 0 : index
    %c2_218 = arith.constant 2 : index
    %c0_219 = arith.constant 0 : index
    %245 = vector.load %arg15[%c0_217, %c2_218, %c0_219] : memref<18x18x32xf32, #tpu.memory_space<vmem>>, vector<16x16x32xf32>
    %246 = vector.shape_cast %245 : vector<16x16x32xf32> to vector<256x32xf32>
    %c1_220 = arith.constant 1 : index
    %c0_221 = arith.constant 0 : index
    %c0_222 = arith.constant 0 : index
    %247 = vector.load %arg15[%c1_220, %c0_221, %c0_222] : memref<18x18x32xf32, #tpu.memory_space<vmem>>, vector<16x16x32xf32>
    %248 = vector.shape_cast %247 : vector<16x16x32xf32> to vector<256x32xf32>
    %c1_223 = arith.constant 1 : index
    %c1_224 = arith.constant 1 : index
    %c0_225 = arith.constant 0 : index
    %249 = vector.load %arg15[%c1_223, %c1_224, %c0_225] : memref<18x18x32xf32, #tpu.memory_space<vmem>>, vector<16x16x32xf32>
    %250 = vector.shape_cast %249 : vector<16x16x32xf32> to vector<256x32xf32>
    %c1_226 = arith.constant 1 : index
    %c2_227 = arith.constant 2 : index
    %c0_228 = arith.constant 0 : index
    %251 = vector.load %arg15[%c1_226, %c2_227, %c0_228] : memref<18x18x32xf32, #tpu.memory_space<vmem>>, vector<16x16x32xf32>
    %252 = vector.shape_cast %251 : vector<16x16x32xf32> to vector<256x32xf32>
    %c2_229 = arith.constant 2 : index
    %c0_230 = arith.constant 0 : index
    %c0_231 = arith.constant 0 : index
    %253 = vector.load %arg15[%c2_229, %c0_230, %c0_231] : memref<18x18x32xf32, #tpu.memory_space<vmem>>, vector<16x16x32xf32>
    %254 = vector.shape_cast %253 : vector<16x16x32xf32> to vector<256x32xf32>
    %c2_232 = arith.constant 2 : index
    %c1_233 = arith.constant 1 : index
    %c0_234 = arith.constant 0 : index
    %255 = vector.load %arg15[%c2_232, %c1_233, %c0_234] : memref<18x18x32xf32, #tpu.memory_space<vmem>>, vector<16x16x32xf32>
    %256 = vector.shape_cast %255 : vector<16x16x32xf32> to vector<256x32xf32>
    %c2_235 = arith.constant 2 : index
    %c2_236 = arith.constant 2 : index
    %c0_237 = arith.constant 0 : index
    %257 = vector.load %arg15[%c2_235, %c2_236, %c0_237] : memref<18x18x32xf32, #tpu.memory_space<vmem>>, vector<16x16x32xf32>
    %258 = vector.shape_cast %257 : vector<16x16x32xf32> to vector<256x32xf32>
    %259 = tpu.concatenate %242, %244, %246, %248, %250, %252, %254, %256, %258 in 1 : vector<256x32xf32>, vector<256x32xf32>, vector<256x32xf32>, vector<256x32xf32>, vector<256x32xf32>, vector<256x32xf32>, vector<256x32xf32>, vector<256x32xf32>, vector<256x32xf32> -> vector<256x288xf32>
    %c0_238 = arith.constant 0 : index
    %c0_239 = arith.constant 0 : index
    %260 = vector.load %arg6[%c0_238, %c0_239] : memref<288x64xf32, #tpu.memory_space<vmem>>, vector<288x64xf32>
    %cst_240 = arith.constant dense<0.000000e+00> : vector<256x64xf32>
    %261 = tpu.matmul %259, %260, %cst_240 {dimension_numbers = #tpu.dot_dimension_numbers<[1], [0], [0], [1], [0, 0, 1, 1], [], []>} : vector<256x288xf32>, vector<288x64xf32>, vector<256x64xf32> -> vector<256x64xf32>
    %c0_241 = arith.constant 0 : index
    %c0_242 = arith.constant 0 : index
    %262 = vector.load %arg7[%c0_241, %c0_242] : memref<1x64xf32, #tpu.memory_space<vmem>>, vector<1x64xf32>
    %263 = vector.broadcast %262 : vector<1x64xf32> to vector<256x64xf32>
    %264 = arith.mulf %261, %263 : vector<256x64xf32>
    %c0_243 = arith.constant 0 : index
    %c0_244 = arith.constant 0 : index
    %265 = vector.load %arg8[%c0_243, %c0_244] : memref<1x64xf32, #tpu.memory_space<vmem>>, vector<1x64xf32>
    %266 = vector.broadcast %265 : vector<1x64xf32> to vector<256x64xf32>
    %267 = arith.addf %264, %266 : vector<256x64xf32>
    %cst_245 = arith.constant 0.000000e+00 : f32
    %268 = vector.broadcast %cst_245 : f32 to vector<256x64xf32>
    %269 = arith.maximumf %267, %268 : vector<256x64xf32>
    %270 = vector.shape_cast %269 : vector<256x64xf32> to vector<16x16x64xf32>
    %c1_246 = arith.constant 1 : index
    %c1_247 = arith.constant 1 : index
    %c0_248 = arith.constant 0 : index
    %271 = vector.load %arg16[%c1_246, %c1_247, %c0_248] : memref<18x18x64xf32, #tpu.memory_space<vmem>>, vector<16x16x64xf32>
    tpu.vector_store %arg16[%c1_246, %c1_247, %c0_248], %270 {strides = array<i32>} : memref<18x18x64xf32, #tpu.memory_space<vmem>>, vector<16x16x64xf32>,
    %c0_249 = arith.constant 0 : index
    %c0_250 = arith.constant 0 : index
    %c0_251 = arith.constant 0 : index
    %272 = vector.load %arg16[%c0_249, %c0_250, %c0_251] : memref<18x18x64xf32, #tpu.memory_space<vmem>>, vector<16x16x64xf32>
    %273 = vector.shape_cast %272 : vector<16x16x64xf32> to vector<256x64xf32>
    %c0_252 = arith.constant 0 : index
    %c1_253 = arith.constant 1 : index
    %c0_254 = arith.constant 0 : index
    %274 = vector.load %arg16[%c0_252, %c1_253, %c0_254] : memref<18x18x64xf32, #tpu.memory_space<vmem>>, vector<16x16x64xf32>
    %275 = vector.shape_cast %274 : vector<16x16x64xf32> to vector<256x64xf32>
    %c0_255 = arith.constant 0 : index
    %c2_256 = arith.constant 2 : index
    %c0_257 = arith.constant 0 : index
    %276 = vector.load %arg16[%c0_255, %c2_256, %c0_257] : memref<18x18x64xf32, #tpu.memory_space<vmem>>, vector<16x16x64xf32>
    %277 = vector.shape_cast %276 : vector<16x16x64xf32> to vector<256x64xf32>
    %c1_258 = arith.constant 1 : index
    %c0_259 = arith.constant 0 : index
    %c0_260 = arith.constant 0 : index
    %278 = vector.load %arg16[%c1_258, %c0_259, %c0_260] : memref<18x18x64xf32, #tpu.memory_space<vmem>>, vector<16x16x64xf32>
    %279 = vector.shape_cast %278 : vector<16x16x64xf32> to vector<256x64xf32>
    %c1_261 = arith.constant 1 : index
    %c1_262 = arith.constant 1 : index
    %c0_263 = arith.constant 0 : index
    %280 = vector.load %arg16[%c1_261, %c1_262, %c0_263] : memref<18x18x64xf32, #tpu.memory_space<vmem>>, vector<16x16x64xf32>
    %281 = vector.shape_cast %280 : vector<16x16x64xf32> to vector<256x64xf32>
    %c1_264 = arith.constant 1 : index
    %c2_265 = arith.constant 2 : index
    %c0_266 = arith.constant 0 : index
    %282 = vector.load %arg16[%c1_264, %c2_265, %c0_266] : memref<18x18x64xf32, #tpu.memory_space<vmem>>, vector<16x16x64xf32>
    %283 = vector.shape_cast %282 : vector<16x16x64xf32> to vector<256x64xf32>
    %c2_267 = arith.constant 2 : index
    %c0_268 = arith.constant 0 : index
    %c0_269 = arith.constant 0 : index
    %284 = vector.load %arg16[%c2_267, %c0_268, %c0_269] : memref<18x18x64xf32, #tpu.memory_space<vmem>>, vector<16x16x64xf32>
    %285 = vector.shape_cast %284 : vector<16x16x64xf32> to vector<256x64xf32>
    %c2_270 = arith.constant 2 : index
    %c1_271 = arith.constant 1 : index
    %c0_272 = arith.constant 0 : index
    %286 = vector.load %arg16[%c2_270, %c1_271, %c0_272] : memref<18x18x64xf32, #tpu.memory_space<vmem>>, vector<16x16x64xf32>
    %287 = vector.shape_cast %286 : vector<16x16x64xf32> to vector<256x64xf32>
    %c2_273 = arith.constant 2 : index
    %c2_274 = arith.constant 2 : index
    %c0_275 = arith.constant 0 : index
    %288 = vector.load %arg16[%c2_273, %c2_274, %c0_275] : memref<18x18x64xf32, #tpu.memory_space<vmem>>, vector<16x16x64xf32>
    %289 = vector.shape_cast %288 : vector<16x16x64xf32> to vector<256x64xf32>
    %290 = tpu.concatenate %273, %275, %277, %279, %281, %283, %285, %287, %289 in 1 : vector<256x64xf32>, vector<256x64xf32>, vector<256x64xf32>, vector<256x64xf32>, vector<256x64xf32>, vector<256x64xf32>, vector<256x64xf32>, vector<256x64xf32>, vector<256x64xf32> -> vector<256x576xf32>
    %c0_276 = arith.constant 0 : index
    %c0_277 = arith.constant 0 : index
    %291 = vector.load %arg9[%c0_276, %c0_277] : memref<576x32xf32, #tpu.memory_space<vmem>>, vector<576x32xf32>
    %cst_278 = arith.constant dense<0.000000e+00> : vector<256x32xf32>
    %292 = tpu.matmul %290, %291, %cst_278 {dimension_numbers = #tpu.dot_dimension_numbers<[1], [0], [0], [1], [0, 0, 1, 1], [], []>} : vector<256x576xf32>, vector<576x32xf32>, vector<256x32xf32> -> vector<256x32xf32>
    %c0_279 = arith.constant 0 : index
    %c0_280 = arith.constant 0 : index
    %293 = vector.load %arg10[%c0_279, %c0_280] : memref<1x32xf32, #tpu.memory_space<vmem>>, vector<1x32xf32>
    %294 = vector.broadcast %293 : vector<1x32xf32> to vector<256x32xf32>
    %295 = arith.mulf %292, %294 : vector<256x32xf32>
    %c0_281 = arith.constant 0 : index
    %c0_282 = arith.constant 0 : index
    %296 = vector.load %arg11[%c0_281, %c0_282] : memref<1x32xf32, #tpu.memory_space<vmem>>, vector<1x32xf32>
    %297 = vector.broadcast %296 : vector<1x32xf32> to vector<256x32xf32>
    %298 = arith.addf %295, %297 : vector<256x32xf32>
    %cst_283 = arith.constant 0.000000e+00 : f32
    %299 = vector.broadcast %cst_283 : f32 to vector<256x32xf32>
    %300 = arith.maximumf %298, %299 : vector<256x32xf32>
    %c0_284 = arith.constant 0 : index
    %c0_285 = arith.constant 0 : index
    %301 = vector.load %arg12[%c0_284, %c0_285] : memref<1x32xf32, #tpu.memory_space<vmem>>, vector<1x32xf32>
    %302 = tpu.transpose %300, [1, 0] : vector<256x32xf32> -> vector<32x256xf32>
    %cst_286 = arith.constant dense<0.000000e+00> : vector<1x256xf32>
    %303 = tpu.matmul %301, %302, %cst_286 {dimension_numbers = #tpu.dot_dimension_numbers<[1], [0], [0], [1], [0, 0, 1, 1], [], []>} : vector<1x32xf32>, vector<32x256xf32>, vector<1x256xf32> -> vector<1x256xf32>
    %c0_287 = arith.constant 0 : index
    %c0_288 = arith.constant 0 : index
    %304 = vector.load %arg13[%c0_287, %c0_288] : memref<1x1xf32, #tpu.memory_space<vmem>>, vector<1x1xf32>
    %305 = vector.broadcast %304 : vector<1x1xf32> to vector<1x256xf32>
    %306 = arith.addf %303, %305 : vector<1x256xf32>
    %307 = math.tanh %306 : vector<1x256xf32>
    %c0_289 = arith.constant 0 : index
    %c0_290 = arith.constant 0 : index
    %c0_291 = arith.constant 0 : index
    %308 = vector.load %arg2[%c0_289, %c0_290, %c0_291] : memref<1x1x256xf32, #tpu.memory_space<vmem>>, vector<1x1x256xf32>
    %309 = vector.shape_cast %308 : vector<1x1x256xf32> to vector<1x256xf32>
    %310 = arith.addf %307, %309 : vector<1x256xf32>
    %c0_292 = arith.constant 0 : index
    %c0_293 = arith.constant 0 : index
    %c0_294 = arith.constant 0 : index
    %311 = vector.load %arg14[%c0_292, %c0_293, %c0_294] : memref<1x1x256xf32, #tpu.memory_space<vmem>>, vector<1x1x256xf32>
    %312 = vector.shape_cast %311 : vector<1x1x256xf32> to vector<1x256xf32>
    %313 = vector.shape_cast %310 : vector<1x256xf32> to vector<1x1x256xf32>
    tpu.vector_store %arg14[%c0_292, %c0_293, %c0_294], %313 {strides = array<i32>} : memref<1x1x256xf32, #tpu.memory_space<vmem>>, vector<1x1x256xf32>,
    return
  }
  func.func @transform_0(%arg0: i32) -> (i32, i32, i32, i32) {
    %c0_i32 = arith.constant 0 : i32
    %c0_i32_0 = arith.constant 0 : i32
    %c0_i32_1 = arith.constant 0 : i32
    %c0_i32_2 = arith.constant 0 : i32
    return %arg0, %c0_i32, %c0_i32_0, %c0_i32_1 : i32, i32, i32, i32
  }
  func.func @transform_1(%arg0: i32) -> (i32, i32, i32) {
    %c0_i32 = arith.constant 0 : i32
    %c0_i32_0 = arith.constant 0 : i32
    %c0_i32_1 = arith.constant 0 : i32
    return %arg0, %c0_i32, %c0_i32_0 : i32, i32, i32
  }
  func.func @transform_2(%arg0: i32) -> (i32, i32, i32, i32) {
    %c0_i32 = arith.constant 0 : i32
    %c0_i32_0 = arith.constant 0 : i32
    %c0_i32_1 = arith.constant 0 : i32
    %c0_i32_2 = arith.constant 0 : i32
    %c0_i32_3 = arith.constant 0 : i32
    return %c0_i32, %c0_i32_0, %c0_i32_1, %c0_i32_2 : i32, i32, i32, i32
  }
  func.func @transform_3(%arg0: i32) -> (i32, i32) {
    %c0_i32 = arith.constant 0 : i32
    %c0_i32_0 = arith.constant 0 : i32
    %c0_i32_1 = arith.constant 0 : i32
    return %c0_i32, %c0_i32_0 : i32, i32
  }
  func.func @transform_4(%arg0: i32) -> (i32, i32) {
    %c0_i32 = arith.constant 0 : i32
    %c0_i32_0 = arith.constant 0 : i32
    %c0_i32_1 = arith.constant 0 : i32
    return %c0_i32, %c0_i32_0 : i32, i32
  }
  func.func @transform_5(%arg0: i32) -> (i32, i32) {
    %c0_i32 = arith.constant 0 : i32
    %c0_i32_0 = arith.constant 0 : i32
    %c0_i32_1 = arith.constant 0 : i32
    return %c0_i32, %c0_i32_0 : i32, i32
  }
  func.func @transform_6(%arg0: i32) -> (i32, i32) {
    %c0_i32 = arith.constant 0 : i32
    %c0_i32_0 = arith.constant 0 : i32
    %c0_i32_1 = arith.constant 0 : i32
    return %c0_i32, %c0_i32_0 : i32, i32
  }
  func.func @transform_7(%arg0: i32) -> (i32, i32) {
    %c0_i32 = arith.constant 0 : i32
    %c0_i32_0 = arith.constant 0 : i32
    %c0_i32_1 = arith.constant 0 : i32
    return %c0_i32, %c0_i32_0 : i32, i32
  }
  func.func @transform_8(%arg0: i32) -> (i32, i32) {
    %c0_i32 = arith.constant 0 : i32
    %c0_i32_0 = arith.constant 0 : i32
    %c0_i32_1 = arith.constant 0 : i32
    return %c0_i32, %c0_i32_0 : i32, i32
  }
  func.func @transform_9(%arg0: i32) -> (i32, i32) {
    %c0_i32 = arith.constant 0 : i32
    %c0_i32_0 = arith.constant 0 : i32
    %c0_i32_1 = arith.constant 0 : i32
    return %c0_i32, %c0_i32_0 : i32, i32
  }
  func.func @transform_10(%arg0: i32) -> (i32, i32) {
    %c0_i32 = arith.constant 0 : i32
    %c0_i32_0 = arith.constant 0 : i32
    %c0_i32_1 = arith.constant 0 : i32
    return %c0_i32, %c0_i32_0 : i32, i32
  }
  func.func @transform_11(%arg0: i32) -> (i32, i32) {
    %c0_i32 = arith.constant 0 : i32
    %c0_i32_0 = arith.constant 0 : i32
    %c0_i32_1 = arith.constant 0 : i32
    return %c0_i32, %c0_i32_0 : i32, i32
  }
  func.func @transform_12(%arg0: i32) -> (i32, i32) {
    %c0_i32 = arith.constant 0 : i32
    %c0_i32_0 = arith.constant 0 : i32
    %c0_i32_1 = arith.constant 0 : i32
    return %c0_i32, %c0_i32_0 : i32, i32
  }
  func.func @transform_13(%arg0: i32) -> (i32, i32, i32) {
    %c0_i32 = arith.constant 0 : i32
    %c0_i32_0 = arith.constant 0 : i32
    %c0_i32_1 = arith.constant 0 : i32
    return %arg0, %c0_i32, %c0_i32_0 : i32, i32, i32
  }
}

</mosaic_0001>

<llo_original>
// kernel: simple_hic_align_pallas.1
$region0: #{simple_hic_align_pallas.1}
  #allocation0 [shape = 'u32[]', space=smem, size = 0x4, offset = 0x4, fixed_abs, tag = 'smem constant byte address 0x4 - core index']
  #allocation1 [shape = 'u32[72,128]{1,0:T(1,128)}', space=vmem, size = 0x9000, scoped, tag = 'internal scratch']
  #allocation2 [shape = 'f32[18,18,32]{2,1,0:T(8,128)}', space=vmem, size = 0x36000, scoped, tag = 'scratch operand']
  #allocation3 [shape = 'f32[18,18,64]{2,1,0:T(8,128)}', space=vmem, size = 0x36000, scoped, tag = 'scratch operand']
  #allocation4 [shape = 'f32[1,1]{1,0:T(1,128)S(1)}', space=vmem, size = 0x200, scoped, tag = 'scoped memory for simple_hic_align_pallas.1']
  %s0 = inlined_call_operand.vmem [shape: f32[2,20,20,1], index: 0, kind: input, shape index: {}]
  %s1 = inlined_call_operand.vmem [shape: f32[2,1,256], index: 1, kind: input, shape index: {}]
  %s2 = inlined_call_operand.vmem [shape: f32[5,5,1,32], index: 2, kind: input, shape index: {}]
  %s3 = inlined_call_operand.vmem [shape: f32[1,32], index: 3, kind: input, shape index: {}]
  %s4 = inlined_call_operand.vmem [shape: f32[1,32], index: 4, kind: input, shape index: {}]
  %s5 = inlined_call_operand.vmem [shape: f32[288,64], index: 5, kind: input, shape index: {}]
  %s6 = inlined_call_operand.vmem [shape: f32[1,64], index: 6, kind: input, shape index: {}]
  %s7 = inlined_call_operand.vmem [shape: f32[1,64], index: 7, kind: input, shape index: {}]
  %s8 = inlined_call_operand.vmem [shape: f32[576,32], index: 8, kind: input, shape index: {}]
  %s9 = inlined_call_operand.vmem [shape: f32[1,32], index: 9, kind: input, shape index: {}]
  %s10 = inlined_call_operand.vmem [shape: f32[1,32], index: 10, kind: input, shape index: {}]
  %s11 = inlined_call_operand.vmem [shape: f32[1,32], index: 11, kind: input, shape index: {}]
  %s12 = inlined_call_operand.<no memory space> [shape: f32[1,1], index: 12, kind: input, shape index: {}]
  %s13 = inlined_call_operand.vmem [shape: f32[2,1,256], index: 13, kind: output, shape index: {}]
  %s14 = sld [smem:[#allocation0]]
  $region85: #{simple_hic_align_pallas.1} parent=0
    _
  %s16 = ssub.s32 1, %s14
  %s17 = scalar_select 0, %s16, %s14
  %v18 = vstv %s12
  %19 = vst [vmem:[#allocation4] sm:$0x1] %v18
  loop: start=0, step=1, limit=4
  $region2: #{simple_hic_align_pallas.1} parent=0 // loop_pre_header
    _
  $region3: #{simple_hic_align_pallas.1} parent=0 // loop_header
    %s21 = sphi 0, %s25
    %p22 = scmp.ge.s32.totalorder %s21, 4
    %s31 = sphi 0, %s33
    %s34 = sphi 0, %s31
    %s35 = sphi 0, %s34
    %s51 = sphi 0, %s35
    %s57 = sphi 0, %s59
    %s60 = sphi 0, %s57
    %s61 = sphi 0, %s60
    %s77 = sphi 0, %s61
    %s81 = sphi 0, %s81
    %s83 = sphi 0, %s81
    %s84 = sphi 0, %s83
    %s98 = sphi 0, %s84
    %s102 = sphi 0, %s102
    %s104 = sphi 0, %s102
    %s105 = sphi 0, %s104
    %s119 = sphi 0, %s105
    %s123 = sphi 0, %s123
    %s125 = sphi 0, %s123
    %s126 = sphi 0, %s125
    %s140 = sphi 0, %s126
    %s144 = sphi 0, %s144
    %s146 = sphi 0, %s144
    %s147 = sphi 0, %s146
    %s161 = sphi 0, %s147
    %s165 = sphi 0, %s165
    %s167 = sphi 0, %s165
    %s168 = sphi 0, %s167
    %s182 = sphi 0, %s168
    %s186 = sphi 0, %s186
    %s188 = sphi 0, %s186
    %s189 = sphi 0, %s188
    %s203 = sphi 0, %s189
    %s207 = sphi 0, %s207
    %s209 = sphi 0, %s207
    %s210 = sphi 0, %s209
    %s224 = sphi 0, %s210
    %s228 = sphi 0, %s228
    %s230 = sphi 0, %s228
    %s231 = sphi 0, %s230
    %s245 = sphi 0, %s231
    %s249 = sphi 0, %s249
    %s251 = sphi 0, %s249
    %s252 = sphi 0, %s251
    %s266 = sphi 0, %s252
    %s270 = sphi 0, %s270
    %s272 = sphi 0, %s270
    %s273 = sphi 0, %s272
    %s287 = sphi 0, %s273
    %s291 = sphi 0, %s291
    %s293 = sphi 0, %s291
    %s294 = sphi 0, %s293
    %s308 = sphi 0, %s294
    %s314 = sphi 0, %s316
    %s317 = sphi 0, %s314
    %s318 = sphi 0, %s317
    %s334 = sphi 0, %s318
  $region4: #{simple_hic_align_pallas.1} parent=0 // loop_header_branch
    %24 = sbr.rel (%p22) target = $region8
  $region5: #{simple_hic_align_pallas.1} parent=0 // loop_body
    %s26 = ssub.s32 %s21, 1
    %s27 = ssub.s32 %s21, 2
    %s28 = sadd.s32 %s21, 1
    %s29 = ssub.s32 %s21, %s28
    %p30 = scmp.eq.s32.totalorder %s29, 0
    %s32 = sadd.s32 %s31, 1
    %s33 = scalar_select %p30, %s31, %s32
    %p36 = pneg %p30
    %p37 = scmp.eq.s32.totalorder %s21, 1
    %p38 = por %p36, %p37
    %p39 = scmp.ne.s32.totalorder %s31, %s34
    %p40 = scmp.eq.s32.totalorder %s21, 0
    %p41 = por %p39, %p40
    %p42 = scmp.ne.s32.totalorder %s31, %s34
    %p43 = scmp.eq.s32.totalorder %s26, 1
    %p44 = por %p42, %p43
    %p45 = scmp.ne.s32.totalorder %s34, %s35
    %p46 = scmp.eq.s32.totalorder %s26, 0
    %p47 = por %p45, %p46
    %p48 = scmp.ne.s32.totalorder %s34, %s35
    %p49 = scmp.eq.s32.totalorder %s27, 1
    %p50 = por %p48, %p49
    %p52 = scmp.ne.s32.totalorder %s35, %s51
    %p53 = scmp.eq.s32.totalorder %s27, 0
    %p54 = por %p52, %p53
    %s55 = ssub.s32 %s21, %s28
    %p56 = scmp.eq.s32.totalorder %s55, 0
    %s58 = sadd.s32 %s57, 1
    %s59 = scalar_select %p56, %s57, %s58
    %p62 = pneg %p56
    %p63 = scmp.eq.s32.totalorder %s21, 1
    %p64 = por %p62, %p63
    %p65 = scmp.ne.s32.totalorder %s57, %s60
    %p66 = scmp.eq.s32.totalorder %s21, 0
    %p67 = por %p65, %p66
    %p68 = scmp.ne.s32.totalorder %s57, %s60
    %p69 = scmp.eq.s32.totalorder %s26, 1
    %p70 = por %p68, %p69
    %p71 = scmp.ne.s32.totalorder %s60, %s61
    %p72 = scmp.eq.s32.totalorder %s26, 0
    %p73 = por %p71, %p72
    %p74 = scmp.ne.s32.totalorder %s60, %s61
    %p75 = scmp.eq.s32.totalorder %s27, 1
    %p76 = por %p74, %p75
    %p78 = scmp.ne.s32.totalorder %s61, %s77
    %p79 = scmp.eq.s32.totalorder %s27, 0
    %p80 = por %p78, %p79
    %s82 = sadd.s32 %s81, 1
    %p85 = scmp.eq.s32.totalorder %s21, 1
    %p86 = scmp.ne.s32.totalorder %s81, %s83
    %p87 = scmp.eq.s32.totalorder %s21, 0
    %p88 = por %p86, %p87
    %p89 = scmp.ne.s32.totalorder %s81, %s83
    %p90 = scmp.eq.s32.totalorder %s26, 1
    %p91 = por %p89, %p90
    %p92 = scmp.ne.s32.totalorder %s83, %s84
    %p93 = scmp.eq.s32.totalorder %s26, 0
    %p94 = por %p92, %p93
    %p95 = scmp.ne.s32.totalorder %s83, %s84
    %p96 = scmp.eq.s32.totalorder %s27, 1
    %p97 = por %p95, %p96
    %p99 = scmp.ne.s32.totalorder %s84, %s98
    %p100 = scmp.eq.s32.totalorder %s27, 0
    %p101 = por %p99, %p100
    %s103 = sadd.s32 %s102, 1
    %p106 = scmp.eq.s32.totalorder %s21, 1
    %p107 = scmp.ne.s32.totalorder %s102, %s104
    %p108 = scmp.eq.s32.totalorder %s21, 0
    %p109 = por %p107, %p108
    %p110 = scmp.ne.s32.totalorder %s102, %s104
    %p111 = scmp.eq.s32.totalorder %s26, 1
    %p112 = por %p110, %p111
    %p113 = scmp.ne.s32.totalorder %s104, %s105
    %p114 = scmp.eq.s32.totalorder %s26, 0
    %p115 = por %p113, %p114
    %p116 = scmp.ne.s32.totalorder %s104, %s105
    %p117 = scmp.eq.s32.totalorder %s27, 1
    %p118 = por %p116, %p117
    %p120 = scmp.ne.s32.totalorder %s105, %s119
    %p121 = scmp.eq.s32.totalorder %s27, 0
    %p122 = por %p120, %p121
    %s124 = sadd.s32 %s123, 1
    %p127 = scmp.eq.s32.totalorder %s21, 1
    %p128 = scmp.ne.s32.totalorder %s123, %s125
    %p129 = scmp.eq.s32.totalorder %s21, 0
    %p130 = por %p128, %p129
    %p131 = scmp.ne.s32.totalorder %s123, %s125
    %p132 = scmp.eq.s32.totalorder %s26, 1
    %p133 = por %p131, %p132
    %p134 = scmp.ne.s32.totalorder %s125, %s126
    %p135 = scmp.eq.s32.totalorder %s26, 0
    %p136 = por %p134, %p135
    %p137 = scmp.ne.s32.totalorder %s125, %s126
    %p138 = scmp.eq.s32.totalorder %s27, 1
    %p139 = por %p137, %p138
    %p141 = scmp.ne.s32.totalorder %s126, %s140
    %p142 = scmp.eq.s32.totalorder %s27, 0
    %p143 = por %p141, %p142
    %s145 = sadd.s32 %s144, 1
    %p148 = scmp.eq.s32.totalorder %s21, 1
    %p149 = scmp.ne.s32.totalorder %s144, %s146
    %p150 = scmp.eq.s32.totalorder %s21, 0
    %p151 = por %p149, %p150
    %p152 = scmp.ne.s32.totalorder %s144, %s146
    %p153 = scmp.eq.s32.totalorder %s26, 1
    %p154 = por %p152, %p153
    %p155 = scmp.ne.s32.totalorder %s146, %s147
    %p156 = scmp.eq.s32.totalorder %s26, 0
    %p157 = por %p155, %p156
    %p158 = scmp.ne.s32.totalorder %s146, %s147
    %p159 = scmp.eq.s32.totalorder %s27, 1
    %p160 = por %p158, %p159
    %p162 = scmp.ne.s32.totalorder %s147, %s161
    %p163 = scmp.eq.s32.totalorder %s27, 0
    %p164 = por %p162, %p163
    %s166 = sadd.s32 %s165, 1
    %p169 = scmp.eq.s32.totalorder %s21, 1
    %p170 = scmp.ne.s32.totalorder %s165, %s167
    %p171 = scmp.eq.s32.totalorder %s21, 0
    %p172 = por %p170, %p171
    %p173 = scmp.ne.s32.totalorder %s165, %s167
    %p174 = scmp.eq.s32.totalorder %s26, 1
    %p175 = por %p173, %p174
    %p176 = scmp.ne.s32.totalorder %s167, %s168
    %p177 = scmp.eq.s32.totalorder %s26, 0
    %p178 = por %p176, %p177
    %p179 = scmp.ne.s32.totalorder %s167, %s168
    %p180 = scmp.eq.s32.totalorder %s27, 1
    %p181 = por %p179, %p180
    %p183 = scmp.ne.s32.totalorder %s168, %s182
    %p184 = scmp.eq.s32.totalorder %s27, 0
    %p185 = por %p183, %p184
    %s187 = sadd.s32 %s186, 1
    %p190 = scmp.eq.s32.totalorder %s21, 1
    %p191 = scmp.ne.s32.totalorder %s186, %s188
    %p192 = scmp.eq.s32.totalorder %s21, 0
    %p193 = por %p191, %p192
    %p194 = scmp.ne.s32.totalorder %s186, %s188
    %p195 = scmp.eq.s32.totalorder %s26, 1
    %p196 = por %p194, %p195
    %p197 = scmp.ne.s32.totalorder %s188, %s189
    %p198 = scmp.eq.s32.totalorder %s26, 0
    %p199 = por %p197, %p198
    %p200 = scmp.ne.s32.totalorder %s188, %s189
    %p201 = scmp.eq.s32.totalorder %s27, 1
    %p202 = por %p200, %p201
    %p204 = scmp.ne.s32.totalorder %s189, %s203
    %p205 = scmp.eq.s32.totalorder %s27, 0
    %p206 = por %p204, %p205
    %s208 = sadd.s32 %s207, 1
    %p211 = scmp.eq.s32.totalorder %s21, 1
    %p212 = scmp.ne.s32.totalorder %s207, %s209
    %p213 = scmp.eq.s32.totalorder %s21, 0
    %p214 = por %p212, %p213
    %p215 = scmp.ne.s32.totalorder %s207, %s209
    %p216 = scmp.eq.s32.totalorder %s26, 1
    %p217 = por %p215, %p216
    %p218 = scmp.ne.s32.totalorder %s209, %s210
    %p219 = scmp.eq.s32.totalorder %s26, 0
    %p220 = por %p218, %p219
    %p221 = scmp.ne.s32.totalorder %s209, %s210
    %p222 = scmp.eq.s32.totalorder %s27, 1
    %p223 = por %p221, %p222
    %p225 = scmp.ne.s32.totalorder %s210, %s224
    %p226 = scmp.eq.s32.totalorder %s27, 0
    %p227 = por %p225, %p226
    %s229 = sadd.s32 %s228, 1
    %p232 = scmp.eq.s32.totalorder %s21, 1
    %p233 = scmp.ne.s32.totalorder %s228, %s230
    %p234 = scmp.eq.s32.totalorder %s21, 0
    %p235 = por %p233, %p234
    %p236 = scmp.ne.s32.totalorder %s228, %s230
    %p237 = scmp.eq.s32.totalorder %s26, 1
    %p238 = por %p236, %p237
    %p239 = scmp.ne.s32.totalorder %s230, %s231
    %p240 = scmp.eq.s32.totalorder %s26, 0
    %p241 = por %p239, %p240
    %p242 = scmp.ne.s32.totalorder %s230, %s231
    %p243 = scmp.eq.s32.totalorder %s27, 1
    %p244 = por %p242, %p243
    %p246 = scmp.ne.s32.totalorder %s231, %s245
    %p247 = scmp.eq.s32.totalorder %s27, 0
    %p248 = por %p246, %p247
    %s250 = sadd.s32 %s249, 1
    %p253 = scmp.eq.s32.totalorder %s21, 1
    %p254 = scmp.ne.s32.totalorder %s249, %s251
    %p255 = scmp.eq.s32.totalorder %s21, 0
    %p256 = por %p254, %p255
    %p257 = scmp.ne.s32.totalorder %s249, %s251
    %p258 = scmp.eq.s32.totalorder %s26, 1
    %p259 = por %p257, %p258
    %p260 = scmp.ne.s32.totalorder %s251, %s252
    %p261 = scmp.eq.s32.totalorder %s26, 0
    %p262 = por %p260, %p261
    %p263 = scmp.ne.s32.totalorder %s251, %s252
    %p264 = scmp.eq.s32.totalorder %s27, 1
    %p265 = por %p263, %p264
    %p267 = scmp.ne.s32.totalorder %s252, %s266
    %p268 = scmp.eq.s32.totalorder %s27, 0
    %p269 = por %p267, %p268
    %s271 = sadd.s32 %s270, 1
    %p274 = scmp.eq.s32.totalorder %s21, 1
    %p275 = scmp.ne.s32.totalorder %s270, %s272
    %p276 = scmp.eq.s32.totalorder %s21, 0
    %p277 = por %p275, %p276
    %p278 = scmp.ne.s32.totalorder %s270, %s272
    %p279 = scmp.eq.s32.totalorder %s26, 1
    %p280 = por %p278, %p279
    %p281 = scmp.ne.s32.totalorder %s272, %s273
    %p282 = scmp.eq.s32.totalorder %s26, 0
    %p283 = por %p281, %p282
    %p284 = scmp.ne.s32.totalorder %s272, %s273
    %p285 = scmp.eq.s32.totalorder %s27, 1
    %p286 = por %p284, %p285
    %p288 = scmp.ne.s32.totalorder %s273, %s287
    %p289 = scmp.eq.s32.totalorder %s27, 0
    %p290 = por %p288, %p289
    %s292 = sadd.s32 %s291, 1
    %p295 = scmp.eq.s32.totalorder %s21, 1
    %p296 = scmp.ne.s32.totalorder %s291, %s293
    %p297 = scmp.eq.s32.totalorder %s21, 0
    %p298 = por %p296, %p297
    %p299 = scmp.ne.s32.totalorder %s291, %s293
    %p300 = scmp.eq.s32.totalorder %s26, 1
    %p301 = por %p299, %p300
    %p302 = scmp.ne.s32.totalorder %s293, %s294
    %p303 = scmp.eq.s32.totalorder %s26, 0
    %p304 = por %p302, %p303
    %p305 = scmp.ne.s32.totalorder %s293, %s294
    %p306 = scmp.eq.s32.totalorder %s27, 1
    %p307 = por %p305, %p306
    %p309 = scmp.ne.s32.totalorder %s294, %s308
    %p310 = scmp.eq.s32.totalorder %s27, 0
    %p311 = por %p309, %p310
    %s312 = ssub.s32 %s21, %s28
    %p313 = scmp.eq.s32.totalorder %s312, 0
    %s315 = sadd.s32 %s314, 1
    %s316 = scalar_select %p313, %s314, %s315
    %p319 = pneg %p313
    %p320 = scmp.eq.s32.totalorder %s21, 1
    %p321 = por %p319, %p320
    %p322 = scmp.ne.s32.totalorder %s314, %s317
    %p323 = scmp.eq.s32.totalorder %s21, 0
    %p324 = por %p322, %p323
    %p325 = scmp.ne.s32.totalorder %s314, %s317
    %p326 = scmp.eq.s32.totalorder %s26, 1
    %p327 = por %p325, %p326
    %p328 = scmp.ne.s32.totalorder %s317, %s318
    %p329 = scmp.eq.s32.totalorder %s26, 0
    %p330 = por %p328, %p329
    %p331 = scmp.ne.s32.totalorder %s317, %s318
    %p332 = scmp.eq.s32.totalorder %s27, 1
    %p333 = por %p331, %p332
    %p335 = scmp.ne.s32.totalorder %s318, %s334
    %p336 = scmp.eq.s32.totalorder %s27, 0
    %p337 = por %p335, %p336
    %p338 = scmp.le.s32.totalorder 1, %s21
    %p339 = scmp.lt.s32.totalorder %s21, 3
    %p340 = pnand %p338, %p339
    %p341 = pneg %p340
    // Predicated region
    $region9: #{simple_hic_align_pallas.1} parent=5 // pred_check
      _
    $region10: #{simple_hic_align_pallas.1} parent=5 // pred_check_branch
      %343 = sbr.rel (%p340) target = $region12
    $region11: #{simple_hic_align_pallas.1} parent=5 // pred_region
      %s344 = ssub.s32 %s21, 1
      // Predicated region
      $region13: #{simple_hic_align_pallas.1} parent=11 // pred_check
        %p345 = pneg %p94
      $region14: #{simple_hic_align_pallas.1} parent=11 // pred_check_branch
        %347 = sbr.rel (%p345) target = $region16
      $region15: #{simple_hic_align_pallas.1} parent=11 // pred_region
        _
      $region16: #{simple_hic_align_pallas.1} parent=11 // pred_fallthru
        _
      // Predicated region
      $region17: #{simple_hic_align_pallas.1} parent=11 // pred_check
        %p348 = pneg %p115
      $region18: #{simple_hic_align_pallas.1} parent=11 // pred_check_branch
        %350 = sbr.rel (%p348) target = $region20
      $region19: #{simple_hic_align_pallas.1} parent=11 // pred_region
        _
      $region20: #{simple_hic_align_pallas.1} parent=11 // pred_fallthru
        _
      // Predicated region
      $region21: #{simple_hic_align_pallas.1} parent=11 // pred_check
        %p351 = pneg %p136
      $region22: #{simple_hic_align_pallas.1} parent=11 // pred_check_branch
        %353 = sbr.rel (%p351) target = $region24
      $region23: #{simple_hic_align_pallas.1} parent=11 // pred_region
        _
      $region24: #{simple_hic_align_pallas.1} parent=11 // pred_fallthru
        _
      // Predicated region
      $region25: #{simple_hic_align_pallas.1} parent=11 // pred_check
        %p354 = pneg %p157
      $region26: #{simple_hic_align_pallas.1} parent=11 // pred_check_branch
        %356 = sbr.rel (%p354) target = $region28
      $region27: #{simple_hic_align_pallas.1} parent=11 // pred_region
        _
      $region28: #{simple_hic_align_pallas.1} parent=11 // pred_fallthru
        _
      // Predicated region
      $region29: #{simple_hic_align_pallas.1} parent=11 // pred_check
        %p357 = pneg %p178
      $region30: #{simple_hic_align_pallas.1} parent=11 // pred_check_branch
        %359 = sbr.rel (%p357) target = $region32
      $region31: #{simple_hic_align_pallas.1} parent=11 // pred_region
        _
      $region32: #{simple_hic_align_pallas.1} parent=11 // pred_fallthru
        _
      // Predicated region
      $region33: #{simple_hic_align_pallas.1} parent=11 // pred_check
        %p360 = pneg %p199
      $region34: #{simple_hic_align_pallas.1} parent=11 // pred_check_branch
        %362 = sbr.rel (%p360) target = $region36
      $region35: #{simple_hic_align_pallas.1} parent=11 // pred_region
        _
      $region36: #{simple_hic_align_pallas.1} parent=11 // pred_fallthru
        _
      // Predicated region
      $region37: #{simple_hic_align_pallas.1} parent=11 // pred_check
        %p363 = pneg %p220
      $region38: #{simple_hic_align_pallas.1} parent=11 // pred_check_branch
        %365 = sbr.rel (%p363) target = $region40
      $region39: #{simple_hic_align_pallas.1} parent=11 // pred_region
        _
      $region40: #{simple_hic_align_pallas.1} parent=11 // pred_fallthru
        _
      // Predicated region
      $region41: #{simple_hic_align_pallas.1} parent=11 // pred_check
        %p366 = pneg %p241
      $region42: #{simple_hic_align_pallas.1} parent=11 // pred_check_branch
        %368 = sbr.rel (%p366) target = $region44
      $region43: #{simple_hic_align_pallas.1} parent=11 // pred_region
        _
      $region44: #{simple_hic_align_pallas.1} parent=11 // pred_fallthru
        _
      // Predicated region
      $region45: #{simple_hic_align_pallas.1} parent=11 // pred_check
        %p369 = pneg %p262
      $region46: #{simple_hic_align_pallas.1} parent=11 // pred_check_branch
        %371 = sbr.rel (%p369) target = $region48
      $region47: #{simple_hic_align_pallas.1} parent=11 // pred_region
        _
      $region48: #{simple_hic_align_pallas.1} parent=11 // pred_fallthru
        _
      // Predicated region
      $region49: #{simple_hic_align_pallas.1} parent=11 // pred_check
        %p372 = pneg %p283
      $region50: #{simple_hic_align_pallas.1} parent=11 // pred_check_branch
        %374 = sbr.rel (%p372) target = $region52
      $region51: #{simple_hic_align_pallas.1} parent=11 // pred_region
        _
      $region52: #{simple_hic_align_pallas.1} parent=11 // pred_fallthru
        _
      // Predicated region
      $region53: #{simple_hic_align_pallas.1} parent=11 // pred_check
        %p375 = pneg %p304
      $region54: #{simple_hic_align_pallas.1} parent=11 // pred_check_branch
        %377 = sbr.rel (%p375) target = $region56
      $region55: #{simple_hic_align_pallas.1} parent=11 // pred_region
        _
      $region56: #{simple_hic_align_pallas.1} parent=11 // pred_fallthru
        _
    $region12: #{simple_hic_align_pallas.1} parent=5 // pred_fallthru
      _
    %p378 = scmp.lt.s32.totalorder %s21, 2
    // Predicated region
    $region57: #{simple_hic_align_pallas.1} parent=5 // pred_check
      %p379 = pneg %p378
    $region58: #{simple_hic_align_pallas.1} parent=5 // pred_check_branch
      %381 = sbr.rel (%p379) target = $region60
    $region59: #{simple_hic_align_pallas.1} parent=5 // pred_region
      // Predicated region
      $region61: #{simple_hic_align_pallas.1} parent=59 // pred_check
        %p382 = pneg %p41
      $region62: #{simple_hic_align_pallas.1} parent=59 // pred_check_branch
        %384 = sbr.rel (%p382) target = $region64
      $region63: #{simple_hic_align_pallas.1} parent=59 // pred_region
        %p385 = scmp.lt.s32.totalorder %s21, 1
        %s386 = scalar_select %p385, %s21, 1
        %s387 = smul.addr %s386, 60
        %s388 = smul.addr %s387, 8
        %s389 = scalar_lea.vmem %s0, %s388
      $region64: #{simple_hic_align_pallas.1} parent=59 // pred_fallthru
        _
      // Predicated region
      $region65: #{simple_hic_align_pallas.1} parent=59 // pred_check
        %p390 = pneg %p67
      $region66: #{simple_hic_align_pallas.1} parent=59 // pred_check_branch
        %392 = sbr.rel (%p390) target = $region68
      $region67: #{simple_hic_align_pallas.1} parent=59 // pred_region
        %p393 = scmp.lt.s32.totalorder %s21, 1
        %s394 = scalar_select %p393, %s21, 1
        %s395 = smul.addr %s394, 2
        %s396 = scalar_lea.vmem %s1, %s395
      $region68: #{simple_hic_align_pallas.1} parent=59 // pred_fallthru
        _
    $region60: #{simple_hic_align_pallas.1} parent=5 // pred_fallthru
      _
    %p397 = scmp.le.s32.totalorder 1, %s21
    %p398 = scmp.lt.s32.totalorder %s21, 3
    %p399 = pnand %p397, %p398
    %p400 = pneg %p399
    // Predicated region
    $region69: #{simple_hic_align_pallas.1} parent=5 // pred_check
      _
    $region70: #{simple_hic_align_pallas.1} parent=5 // pred_check_branch
      %402 = sbr.rel (%p399) target = $region72
    $region71: #{simple_hic_align_pallas.1} parent=5 // pred_region
      %s403 = ssub.s32 %s21, 1
      %p404 = scmp.lt.s32.totalorder %s26, 1
      %s405 = scalar_select %p404, %s26, 1
      %s406 = smul.addr %s405, 60
      %s407 = smul.addr %s406, 8
      %s408 = scalar_lea.vmem %s0, %s407
      %p409 = pneg %p47
      %p410 = pneg %p44
      %p411 = scmp.lt.s32.totalorder %s26, 1
      %s412 = scalar_select %p411, %s26, 1
      %s413 = smul.addr %s412, 2
      %s414 = scalar_lea.vmem %s1, %s413
      %p415 = pneg %p73
      %p416 = pneg %p70
      %p417 = pneg %p94
      %p418 = pneg %p91
      %p419 = pneg %p115
      %p420 = pneg %p112
      %p421 = pneg %p136
      %p422 = pneg %p133
      %p423 = pneg %p157
      %p424 = pneg %p154
      %p425 = pneg %p178
      %p426 = pneg %p175
      %p427 = pneg %p199
      %p428 = pneg %p196
      %p429 = pneg %p220
      %p430 = pneg %p217
      %p431 = pneg %p241
      %p432 = pneg %p238
      %p433 = pneg %p262
      %p434 = pneg %p259
      %p435 = pneg %p283
      %p436 = pneg %p280
      %p437 = pneg %p304
      %p438 = pneg %p301
      %p439 = pneg %p330
      %p440 = pneg %p327
      %p441 = scmp.lt.s32.totalorder %s26, 1
      %s442 = scalar_select %p441, %s26, 1
      %s443 = smul.addr %s442, 2
      %s444 = scalar_lea.vmem %s13, %s443
      %p445 = scmp.lt.s32.totalorder %s26, 1
      %s446 = scalar_select %p445, %s26, 1
      %s447 = smul.addr %s446, 60
      %s448 = smul.addr %s447, 8
      %s449 = scalar_lea.vmem %s0, %s448
      %p450 = scmp.lt.s32.totalorder %s26, 1
      %s451 = scalar_select %p450, %s26, 1
      %s452 = smul.addr %s451, 2
      %s453 = scalar_lea.vmem %s1, %s452
      %p454 = scmp.lt.s32.totalorder %s26, 1
      %s455 = scalar_select %p454, %s26, 1
      %s456 = smul.addr %s455, 2
      %s457 = scalar_lea.vmem %s13, %s456
      %vm458 = vcmask 261120
      %459 = vst.msk [vmem:[#allocation2] sm:$0xff] %vm458, 0.0
      %460 = vst.msk [vmem:[#allocation2 + $0x8] sm:$0xff] %vm458, 0.0
      %vm461 = vcmask 254976
      %462 = vst.msk [vmem:[#allocation2 + $0x10] sm:$0x3] %vm461, 0.0
      %463 = vst.msk [vmem:[#allocation2 + $0x18] sm:$0xff] %vm458, 0.0
      %464 = vst.msk [vmem:[#allocation2 + $0x20] sm:$0xff] %vm458, 0.0
      %465 = vst.msk [vmem:[#allocation2 + $0x28] sm:$0x3] %vm461, 0.0
      %466 = vst.msk [vmem:[#allocation2 + $0x30] sm:$0xff] %vm458, 0.0
      %467 = vst.msk [vmem:[#allocation2 + $0x38] sm:$0xff] %vm458, 0.0
      %468 = vst.msk [vmem:[#allocation2 + $0x40] sm:$0x3] %vm461, 0.0
      %469 = vst.msk [vmem:[#allocation2 + $0x48] sm:$0xff] %vm458, 0.0
      %470 = vst.msk [vmem:[#allocation2 + $0x50] sm:$0xff] %vm458, 0.0
      %471 = vst.msk [vmem:[#allocation2 + $0x58] sm:$0x3] %vm461, 0.0
      %472 = vst.msk [vmem:[#allocation2 + $0x60] sm:$0xff] %vm458, 0.0
      %473 = vst.msk [vmem:[#allocation2 + $0x68] sm:$0xff] %vm458, 0.0
      %474 = vst.msk [vmem:[#allocation2 + $0x70] sm:$0x3] %vm461, 0.0
      %475 = vst.msk [vmem:[#allocation2 + $0x78] sm:$0xff] %vm458, 0.0
      %476 = vst.msk [vmem:[#allocation2 + $0x80] sm:$0xff] %vm458, 0.0
      %477 = vst.msk [vmem:[#allocation2 + $0x88] sm:$0x3] %vm461, 0.0
      %478 = vst.msk [vmem:[#allocation2 + $0x90] sm:$0xff] %vm458, 0.0
      %479 = vst.msk [vmem:[#allocation2 + $0x98] sm:$0xff] %vm458, 0.0
      %480 = vst.msk [vmem:[#allocation2 + $0xa0] sm:$0x3] %vm461, 0.0
      %481 = vst.msk [vmem:[#allocation2 + $0xa8] sm:$0xff] %vm458, 0.0
      %482 = vst.msk [vmem:[#allocation2 + $0xb0] sm:$0xff] %vm458, 0.0
      %483 = vst.msk [vmem:[#allocation2 + $0xb8] sm:$0x3] %vm461, 0.0
      %484 = vst.msk [vmem:[#allocation2 + $0xc0] sm:$0xff] %vm458, 0.0
      %485 = vst.msk [vmem:[#allocation2 + $0xc8] sm:$0xff] %vm458, 0.0
      %486 = vst.msk [vmem:[#allocation2 + $0xd0] sm:$0x3] %vm461, 0.0
      %487 = vst.msk [vmem:[#allocation2 + $0xd8] sm:$0xff] %vm458, 0.0
      %488 = vst.msk [vmem:[#allocation2 + $0xe0] sm:$0xff] %vm458, 0.0
      %489 = vst.msk [vmem:[#allocation2 + $0xe8] sm:$0x3] %vm461, 0.0
      %490 = vst.msk [vmem:[#allocation2 + $0xf0] sm:$0xff] %vm458, 0.0
      %491 = vst.msk [vmem:[#allocation2 + $0xf8] sm:$0xff] %vm458, 0.0
      %492 = vst.msk [vmem:[#allocation2 + $0x100] sm:$0x3] %vm461, 0.0
      %493 = vst.msk [vmem:[#allocation2 + $0x108] sm:$0xff] %vm458, 0.0
      %494 = vst.msk [vmem:[#allocation2 + $0x110] sm:$0xff] %vm458, 0.0
      %495 = vst.msk [vmem:[#allocation2 + $0x118] sm:$0x3] %vm461, 0.0
      %496 = vst.msk [vmem:[#allocation2 + $0x120] sm:$0xff] %vm458, 0.0
      %497 = vst.msk [vmem:[#allocation2 + $0x128] sm:$0xff] %vm458, 0.0
      %498 = vst.msk [vmem:[#allocation2 + $0x130] sm:$0x3] %vm461, 0.0
      %499 = vst.msk [vmem:[#allocation2 + $0x138] sm:$0xff] %vm458, 0.0
      %500 = vst.msk [vmem:[#allocation2 + $0x140] sm:$0xff] %vm458, 0.0
      %501 = vst.msk [vmem:[#allocation2 + $0x148] sm:$0x3] %vm461, 0.0
      %502 = vst.msk [vmem:[#allocation2 + $0x150] sm:$0xff] %vm458, 0.0
      %503 = vst.msk [vmem:[#allocation2 + $0x158] sm:$0xff] %vm458, 0.0
      %504 = vst.msk [vmem:[#allocation2 + $0x160] sm:$0x3] %vm461, 0.0
      %505 = vst.msk [vmem:[#allocation2 + $0x168] sm:$0xff] %vm458, 0.0
      %506 = vst.msk [vmem:[#allocation2 + $0x170] sm:$0xff] %vm458, 0.0
      %507 = vst.msk [vmem:[#allocation2 + $0x178] sm:$0x3] %vm461, 0.0
      %508 = vst.msk [vmem:[#allocation2 + $0x180] sm:$0xff] %vm458, 0.0
      %509 = vst.msk [vmem:[#allocation2 + $0x188] sm:$0xff] %vm458, 0.0
      %510 = vst.msk [vmem:[#allocation2 + $0x190] sm:$0x3] %vm461, 0.0
      %511 = vst.msk [vmem:[#allocation2 + $0x198] sm:$0xff] %vm458, 0.0
      %512 = vst.msk [vmem:[#allocation2 + $0x1a0] sm:$0xff] %vm458, 0.0
      %513 = vst.msk [vmem:[#allocation2 + $0x1a8] sm:$0x3] %vm461, 0.0
      %vm514 = vcmask 523264
      %515 = vst.msk [vmem:[#allocation3] sm:$0xff] %vm514, 0.0
      %516 = vst.msk [vmem:[#allocation3 + $0x8] sm:$0xff] %vm514, 0.0
      %vm517 = vcmask 517120
      %518 = vst.msk [vmem:[#allocation3 + $0x10] sm:$0x3] %vm517, 0.0
      %519 = vst.msk [vmem:[#allocation3 + $0x18] sm:$0xff] %vm514, 0.0
      %520 = vst.msk [vmem:[#allocation3 + $0x20] sm:$0xff] %vm514, 0.0
      %521 = vst.msk [vmem:[#allocation3 + $0x28] sm:$0x3] %vm517, 0.0
      %522 = vst.msk [vmem:[#allocation3 + $0x30] sm:$0xff] %vm514, 0.0
      %523 = vst.msk [vmem:[#allocation3 + $0x38] sm:$0xff] %vm514, 0.0
      %524 = vst.msk [vmem:[#allocation3 + $0x40] sm:$0x3] %vm517, 0.0
      %525 = vst.msk [vmem:[#allocation3 + $0x48] sm:$0xff] %vm514, 0.0
      %526 = vst.msk [vmem:[#allocation3 + $0x50] sm:$0xff] %vm514, 0.0
      %527 = vst.msk [vmem:[#allocation3 + $0x58] sm:$0x3] %vm517, 0.0
      %528 = vst.msk [vmem:[#allocation3 + $0x60] sm:$0xff] %vm514, 0.0
      %529 = vst.msk [vmem:[#allocation3 + $0x68] sm:$0xff] %vm514, 0.0
      %530 = vst.msk [vmem:[#allocation3 + $0x70] sm:$0x3] %vm517, 0.0
      %531 = vst.msk [vmem:[#allocation3 + $0x78] sm:$0xff] %vm514, 0.0
      %532 = vst.msk [vmem:[#allocation3 + $0x80] sm:$0xff] %vm514, 0.0
      %533 = vst.msk [vmem:[#allocation3 + $0x88] sm:$0x3] %vm517, 0.0
      %534 = vst.msk [vmem:[#allocation3 + $0x90] sm:$0xff] %vm514, 0.0
      %535 = vst.msk [vmem:[#allocation3 + $0x98] sm:$0xff] %vm514, 0.0
      %536 = vst.msk [vmem:[#allocation3 + $0xa0] sm:$0x3] %vm517, 0.0
      %537 = vst.msk [vmem:[#allocation3 + $0xa8] sm:$0xff] %vm514, 0.0
      %538 = vst.msk [vmem:[#allocation3 + $0xb0] sm:$0xff] %vm514, 0.0
      %539 = vst.msk [vmem:[#allocation3 + $0xb8] sm:$0x3] %vm517, 0.0
      %540 = vst.msk [vmem:[#allocation3 + $0xc0] sm:$0xff] %vm514, 0.0
      %541 = vst.msk [vmem:[#allocation3 + $0xc8] sm:$0xff] %vm514, 0.0
      %542 = vst.msk [vmem:[#allocation3 + $0xd0] sm:$0x3] %vm517, 0.0
      %543 = vst.msk [vmem:[#allocation3 + $0xd8] sm:$0xff] %vm514, 0.0
      %544 = vst.msk [vmem:[#allocation3 + $0xe0] sm:$0xff] %vm514, 0.0
      %545 = vst.msk [vmem:[#allocation3 + $0xe8] sm:$0x3] %vm517, 0.0
      %546 = vst.msk [vmem:[#allocation3 + $0xf0] sm:$0xff] %vm514, 0.0
      %547 = vst.msk [vmem:[#allocation3 + $0xf8] sm:$0xff] %vm514, 0.0
      %548 = vst.msk [vmem:[#allocation3 + $0x100] sm:$0x3] %vm517, 0.0
      %549 = vst.msk [vmem:[#allocation3 + $0x108] sm:$0xff] %vm514, 0.0
      %550 = vst.msk [vmem:[#allocation3 + $0x110] sm:$0xff] %vm514, 0.0
      %551 = vst.msk [vmem:[#allocation3 + $0x118] sm:$0x3] %vm517, 0.0
      %552 = vst.msk [vmem:[#allocation3 + $0x120] sm:$0xff] %vm514, 0.0
      %553 = vst.msk [vmem:[#allocation3 + $0x128] sm:$0xff] %vm514, 0.0
      %554 = vst.msk [vmem:[#allocation3 + $0x130] sm:$0x3] %vm517, 0.0
      %555 = vst.msk [vmem:[#allocation3 + $0x138] sm:$0xff] %vm514, 0.0
      %556 = vst.msk [vmem:[#allocation3 + $0x140] sm:$0xff] %vm514, 0.0
      %557 = vst.msk [vmem:[#allocation3 + $0x148] sm:$0x3] %vm517, 0.0
      %558 = vst.msk [vmem:[#allocation3 + $0x150] sm:$0xff] %vm514, 0.0
      %559 = vst.msk [vmem:[#allocation3 + $0x158] sm:$0xff] %vm514, 0.0
      %560 = vst.msk [vmem:[#allocation3 + $0x160] sm:$0x3] %vm517, 0.0
      %561 = vst.msk [vmem:[#allocation3 + $0x168] sm:$0xff] %vm514, 0.0
      %562 = vst.msk [vmem:[#allocation3 + $0x170] sm:$0xff] %vm514, 0.0
      %563 = vst.msk [vmem:[#allocation3 + $0x178] sm:$0x3] %vm517, 0.0
      %564 = vst.msk [vmem:[#allocation3 + $0x180] sm:$0xff] %vm514, 0.0
      %565 = vst.msk [vmem:[#allocation3 + $0x188] sm:$0xff] %vm514, 0.0
      %566 = vst.msk [vmem:[#allocation3 + $0x190] sm:$0x3] %vm517, 0.0
      %567 = vst.msk [vmem:[#allocation3 + $0x198] sm:$0xff] %vm514, 0.0
      %568 = vst.msk [vmem:[#allocation3 + $0x1a0] sm:$0xff] %vm514, 0.0
      %569 = vst.msk [vmem:[#allocation3 + $0x1a8] sm:$0x3] %vm517, 0.0
      %v570 = vld [vmem:[%s449] sm:$0xff]
      %v571 = vld [vmem:[%s449 + $0x8] sm:$0xff]
      %v572 = vld [vmem:[%s449 + $0x18] sm:$0xff]
      %v573 = vld [vmem:[%s449 + $0x20] sm:$0xff]
      %v574 = vld [vmem:[%s449 + $0x30] sm:$0xff]
      %v575 = vld [vmem:[%s449 + $0x38] sm:$0xff]
      %v576 = vld [vmem:[%s449 + $0x48] sm:$0xff]
      %v577 = vld [vmem:[%s449 + $0x50] sm:$0xff]
      %v578 = vld [vmem:[%s449 + $0x60] sm:$0xff]
      %v579 = vld [vmem:[%s449 + $0x68] sm:$0xff]
      %v580 = vld [vmem:[%s449 + $0x78] sm:$0xff]
      %v581 = vld [vmem:[%s449 + $0x80] sm:$0xff]
      %v582 = vld [vmem:[%s449 + $0x90] sm:$0xff]
      %v583 = vld [vmem:[%s449 + $0x98] sm:$0xff]
      %v584 = vld [vmem:[%s449 + $0xa8] sm:$0xff]
      %v585 = vld [vmem:[%s449 + $0xb0] sm:$0xff]
      %v586 = vld [vmem:[%s449 + $0xc0] sm:$0xff]
      %v587 = vld [vmem:[%s449 + $0xc8] sm:$0xff]
      %v588 = vld [vmem:[%s449 + $0xd8] sm:$0xff]
      %v589 = vld [vmem:[%s449 + $0xe0] sm:$0xff]
      %v590 = vld [vmem:[%s449 + $0xf0] sm:$0xff]
      %v591 = vld [vmem:[%s449 + $0xf8] sm:$0xff]
      %v592 = vld [vmem:[%s449 + $0x108] sm:$0xff]
      %v593 = vld [vmem:[%s449 + $0x110] sm:$0xff]
      %v594 = vld [vmem:[%s449 + $0x120] sm:$0xff]
      %v595 = vld [vmem:[%s449 + $0x128] sm:$0xff]
      %v596 = vld [vmem:[%s449 + $0x138] sm:$0xff]
      %v597 = vld [vmem:[%s449 + $0x140] sm:$0xff]
      %v598 = vld [vmem:[%s449 + $0x150] sm:$0xff]
      %v599 = vld [vmem:[%s449 + $0x158] sm:$0xff]
      %v600 = vld [vmem:[%s449 + $0x168] sm:$0xff]
      %v601 = vld [vmem:[%s449 + $0x170] sm:$0xff]
      %v602 = vld [vmem:[%s2] sm:$0x1]
      %604 = vset.pattern.permute.xlu0 0
      %605 = vperm.xlu0 %604, %v570
      %v606 = vpop.permute.xlu0 %605
      %609 = vset.pattern.permute.xlu0 0
      %610 = vperm.xlu0 %609, %v571
      %v611 = vpop.permute.xlu0 %610
      %614 = vset.pattern.permute.xlu0 0
      %615 = vperm.xlu0 %614, %v572
      %v616 = vpop.permute.xlu0 %615
      %619 = vset.pattern.permute.xlu0 0
      %620 = vperm.xlu0 %619, %v573
      %v621 = vpop.permute.xlu0 %620
      %624 = vset.pattern.permute.xlu0 0
      %625 = vperm.xlu0 %624, %v574
      %v626 = vpop.permute.xlu0 %625
      %629 = vset.pattern.permute.xlu0 0
      %630 = vperm.xlu0 %629, %v575
      %v631 = vpop.permute.xlu0 %630
      %634 = vset.pattern.permute.xlu0 0
      %635 = vperm.xlu0 %634, %v576
      %v636 = vpop.permute.xlu0 %635
      %639 = vset.pattern.permute.xlu0 0
      %640 = vperm.xlu0 %639, %v577
      %v641 = vpop.permute.xlu0 %640
      %644 = vset.pattern.permute.xlu0 0
      %645 = vperm.xlu0 %644, %v578
      %v646 = vpop.permute.xlu0 %645
      %649 = vset.pattern.permute.xlu0 0
      %650 = vperm.xlu0 %649, %v579
      %v651 = vpop.permute.xlu0 %650
      %654 = vset.pattern.permute.xlu0 0
      %655 = vperm.xlu0 %654, %v580
      %v656 = vpop.permute.xlu0 %655
      %659 = vset.pattern.permute.xlu0 0
      %660 = vperm.xlu0 %659, %v581
      %v661 = vpop.permute.xlu0 %660
      %664 = vset.pattern.permute.xlu0 0
      %665 = vperm.xlu0 %664, %v582
      %v666 = vpop.permute.xlu0 %665
      %669 = vset.pattern.permute.xlu0 0
      %670 = vperm.xlu0 %669, %v583
      %v671 = vpop.permute.xlu0 %670
      %674 = vset.pattern.permute.xlu0 0
      %675 = vperm.xlu0 %674, %v584
      %v676 = vpop.permute.xlu0 %675
      %679 = vset.pattern.permute.xlu0 0
      %680 = vperm.xlu0 %679, %v585
      %v681 = vpop.permute.xlu0 %680
      %684 = vset.pattern.permute.xlu0 0
      %685 = vperm.xlu0 %684, %v586
      %v686 = vpop.permute.xlu0 %685
      %689 = vset.pattern.permute.xlu0 0
      %690 = vperm.xlu0 %689, %v587
      %v691 = vpop.permute.xlu0 %690
      %694 = vset.pattern.permute.xlu0 0
      %695 = vperm.xlu0 %694, %v588
      %v696 = vpop.permute.xlu0 %695
      %699 = vset.pattern.permute.xlu0 0
      %700 = vperm.xlu0 %699, %v589
      %v701 = vpop.permute.xlu0 %700
      %704 = vset.pattern.permute.xlu0 0
      %705 = vperm.xlu0 %704, %v590
      %v706 = vpop.permute.xlu0 %705
      %709 = vset.pattern.permute.xlu0 0
      %710 = vperm.xlu0 %709, %v591
      %v711 = vpop.permute.xlu0 %710
      %714 = vset.pattern.permute.xlu0 0
      %715 = vperm.xlu0 %714, %v592
      %v716 = vpop.permute.xlu0 %715
      %719 = vset.pattern.permute.xlu0 0
      %720 = vperm.xlu0 %719, %v593
      %v721 = vpop.permute.xlu0 %720
      %724 = vset.pattern.permute.xlu0 0
      %725 = vperm.xlu0 %724, %v594
      %v726 = vpop.permute.xlu0 %725
      %729 = vset.pattern.permute.xlu0 0
      %730 = vperm.xlu0 %729, %v595
      %v731 = vpop.permute.xlu0 %730
      %734 = vset.pattern.permute.xlu0 0
      %735 = vperm.xlu0 %734, %v596
      %v736 = vpop.permute.xlu0 %735
      %739 = vset.pattern.permute.xlu0 0
      %740 = vperm.xlu0 %739, %v597
      %v741 = vpop.permute.xlu0 %740
      %744 = vset.pattern.permute.xlu0 0
      %745 = vperm.xlu0 %744, %v598
      %v746 = vpop.permute.xlu0 %745
      %749 = vset.pattern.permute.xlu0 0
      %750 = vperm.xlu0 %749, %v599
      %v751 = vpop.permute.xlu0 %750
      %754 = vset.pattern.permute.xlu0 0
      %755 = vperm.xlu0 %754, %v600
      %v756 = vpop.permute.xlu0 %755
      %759 = vset.pattern.permute.xlu0 0
      %760 = vperm.xlu0 %759, %v601
      %v761 = vpop.permute.xlu0 %760
      %v764 = vperm.slane %v602, 0
      %v766 = vmul.f32 %v606, %v764
      %v767 = vmul.f32 %v611, %v764
      %v768 = vmul.f32 %v616, %v764
      %v769 = vmul.f32 %v621, %v764
      %v770 = vmul.f32 %v626, %v764
      %v771 = vmul.f32 %v631, %v764
      %v772 = vmul.f32 %v636, %v764
      %v773 = vmul.f32 %v641, %v764
      %v774 = vmul.f32 %v646, %v764
      %v775 = vmul.f32 %v651, %v764
      %v776 = vmul.f32 %v656, %v764
      %v777 = vmul.f32 %v661, %v764
      %v778 = vmul.f32 %v666, %v764
      %v779 = vmul.f32 %v671, %v764
      %v780 = vmul.f32 %v676, %v764
      %v781 = vmul.f32 %v681, %v764
      %v782 = vmul.f32 %v686, %v764
      %v783 = vmul.f32 %v691, %v764
      %v784 = vmul.f32 %v696, %v764
      %v785 = vmul.f32 %v701, %v764
      %v786 = vmul.f32 %v706, %v764
      %v787 = vmul.f32 %v711, %v764
      %v788 = vmul.f32 %v716, %v764
      %v789 = vmul.f32 %v721, %v764
      %v790 = vmul.f32 %v726, %v764
      %v791 = vmul.f32 %v731, %v764
      %v792 = vmul.f32 %v736, %v764
      %v793 = vmul.f32 %v741, %v764
      %v794 = vmul.f32 %v746, %v764
      %v795 = vmul.f32 %v751, %v764
      %v796 = vmul.f32 %v756, %v764
      %v797 = vmul.f32 %v761, %v764
      %v798 = vadd.f32 %v766, 0.0
      %v799 = vadd.f32 %v767, 0.0
      %v800 = vadd.f32 %v768, 0.0
      %v801 = vadd.f32 %v769, 0.0
      %v802 = vadd.f32 %v770, 0.0
      %v803 = vadd.f32 %v771, 0.0
      %v804 = vadd.f32 %v772, 0.0
      %v805 = vadd.f32 %v773, 0.0
      %v806 = vadd.f32 %v774, 0.0
      %v807 = vadd.f32 %v775, 0.0
      %v808 = vadd.f32 %v776, 0.0
      %v809 = vadd.f32 %v777, 0.0
      %v810 = vadd.f32 %v778, 0.0
      %v811 = vadd.f32 %v779, 0.0
      %v812 = vadd.f32 %v780, 0.0
      %v813 = vadd.f32 %v781, 0.0
      %v814 = vadd.f32 %v782, 0.0
      %v815 = vadd.f32 %v783, 0.0
      %v816 = vadd.f32 %v784, 0.0
      %v817 = vadd.f32 %v785, 0.0
      %v818 = vadd.f32 %v786, 0.0
      %v819 = vadd.f32 %v787, 0.0
      %v820 = vadd.f32 %v788, 0.0
      %v821 = vadd.f32 %v789, 0.0
      %v822 = vadd.f32 %v790, 0.0
      %v823 = vadd.f32 %v791, 0.0
      %v824 = vadd.f32 %v792, 0.0
      %v825 = vadd.f32 %v793, 0.0
      %v826 = vadd.f32 %v794, 0.0
      %v827 = vadd.f32 %v795, 0.0
      %v828 = vadd.f32 %v796, 0.0
      %v829 = vadd.f32 %v797, 0.0
      %v830 = vld [vmem:[%s449 + $0x1] sm:$0xff]
      %v831 = vld [vmem:[%s449 + $0x9] sm:$0xff]
      %v832 = vld [vmem:[%s449 + $0x19] sm:$0xff]
      %v833 = vld [vmem:[%s449 + $0x21] sm:$0xff]
      %v834 = vld [vmem:[%s449 + $0x31] sm:$0xff]
      %v835 = vld [vmem:[%s449 + $0x39] sm:$0xff]
      %v836 = vld [vmem:[%s449 + $0x49] sm:$0xff]
      %v837 = vld [vmem:[%s449 + $0x51] sm:$0xff]
      %v838 = vld [vmem:[%s449 + $0x61] sm:$0xff]
      %v839 = vld [vmem:[%s449 + $0x69] sm:$0xff]
      %v840 = vld [vmem:[%s449 + $0x79] sm:$0xff]
      %v841 = vld [vmem:[%s449 + $0x81] sm:$0xff]
      %v842 = vld [vmem:[%s449 + $0x91] sm:$0xff]
      %v843 = vld [vmem:[%s449 + $0x99] sm:$0xff]
      %v844 = vld [vmem:[%s449 + $0xa9] sm:$0xff]
      %v845 = vld [vmem:[%s449 + $0xb1] sm:$0xff]
      %v846 = vld [vmem:[%s449 + $0xc1] sm:$0xff]
      %v847 = vld [vmem:[%s449 + $0xc9] sm:$0xff]
      %v848 = vld [vmem:[%s449 + $0xd9] sm:$0xff]
      %v849 = vld [vmem:[%s449 + $0xe1] sm:$0xff]
      %v850 = vld [vmem:[%s449 + $0xf1] sm:$0xff]
      %v851 = vld [vmem:[%s449 + $0xf9] sm:$0xff]
      %v852 = vld [vmem:[%s449 + $0x109] sm:$0xff]
      %v853 = vld [vmem:[%s449 + $0x111] sm:$0xff]
      %v854 = vld [vmem:[%s449 + $0x121] sm:$0xff]
      %v855 = vld [vmem:[%s449 + $0x129] sm:$0xff]
      %v856 = vld [vmem:[%s449 + $0x139] sm:$0xff]
      %v857 = vld [vmem:[%s449 + $0x141] sm:$0xff]
      %v858 = vld [vmem:[%s449 + $0x151] sm:$0xff]
      %v859 = vld [vmem:[%s449 + $0x159] sm:$0xff]
      %v860 = vld [vmem:[%s449 + $0x169] sm:$0xff]
      %v861 = vld [vmem:[%s449 + $0x171] sm:$0xff]
      %s862 = scalar_lea.vmem %s2, 1
      %v863 = vld [vmem:[%s862] sm:$0x1]
      %865 = vset.pattern.permute.xlu0 0
      %866 = vperm.xlu0 %865, %v830
      %v867 = vpop.permute.xlu0 %866
      %870 = vset.pattern.permute.xlu0 0
      %871 = vperm.xlu0 %870, %v831
      %v872 = vpop.permute.xlu0 %871
      %875 = vset.pattern.permute.xlu0 0
      %876 = vperm.xlu0 %875, %v832
      %v877 = vpop.permute.xlu0 %876
      %880 = vset.pattern.permute.xlu0 0
      %881 = vperm.xlu0 %880, %v833
      %v882 = vpop.permute.xlu0 %881
      %885 = vset.pattern.permute.xlu0 0
      %886 = vperm.xlu0 %885, %v834
      %v887 = vpop.permute.xlu0 %886
      %890 = vset.pattern.permute.xlu0 0
      %891 = vperm.xlu0 %890, %v835
      %v892 = vpop.permute.xlu0 %891
      %895 = vset.pattern.permute.xlu0 0
      %896 = vperm.xlu0 %895, %v836
      %v897 = vpop.permute.xlu0 %896
      %900 = vset.pattern.permute.xlu0 0
      %901 = vperm.xlu0 %900, %v837
      %v902 = vpop.permute.xlu0 %901
      %905 = vset.pattern.permute.xlu0 0
      %906 = vperm.xlu0 %905, %v838
      %v907 = vpop.permute.xlu0 %906
      %910 = vset.pattern.permute.xlu0 0
      %911 = vperm.xlu0 %910, %v839
      %v912 = vpop.permute.xlu0 %911
      %915 = vset.pattern.permute.xlu0 0
      %916 = vperm.xlu0 %915, %v840
      %v917 = vpop.permute.xlu0 %916
      %920 = vset.pattern.permute.xlu0 0
      %921 = vperm.xlu0 %920, %v841
      %v922 = vpop.permute.xlu0 %921
      %925 = vset.pattern.permute.xlu0 0
      %926 = vperm.xlu0 %925, %v842
      %v927 = vpop.permute.xlu0 %926
      %930 = vset.pattern.permute.xlu0 0
      %931 = vperm.xlu0 %930, %v843
      %v932 = vpop.permute.xlu0 %931
      %935 = vset.pattern.permute.xlu0 0
      %936 = vperm.xlu0 %935, %v844
      %v937 = vpop.permute.xlu0 %936
      %940 = vset.pattern.permute.xlu0 0
      %941 = vperm.xlu0 %940, %v845
      %v942 = vpop.permute.xlu0 %941
      %945 = vset.pattern.permute.xlu0 0
      %946 = vperm.xlu0 %945, %v846
      %v947 = vpop.permute.xlu0 %946
      %950 = vset.pattern.permute.xlu0 0
      %951 = vperm.xlu0 %950, %v847
      %v952 = vpop.permute.xlu0 %951
      %955 = vset.pattern.permute.xlu0 0
      %956 = vperm.xlu0 %955, %v848
      %v957 = vpop.permute.xlu0 %956
      %960 = vset.pattern.permute.xlu0 0
      %961 = vperm.xlu0 %960, %v849
      %v962 = vpop.permute.xlu0 %961
      %965 = vset.pattern.permute.xlu0 0
      %966 = vperm.xlu0 %965, %v850
      %v967 = vpop.permute.xlu0 %966
      %970 = vset.pattern.permute.xlu0 0
      %971 = vperm.xlu0 %970, %v851
      %v972 = vpop.permute.xlu0 %971
      %975 = vset.pattern.permute.xlu0 0
      %976 = vperm.xlu0 %975, %v852
      %v977 = vpop.permute.xlu0 %976
      %980 = vset.pattern.permute.xlu0 0
      %981 = vperm.xlu0 %980, %v853
      %v982 = vpop.permute.xlu0 %981
      %985 = vset.pattern.permute.xlu0 0
      %986 = vperm.xlu0 %985, %v854
      %v987 = vpop.permute.xlu0 %986
      %990 = vset.pattern.permute.xlu0 0
      %991 = vperm.xlu0 %990, %v855
      %v992 = vpop.permute.xlu0 %991
      %995 = vset.pattern.permute.xlu0 0
      %996 = vperm.xlu0 %995, %v856
      %v997 = vpop.permute.xlu0 %996
      %1000 = vset.pattern.permute.xlu0 0
      %1001 = vperm.xlu0 %1000, %v857
      %v1002 = vpop.permute.xlu0 %1001
      %1005 = vset.pattern.permute.xlu0 0
      %1006 = vperm.xlu0 %1005, %v858
      %v1007 = vpop.permute.xlu0 %1006
      %1010 = vset.pattern.permute.xlu0 0
      %1011 = vperm.xlu0 %1010, %v859
      %v1012 = vpop.permute.xlu0 %1011
      %1015 = vset.pattern.permute.xlu0 0
      %1016 = vperm.xlu0 %1015, %v860
      %v1017 = vpop.permute.xlu0 %1016
      %1020 = vset.pattern.permute.xlu0 0
      %1021 = vperm.xlu0 %1020, %v861
      %v1022 = vpop.permute.xlu0 %1021
      %v1025 = vperm.slane %v863, 0
      %v1027 = vmul.f32 %v867, %v1025
      %v1028 = vmul.f32 %v872, %v1025
      %v1029 = vmul.f32 %v877, %v1025
      %v1030 = vmul.f32 %v882, %v1025
      %v1031 = vmul.f32 %v887, %v1025
      %v1032 = vmul.f32 %v892, %v1025
      %v1033 = vmul.f32 %v897, %v1025
      %v1034 = vmul.f32 %v902, %v1025
      %v1035 = vmul.f32 %v907, %v1025
      %v1036 = vmul.f32 %v912, %v1025
      %v1037 = vmul.f32 %v917, %v1025
      %v1038 = vmul.f32 %v922, %v1025
      %v1039 = vmul.f32 %v927, %v1025
      %v1040 = vmul.f32 %v932, %v1025
      %v1041 = vmul.f32 %v937, %v1025
      %v1042 = vmul.f32 %v942, %v1025
      %v1043 = vmul.f32 %v947, %v1025
      %v1044 = vmul.f32 %v952, %v1025
      %v1045 = vmul.f32 %v957, %v1025
      %v1046 = vmul.f32 %v962, %v1025
      %v1047 = vmul.f32 %v967, %v1025
      %v1048 = vmul.f32 %v972, %v1025
      %v1049 = vmul.f32 %v977, %v1025
      %v1050 = vmul.f32 %v982, %v1025
      %v1051 = vmul.f32 %v987, %v1025
      %v1052 = vmul.f32 %v992, %v1025
      %v1053 = vmul.f32 %v997, %v1025
      %v1054 = vmul.f32 %v1002, %v1025
      %v1055 = vmul.f32 %v1007, %v1025
      %v1056 = vmul.f32 %v1012, %v1025
      %v1057 = vmul.f32 %v1017, %v1025
      %v1058 = vmul.f32 %v1022, %v1025
      %v1059 = vadd.f32 %v798, %v1027
      %v1060 = vadd.f32 %v799, %v1028
      %v1061 = vadd.f32 %v800, %v1029
      %v1062 = vadd.f32 %v801, %v1030
      %v1063 = vadd.f32 %v802, %v1031
      %v1064 = vadd.f32 %v803, %v1032
      %v1065 = vadd.f32 %v804, %v1033
      %v1066 = vadd.f32 %v805, %v1034
      %v1067 = vadd.f32 %v806, %v1035
      %v1068 = vadd.f32 %v807, %v1036
      %v1069 = vadd.f32 %v808, %v1037
      %v1070 = vadd.f32 %v809, %v1038
      %v1071 = vadd.f32 %v810, %v1039
      %v1072 = vadd.f32 %v811, %v1040
      %v1073 = vadd.f32 %v812, %v1041
      %v1074 = vadd.f32 %v813, %v1042
      %v1075 = vadd.f32 %v814, %v1043
      %v1076 = vadd.f32 %v815, %v1044
      %v1077 = vadd.f32 %v816, %v1045
      %v1078 = vadd.f32 %v817, %v1046
      %v1079 = vadd.f32 %v818, %v1047
      %v1080 = vadd.f32 %v819, %v1048
      %v1081 = vadd.f32 %v820, %v1049
      %v1082 = vadd.f32 %v821, %v1050
      %v1083 = vadd.f32 %v822, %v1051
      %v1084 = vadd.f32 %v823, %v1052
      %v1085 = vadd.f32 %v824, %v1053
      %v1086 = vadd.f32 %v825, %v1054
      %v1087 = vadd.f32 %v826, %v1055
      %v1088 = vadd.f32 %v827, %v1056
      %v1089 = vadd.f32 %v828, %v1057
      %v1090 = vadd.f32 %v829, %v1058
      %v1091 = vld [vmem:[%s449 + $0x2] sm:$0xff]
      %v1092 = vld [vmem:[%s449 + $0xa] sm:$0xff]
      %v1093 = vld [vmem:[%s449 + $0x1a] sm:$0xff]
      %v1094 = vld [vmem:[%s449 + $0x22] sm:$0xff]
      %v1095 = vld [vmem:[%s449 + $0x32] sm:$0xff]
      %v1096 = vld [vmem:[%s449 + $0x3a] sm:$0xff]
      %v1097 = vld [vmem:[%s449 + $0x4a] sm:$0xff]
      %v1098 = vld [vmem:[%s449 + $0x52] sm:$0xff]
      %v1099 = vld [vmem:[%s449 + $0x62] sm:$0xff]
      %v1100 = vld [vmem:[%s449 + $0x6a] sm:$0xff]
      %v1101 = vld [vmem:[%s449 + $0x7a] sm:$0xff]
      %v1102 = vld [vmem:[%s449 + $0x82] sm:$0xff]
      %v1103 = vld [vmem:[%s449 + $0x92] sm:$0xff]
      %v1104 = vld [vmem:[%s449 + $0x9a] sm:$0xff]
      %v1105 = vld [vmem:[%s449 + $0xaa] sm:$0xff]
      %v1106 = vld [vmem:[%s449 + $0xb2] sm:$0xff]
      %v1107 = vld [vmem:[%s449 + $0xc2] sm:$0xff]
      %v1108 = vld [vmem:[%s449 + $0xca] sm:$0xff]
      %v1109 = vld [vmem:[%s449 + $0xda] sm:$0xff]
      %v1110 = vld [vmem:[%s449 + $0xe2] sm:$0xff]
      %v1111 = vld [vmem:[%s449 + $0xf2] sm:$0xff]
      %v1112 = vld [vmem:[%s449 + $0xfa] sm:$0xff]
      %v1113 = vld [vmem:[%s449 + $0x10a] sm:$0xff]
      %v1114 = vld [vmem:[%s449 + $0x112] sm:$0xff]
      %v1115 = vld [vmem:[%s449 + $0x122] sm:$0xff]
      %v1116 = vld [vmem:[%s449 + $0x12a] sm:$0xff]
      %v1117 = vld [vmem:[%s449 + $0x13a] sm:$0xff]
      %v1118 = vld [vmem:[%s449 + $0x142] sm:$0xff]
      %v1119 = vld [vmem:[%s449 + $0x152] sm:$0xff]
      %v1120 = vld [vmem:[%s449 + $0x15a] sm:$0xff]
      %v1121 = vld [vmem:[%s449 + $0x16a] sm:$0xff]
      %v1122 = vld [vmem:[%s449 + $0x172] sm:$0xff]
      %s1123 = scalar_lea.vmem %s2, 2
      %v1124 = vld [vmem:[%s1123] sm:$0x1]
      %1126 = vset.pattern.permute.xlu0 0
      %1127 = vperm.xlu0 %1126, %v1091
      %v1128 = vpop.permute.xlu0 %1127
      %1131 = vset.pattern.permute.xlu0 0
      %1132 = vperm.xlu0 %1131, %v1092
      %v1133 = vpop.permute.xlu0 %1132
      %1136 = vset.pattern.permute.xlu0 0
      %1137 = vperm.xlu0 %1136, %v1093
      %v1138 = vpop.permute.xlu0 %1137
      %1141 = vset.pattern.permute.xlu0 0
      %1142 = vperm.xlu0 %1141, %v1094
      %v1143 = vpop.permute.xlu0 %1142
      %1146 = vset.pattern.permute.xlu0 0
      %1147 = vperm.xlu0 %1146, %v1095
      %v1148 = vpop.permute.xlu0 %1147
      %1151 = vset.pattern.permute.xlu0 0
      %1152 = vperm.xlu0 %1151, %v1096
      %v1153 = vpop.permute.xlu0 %1152
      %1156 = vset.pattern.permute.xlu0 0
      %1157 = vperm.xlu0 %1156, %v1097
      %v1158 = vpop.permute.xlu0 %1157
      %1161 = vset.pattern.permute.xlu0 0
      %1162 = vperm.xlu0 %1161, %v1098
      %v1163 = vpop.permute.xlu0 %1162
      %1166 = vset.pattern.permute.xlu0 0
      %1167 = vperm.xlu0 %1166, %v1099
      %v1168 = vpop.permute.xlu0 %1167
      %1171 = vset.pattern.permute.xlu0 0
      %1172 = vperm.xlu0 %1171, %v1100
      %v1173 = vpop.permute.xlu0 %1172
      %1176 = vset.pattern.permute.xlu0 0
      %1177 = vperm.xlu0 %1176, %v1101
      %v1178 = vpop.permute.xlu0 %1177
      %1181 = vset.pattern.permute.xlu0 0
      %1182 = vperm.xlu0 %1181, %v1102
      %v1183 = vpop.permute.xlu0 %1182
      %1186 = vset.pattern.permute.xlu0 0
      %1187 = vperm.xlu0 %1186, %v1103
      %v1188 = vpop.permute.xlu0 %1187
      %1191 = vset.pattern.permute.xlu0 0
      %1192 = vperm.xlu0 %1191, %v1104
      %v1193 = vpop.permute.xlu0 %1192
      %1196 = vset.pattern.permute.xlu0 0
      %1197 = vperm.xlu0 %1196, %v1105
      %v1198 = vpop.permute.xlu0 %1197
      %1201 = vset.pattern.permute.xlu0 0
      %1202 = vperm.xlu0 %1201, %v1106
      %v1203 = vpop.permute.xlu0 %1202
      %1206 = vset.pattern.permute.xlu0 0
      %1207 = vperm.xlu0 %1206, %v1107
      %v1208 = vpop.permute.xlu0 %1207
      %1211 = vset.pattern.permute.xlu0 0
      %1212 = vperm.xlu0 %1211, %v1108
      %v1213 = vpop.permute.xlu0 %1212
      %1216 = vset.pattern.permute.xlu0 0
      %1217 = vperm.xlu0 %1216, %v1109
      %v1218 = vpop.permute.xlu0 %1217
      %1221 = vset.pattern.permute.xlu0 0
      %1222 = vperm.xlu0 %1221, %v1110
      %v1223 = vpop.permute.xlu0 %1222
      %1226 = vset.pattern.permute.xlu0 0
      %1227 = vperm.xlu0 %1226, %v1111
      %v1228 = vpop.permute.xlu0 %1227
      %1231 = vset.pattern.permute.xlu0 0
      %1232 = vperm.xlu0 %1231, %v1112
      %v1233 = vpop.permute.xlu0 %1232
      %1236 = vset.pattern.permute.xlu0 0
      %1237 = vperm.xlu0 %1236, %v1113
      %v1238 = vpop.permute.xlu0 %1237
      %1241 = vset.pattern.permute.xlu0 0
      %1242 = vperm.xlu0 %1241, %v1114
      %v1243 = vpop.permute.xlu0 %1242
      %1246 = vset.pattern.permute.xlu0 0
      %1247 = vperm.xlu0 %1246, %v1115
      %v1248 = vpop.permute.xlu0 %1247
      %1251 = vset.pattern.permute.xlu0 0
      %1252 = vperm.xlu0 %1251, %v1116
      %v1253 = vpop.permute.xlu0 %1252
      %1256 = vset.pattern.permute.xlu0 0
      %1257 = vperm.xlu0 %1256, %v1117
      %v1258 = vpop.permute.xlu0 %1257
      %1261 = vset.pattern.permute.xlu0 0
      %1262 = vperm.xlu0 %1261, %v1118
      %v1263 = vpop.permute.xlu0 %1262
      %1266 = vset.pattern.permute.xlu0 0
      %1267 = vperm.xlu0 %1266, %v1119
      %v1268 = vpop.permute.xlu0 %1267
      %1271 = vset.pattern.permute.xlu0 0
      %1272 = vperm.xlu0 %1271, %v1120
      %v1273 = vpop.permute.xlu0 %1272
      %1276 = vset.pattern.permute.xlu0 0
      %1277 = vperm.xlu0 %1276, %v1121
      %v1278 = vpop.permute.xlu0 %1277
      %1281 = vset.pattern.permute.xlu0 0
      %1282 = vperm.xlu0 %1281, %v1122
      %v1283 = vpop.permute.xlu0 %1282
      %v1286 = vperm.slane %v1124, 0
      %v1288 = vmul.f32 %v1128, %v1286
      %v1289 = vmul.f32 %v1133, %v1286
      %v1290 = vmul.f32 %v1138, %v1286
      %v1291 = vmul.f32 %v1143, %v1286
      %v1292 = vmul.f32 %v1148, %v1286
      %v1293 = vmul.f32 %v1153, %v1286
      %v1294 = vmul.f32 %v1158, %v1286
      %v1295 = vmul.f32 %v1163, %v1286
      %v1296 = vmul.f32 %v1168, %v1286
      %v1297 = vmul.f32 %v1173, %v1286
      %v1298 = vmul.f32 %v1178, %v1286
      %v1299 = vmul.f32 %v1183, %v1286
      %v1300 = vmul.f32 %v1188, %v1286
      %v1301 = vmul.f32 %v1193, %v1286
      %v1302 = vmul.f32 %v1198, %v1286
      %v1303 = vmul.f32 %v1203, %v1286
      %v1304 = vmul.f32 %v1208, %v1286
      %v1305 = vmul.f32 %v1213, %v1286
      %v1306 = vmul.f32 %v1218, %v1286
      %v1307 = vmul.f32 %v1223, %v1286
      %v1308 = vmul.f32 %v1228, %v1286
      %v1309 = vmul.f32 %v1233, %v1286
      %v1310 = vmul.f32 %v1238, %v1286
      %v1311 = vmul.f32 %v1243, %v1286
      %v1312 = vmul.f32 %v1248, %v1286
      %v1313 = vmul.f32 %v1253, %v1286
      %v1314 = vmul.f32 %v1258, %v1286
      %v1315 = vmul.f32 %v1263, %v1286
      %v1316 = vmul.f32 %v1268, %v1286
      %v1317 = vmul.f32 %v1273, %v1286
      %v1318 = vmul.f32 %v1278, %v1286
      %v1319 = vmul.f32 %v1283, %v1286
      %v1320 = vadd.f32 %v1059, %v1288
      %v1321 = vadd.f32 %v1060, %v1289
      %v1322 = vadd.f32 %v1061, %v1290
      %v1323 = vadd.f32 %v1062, %v1291
      %v1324 = vadd.f32 %v1063, %v1292
      %v1325 = vadd.f32 %v1064, %v1293
      %v1326 = vadd.f32 %v1065, %v1294
      %v1327 = vadd.f32 %v1066, %v1295
      %v1328 = vadd.f32 %v1067, %v1296
      %v1329 = vadd.f32 %v1068, %v1297
      %v1330 = vadd.f32 %v1069, %v1298
      %v1331 = vadd.f32 %v1070, %v1299
      %v1332 = vadd.f32 %v1071, %v1300
      %v1333 = vadd.f32 %v1072, %v1301
      %v1334 = vadd.f32 %v1073, %v1302
      %v1335 = vadd.f32 %v1074, %v1303
      %v1336 = vadd.f32 %v1075, %v1304
      %v1337 = vadd.f32 %v1076, %v1305
      %v1338 = vadd.f32 %v1077, %v1306
      %v1339 = vadd.f32 %v1078, %v1307
      %v1340 = vadd.f32 %v1079, %v1308
      %v1341 = vadd.f32 %v1080, %v1309
      %v1342 = vadd.f32 %v1081, %v1310
      %v1343 = vadd.f32 %v1082, %v1311
      %v1344 = vadd.f32 %v1083, %v1312
      %v1345 = vadd.f32 %v1084, %v1313
      %v1346 = vadd.f32 %v1085, %v1314
      %v1347 = vadd.f32 %v1086, %v1315
      %v1348 = vadd.f32 %v1087, %v1316
      %v1349 = vadd.f32 %v1088, %v1317
      %v1350 = vadd.f32 %v1089, %v1318
      %v1351 = vadd.f32 %v1090, %v1319
      %v1352 = vld [vmem:[%s449 + $0x3] sm:$0xff]
      %v1353 = vld [vmem:[%s449 + $0xb] sm:$0xff]
      %v1354 = vld [vmem:[%s449 + $0x1b] sm:$0xff]
      %v1355 = vld [vmem:[%s449 + $0x23] sm:$0xff]
      %v1356 = vld [vmem:[%s449 + $0x33] sm:$0xff]
      %v1357 = vld [vmem:[%s449 + $0x3b] sm:$0xff]
      %v1358 = vld [vmem:[%s449 + $0x4b] sm:$0xff]
      %v1359 = vld [vmem:[%s449 + $0x53] sm:$0xff]
      %v1360 = vld [vmem:[%s449 + $0x63] sm:$0xff]
      %v1361 = vld [vmem:[%s449 + $0x6b] sm:$0xff]
      %v1362 = vld [vmem:[%s449 + $0x7b] sm:$0xff]
      %v1363 = vld [vmem:[%s449 + $0x83] sm:$0xff]
      %v1364 = vld [vmem:[%s449 + $0x93] sm:$0xff]
      %v1365 = vld [vmem:[%s449 + $0x9b] sm:$0xff]
      %v1366 = vld [vmem:[%s449 + $0xab] sm:$0xff]
      %v1367 = vld [vmem:[%s449 + $0xb3] sm:$0xff]
      %v1368 = vld [vmem:[%s449 + $0xc3] sm:$0xff]
      %v1369 = vld [vmem:[%s449 + $0xcb] sm:$0xff]
      %v1370 = vld [vmem:[%s449 + $0xdb] sm:$0xff]
      %v1371 = vld [vmem:[%s449 + $0xe3] sm:$0xff]
      %v1372 = vld [vmem:[%s449 + $0xf3] sm:$0xff]
      %v1373 = vld [vmem:[%s449 + $0xfb] sm:$0xff]
      %v1374 = vld [vmem:[%s449 + $0x10b] sm:$0xff]
      %v1375 = vld [vmem:[%s449 + $0x113] sm:$0xff]
      %v1376 = vld [vmem:[%s449 + $0x123] sm:$0xff]
      %v1377 = vld [vmem:[%s449 + $0x12b] sm:$0xff]
      %v1378 = vld [vmem:[%s449 + $0x13b] sm:$0xff]
      %v1379 = vld [vmem:[%s449 + $0x143] sm:$0xff]
      %v1380 = vld [vmem:[%s449 + $0x153] sm:$0xff]
      %v1381 = vld [vmem:[%s449 + $0x15b] sm:$0xff]
      %v1382 = vld [vmem:[%s449 + $0x16b] sm:$0xff]
      %v1383 = vld [vmem:[%s449 + $0x173] sm:$0xff]
      %s1384 = scalar_lea.vmem %s2, 3
      %v1385 = vld [vmem:[%s1384] sm:$0x1]
      %1387 = vset.pattern.permute.xlu0 0
      %1388 = vperm.xlu0 %1387, %v1352
      %v1389 = vpop.permute.xlu0 %1388
      %1392 = vset.pattern.permute.xlu0 0
      %1393 = vperm.xlu0 %1392, %v1353
      %v1394 = vpop.permute.xlu0 %1393
      %1397 = vset.pattern.permute.xlu0 0
      %1398 = vperm.xlu0 %1397, %v1354
      %v1399 = vpop.permute.xlu0 %1398
      %1402 = vset.pattern.permute.xlu0 0
      %1403 = vperm.xlu0 %1402, %v1355
      %v1404 = vpop.permute.xlu0 %1403
      %1407 = vset.pattern.permute.xlu0 0
      %1408 = vperm.xlu0 %1407, %v1356
      %v1409 = vpop.permute.xlu0 %1408
      %1412 = vset.pattern.permute.xlu0 0
      %1413 = vperm.xlu0 %1412, %v1357
      %v1414 = vpop.permute.xlu0 %1413
      %1417 = vset.pattern.permute.xlu0 0
      %1418 = vperm.xlu0 %1417, %v1358
      %v1419 = vpop.permute.xlu0 %1418
      %1422 = vset.pattern.permute.xlu0 0
      %1423 = vperm.xlu0 %1422, %v1359
      %v1424 = vpop.permute.xlu0 %1423
      %1427 = vset.pattern.permute.xlu0 0
      %1428 = vperm.xlu0 %1427, %v1360
      %v1429 = vpop.permute.xlu0 %1428
      %1432 = vset.pattern.permute.xlu0 0
      %1433 = vperm.xlu0 %1432, %v1361
      %v1434 = vpop.permute.xlu0 %1433
      %1437 = vset.pattern.permute.xlu0 0
      %1438 = vperm.xlu0 %1437, %v1362
      %v1439 = vpop.permute.xlu0 %1438
      %1442 = vset.pattern.permute.xlu0 0
      %1443 = vperm.xlu0 %1442, %v1363
      %v1444 = vpop.permute.xlu0 %1443
      %1447 = vset.pattern.permute.xlu0 0
      %1448 = vperm.xlu0 %1447, %v1364
      %v1449 = vpop.permute.xlu0 %1448
      %1452 = vset.pattern.permute.xlu0 0
      %1453 = vperm.xlu0 %1452, %v1365
      %v1454 = vpop.permute.xlu0 %1453
      %1457 = vset.pattern.permute.xlu0 0
      %1458 = vperm.xlu0 %1457, %v1366
      %v1459 = vpop.permute.xlu0 %1458
      %1462 = vset.pattern.permute.xlu0 0
      %1463 = vperm.xlu0 %1462, %v1367
      %v1464 = vpop.permute.xlu0 %1463
      %1467 = vset.pattern.permute.xlu0 0
      %1468 = vperm.xlu0 %1467, %v1368
      %v1469 = vpop.permute.xlu0 %1468
      %1472 = vset.pattern.permute.xlu0 0
      %1473 = vperm.xlu0 %1472, %v1369
      %v1474 = vpop.permute.xlu0 %1473
      %1477 = vset.pattern.permute.xlu0 0
      %1478 = vperm.xlu0 %1477, %v1370
      %v1479 = vpop.permute.xlu0 %1478
      %1482 = vset.pattern.permute.xlu0 0
      %1483 = vperm.xlu0 %1482, %v1371
      %v1484 = vpop.permute.xlu0 %1483
      %1487 = vset.pattern.permute.xlu0 0
      %1488 = vperm.xlu0 %1487, %v1372
      %v1489 = vpop.permute.xlu0 %1488
      %1492 = vset.pattern.permute.xlu0 0
      %1493 = vperm.xlu0 %1492, %v1373
      %v1494 = vpop.permute.xlu0 %1493
      %1497 = vset.pattern.permute.xlu0 0
      %1498 = vperm.xlu0 %1497, %v1374
      %v1499 = vpop.permute.xlu0 %1498
      %1502 = vset.pattern.permute.xlu0 0
      %1503 = vperm.xlu0 %1502, %v1375
      %v1504 = vpop.permute.xlu0 %1503
      %1507 = vset.pattern.permute.xlu0 0
      %1508 = vperm.xlu0 %1507, %v1376
      %v1509 = vpop.permute.xlu0 %1508
      %1512 = vset.pattern.permute.xlu0 0
      %1513 = vperm.xlu0 %1512, %v1377
      %v1514 = vpop.permute.xlu0 %1513
      %1517 = vset.pattern.permute.xlu0 0
      %1518 = vperm.xlu0 %1517, %v1378
      %v1519 = vpop.permute.xlu0 %1518
      %1522 = vset.pattern.permute.xlu0 0
      %1523 = vperm.xlu0 %1522, %v1379
      %v1524 = vpop.permute.xlu0 %1523
      %1527 = vset.pattern.permute.xlu0 0
      %1528 = vperm.xlu0 %1527, %v1380
      %v1529 = vpop.permute.xlu0 %1528
      %1532 = vset.pattern.permute.xlu0 0
      %1533 = vperm.xlu0 %1532, %v1381
      %v1534 = vpop.permute.xlu0 %1533
      %1537 = vset.pattern.permute.xlu0 0
      %1538 = vperm.xlu0 %1537, %v1382
      %v1539 = vpop.permute.xlu0 %1538
      %1542 = vset.pattern.permute.xlu0 0
      %1543 = vperm.xlu0 %1542, %v1383
      %v1544 = vpop.permute.xlu0 %1543
      %v1547 = vperm.slane %v1385, 0
      %v1549 = vmul.f32 %v1389, %v1547
      %v1550 = vmul.f32 %v1394, %v1547
      %v1551 = vmul.f32 %v1399, %v1547
      %v1552 = vmul.f32 %v1404, %v1547
      %v1553 = vmul.f32 %v1409, %v1547
      %v1554 = vmul.f32 %v1414, %v1547
      %v1555 = vmul.f32 %v1419, %v1547
      %v1556 = vmul.f32 %v1424, %v1547
      %v1557 = vmul.f32 %v1429, %v1547
      %v1558 = vmul.f32 %v1434, %v1547
      %v1559 = vmul.f32 %v1439, %v1547
      %v1560 = vmul.f32 %v1444, %v1547
      %v1561 = vmul.f32 %v1449, %v1547
      %v1562 = vmul.f32 %v1454, %v1547
      %v1563 = vmul.f32 %v1459, %v1547
      %v1564 = vmul.f32 %v1464, %v1547
      %v1565 = vmul.f32 %v1469, %v1547
      %v1566 = vmul.f32 %v1474, %v1547
      %v1567 = vmul.f32 %v1479, %v1547
      %v1568 = vmul.f32 %v1484, %v1547
      %v1569 = vmul.f32 %v1489, %v1547
      %v1570 = vmul.f32 %v1494, %v1547
      %v1571 = vmul.f32 %v1499, %v1547
      %v1572 = vmul.f32 %v1504, %v1547
      %v1573 = vmul.f32 %v1509, %v1547
      %v1574 = vmul.f32 %v1514, %v1547
      %v1575 = vmul.f32 %v1519, %v1547
      %v1576 = vmul.f32 %v1524, %v1547
      %v1577 = vmul.f32 %v1529, %v1547
      %v1578 = vmul.f32 %v1534, %v1547
      %v1579 = vmul.f32 %v1539, %v1547
      %v1580 = vmul.f32 %v1544, %v1547
      %v1581 = vadd.f32 %v1320, %v1549
      %v1582 = vadd.f32 %v1321, %v1550
      %v1583 = vadd.f32 %v1322, %v1551
      %v1584 = vadd.f32 %v1323, %v1552
      %v1585 = vadd.f32 %v1324, %v1553
      %v1586 = vadd.f32 %v1325, %v1554
      %v1587 = vadd.f32 %v1326, %v1555
      %v1588 = vadd.f32 %v1327, %v1556
      %v1589 = vadd.f32 %v1328, %v1557
      %v1590 = vadd.f32 %v1329, %v1558
      %v1591 = vadd.f32 %v1330, %v1559
      %v1592 = vadd.f32 %v1331, %v1560
      %v1593 = vadd.f32 %v1332, %v1561
      %v1594 = vadd.f32 %v1333, %v1562
      %v1595 = vadd.f32 %v1334, %v1563
      %v1596 = vadd.f32 %v1335, %v1564
      %v1597 = vadd.f32 %v1336, %v1565
      %v1598 = vadd.f32 %v1337, %v1566
      %v1599 = vadd.f32 %v1338, %v1567
      %v1600 = vadd.f32 %v1339, %v1568
      %v1601 = vadd.f32 %v1340, %v1569
      %v1602 = vadd.f32 %v1341, %v1570
      %v1603 = vadd.f32 %v1342, %v1571
      %v1604 = vadd.f32 %v1343, %v1572
      %v1605 = vadd.f32 %v1344, %v1573
      %v1606 = vadd.f32 %v1345, %v1574
      %v1607 = vadd.f32 %v1346, %v1575
      %v1608 = vadd.f32 %v1347, %v1576
      %v1609 = vadd.f32 %v1348, %v1577
      %v1610 = vadd.f32 %v1349, %v1578
      %v1611 = vadd.f32 %v1350, %v1579
      %v1612 = vadd.f32 %v1351, %v1580
      %v1613 = vld [vmem:[%s449 + $0x4] sm:$0xff]
      %v1614 = vld [vmem:[%s449 + $0xc] sm:$0xff]
      %v1615 = vld [vmem:[%s449 + $0x1c] sm:$0xff]
      %v1616 = vld [vmem:[%s449 + $0x24] sm:$0xff]
      %v1617 = vld [vmem:[%s449 + $0x34] sm:$0xff]
      %v1618 = vld [vmem:[%s449 + $0x3c] sm:$0xff]
      %v1619 = vld [vmem:[%s449 + $0x4c] sm:$0xff]
      %v1620 = vld [vmem:[%s449 + $0x54] sm:$0xff]
      %v1621 = vld [vmem:[%s449 + $0x64] sm:$0xff]
      %v1622 = vld [vmem:[%s449 + $0x6c] sm:$0xff]
      %v1623 = vld [vmem:[%s449 + $0x7c] sm:$0xff]
      %v1624 = vld [vmem:[%s449 + $0x84] sm:$0xff]
      %v1625 = vld [vmem:[%s449 + $0x94] sm:$0xff]
      %v1626 = vld [vmem:[%s449 + $0x9c] sm:$0xff]
      %v1627 = vld [vmem:[%s449 + $0xac] sm:$0xff]
      %v1628 = vld [vmem:[%s449 + $0xb4] sm:$0xff]
      %v1629 = vld [vmem:[%s449 + $0xc4] sm:$0xff]
      %v1630 = vld [vmem:[%s449 + $0xcc] sm:$0xff]
      %v1631 = vld [vmem:[%s449 + $0xdc] sm:$0xff]
      %v1632 = vld [vmem:[%s449 + $0xe4] sm:$0xff]
      %v1633 = vld [vmem:[%s449 + $0xf4] sm:$0xff]
      %v1634 = vld [vmem:[%s449 + $0xfc] sm:$0xff]
      %v1635 = vld [vmem:[%s449 + $0x10c] sm:$0xff]
      %v1636 = vld [vmem:[%s449 + $0x114] sm:$0xff]
      %v1637 = vld [vmem:[%s449 + $0x124] sm:$0xff]
      %v1638 = vld [vmem:[%s449 + $0x12c] sm:$0xff]
      %v1639 = vld [vmem:[%s449 + $0x13c] sm:$0xff]
      %v1640 = vld [vmem:[%s449 + $0x144] sm:$0xff]
      %v1641 = vld [vmem:[%s449 + $0x154] sm:$0xff]
      %v1642 = vld [vmem:[%s449 + $0x15c] sm:$0xff]
      %v1643 = vld [vmem:[%s449 + $0x16c] sm:$0xff]
      %v1644 = vld [vmem:[%s449 + $0x174] sm:$0xff]
      %s1645 = scalar_lea.vmem %s2, 4
      %v1646 = vld [vmem:[%s1645] sm:$0x1]
      %1648 = vset.pattern.permute.xlu0 0
      %1649 = vperm.xlu0 %1648, %v1613
      %v1650 = vpop.permute.xlu0 %1649
      %1653 = vset.pattern.permute.xlu0 0
      %1654 = vperm.xlu0 %1653, %v1614
      %v1655 = vpop.permute.xlu0 %1654
      %1658 = vset.pattern.permute.xlu0 0
      %1659 = vperm.xlu0 %1658, %v1615
      %v1660 = vpop.permute.xlu0 %1659
      %1663 = vset.pattern.permute.xlu0 0
      %1664 = vperm.xlu0 %1663, %v1616
      %v1665 = vpop.permute.xlu0 %1664
      %1668 = vset.pattern.permute.xlu0 0
      %1669 = vperm.xlu0 %1668, %v1617
      %v1670 = vpop.permute.xlu0 %1669
      %1673 = vset.pattern.permute.xlu0 0
      %1674 = vperm.xlu0 %1673, %v1618
      %v1675 = vpop.permute.xlu0 %1674
      %1678 = vset.pattern.permute.xlu0 0
      %1679 = vperm.xlu0 %1678, %v1619
      %v1680 = vpop.permute.xlu0 %1679
      %1683 = vset.pattern.permute.xlu0 0
      %1684 = vperm.xlu0 %1683, %v1620
      %v1685 = vpop.permute.xlu0 %1684
      %1688 = vset.pattern.permute.xlu0 0
      %1689 = vperm.xlu0 %1688, %v1621
      %v1690 = vpop.permute.xlu0 %1689
      %1693 = vset.pattern.permute.xlu0 0
      %1694 = vperm.xlu0 %1693, %v1622
      %v1695 = vpop.permute.xlu0 %1694
      %1698 = vset.pattern.permute.xlu0 0
      %1699 = vperm.xlu0 %1698, %v1623
      %v1700 = vpop.permute.xlu0 %1699
      %1703 = vset.pattern.permute.xlu0 0
      %1704 = vperm.xlu0 %1703, %v1624
      %v1705 = vpop.permute.xlu0 %1704
      %1708 = vset.pattern.permute.xlu0 0
      %1709 = vperm.xlu0 %1708, %v1625
      %v1710 = vpop.permute.xlu0 %1709
      %1713 = vset.pattern.permute.xlu0 0
      %1714 = vperm.xlu0 %1713, %v1626
      %v1715 = vpop.permute.xlu0 %1714
      %1718 = vset.pattern.permute.xlu0 0
      %1719 = vperm.xlu0 %1718, %v1627
      %v1720 = vpop.permute.xlu0 %1719
      %1723 = vset.pattern.permute.xlu0 0
      %1724 = vperm.xlu0 %1723, %v1628
      %v1725 = vpop.permute.xlu0 %1724
      %1728 = vset.pattern.permute.xlu0 0
      %1729 = vperm.xlu0 %1728, %v1629
      %v1730 = vpop.permute.xlu0 %1729
      %1733 = vset.pattern.permute.xlu0 0
      %1734 = vperm.xlu0 %1733, %v1630
      %v1735 = vpop.permute.xlu0 %1734
      %1738 = vset.pattern.permute.xlu0 0
      %1739 = vperm.xlu0 %1738, %v1631
      %v1740 = vpop.permute.xlu0 %1739
      %1743 = vset.pattern.permute.xlu0 0
      %1744 = vperm.xlu0 %1743, %v1632
      %v1745 = vpop.permute.xlu0 %1744
      %1748 = vset.pattern.permute.xlu0 0
      %1749 = vperm.xlu0 %1748, %v1633
      %v1750 = vpop.permute.xlu0 %1749
      %1753 = vset.pattern.permute.xlu0 0
      %1754 = vperm.xlu0 %1753, %v1634
      %v1755 = vpop.permute.xlu0 %1754
      %1758 = vset.pattern.permute.xlu0 0
      %1759 = vperm.xlu0 %1758, %v1635
      %v1760 = vpop.permute.xlu0 %1759
      %1763 = vset.pattern.permute.xlu0 0
      %1764 = vperm.xlu0 %1763, %v1636
      %v1765 = vpop.permute.xlu0 %1764
      %1768 = vset.pattern.permute.xlu0 0
      %1769 = vperm.xlu0 %1768, %v1637
      %v1770 = vpop.permute.xlu0 %1769
      %1773 = vset.pattern.permute.xlu0 0
      %1774 = vperm.xlu0 %1773, %v1638
      %v1775 = vpop.permute.xlu0 %1774
      %1778 = vset.pattern.permute.xlu0 0
      %1779 = vperm.xlu0 %1778, %v1639
      %v1780 = vpop.permute.xlu0 %1779
      %1783 = vset.pattern.permute.xlu0 0
      %1784 = vperm.xlu0 %1783, %v1640
      %v1785 = vpop.permute.xlu0 %1784
      %1788 = vset.pattern.permute.xlu0 0
      %1789 = vperm.xlu0 %1788, %v1641
      %v1790 = vpop.permute.xlu0 %1789
      %1793 = vset.pattern.permute.xlu0 0
      %1794 = vperm.xlu0 %1793, %v1642
      %v1795 = vpop.permute.xlu0 %1794
      %1798 = vset.pattern.permute.xlu0 0
      %1799 = vperm.xlu0 %1798, %v1643
      %v1800 = vpop.permute.xlu0 %1799
      %1803 = vset.pattern.permute.xlu0 0
      %1804 = vperm.xlu0 %1803, %v1644
      %v1805 = vpop.permute.xlu0 %1804
      %v1808 = vperm.slane %v1646, 0
      %v1810 = vmul.f32 %v1650, %v1808
      %v1811 = vmul.f32 %v1655, %v1808
      %v1812 = vmul.f32 %v1660, %v1808
      %v1813 = vmul.f32 %v1665, %v1808
      %v1814 = vmul.f32 %v1670, %v1808
      %v1815 = vmul.f32 %v1675, %v1808
      %v1816 = vmul.f32 %v1680, %v1808
      %v1817 = vmul.f32 %v1685, %v1808
      %v1818 = vmul.f32 %v1690, %v1808
      %v1819 = vmul.f32 %v1695, %v1808
      %v1820 = vmul.f32 %v1700, %v1808
      %v1821 = vmul.f32 %v1705, %v1808
      %v1822 = vmul.f32 %v1710, %v1808
      %v1823 = vmul.f32 %v1715, %v1808
      %v1824 = vmul.f32 %v1720, %v1808
      %v1825 = vmul.f32 %v1725, %v1808
      %v1826 = vmul.f32 %v1730, %v1808
      %v1827 = vmul.f32 %v1735, %v1808
      %v1828 = vmul.f32 %v1740, %v1808
      %v1829 = vmul.f32 %v1745, %v1808
      %v1830 = vmul.f32 %v1750, %v1808
      %v1831 = vmul.f32 %v1755, %v1808
      %v1832 = vmul.f32 %v1760, %v1808
      %v1833 = vmul.f32 %v1765, %v1808
      %v1834 = vmul.f32 %v1770, %v1808
      %v1835 = vmul.f32 %v1775, %v1808
      %v1836 = vmul.f32 %v1780, %v1808
      %v1837 = vmul.f32 %v1785, %v1808
      %v1838 = vmul.f32 %v1790, %v1808
      %v1839 = vmul.f32 %v1795, %v1808
      %v1840 = vmul.f32 %v1800, %v1808
      %v1841 = vmul.f32 %v1805, %v1808
      %v1842 = vadd.f32 %v1581, %v1810
      %v1843 = vadd.f32 %v1582, %v1811
      %v1844 = vadd.f32 %v1583, %v1812
      %v1845 = vadd.f32 %v1584, %v1813
      %v1846 = vadd.f32 %v1585, %v1814
      %v1847 = vadd.f32 %v1586, %v1815
      %v1848 = vadd.f32 %v1587, %v1816
      %v1849 = vadd.f32 %v1588, %v1817
      %v1850 = vadd.f32 %v1589, %v1818
      %v1851 = vadd.f32 %v1590, %v1819
      %v1852 = vadd.f32 %v1591, %v1820
      %v1853 = vadd.f32 %v1592, %v1821
      %v1854 = vadd.f32 %v1593, %v1822
      %v1855 = vadd.f32 %v1594, %v1823
      %v1856 = vadd.f32 %v1595, %v1824
      %v1857 = vadd.f32 %v1596, %v1825
      %v1858 = vadd.f32 %v1597, %v1826
      %v1859 = vadd.f32 %v1598, %v1827
      %v1860 = vadd.f32 %v1599, %v1828
      %v1861 = vadd.f32 %v1600, %v1829
      %v1862 = vadd.f32 %v1601, %v1830
      %v1863 = vadd.f32 %v1602, %v1831
      %v1864 = vadd.f32 %v1603, %v1832
      %v1865 = vadd.f32 %v1604, %v1833
      %v1866 = vadd.f32 %v1605, %v1834
      %v1867 = vadd.f32 %v1606, %v1835
      %v1868 = vadd.f32 %v1607, %v1836
      %v1869 = vadd.f32 %v1608, %v1837
      %v1870 = vadd.f32 %v1609, %v1838
      %v1871 = vadd.f32 %v1610, %v1839
      %v1872 = vadd.f32 %v1611, %v1840
      %v1873 = vadd.f32 %v1612, %v1841
      %s1874 = scalar_lea.vmem %s449, 24
      %v1875 = vld [vmem:[%s1874] sm:$0xff]
      %v1876 = vld [vmem:[%s1874 + $0x8] sm:$0xff]
      %v1877 = vld [vmem:[%s1874 + $0x18] sm:$0xff]
      %v1878 = vld [vmem:[%s1874 + $0x20] sm:$0xff]
      %v1879 = vld [vmem:[%s1874 + $0x30] sm:$0xff]
      %v1880 = vld [vmem:[%s1874 + $0x38] sm:$0xff]
      %v1881 = vld [vmem:[%s1874 + $0x48] sm:$0xff]
      %v1882 = vld [vmem:[%s1874 + $0x50] sm:$0xff]
      %v1883 = vld [vmem:[%s1874 + $0x60] sm:$0xff]
      %v1884 = vld [vmem:[%s1874 + $0x68] sm:$0xff]
      %v1885 = vld [vmem:[%s1874 + $0x78] sm:$0xff]
      %v1886 = vld [vmem:[%s1874 + $0x80] sm:$0xff]
      %v1887 = vld [vmem:[%s1874 + $0x90] sm:$0xff]
      %v1888 = vld [vmem:[%s1874 + $0x98] sm:$0xff]
      %v1889 = vld [vmem:[%s1874 + $0xa8] sm:$0xff]
      %v1890 = vld [vmem:[%s1874 + $0xb0] sm:$0xff]
      %v1891 = vld [vmem:[%s1874 + $0xc0] sm:$0xff]
      %v1892 = vld [vmem:[%s1874 + $0xc8] sm:$0xff]
      %v1893 = vld [vmem:[%s1874 + $0xd8] sm:$0xff]
      %v1894 = vld [vmem:[%s1874 + $0xe0] sm:$0xff]
      %v1895 = vld [vmem:[%s1874 + $0xf0] sm:$0xff]
      %v1896 = vld [vmem:[%s1874 + $0xf8] sm:$0xff]
      %v1897 = vld [vmem:[%s1874 + $0x108] sm:$0xff]
      %v1898 = vld [vmem:[%s1874 + $0x110] sm:$0xff]
      %v1899 = vld [vmem:[%s1874 + $0x120] sm:$0xff]
      %v1900 = vld [vmem:[%s1874 + $0x128] sm:$0xff]
      %v1901 = vld [vmem:[%s1874 + $0x138] sm:$0xff]
      %v1902 = vld [vmem:[%s1874 + $0x140] sm:$0xff]
      %v1903 = vld [vmem:[%s1874 + $0x150] sm:$0xff]
      %v1904 = vld [vmem:[%s1874 + $0x158] sm:$0xff]
      %v1905 = vld [vmem:[%s1874 + $0x168] sm:$0xff]
      %v1906 = vld [vmem:[%s1874 + $0x170] sm:$0xff]
      %s1907 = scalar_lea.vmem %s2, 5
      %v1908 = vld [vmem:[%s1907] sm:$0x1]
      %1910 = vset.pattern.permute.xlu0 0
      %1911 = vperm.xlu0 %1910, %v1875
      %v1912 = vpop.permute.xlu0 %1911
      %1915 = vset.pattern.permute.xlu0 0
      %1916 = vperm.xlu0 %1915, %v1876
      %v1917 = vpop.permute.xlu0 %1916
      %1920 = vset.pattern.permute.xlu0 0
      %1921 = vperm.xlu0 %1920, %v1877
      %v1922 = vpop.permute.xlu0 %1921
      %1925 = vset.pattern.permute.xlu0 0
      %1926 = vperm.xlu0 %1925, %v1878
      %v1927 = vpop.permute.xlu0 %1926
      %1930 = vset.pattern.permute.xlu0 0
      %1931 = vperm.xlu0 %1930, %v1879
      %v1932 = vpop.permute.xlu0 %1931
      %1935 = vset.pattern.permute.xlu0 0
      %1936 = vperm.xlu0 %1935, %v1880
      %v1937 = vpop.permute.xlu0 %1936
      %1940 = vset.pattern.permute.xlu0 0
      %1941 = vperm.xlu0 %1940, %v1881
      %v1942 = vpop.permute.xlu0 %1941
      %1945 = vset.pattern.permute.xlu0 0
      %1946 = vperm.xlu0 %1945, %v1882
      %v1947 = vpop.permute.xlu0 %1946
      %1950 = vset.pattern.permute.xlu0 0
      %1951 = vperm.xlu0 %1950, %v1883
      %v1952 = vpop.permute.xlu0 %1951
      %1955 = vset.pattern.permute.xlu0 0
      %1956 = vperm.xlu0 %1955, %v1884
      %v1957 = vpop.permute.xlu0 %1956
      %1960 = vset.pattern.permute.xlu0 0
      %1961 = vperm.xlu0 %1960, %v1885
      %v1962 = vpop.permute.xlu0 %1961
      %1965 = vset.pattern.permute.xlu0 0
      %1966 = vperm.xlu0 %1965, %v1886
      %v1967 = vpop.permute.xlu0 %1966
      %1970 = vset.pattern.permute.xlu0 0
      %1971 = vperm.xlu0 %1970, %v1887
      %v1972 = vpop.permute.xlu0 %1971
      %1975 = vset.pattern.permute.xlu0 0
      %1976 = vperm.xlu0 %1975, %v1888
      %v1977 = vpop.permute.xlu0 %1976
      %1980 = vset.pattern.permute.xlu0 0
      %1981 = vperm.xlu0 %1980, %v1889
      %v1982 = vpop.permute.xlu0 %1981
      %1985 = vset.pattern.permute.xlu0 0
      %1986 = vperm.xlu0 %1985, %v1890
      %v1987 = vpop.permute.xlu0 %1986
      %1990 = vset.pattern.permute.xlu0 0
      %1991 = vperm.xlu0 %1990, %v1891
      %v1992 = vpop.permute.xlu0 %1991
      %1995 = vset.pattern.permute.xlu0 0
      %1996 = vperm.xlu0 %1995, %v1892
      %v1997 = vpop.permute.xlu0 %1996
      %2000 = vset.pattern.permute.xlu0 0
      %2001 = vperm.xlu0 %2000, %v1893
      %v2002 = vpop.permute.xlu0 %2001
      %2005 = vset.pattern.permute.xlu0 0
      %2006 = vperm.xlu0 %2005, %v1894
      %v2007 = vpop.permute.xlu0 %2006
      %2010 = vset.pattern.permute.xlu0 0
      %2011 = vperm.xlu0 %2010, %v1895
      %v2012 = vpop.permute.xlu0 %2011
      %2015 = vset.pattern.permute.xlu0 0
      %2016 = vperm.xlu0 %2015, %v1896
      %v2017 = vpop.permute.xlu0 %2016
      %2020 = vset.pattern.permute.xlu0 0
      %2021 = vperm.xlu0 %2020, %v1897
      %v2022 = vpop.permute.xlu0 %2021
      %2025 = vset.pattern.permute.xlu0 0
      %2026 = vperm.xlu0 %2025, %v1898
      %v2027 = vpop.permute.xlu0 %2026
      %2030 = vset.pattern.permute.xlu0 0
      %2031 = vperm.xlu0 %2030, %v1899
      %v2032 = vpop.permute.xlu0 %2031
      %2035 = vset.pattern.permute.xlu0 0
      %2036 = vperm.xlu0 %2035, %v1900
      %v2037 = vpop.permute.xlu0 %2036
      %2040 = vset.pattern.permute.xlu0 0
      %2041 = vperm.xlu0 %2040, %v1901
      %v2042 = vpop.permute.xlu0 %2041
      %2045 = vset.pattern.permute.xlu0 0
      %2046 = vperm.xlu0 %2045, %v1902
      %v2047 = vpop.permute.xlu0 %2046
      %2050 = vset.pattern.permute.xlu0 0
      %2051 = vperm.xlu0 %2050, %v1903
      %v2052 = vpop.permute.xlu0 %2051
      %2055 = vset.pattern.permute.xlu0 0
      %2056 = vperm.xlu0 %2055, %v1904
      %v2057 = vpop.permute.xlu0 %2056
      %2060 = vset.pattern.permute.xlu0 0
      %2061 = vperm.xlu0 %2060, %v1905
      %v2062 = vpop.permute.xlu0 %2061
      %2065 = vset.pattern.permute.xlu0 0
      %2066 = vperm.xlu0 %2065, %v1906
      %v2067 = vpop.permute.xlu0 %2066
      %v2070 = vperm.slane %v1908, 0
      %v2072 = vmul.f32 %v1912, %v2070
      %v2073 = vmul.f32 %v1917, %v2070
      %v2074 = vmul.f32 %v1922, %v2070
      %v2075 = vmul.f32 %v1927, %v2070
      %v2076 = vmul.f32 %v1932, %v2070
      %v2077 = vmul.f32 %v1937, %v2070
      %v2078 = vmul.f32 %v1942, %v2070
      %v2079 = vmul.f32 %v1947, %v2070
      %v2080 = vmul.f32 %v1952, %v2070
      %v2081 = vmul.f32 %v1957, %v2070
      %v2082 = vmul.f32 %v1962, %v2070
      %v2083 = vmul.f32 %v1967, %v2070
      %v2084 = vmul.f32 %v1972, %v2070
      %v2085 = vmul.f32 %v1977, %v2070
      %v2086 = vmul.f32 %v1982, %v2070
      %v2087 = vmul.f32 %v1987, %v2070
      %v2088 = vmul.f32 %v1992, %v2070
      %v2089 = vmul.f32 %v1997, %v2070
      %v2090 = vmul.f32 %v2002, %v2070
      %v2091 = vmul.f32 %v2007, %v2070
      %v2092 = vmul.f32 %v2012, %v2070
      %v2093 = vmul.f32 %v2017, %v2070
      %v2094 = vmul.f32 %v2022, %v2070
      %v2095 = vmul.f32 %v2027, %v2070
      %v2096 = vmul.f32 %v2032, %v2070
      %v2097 = vmul.f32 %v2037, %v2070
      %v2098 = vmul.f32 %v2042, %v2070
      %v2099 = vmul.f32 %v2047, %v2070
      %v2100 = vmul.f32 %v2052, %v2070
      %v2101 = vmul.f32 %v2057, %v2070
      %v2102 = vmul.f32 %v2062, %v2070
      %v2103 = vmul.f32 %v2067, %v2070
      %v2104 = vadd.f32 %v1842, %v2072
      %v2105 = vadd.f32 %v1843, %v2073
      %v2106 = vadd.f32 %v1844, %v2074
      %v2107 = vadd.f32 %v1845, %v2075
      %v2108 = vadd.f32 %v1846, %v2076
      %v2109 = vadd.f32 %v1847, %v2077
      %v2110 = vadd.f32 %v1848, %v2078
      %v2111 = vadd.f32 %v1849, %v2079
      %v2112 = vadd.f32 %v1850, %v2080
      %v2113 = vadd.f32 %v1851, %v2081
      %v2114 = vadd.f32 %v1852, %v2082
      %v2115 = vadd.f32 %v1853, %v2083
      %v2116 = vadd.f32 %v1854, %v2084
      %v2117 = vadd.f32 %v1855, %v2085
      %v2118 = vadd.f32 %v1856, %v2086
      %v2119 = vadd.f32 %v1857, %v2087
      %v2120 = vadd.f32 %v1858, %v2088
      %v2121 = vadd.f32 %v1859, %v2089
      %v2122 = vadd.f32 %v1860, %v2090
      %v2123 = vadd.f32 %v1861, %v2091
      %v2124 = vadd.f32 %v1862, %v2092
      %v2125 = vadd.f32 %v1863, %v2093
      %v2126 = vadd.f32 %v1864, %v2094
      %v2127 = vadd.f32 %v1865, %v2095
      %v2128 = vadd.f32 %v1866, %v2096
      %v2129 = vadd.f32 %v1867, %v2097
      %v2130 = vadd.f32 %v1868, %v2098
      %v2131 = vadd.f32 %v1869, %v2099
      %v2132 = vadd.f32 %v1870, %v2100
      %v2133 = vadd.f32 %v1871, %v2101
      %v2134 = vadd.f32 %v1872, %v2102
      %v2135 = vadd.f32 %v1873, %v2103
      %v2136 = vld [vmem:[%s1874 + $0x1] sm:$0xff]
      %v2137 = vld [vmem:[%s1874 + $0x9] sm:$0xff]
      %v2138 = vld [vmem:[%s1874 + $0x19] sm:$0xff]
      %v2139 = vld [vmem:[%s1874 + $0x21] sm:$0xff]
      %v2140 = vld [vmem:[%s1874 + $0x31] sm:$0xff]
      %v2141 = vld [vmem:[%s1874 + $0x39] sm:$0xff]
      %v2142 = vld [vmem:[%s1874 + $0x49] sm:$0xff]
      %v2143 = vld [vmem:[%s1874 + $0x51] sm:$0xff]
      %v2144 = vld [vmem:[%s1874 + $0x61] sm:$0xff]
      %v2145 = vld [vmem:[%s1874 + $0x69] sm:$0xff]
      %v2146 = vld [vmem:[%s1874 + $0x79] sm:$0xff]
      %v2147 = vld [vmem:[%s1874 + $0x81] sm:$0xff]
      %v2148 = vld [vmem:[%s1874 + $0x91] sm:$0xff]
      %v2149 = vld [vmem:[%s1874 + $0x99] sm:$0xff]
      %v2150 = vld [vmem:[%s1874 + $0xa9] sm:$0xff]
      %v2151 = vld [vmem:[%s1874 + $0xb1] sm:$0xff]
      %v2152 = vld [vmem:[%s1874 + $0xc1] sm:$0xff]
      %v2153 = vld [vmem:[%s1874 + $0xc9] sm:$0xff]
      %v2154 = vld [vmem:[%s1874 + $0xd9] sm:$0xff]
      %v2155 = vld [vmem:[%s1874 + $0xe1] sm:$0xff]
      %v2156 = vld [vmem:[%s1874 + $0xf1] sm:$0xff]
      %v2157 = vld [vmem:[%s1874 + $0xf9] sm:$0xff]
      %v2158 = vld [vmem:[%s1874 + $0x109] sm:$0xff]
      %v2159 = vld [vmem:[%s1874 + $0x111] sm:$0xff]
      %v2160 = vld [vmem:[%s1874 + $0x121] sm:$0xff]
      %v2161 = vld [vmem:[%s1874 + $0x129] sm:$0xff]
      %v2162 = vld [vmem:[%s1874 + $0x139] sm:$0xff]
      %v2163 = vld [vmem:[%s1874 + $0x141] sm:$0xff]
      %v2164 = vld [vmem:[%s1874 + $0x151] sm:$0xff]
      %v2165 = vld [vmem:[%s1874 + $0x159] sm:$0xff]
      %v2166 = vld [vmem:[%s1874 + $0x169] sm:$0xff]
      %v2167 = vld [vmem:[%s1874 + $0x171] sm:$0xff]
      %s2168 = scalar_lea.vmem %s2, 6
      %v2169 = vld [vmem:[%s2168] sm:$0x1]
      %2171 = vset.pattern.permute.xlu0 0
      %2172 = vperm.xlu0 %2171, %v2136
      %v2173 = vpop.permute.xlu0 %2172
      %2176 = vset.pattern.permute.xlu0 0
      %2177 = vperm.xlu0 %2176, %v2137
      %v2178 = vpop.permute.xlu0 %2177
      %2181 = vset.pattern.permute.xlu0 0
      %2182 = vperm.xlu0 %2181, %v2138
      %v2183 = vpop.permute.xlu0 %2182
      %2186 = vset.pattern.permute.xlu0 0
      %2187 = vperm.xlu0 %2186, %v2139
      %v2188 = vpop.permute.xlu0 %2187
      %2191 = vset.pattern.permute.xlu0 0
      %2192 = vperm.xlu0 %2191, %v2140
      %v2193 = vpop.permute.xlu0 %2192
      %2196 = vset.pattern.permute.xlu0 0
      %2197 = vperm.xlu0 %2196, %v2141
      %v2198 = vpop.permute.xlu0 %2197
      %2201 = vset.pattern.permute.xlu0 0
      %2202 = vperm.xlu0 %2201, %v2142
      %v2203 = vpop.permute.xlu0 %2202
      %2206 = vset.pattern.permute.xlu0 0
      %2207 = vperm.xlu0 %2206, %v2143
      %v2208 = vpop.permute.xlu0 %2207
      %2211 = vset.pattern.permute.xlu0 0
      %2212 = vperm.xlu0 %2211, %v2144
      %v2213 = vpop.permute.xlu0 %2212
      %2216 = vset.pattern.permute.xlu0 0
      %2217 = vperm.xlu0 %2216, %v2145
      %v2218 = vpop.permute.xlu0 %2217
      %2221 = vset.pattern.permute.xlu0 0
      %2222 = vperm.xlu0 %2221, %v2146
      %v2223 = vpop.permute.xlu0 %2222
      %2226 = vset.pattern.permute.xlu0 0
      %2227 = vperm.xlu0 %2226, %v2147
      %v2228 = vpop.permute.xlu0 %2227
      %2231 = vset.pattern.permute.xlu0 0
      %2232 = vperm.xlu0 %2231, %v2148
      %v2233 = vpop.permute.xlu0 %2232
      %2236 = vset.pattern.permute.xlu0 0
      %2237 = vperm.xlu0 %2236, %v2149
      %v2238 = vpop.permute.xlu0 %2237
      %2241 = vset.pattern.permute.xlu0 0
      %2242 = vperm.xlu0 %2241, %v2150
      %v2243 = vpop.permute.xlu0 %2242
      %2246 = vset.pattern.permute.xlu0 0
      %2247 = vperm.xlu0 %2246, %v2151
      %v2248 = vpop.permute.xlu0 %2247
      %2251 = vset.pattern.permute.xlu0 0
      %2252 = vperm.xlu0 %2251, %v2152
      %v2253 = vpop.permute.xlu0 %2252
      %2256 = vset.pattern.permute.xlu0 0
      %2257 = vperm.xlu0 %2256, %v2153
      %v2258 = vpop.permute.xlu0 %2257
      %2261 = vset.pattern.permute.xlu0 0
      %2262 = vperm.xlu0 %2261, %v2154
      %v2263 = vpop.permute.xlu0 %2262
      %2266 = vset.pattern.permute.xlu0 0
      %2267 = vperm.xlu0 %2266, %v2155
      %v2268 = vpop.permute.xlu0 %2267
      %2271 = vset.pattern.permute.xlu0 0
      %2272 = vperm.xlu0 %2271, %v2156
      %v2273 = vpop.permute.xlu0 %2272
      %2276 = vset.pattern.permute.xlu0 0
      %2277 = vperm.xlu0 %2276, %v2157
      %v2278 = vpop.permute.xlu0 %2277
      %2281 = vset.pattern.permute.xlu0 0
      %2282 = vperm.xlu0 %2281, %v2158
      %v2283 = vpop.permute.xlu0 %2282
      %2286 = vset.pattern.permute.xlu0 0
      %2287 = vperm.xlu0 %2286, %v2159
      %v2288 = vpop.permute.xlu0 %2287
      %2291 = vset.pattern.permute.xlu0 0
      %2292 = vperm.xlu0 %2291, %v2160
      %v2293 = vpop.permute.xlu0 %2292
      %2296 = vset.pattern.permute.xlu0 0
      %2297 = vperm.xlu0 %2296, %v2161
      %v2298 = vpop.permute.xlu0 %2297
      %2301 = vset.pattern.permute.xlu0 0
      %2302 = vperm.xlu0 %2301, %v2162
      %v2303 = vpop.permute.xlu0 %2302
      %2306 = vset.pattern.permute.xlu0 0
      %2307 = vperm.xlu0 %2306, %v2163
      %v2308 = vpop.permute.xlu0 %2307
      %2311 = vset.pattern.permute.xlu0 0
      %2312 = vperm.xlu0 %2311, %v2164
      %v2313 = vpop.permute.xlu0 %2312
      %2316 = vset.pattern.permute.xlu0 0
      %2317 = vperm.xlu0 %2316, %v2165
      %v2318 = vpop.permute.xlu0 %2317
      %2321 = vset.pattern.permute.xlu0 0
      %2322 = vperm.xlu0 %2321, %v2166
      %v2323 = vpop.permute.xlu0 %2322
      %2326 = vset.pattern.permute.xlu0 0
      %2327 = vperm.xlu0 %2326, %v2167
      %v2328 = vpop.permute.xlu0 %2327
      %v2331 = vperm.slane %v2169, 0
      %v2333 = vmul.f32 %v2173, %v2331
      %v2334 = vmul.f32 %v2178, %v2331
      %v2335 = vmul.f32 %v2183, %v2331
      %v2336 = vmul.f32 %v2188, %v2331
      %v2337 = vmul.f32 %v2193, %v2331
      %v2338 = vmul.f32 %v2198, %v2331
      %v2339 = vmul.f32 %v2203, %v2331
      %v2340 = vmul.f32 %v2208, %v2331
      %v2341 = vmul.f32 %v2213, %v2331
      %v2342 = vmul.f32 %v2218, %v2331
      %v2343 = vmul.f32 %v2223, %v2331
      %v2344 = vmul.f32 %v2228, %v2331
      %v2345 = vmul.f32 %v2233, %v2331
      %v2346 = vmul.f32 %v2238, %v2331
      %v2347 = vmul.f32 %v2243, %v2331
      %v2348 = vmul.f32 %v2248, %v2331
      %v2349 = vmul.f32 %v2253, %v2331
      %v2350 = vmul.f32 %v2258, %v2331
      %v2351 = vmul.f32 %v2263, %v2331
      %v2352 = vmul.f32 %v2268, %v2331
      %v2353 = vmul.f32 %v2273, %v2331
      %v2354 = vmul.f32 %v2278, %v2331
      %v2355 = vmul.f32 %v2283, %v2331
      %v2356 = vmul.f32 %v2288, %v2331
      %v2357 = vmul.f32 %v2293, %v2331
      %v2358 = vmul.f32 %v2298, %v2331
      %v2359 = vmul.f32 %v2303, %v2331
      %v2360 = vmul.f32 %v2308, %v2331
      %v2361 = vmul.f32 %v2313, %v2331
      %v2362 = vmul.f32 %v2318, %v2331
      %v2363 = vmul.f32 %v2323, %v2331
      %v2364 = vmul.f32 %v2328, %v2331
      %v2365 = vadd.f32 %v2104, %v2333
      %v2366 = vadd.f32 %v2105, %v2334
      %v2367 = vadd.f32 %v2106, %v2335
      %v2368 = vadd.f32 %v2107, %v2336
      %v2369 = vadd.f32 %v2108, %v2337
      %v2370 = vadd.f32 %v2109, %v2338
      %v2371 = vadd.f32 %v2110, %v2339
      %v2372 = vadd.f32 %v2111, %v2340
      %v2373 = vadd.f32 %v2112, %v2341
      %v2374 = vadd.f32 %v2113, %v2342
      %v2375 = vadd.f32 %v2114, %v2343
      %v2376 = vadd.f32 %v2115, %v2344
      %v2377 = vadd.f32 %v2116, %v2345
      %v2378 = vadd.f32 %v2117, %v2346
      %v2379 = vadd.f32 %v2118, %v2347
      %v2380 = vadd.f32 %v2119, %v2348
      %v2381 = vadd.f32 %v2120, %v2349
      %v2382 = vadd.f32 %v2121, %v2350
      %v2383 = vadd.f32 %v2122, %v2351
      %v2384 = vadd.f32 %v2123, %v2352
      %v2385 = vadd.f32 %v2124, %v2353
      %v2386 = vadd.f32 %v2125, %v2354
      %v2387 = vadd.f32 %v2126, %v2355
      %v2388 = vadd.f32 %v2127, %v2356
      %v2389 = vadd.f32 %v2128, %v2357
      %v2390 = vadd.f32 %v2129, %v2358
      %v2391 = vadd.f32 %v2130, %v2359
      %v2392 = vadd.f32 %v2131, %v2360
      %v2393 = vadd.f32 %v2132, %v2361
      %v2394 = vadd.f32 %v2133, %v2362
      %v2395 = vadd.f32 %v2134, %v2363
      %v2396 = vadd.f32 %v2135, %v2364
      %v2397 = vld [vmem:[%s1874 + $0x2] sm:$0xff]
      %v2398 = vld [vmem:[%s1874 + $0xa] sm:$0xff]
      %v2399 = vld [vmem:[%s1874 + $0x1a] sm:$0xff]
      %v2400 = vld [vmem:[%s1874 + $0x22] sm:$0xff]
      %v2401 = vld [vmem:[%s1874 + $0x32] sm:$0xff]
      %v2402 = vld [vmem:[%s1874 + $0x3a] sm:$0xff]
      %v2403 = vld [vmem:[%s1874 + $0x4a] sm:$0xff]
      %v2404 = vld [vmem:[%s1874 + $0x52] sm:$0xff]
      %v2405 = vld [vmem:[%s1874 + $0x62] sm:$0xff]
      %v2406 = vld [vmem:[%s1874 + $0x6a] sm:$0xff]
      %v2407 = vld [vmem:[%s1874 + $0x7a] sm:$0xff]
      %v2408 = vld [vmem:[%s1874 + $0x82] sm:$0xff]
      %v2409 = vld [vmem:[%s1874 + $0x92] sm:$0xff]
      %v2410 = vld [vmem:[%s1874 + $0x9a] sm:$0xff]
      %v2411 = vld [vmem:[%s1874 + $0xaa] sm:$0xff]
      %v2412 = vld [vmem:[%s1874 + $0xb2] sm:$0xff]
      %v2413 = vld [vmem:[%s1874 + $0xc2] sm:$0xff]
      %v2414 = vld [vmem:[%s1874 + $0xca] sm:$0xff]
      %v2415 = vld [vmem:[%s1874 + $0xda] sm:$0xff]
      %v2416 = vld [vmem:[%s1874 + $0xe2] sm:$0xff]
      %v2417 = vld [vmem:[%s1874 + $0xf2] sm:$0xff]
      %v2418 = vld [vmem:[%s1874 + $0xfa] sm:$0xff]
      %v2419 = vld [vmem:[%s1874 + $0x10a] sm:$0xff]
      %v2420 = vld [vmem:[%s1874 + $0x112] sm:$0xff]
      %v2421 = vld [vmem:[%s1874 + $0x122] sm:$0xff]
      %v2422 = vld [vmem:[%s1874 + $0x12a] sm:$0xff]
      %v2423 = vld [vmem:[%s1874 + $0x13a] sm:$0xff]
      %v2424 = vld [vmem:[%s1874 + $0x142] sm:$0xff]
      %v2425 = vld [vmem:[%s1874 + $0x152] sm:$0xff]
      %v2426 = vld [vmem:[%s1874 + $0x15a] sm:$0xff]
      %v2427 = vld [vmem:[%s1874 + $0x16a] sm:$0xff]
      %v2428 = vld [vmem:[%s1874 + $0x172] sm:$0xff]
      %s2429 = scalar_lea.vmem %s2, 7
      %v2430 = vld [vmem:[%s2429] sm:$0x1]
      %2432 = vset.pattern.permute.xlu0 0
      %2433 = vperm.xlu0 %2432, %v2397
      %v2434 = vpop.permute.xlu0 %2433
      %2437 = vset.pattern.permute.xlu0 0
      %2438 = vperm.xlu0 %2437, %v2398
      %v2439 = vpop.permute.xlu0 %2438
      %2442 = vset.pattern.permute.xlu0 0
      %2443 = vperm.xlu0 %2442, %v2399
      %v2444 = vpop.permute.xlu0 %2443
      %2447 = vset.pattern.permute.xlu0 0
      %2448 = vperm.xlu0 %2447, %v2400
      %v2449 = vpop.permute.xlu0 %2448
      %2452 = vset.pattern.permute.xlu0 0
      %2453 = vperm.xlu0 %2452, %v2401
      %v2454 = vpop.permute.xlu0 %2453
      %2457 = vset.pattern.permute.xlu0 0
      %2458 = vperm.xlu0 %2457, %v2402
      %v2459 = vpop.permute.xlu0 %2458
      %2462 = vset.pattern.permute.xlu0 0
      %2463 = vperm.xlu0 %2462, %v2403
      %v2464 = vpop.permute.xlu0 %2463
      %2467 = vset.pattern.permute.xlu0 0
      %2468 = vperm.xlu0 %2467, %v2404
      %v2469 = vpop.permute.xlu0 %2468
      %2472 = vset.pattern.permute.xlu0 0
      %2473 = vperm.xlu0 %2472, %v2405
      %v2474 = vpop.permute.xlu0 %2473
      %2477 = vset.pattern.permute.xlu0 0
      %2478 = vperm.xlu0 %2477, %v2406
      %v2479 = vpop.permute.xlu0 %2478
      %2482 = vset.pattern.permute.xlu0 0
      %2483 = vperm.xlu0 %2482, %v2407
      %v2484 = vpop.permute.xlu0 %2483
      %2487 = vset.pattern.permute.xlu0 0
      %2488 = vperm.xlu0 %2487, %v2408
      %v2489 = vpop.permute.xlu0 %2488
      %2492 = vset.pattern.permute.xlu0 0
      %2493 = vperm.xlu0 %2492, %v2409
      %v2494 = vpop.permute.xlu0 %2493
      %2497 = vset.pattern.permute.xlu0 0
      %2498 = vperm.xlu0 %2497, %v2410
      %v2499 = vpop.permute.xlu0 %2498
      %2502 = vset.pattern.permute.xlu0 0
      %2503 = vperm.xlu0 %2502, %v2411
      %v2504 = vpop.permute.xlu0 %2503
      %2507 = vset.pattern.permute.xlu0 0
      %2508 = vperm.xlu0 %2507, %v2412
      %v2509 = vpop.permute.xlu0 %2508
      %2512 = vset.pattern.permute.xlu0 0
      %2513 = vperm.xlu0 %2512, %v2413
      %v2514 = vpop.permute.xlu0 %2513
      %2517 = vset.pattern.permute.xlu0 0
      %2518 = vperm.xlu0 %2517, %v2414
      %v2519 = vpop.permute.xlu0 %2518
      %2522 = vset.pattern.permute.xlu0 0
      %2523 = vperm.xlu0 %2522, %v2415
      %v2524 = vpop.permute.xlu0 %2523
      %2527 = vset.pattern.permute.xlu0 0
      %2528 = vperm.xlu0 %2527, %v2416
      %v2529 = vpop.permute.xlu0 %2528
      %2532 = vset.pattern.permute.xlu0 0
      %2533 = vperm.xlu0 %2532, %v2417
      %v2534 = vpop.permute.xlu0 %2533
      %2537 = vset.pattern.permute.xlu0 0
      %2538 = vperm.xlu0 %2537, %v2418
      %v2539 = vpop.permute.xlu0 %2538
      %2542 = vset.pattern.permute.xlu0 0
      %2543 = vperm.xlu0 %2542, %v2419
      %v2544 = vpop.permute.xlu0 %2543
      %2547 = vset.pattern.permute.xlu0 0
      %2548 = vperm.xlu0 %2547, %v2420
      %v2549 = vpop.permute.xlu0 %2548
      %2552 = vset.pattern.permute.xlu0 0
      %2553 = vperm.xlu0 %2552, %v2421
      %v2554 = vpop.permute.xlu0 %2553
      %2557 = vset.pattern.permute.xlu0 0
      %2558 = vperm.xlu0 %2557, %v2422
      %v2559 = vpop.permute.xlu0 %2558
      %2562 = vset.pattern.permute.xlu0 0
      %2563 = vperm.xlu0 %2562, %v2423
      %v2564 = vpop.permute.xlu0 %2563
      %2567 = vset.pattern.permute.xlu0 0
      %2568 = vperm.xlu0 %2567, %v2424
      %v2569 = vpop.permute.xlu0 %2568
      %2572 = vset.pattern.permute.xlu0 0
      %2573 = vperm.xlu0 %2572, %v2425
      %v2574 = vpop.permute.xlu0 %2573
      %2577 = vset.pattern.permute.xlu0 0
      %2578 = vperm.xlu0 %2577, %v2426
      %v2579 = vpop.permute.xlu0 %2578
      %2582 = vset.pattern.permute.xlu0 0
      %2583 = vperm.xlu0 %2582, %v2427
      %v2584 = vpop.permute.xlu0 %2583
      %2587 = vset.pattern.permute.xlu0 0
      %2588 = vperm.xlu0 %2587, %v2428
      %v2589 = vpop.permute.xlu0 %2588
      %v2592 = vperm.slane %v2430, 0
      %v2594 = vmul.f32 %v2434, %v2592
      %v2595 = vmul.f32 %v2439, %v2592
      %v2596 = vmul.f32 %v2444, %v2592
      %v2597 = vmul.f32 %v2449, %v2592
      %v2598 = vmul.f32 %v2454, %v2592
      %v2599 = vmul.f32 %v2459, %v2592
      %v2600 = vmul.f32 %v2464, %v2592
      %v2601 = vmul.f32 %v2469, %v2592
      %v2602 = vmul.f32 %v2474, %v2592
      %v2603 = vmul.f32 %v2479, %v2592
      %v2604 = vmul.f32 %v2484, %v2592
      %v2605 = vmul.f32 %v2489, %v2592
      %v2606 = vmul.f32 %v2494, %v2592
      %v2607 = vmul.f32 %v2499, %v2592
      %v2608 = vmul.f32 %v2504, %v2592
      %v2609 = vmul.f32 %v2509, %v2592
      %v2610 = vmul.f32 %v2514, %v2592
      %v2611 = vmul.f32 %v2519, %v2592
      %v2612 = vmul.f32 %v2524, %v2592
      %v2613 = vmul.f32 %v2529, %v2592
      %v2614 = vmul.f32 %v2534, %v2592
      %v2615 = vmul.f32 %v2539, %v2592
      %v2616 = vmul.f32 %v2544, %v2592
      %v2617 = vmul.f32 %v2549, %v2592
      %v2618 = vmul.f32 %v2554, %v2592
      %v2619 = vmul.f32 %v2559, %v2592
      %v2620 = vmul.f32 %v2564, %v2592
      %v2621 = vmul.f32 %v2569, %v2592
      %v2622 = vmul.f32 %v2574, %v2592
      %v2623 = vmul.f32 %v2579, %v2592
      %v2624 = vmul.f32 %v2584, %v2592
      %v2625 = vmul.f32 %v2589, %v2592
      %v2626 = vadd.f32 %v2365, %v2594
      %v2627 = vadd.f32 %v2366, %v2595
      %v2628 = vadd.f32 %v2367, %v2596
      %v2629 = vadd.f32 %v2368, %v2597
      %v2630 = vadd.f32 %v2369, %v2598
      %v2631 = vadd.f32 %v2370, %v2599
      %v2632 = vadd.f32 %v2371, %v2600
      %v2633 = vadd.f32 %v2372, %v2601
      %v2634 = vadd.f32 %v2373, %v2602
      %v2635 = vadd.f32 %v2374, %v2603
      %v2636 = vadd.f32 %v2375, %v2604
      %v2637 = vadd.f32 %v2376, %v2605
      %v2638 = vadd.f32 %v2377, %v2606
      %v2639 = vadd.f32 %v2378, %v2607
      %v2640 = vadd.f32 %v2379, %v2608
      %v2641 = vadd.f32 %v2380, %v2609
      %v2642 = vadd.f32 %v2381, %v2610
      %v2643 = vadd.f32 %v2382, %v2611
      %v2644 = vadd.f32 %v2383, %v2612
      %v2645 = vadd.f32 %v2384, %v2613
      %v2646 = vadd.f32 %v2385, %v2614
      %v2647 = vadd.f32 %v2386, %v2615
      %v2648 = vadd.f32 %v2387, %v2616
      %v2649 = vadd.f32 %v2388, %v2617
      %v2650 = vadd.f32 %v2389, %v2618
      %v2651 = vadd.f32 %v2390, %v2619
      %v2652 = vadd.f32 %v2391, %v2620
      %v2653 = vadd.f32 %v2392, %v2621
      %v2654 = vadd.f32 %v2393, %v2622
      %v2655 = vadd.f32 %v2394, %v2623
      %v2656 = vadd.f32 %v2395, %v2624
      %v2657 = vadd.f32 %v2396, %v2625
      %v2658 = vld [vmem:[%s1874 + $0x3] sm:$0xff]
      %v2659 = vld [vmem:[%s1874 + $0xb] sm:$0xff]
      %v2660 = vld [vmem:[%s1874 + $0x1b] sm:$0xff]
      %v2661 = vld [vmem:[%s1874 + $0x23] sm:$0xff]
      %v2662 = vld [vmem:[%s1874 + $0x33] sm:$0xff]
      %v2663 = vld [vmem:[%s1874 + $0x3b] sm:$0xff]
      %v2664 = vld [vmem:[%s1874 + $0x4b] sm:$0xff]
      %v2665 = vld [vmem:[%s1874 + $0x53] sm:$0xff]
      %v2666 = vld [vmem:[%s1874 + $0x63] sm:$0xff]
      %v2667 = vld [vmem:[%s1874 + $0x6b] sm:$0xff]
      %v2668 = vld [vmem:[%s1874 + $0x7b] sm:$0xff]
      %v2669 = vld [vmem:[%s1874 + $0x83] sm:$0xff]
      %v2670 = vld [vmem:[%s1874 + $0x93] sm:$0xff]
      %v2671 = vld [vmem:[%s1874 + $0x9b] sm:$0xff]
      %v2672 = vld [vmem:[%s1874 + $0xab] sm:$0xff]
      %v2673 = vld [vmem:[%s1874 + $0xb3] sm:$0xff]
      %v2674 = vld [vmem:[%s1874 + $0xc3] sm:$0xff]
      %v2675 = vld [vmem:[%s1874 + $0xcb] sm:$0xff]
      %v2676 = vld [vmem:[%s1874 + $0xdb] sm:$0xff]
      %v2677 = vld [vmem:[%s1874 + $0xe3] sm:$0xff]
      %v2678 = vld [vmem:[%s1874 + $0xf3] sm:$0xff]
      %v2679 = vld [vmem:[%s1874 + $0xfb] sm:$0xff]
      %v2680 = vld [vmem:[%s1874 + $0x10b] sm:$0xff]
      %v2681 = vld [vmem:[%s1874 + $0x113] sm:$0xff]
      %v2682 = vld [vmem:[%s1874 + $0x123] sm:$0xff]
      %v2683 = vld [vmem:[%s1874 + $0x12b] sm:$0xff]
      %v2684 = vld [vmem:[%s1874 + $0x13b] sm:$0xff]
      %v2685 = vld [vmem:[%s1874 + $0x143] sm:$0xff]
      %v2686 = vld [vmem:[%s1874 + $0x153] sm:$0xff]
      %v2687 = vld [vmem:[%s1874 + $0x15b] sm:$0xff]
      %v2688 = vld [vmem:[%s1874 + $0x16b] sm:$0xff]
      %v2689 = vld [vmem:[%s1874 + $0x173] sm:$0xff]
      %s2690 = scalar_lea.vmem %s2, 8
      %v2691 = vld [vmem:[%s2690] sm:$0x1]
      %2693 = vset.pattern.permute.xlu0 0
      %2694 = vperm.xlu0 %2693, %v2658
      %v2695 = vpop.permute.xlu0 %2694
      %2698 = vset.pattern.permute.xlu0 0
      %2699 = vperm.xlu0 %2698, %v2659
      %v2700 = vpop.permute.xlu0 %2699
      %2703 = vset.pattern.permute.xlu0 0
      %2704 = vperm.xlu0 %2703, %v2660
      %v2705 = vpop.permute.xlu0 %2704
      %2708 = vset.pattern.permute.xlu0 0
      %2709 = vperm.xlu0 %2708, %v2661
      %v2710 = vpop.permute.xlu0 %2709
      %2713 = vset.pattern.permute.xlu0 0
      %2714 = vperm.xlu0 %2713, %v2662
      %v2715 = vpop.permute.xlu0 %2714
      %2718 = vset.pattern.permute.xlu0 0
      %2719 = vperm.xlu0 %2718, %v2663
      %v2720 = vpop.permute.xlu0 %2719
      %2723 = vset.pattern.permute.xlu0 0
      %2724 = vperm.xlu0 %2723, %v2664
      %v2725 = vpop.permute.xlu0 %2724
      %2728 = vset.pattern.permute.xlu0 0
      %2729 = vperm.xlu0 %2728, %v2665
      %v2730 = vpop.permute.xlu0 %2729
      %2733 = vset.pattern.permute.xlu0 0
      %2734 = vperm.xlu0 %2733, %v2666
      %v2735 = vpop.permute.xlu0 %2734
      %2738 = vset.pattern.permute.xlu0 0
      %2739 = vperm.xlu0 %2738, %v2667
      %v2740 = vpop.permute.xlu0 %2739
      %2743 = vset.pattern.permute.xlu0 0
      %2744 = vperm.xlu0 %2743, %v2668
      %v2745 = vpop.permute.xlu0 %2744
      %2748 = vset.pattern.permute.xlu0 0
      %2749 = vperm.xlu0 %2748, %v2669
      %v2750 = vpop.permute.xlu0 %2749
      %2753 = vset.pattern.permute.xlu0 0
      %2754 = vperm.xlu0 %2753, %v2670
      %v2755 = vpop.permute.xlu0 %2754
      %2758 = vset.pattern.permute.xlu0 0
      %2759 = vperm.xlu0 %2758, %v2671
      %v2760 = vpop.permute.xlu0 %2759
      %2763 = vset.pattern.permute.xlu0 0
      %2764 = vperm.xlu0 %2763, %v2672
      %v2765 = vpop.permute.xlu0 %2764
      %2768 = vset.pattern.permute.xlu0 0
      %2769 = vperm.xlu0 %2768, %v2673
      %v2770 = vpop.permute.xlu0 %2769
      %2773 = vset.pattern.permute.xlu0 0
      %2774 = vperm.xlu0 %2773, %v2674
      %v2775 = vpop.permute.xlu0 %2774
      %2778 = vset.pattern.permute.xlu0 0
      %2779 = vperm.xlu0 %2778, %v2675
      %v2780 = vpop.permute.xlu0 %2779
      %2783 = vset.pattern.permute.xlu0 0
      %2784 = vperm.xlu0 %2783, %v2676
      %v2785 = vpop.permute.xlu0 %2784
      %2788 = vset.pattern.permute.xlu0 0
      %2789 = vperm.xlu0 %2788, %v2677
      %v2790 = vpop.permute.xlu0 %2789
      %2793 = vset.pattern.permute.xlu0 0
      %2794 = vperm.xlu0 %2793, %v2678
      %v2795 = vpop.permute.xlu0 %2794
      %2798 = vset.pattern.permute.xlu0 0
      %2799 = vperm.xlu0 %2798, %v2679
      %v2800 = vpop.permute.xlu0 %2799
      %2803 = vset.pattern.permute.xlu0 0
      %2804 = vperm.xlu0 %2803, %v2680
      %v2805 = vpop.permute.xlu0 %2804
      %2808 = vset.pattern.permute.xlu0 0
      %2809 = vperm.xlu0 %2808, %v2681
      %v2810 = vpop.permute.xlu0 %2809
      %2813 = vset.pattern.permute.xlu0 0
      %2814 = vperm.xlu0 %2813, %v2682
      %v2815 = vpop.permute.xlu0 %2814
      %2818 = vset.pattern.permute.xlu0 0
      %2819 = vperm.xlu0 %2818, %v2683
      %v2820 = vpop.permute.xlu0 %2819
      %2823 = vset.pattern.permute.xlu0 0
      %2824 = vperm.xlu0 %2823, %v2684
      %v2825 = vpop.permute.xlu0 %2824
      %2828 = vset.pattern.permute.xlu0 0
      %2829 = vperm.xlu0 %2828, %v2685
      %v2830 = vpop.permute.xlu0 %2829
      %2833 = vset.pattern.permute.xlu0 0
      %2834 = vperm.xlu0 %2833, %v2686
      %v2835 = vpop.permute.xlu0 %2834
      %2838 = vset.pattern.permute.xlu0 0
      %2839 = vperm.xlu0 %2838, %v2687
      %v2840 = vpop.permute.xlu0 %2839
      %2843 = vset.pattern.permute.xlu0 0
      %2844 = vperm.xlu0 %2843, %v2688
      %v2845 = vpop.permute.xlu0 %2844
      %2848 = vset.pattern.permute.xlu0 0
      %2849 = vperm.xlu0 %2848, %v2689
      %v2850 = vpop.permute.xlu0 %2849
      %v2853 = vperm.slane %v2691, 0
      %v2855 = vmul.f32 %v2695, %v2853
      %v2856 = vmul.f32 %v2700, %v2853
      %v2857 = vmul.f32 %v2705, %v2853
      %v2858 = vmul.f32 %v2710, %v2853
      %v2859 = vmul.f32 %v2715, %v2853
      %v2860 = vmul.f32 %v2720, %v2853
      %v2861 = vmul.f32 %v2725, %v2853
      %v2862 = vmul.f32 %v2730, %v2853
      %v2863 = vmul.f32 %v2735, %v2853
      %v2864 = vmul.f32 %v2740, %v2853
      %v2865 = vmul.f32 %v2745, %v2853
      %v2866 = vmul.f32 %v2750, %v2853
      %v2867 = vmul.f32 %v2755, %v2853
      %v2868 = vmul.f32 %v2760, %v2853
      %v2869 = vmul.f32 %v2765, %v2853
      %v2870 = vmul.f32 %v2770, %v2853
      %v2871 = vmul.f32 %v2775, %v2853
      %v2872 = vmul.f32 %v2780, %v2853
      %v2873 = vmul.f32 %v2785, %v2853
      %v2874 = vmul.f32 %v2790, %v2853
      %v2875 = vmul.f32 %v2795, %v2853
      %v2876 = vmul.f32 %v2800, %v2853
      %v2877 = vmul.f32 %v2805, %v2853
      %v2878 = vmul.f32 %v2810, %v2853
      %v2879 = vmul.f32 %v2815, %v2853
      %v2880 = vmul.f32 %v2820, %v2853
      %v2881 = vmul.f32 %v2825, %v2853
      %v2882 = vmul.f32 %v2830, %v2853
      %v2883 = vmul.f32 %v2835, %v2853
      %v2884 = vmul.f32 %v2840, %v2853
      %v2885 = vmul.f32 %v2845, %v2853
      %v2886 = vmul.f32 %v2850, %v2853
      %v2887 = vadd.f32 %v2626, %v2855
      %v2888 = vadd.f32 %v2627, %v2856
      %v2889 = vadd.f32 %v2628, %v2857
      %v2890 = vadd.f32 %v2629, %v2858
      %v2891 = vadd.f32 %v2630, %v2859
      %v2892 = vadd.f32 %v2631, %v2860
      %v2893 = vadd.f32 %v2632, %v2861
      %v2894 = vadd.f32 %v2633, %v2862
      %v2895 = vadd.f32 %v2634, %v2863
      %v2896 = vadd.f32 %v2635, %v2864
      %v2897 = vadd.f32 %v2636, %v2865
      %v2898 = vadd.f32 %v2637, %v2866
      %v2899 = vadd.f32 %v2638, %v2867
      %v2900 = vadd.f32 %v2639, %v2868
      %v2901 = vadd.f32 %v2640, %v2869
      %v2902 = vadd.f32 %v2641, %v2870
      %v2903 = vadd.f32 %v2642, %v2871
      %v2904 = vadd.f32 %v2643, %v2872
      %v2905 = vadd.f32 %v2644, %v2873
      %v2906 = vadd.f32 %v2645, %v2874
      %v2907 = vadd.f32 %v2646, %v2875
      %v2908 = vadd.f32 %v2647, %v2876
      %v2909 = vadd.f32 %v2648, %v2877
      %v2910 = vadd.f32 %v2649, %v2878
      %v2911 = vadd.f32 %v2650, %v2879
      %v2912 = vadd.f32 %v2651, %v2880
      %v2913 = vadd.f32 %v2652, %v2881
      %v2914 = vadd.f32 %v2653, %v2882
      %v2915 = vadd.f32 %v2654, %v2883
      %v2916 = vadd.f32 %v2655, %v2884
      %v2917 = vadd.f32 %v2656, %v2885
      %v2918 = vadd.f32 %v2657, %v2886
      %v2919 = vld [vmem:[%s1874 + $0x4] sm:$0xff]
      %v2920 = vld [vmem:[%s1874 + $0xc] sm:$0xff]
      %v2921 = vld [vmem:[%s1874 + $0x1c] sm:$0xff]
      %v2922 = vld [vmem:[%s1874 + $0x24] sm:$0xff]
      %v2923 = vld [vmem:[%s1874 + $0x34] sm:$0xff]
      %v2924 = vld [vmem:[%s1874 + $0x3c] sm:$0xff]
      %v2925 = vld [vmem:[%s1874 + $0x4c] sm:$0xff]
      %v2926 = vld [vmem:[%s1874 + $0x54] sm:$0xff]
      %v2927 = vld [vmem:[%s1874 + $0x64] sm:$0xff]
      %v2928 = vld [vmem:[%s1874 + $0x6c] sm:$0xff]
      %v2929 = vld [vmem:[%s1874 + $0x7c] sm:$0xff]
      %v2930 = vld [vmem:[%s1874 + $0x84] sm:$0xff]
      %v2931 = vld [vmem:[%s1874 + $0x94] sm:$0xff]
      %v2932 = vld [vmem:[%s1874 + $0x9c] sm:$0xff]
      %v2933 = vld [vmem:[%s1874 + $0xac] sm:$0xff]
      %v2934 = vld [vmem:[%s1874 + $0xb4] sm:$0xff]
      %v2935 = vld [vmem:[%s1874 + $0xc4] sm:$0xff]
      %v2936 = vld [vmem:[%s1874 + $0xcc] sm:$0xff]
      %v2937 = vld [vmem:[%s1874 + $0xdc] sm:$0xff]
      %v2938 = vld [vmem:[%s1874 + $0xe4] sm:$0xff]
      %v2939 = vld [vmem:[%s1874 + $0xf4] sm:$0xff]
      %v2940 = vld [vmem:[%s1874 + $0xfc] sm:$0xff]
      %v2941 = vld [vmem:[%s1874 + $0x10c] sm:$0xff]
      %v2942 = vld [vmem:[%s1874 + $0x114] sm:$0xff]
      %v2943 = vld [vmem:[%s1874 + $0x124] sm:$0xff]
      %v2944 = vld [vmem:[%s1874 + $0x12c] sm:$0xff]
      %v2945 = vld [vmem:[%s1874 + $0x13c] sm:$0xff]
      %v2946 = vld [vmem:[%s1874 + $0x144] sm:$0xff]
      %v2947 = vld [vmem:[%s1874 + $0x154] sm:$0xff]
      %v2948 = vld [vmem:[%s1874 + $0x15c] sm:$0xff]
      %v2949 = vld [vmem:[%s1874 + $0x16c] sm:$0xff]
      %v2950 = vld [vmem:[%s1874 + $0x174] sm:$0xff]
      %s2951 = scalar_lea.vmem %s2, 9
      %v2952 = vld [vmem:[%s2951] sm:$0x1]
      %2954 = vset.pattern.permute.xlu0 0
      %2955 = vperm.xlu0 %2954, %v2919
      %v2956 = vpop.permute.xlu0 %2955
      %2959 = vset.pattern.permute.xlu0 0
      %2960 = vperm.xlu0 %2959, %v2920
      %v2961 = vpop.permute.xlu0 %2960
      %2964 = vset.pattern.permute.xlu0 0
      %2965 = vperm.xlu0 %2964, %v2921
      %v2966 = vpop.permute.xlu0 %2965
      %2969 = vset.pattern.permute.xlu0 0
      %2970 = vperm.xlu0 %2969, %v2922
      %v2971 = vpop.permute.xlu0 %2970
      %2974 = vset.pattern.permute.xlu0 0
      %2975 = vperm.xlu0 %2974, %v2923
      %v2976 = vpop.permute.xlu0 %2975
      %2979 = vset.pattern.permute.xlu0 0
      %2980 = vperm.xlu0 %2979, %v2924
      %v2981 = vpop.permute.xlu0 %2980
      %2984 = vset.pattern.permute.xlu0 0
      %2985 = vperm.xlu0 %2984, %v2925
      %v2986 = vpop.permute.xlu0 %2985
      %2989 = vset.pattern.permute.xlu0 0
      %2990 = vperm.xlu0 %2989, %v2926
      %v2991 = vpop.permute.xlu0 %2990
      %2994 = vset.pattern.permute.xlu0 0
      %2995 = vperm.xlu0 %2994, %v2927
      %v2996 = vpop.permute.xlu0 %2995
      %2999 = vset.pattern.permute.xlu0 0
      %3000 = vperm.xlu0 %2999, %v2928
      %v3001 = vpop.permute.xlu0 %3000
      %3004 = vset.pattern.permute.xlu0 0
      %3005 = vperm.xlu0 %3004, %v2929
      %v3006 = vpop.permute.xlu0 %3005
      %3009 = vset.pattern.permute.xlu0 0
      %3010 = vperm.xlu0 %3009, %v2930
      %v3011 = vpop.permute.xlu0 %3010
      %3014 = vset.pattern.permute.xlu0 0
      %3015 = vperm.xlu0 %3014, %v2931
      %v3016 = vpop.permute.xlu0 %3015
      %3019 = vset.pattern.permute.xlu0 0
      %3020 = vperm.xlu0 %3019, %v2932
      %v3021 = vpop.permute.xlu0 %3020
      %3024 = vset.pattern.permute.xlu0 0
      %3025 = vperm.xlu0 %3024, %v2933
      %v3026 = vpop.permute.xlu0 %3025
      %3029 = vset.pattern.permute.xlu0 0
      %3030 = vperm.xlu0 %3029, %v2934
      %v3031 = vpop.permute.xlu0 %3030
      %3034 = vset.pattern.permute.xlu0 0
      %3035 = vperm.xlu0 %3034, %v2935
      %v3036 = vpop.permute.xlu0 %3035
      %3039 = vset.pattern.permute.xlu0 0
      %3040 = vperm.xlu0 %3039, %v2936
      %v3041 = vpop.permute.xlu0 %3040
      %3044 = vset.pattern.permute.xlu0 0
      %3045 = vperm.xlu0 %3044, %v2937
      %v3046 = vpop.permute.xlu0 %3045
      %3049 = vset.pattern.permute.xlu0 0
      %3050 = vperm.xlu0 %3049, %v2938
      %v3051 = vpop.permute.xlu0 %3050
      %3054 = vset.pattern.permute.xlu0 0
      %3055 = vperm.xlu0 %3054, %v2939
      %v3056 = vpop.permute.xlu0 %3055
      %3059 = vset.pattern.permute.xlu0 0
      %3060 = vperm.xlu0 %3059, %v2940
      %v3061 = vpop.permute.xlu0 %3060
      %3064 = vset.pattern.permute.xlu0 0
      %3065 = vperm.xlu0 %3064, %v2941
      %v3066 = vpop.permute.xlu0 %3065
      %3069 = vset.pattern.permute.xlu0 0
      %3070 = vperm.xlu0 %3069, %v2942
      %v3071 = vpop.permute.xlu0 %3070
      %3074 = vset.pattern.permute.xlu0 0
      %3075 = vperm.xlu0 %3074, %v2943
      %v3076 = vpop.permute.xlu0 %3075
      %3079 = vset.pattern.permute.xlu0 0
      %3080 = vperm.xlu0 %3079, %v2944
      %v3081 = vpop.permute.xlu0 %3080
      %3084 = vset.pattern.permute.xlu0 0
      %3085 = vperm.xlu0 %3084, %v2945
      %v3086 = vpop.permute.xlu0 %3085
      %3089 = vset.pattern.permute.xlu0 0
      %3090 = vperm.xlu0 %3089, %v2946
      %v3091 = vpop.permute.xlu0 %3090
      %3094 = vset.pattern.permute.xlu0 0
      %3095 = vperm.xlu0 %3094, %v2947
      %v3096 = vpop.permute.xlu0 %3095
      %3099 = vset.pattern.permute.xlu0 0
      %3100 = vperm.xlu0 %3099, %v2948
      %v3101 = vpop.permute.xlu0 %3100
      %3104 = vset.pattern.permute.xlu0 0
      %3105 = vperm.xlu0 %3104, %v2949
      %v3106 = vpop.permute.xlu0 %3105
      %3109 = vset.pattern.permute.xlu0 0
      %3110 = vperm.xlu0 %3109, %v2950
      %v3111 = vpop.permute.xlu0 %3110
      %v3114 = vperm.slane %v2952, 0
      %v3116 = vmul.f32 %v2956, %v3114
      %v3117 = vmul.f32 %v2961, %v3114
      %v3118 = vmul.f32 %v2966, %v3114
      %v3119 = vmul.f32 %v2971, %v3114
      %v3120 = vmul.f32 %v2976, %v3114
      %v3121 = vmul.f32 %v2981, %v3114
      %v3122 = vmul.f32 %v2986, %v3114
      %v3123 = vmul.f32 %v2991, %v3114
      %v3124 = vmul.f32 %v2996, %v3114
      %v3125 = vmul.f32 %v3001, %v3114
      %v3126 = vmul.f32 %v3006, %v3114
      %v3127 = vmul.f32 %v3011, %v3114
      %v3128 = vmul.f32 %v3016, %v3114
      %v3129 = vmul.f32 %v3021, %v3114
      %v3130 = vmul.f32 %v3026, %v3114
      %v3131 = vmul.f32 %v3031, %v3114
      %v3132 = vmul.f32 %v3036, %v3114
      %v3133 = vmul.f32 %v3041, %v3114
      %v3134 = vmul.f32 %v3046, %v3114
      %v3135 = vmul.f32 %v3051, %v3114
      %v3136 = vmul.f32 %v3056, %v3114
      %v3137 = vmul.f32 %v3061, %v3114
      %v3138 = vmul.f32 %v3066, %v3114
      %v3139 = vmul.f32 %v3071, %v3114
      %v3140 = vmul.f32 %v3076, %v3114
      %v3141 = vmul.f32 %v3081, %v3114
      %v3142 = vmul.f32 %v3086, %v3114
      %v3143 = vmul.f32 %v3091, %v3114
      %v3144 = vmul.f32 %v3096, %v3114
      %v3145 = vmul.f32 %v3101, %v3114
      %v3146 = vmul.f32 %v3106, %v3114
      %v3147 = vmul.f32 %v3111, %v3114
      %v3148 = vadd.f32 %v2887, %v3116
      %v3149 = vadd.f32 %v2888, %v3117
      %v3150 = vadd.f32 %v2889, %v3118
      %v3151 = vadd.f32 %v2890, %v3119
      %v3152 = vadd.f32 %v2891, %v3120
      %v3153 = vadd.f32 %v2892, %v3121
      %v3154 = vadd.f32 %v2893, %v3122
      %v3155 = vadd.f32 %v2894, %v3123
      %v3156 = vadd.f32 %v2895, %v3124
      %v3157 = vadd.f32 %v2896, %v3125
      %v3158 = vadd.f32 %v2897, %v3126
      %v3159 = vadd.f32 %v2898, %v3127
      %v3160 = vadd.f32 %v2899, %v3128
      %v3161 = vadd.f32 %v2900, %v3129
      %v3162 = vadd.f32 %v2901, %v3130
      %v3163 = vadd.f32 %v2902, %v3131
      %v3164 = vadd.f32 %v2903, %v3132
      %v3165 = vadd.f32 %v2904, %v3133
      %v3166 = vadd.f32 %v2905, %v3134
      %v3167 = vadd.f32 %v2906, %v3135
      %v3168 = vadd.f32 %v2907, %v3136
      %v3169 = vadd.f32 %v2908, %v3137
      %v3170 = vadd.f32 %v2909, %v3138
      %v3171 = vadd.f32 %v2910, %v3139
      %v3172 = vadd.f32 %v2911, %v3140
      %v3173 = vadd.f32 %v2912, %v3141
      %v3174 = vadd.f32 %v2913, %v3142
      %v3175 = vadd.f32 %v2914, %v3143
      %v3176 = vadd.f32 %v2915, %v3144
      %v3177 = vadd.f32 %v2916, %v3145
      %v3178 = vadd.f32 %v2917, %v3146
      %v3179 = vadd.f32 %v2918, %v3147
      %s3180 = scalar_lea.vmem %s449, 48
      %v3181 = vld [vmem:[%s3180] sm:$0xff]
      %v3182 = vld [vmem:[%s3180 + $0x8] sm:$0xff]
      %v3183 = vld [vmem:[%s3180 + $0x18] sm:$0xff]
      %v3184 = vld [vmem:[%s3180 + $0x20] sm:$0xff]
      %v3185 = vld [vmem:[%s3180 + $0x30] sm:$0xff]
      %v3186 = vld [vmem:[%s3180 + $0x38] sm:$0xff]
      %v3187 = vld [vmem:[%s3180 + $0x48] sm:$0xff]
      %v3188 = vld [vmem:[%s3180 + $0x50] sm:$0xff]
      %v3189 = vld [vmem:[%s3180 + $0x60] sm:$0xff]
      %v3190 = vld [vmem:[%s3180 + $0x68] sm:$0xff]
      %v3191 = vld [vmem:[%s3180 + $0x78] sm:$0xff]
      %v3192 = vld [vmem:[%s3180 + $0x80] sm:$0xff]
      %v3193 = vld [vmem:[%s3180 + $0x90] sm:$0xff]
      %v3194 = vld [vmem:[%s3180 + $0x98] sm:$0xff]
      %v3195 = vld [vmem:[%s3180 + $0xa8] sm:$0xff]
      %v3196 = vld [vmem:[%s3180 + $0xb0] sm:$0xff]
      %v3197 = vld [vmem:[%s3180 + $0xc0] sm:$0xff]
      %v3198 = vld [vmem:[%s3180 + $0xc8] sm:$0xff]
      %v3199 = vld [vmem:[%s3180 + $0xd8] sm:$0xff]
      %v3200 = vld [vmem:[%s3180 + $0xe0] sm:$0xff]
      %v3201 = vld [vmem:[%s3180 + $0xf0] sm:$0xff]
      %v3202 = vld [vmem:[%s3180 + $0xf8] sm:$0xff]
      %v3203 = vld [vmem:[%s3180 + $0x108] sm:$0xff]
      %v3204 = vld [vmem:[%s3180 + $0x110] sm:$0xff]
      %v3205 = vld [vmem:[%s3180 + $0x120] sm:$0xff]
      %v3206 = vld [vmem:[%s3180 + $0x128] sm:$0xff]
      %v3207 = vld [vmem:[%s3180 + $0x138] sm:$0xff]
      %v3208 = vld [vmem:[%s3180 + $0x140] sm:$0xff]
      %v3209 = vld [vmem:[%s3180 + $0x150] sm:$0xff]
      %v3210 = vld [vmem:[%s3180 + $0x158] sm:$0xff]
      %v3211 = vld [vmem:[%s3180 + $0x168] sm:$0xff]
      %v3212 = vld [vmem:[%s3180 + $0x170] sm:$0xff]
      %s3213 = scalar_lea.vmem %s2, 10
      %v3214 = vld [vmem:[%s3213] sm:$0x1]
      %3216 = vset.pattern.permute.xlu0 0
      %3217 = vperm.xlu0 %3216, %v3181
      %v3218 = vpop.permute.xlu0 %3217
      %3221 = vset.pattern.permute.xlu0 0
      %3222 = vperm.xlu0 %3221, %v3182
      %v3223 = vpop.permute.xlu0 %3222
      %3226 = vset.pattern.permute.xlu0 0
      %3227 = vperm.xlu0 %3226, %v3183
      %v3228 = vpop.permute.xlu0 %3227
      %3231 = vset.pattern.permute.xlu0 0
      %3232 = vperm.xlu0 %3231, %v3184
      %v3233 = vpop.permute.xlu0 %3232
      %3236 = vset.pattern.permute.xlu0 0
      %3237 = vperm.xlu0 %3236, %v3185
      %v3238 = vpop.permute.xlu0 %3237
      %3241 = vset.pattern.permute.xlu0 0
      %3242 = vperm.xlu0 %3241, %v3186
      %v3243 = vpop.permute.xlu0 %3242
      %3246 = vset.pattern.permute.xlu0 0
      %3247 = vperm.xlu0 %3246, %v3187
      %v3248 = vpop.permute.xlu0 %3247
      %3251 = vset.pattern.permute.xlu0 0
      %3252 = vperm.xlu0 %3251, %v3188
      %v3253 = vpop.permute.xlu0 %3252
      %3256 = vset.pattern.permute.xlu0 0
      %3257 = vperm.xlu0 %3256, %v3189
      %v3258 = vpop.permute.xlu0 %3257
      %3261 = vset.pattern.permute.xlu0 0
      %3262 = vperm.xlu0 %3261, %v3190
      %v3263 = vpop.permute.xlu0 %3262
      %3266 = vset.pattern.permute.xlu0 0
      %3267 = vperm.xlu0 %3266, %v3191
      %v3268 = vpop.permute.xlu0 %3267
      %3271 = vset.pattern.permute.xlu0 0
      %3272 = vperm.xlu0 %3271, %v3192
      %v3273 = vpop.permute.xlu0 %3272
      %3276 = vset.pattern.permute.xlu0 0
      %3277 = vperm.xlu0 %3276, %v3193
      %v3278 = vpop.permute.xlu0 %3277
      %3281 = vset.pattern.permute.xlu0 0
      %3282 = vperm.xlu0 %3281, %v3194
      %v3283 = vpop.permute.xlu0 %3282
      %3286 = vset.pattern.permute.xlu0 0
      %3287 = vperm.xlu0 %3286, %v3195
      %v3288 = vpop.permute.xlu0 %3287
      %3291 = vset.pattern.permute.xlu0 0
      %3292 = vperm.xlu0 %3291, %v3196
      %v3293 = vpop.permute.xlu0 %3292
      %3296 = vset.pattern.permute.xlu0 0
      %3297 = vperm.xlu0 %3296, %v3197
      %v3298 = vpop.permute.xlu0 %3297
      %3301 = vset.pattern.permute.xlu0 0
      %3302 = vperm.xlu0 %3301, %v3198
      %v3303 = vpop.permute.xlu0 %3302
      %3306 = vset.pattern.permute.xlu0 0
      %3307 = vperm.xlu0 %3306, %v3199
      %v3308 = vpop.permute.xlu0 %3307
      %3311 = vset.pattern.permute.xlu0 0
      %3312 = vperm.xlu0 %3311, %v3200
      %v3313 = vpop.permute.xlu0 %3312
      %3316 = vset.pattern.permute.xlu0 0
      %3317 = vperm.xlu0 %3316, %v3201
      %v3318 = vpop.permute.xlu0 %3317
      %3321 = vset.pattern.permute.xlu0 0
      %3322 = vperm.xlu0 %3321, %v3202
      %v3323 = vpop.permute.xlu0 %3322
      %3326 = vset.pattern.permute.xlu0 0
      %3327 = vperm.xlu0 %3326, %v3203
      %v3328 = vpop.permute.xlu0 %3327
      %3331 = vset.pattern.permute.xlu0 0
      %3332 = vperm.xlu0 %3331, %v3204
      %v3333 = vpop.permute.xlu0 %3332
      %3336 = vset.pattern.permute.xlu0 0
      %3337 = vperm.xlu0 %3336, %v3205
      %v3338 = vpop.permute.xlu0 %3337
      %3341 = vset.pattern.permute.xlu0 0
      %3342 = vperm.xlu0 %3341, %v3206
      %v3343 = vpop.permute.xlu0 %3342
      %3346 = vset.pattern.permute.xlu0 0
      %3347 = vperm.xlu0 %3346, %v3207
      %v3348 = vpop.permute.xlu0 %3347
      %3351 = vset.pattern.permute.xlu0 0
      %3352 = vperm.xlu0 %3351, %v3208
      %v3353 = vpop.permute.xlu0 %3352
      %3356 = vset.pattern.permute.xlu0 0
      %3357 = vperm.xlu0 %3356, %v3209
      %v3358 = vpop.permute.xlu0 %3357
      %3361 = vset.pattern.permute.xlu0 0
      %3362 = vperm.xlu0 %3361, %v3210
      %v3363 = vpop.permute.xlu0 %3362
      %3366 = vset.pattern.permute.xlu0 0
      %3367 = vperm.xlu0 %3366, %v3211
      %v3368 = vpop.permute.xlu0 %3367
      %3371 = vset.pattern.permute.xlu0 0
      %3372 = vperm.xlu0 %3371, %v3212
      %v3373 = vpop.permute.xlu0 %3372
      %v3376 = vperm.slane %v3214, 0
      %v3378 = vmul.f32 %v3218, %v3376
      %v3379 = vmul.f32 %v3223, %v3376
      %v3380 = vmul.f32 %v3228, %v3376
      %v3381 = vmul.f32 %v3233, %v3376
      %v3382 = vmul.f32 %v3238, %v3376
      %v3383 = vmul.f32 %v3243, %v3376
      %v3384 = vmul.f32 %v3248, %v3376
      %v3385 = vmul.f32 %v3253, %v3376
      %v3386 = vmul.f32 %v3258, %v3376
      %v3387 = vmul.f32 %v3263, %v3376
      %v3388 = vmul.f32 %v3268, %v3376
      %v3389 = vmul.f32 %v3273, %v3376
      %v3390 = vmul.f32 %v3278, %v3376
      %v3391 = vmul.f32 %v3283, %v3376
      %v3392 = vmul.f32 %v3288, %v3376
      %v3393 = vmul.f32 %v3293, %v3376
      %v3394 = vmul.f32 %v3298, %v3376
      %v3395 = vmul.f32 %v3303, %v3376
      %v3396 = vmul.f32 %v3308, %v3376
      %v3397 = vmul.f32 %v3313, %v3376
      %v3398 = vmul.f32 %v3318, %v3376
      %v3399 = vmul.f32 %v3323, %v3376
      %v3400 = vmul.f32 %v3328, %v3376
      %v3401 = vmul.f32 %v3333, %v3376
      %v3402 = vmul.f32 %v3338, %v3376
      %v3403 = vmul.f32 %v3343, %v3376
      %v3404 = vmul.f32 %v3348, %v3376
      %v3405 = vmul.f32 %v3353, %v3376
      %v3406 = vmul.f32 %v3358, %v3376
      %v3407 = vmul.f32 %v3363, %v3376
      %v3408 = vmul.f32 %v3368, %v3376
      %v3409 = vmul.f32 %v3373, %v3376
      %v3410 = vadd.f32 %v3148, %v3378
      %v3411 = vadd.f32 %v3149, %v3379
      %v3412 = vadd.f32 %v3150, %v3380
      %v3413 = vadd.f32 %v3151, %v3381
      %v3414 = vadd.f32 %v3152, %v3382
      %v3415 = vadd.f32 %v3153, %v3383
      %v3416 = vadd.f32 %v3154, %v3384
      %v3417 = vadd.f32 %v3155, %v3385
      %v3418 = vadd.f32 %v3156, %v3386
      %v3419 = vadd.f32 %v3157, %v3387
      %v3420 = vadd.f32 %v3158, %v3388
      %v3421 = vadd.f32 %v3159, %v3389
      %v3422 = vadd.f32 %v3160, %v3390
      %v3423 = vadd.f32 %v3161, %v3391
      %v3424 = vadd.f32 %v3162, %v3392
      %v3425 = vadd.f32 %v3163, %v3393
      %v3426 = vadd.f32 %v3164, %v3394
      %v3427 = vadd.f32 %v3165, %v3395
      %v3428 = vadd.f32 %v3166, %v3396
      %v3429 = vadd.f32 %v3167, %v3397
      %v3430 = vadd.f32 %v3168, %v3398
      %v3431 = vadd.f32 %v3169, %v3399
      %v3432 = vadd.f32 %v3170, %v3400
      %v3433 = vadd.f32 %v3171, %v3401
      %v3434 = vadd.f32 %v3172, %v3402
      %v3435 = vadd.f32 %v3173, %v3403
      %v3436 = vadd.f32 %v3174, %v3404
      %v3437 = vadd.f32 %v3175, %v3405
      %v3438 = vadd.f32 %v3176, %v3406
      %v3439 = vadd.f32 %v3177, %v3407
      %v3440 = vadd.f32 %v3178, %v3408
      %v3441 = vadd.f32 %v3179, %v3409
      %v3442 = vld [vmem:[%s3180 + $0x1] sm:$0xff]
      %v3443 = vld [vmem:[%s3180 + $0x9] sm:$0xff]
      %v3444 = vld [vmem:[%s3180 + $0x19] sm:$0xff]
      %v3445 = vld [vmem:[%s3180 + $0x21] sm:$0xff]
      %v3446 = vld [vmem:[%s3180 + $0x31] sm:$0xff]
      %v3447 = vld [vmem:[%s3180 + $0x39] sm:$0xff]
      %v3448 = vld [vmem:[%s3180 + $0x49] sm:$0xff]
      %v3449 = vld [vmem:[%s3180 + $0x51] sm:$0xff]
      %v3450 = vld [vmem:[%s3180 + $0x61] sm:$0xff]
      %v3451 = vld [vmem:[%s3180 + $0x69] sm:$0xff]
      %v3452 = vld [vmem:[%s3180 + $0x79] sm:$0xff]
      %v3453 = vld [vmem:[%s3180 + $0x81] sm:$0xff]
      %v3454 = vld [vmem:[%s3180 + $0x91] sm:$0xff]
      %v3455 = vld [vmem:[%s3180 + $0x99] sm:$0xff]
      %v3456 = vld [vmem:[%s3180 + $0xa9] sm:$0xff]
      %v3457 = vld [vmem:[%s3180 + $0xb1] sm:$0xff]
      %v3458 = vld [vmem:[%s3180 + $0xc1] sm:$0xff]
      %v3459 = vld [vmem:[%s3180 + $0xc9] sm:$0xff]
      %v3460 = vld [vmem:[%s3180 + $0xd9] sm:$0xff]
      %v3461 = vld [vmem:[%s3180 + $0xe1] sm:$0xff]
      %v3462 = vld [vmem:[%s3180 + $0xf1] sm:$0xff]
      %v3463 = vld [vmem:[%s3180 + $0xf9] sm:$0xff]
      %v3464 = vld [vmem:[%s3180 + $0x109] sm:$0xff]
      %v3465 = vld [vmem:[%s3180 + $0x111] sm:$0xff]
      %v3466 = vld [vmem:[%s3180 + $0x121] sm:$0xff]
      %v3467 = vld [vmem:[%s3180 + $0x129] sm:$0xff]
      %v3468 = vld [vmem:[%s3180 + $0x139] sm:$0xff]
      %v3469 = vld [vmem:[%s3180 + $0x141] sm:$0xff]
      %v3470 = vld [vmem:[%s3180 + $0x151] sm:$0xff]
      %v3471 = vld [vmem:[%s3180 + $0x159] sm:$0xff]
      %v3472 = vld [vmem:[%s3180 + $0x169] sm:$0xff]
      %v3473 = vld [vmem:[%s3180 + $0x171] sm:$0xff]
      %s3474 = scalar_lea.vmem %s2, 11
      %v3475 = vld [vmem:[%s3474] sm:$0x1]
      %3477 = vset.pattern.permute.xlu0 0
      %3478 = vperm.xlu0 %3477, %v3442
      %v3479 = vpop.permute.xlu0 %3478
      %3482 = vset.pattern.permute.xlu0 0
      %3483 = vperm.xlu0 %3482, %v3443
      %v3484 = vpop.permute.xlu0 %3483
      %3487 = vset.pattern.permute.xlu0 0
      %3488 = vperm.xlu0 %3487, %v3444
      %v3489 = vpop.permute.xlu0 %3488
      %3492 = vset.pattern.permute.xlu0 0
      %3493 = vperm.xlu0 %3492, %v3445
      %v3494 = vpop.permute.xlu0 %3493
      %3497 = vset.pattern.permute.xlu0 0
      %3498 = vperm.xlu0 %3497, %v3446
      %v3499 = vpop.permute.xlu0 %3498
      %3502 = vset.pattern.permute.xlu0 0
      %3503 = vperm.xlu0 %3502, %v3447
      %v3504 = vpop.permute.xlu0 %3503
      %3507 = vset.pattern.permute.xlu0 0
      %3508 = vperm.xlu0 %3507, %v3448
      %v3509 = vpop.permute.xlu0 %3508
      %3512 = vset.pattern.permute.xlu0 0
      %3513 = vperm.xlu0 %3512, %v3449
      %v3514 = vpop.permute.xlu0 %3513
      %3517 = vset.pattern.permute.xlu0 0
      %3518 = vperm.xlu0 %3517, %v3450
      %v3519 = vpop.permute.xlu0 %3518
      %3522 = vset.pattern.permute.xlu0 0
      %3523 = vperm.xlu0 %3522, %v3451
      %v3524 = vpop.permute.xlu0 %3523
      %3527 = vset.pattern.permute.xlu0 0
      %3528 = vperm.xlu0 %3527, %v3452
      %v3529 = vpop.permute.xlu0 %3528
      %3532 = vset.pattern.permute.xlu0 0
      %3533 = vperm.xlu0 %3532, %v3453
      %v3534 = vpop.permute.xlu0 %3533
      %3537 = vset.pattern.permute.xlu0 0
      %3538 = vperm.xlu0 %3537, %v3454
      %v3539 = vpop.permute.xlu0 %3538
      %3542 = vset.pattern.permute.xlu0 0
      %3543 = vperm.xlu0 %3542, %v3455
      %v3544 = vpop.permute.xlu0 %3543
      %3547 = vset.pattern.permute.xlu0 0
      %3548 = vperm.xlu0 %3547, %v3456
      %v3549 = vpop.permute.xlu0 %3548
      %3552 = vset.pattern.permute.xlu0 0
      %3553 = vperm.xlu0 %3552, %v3457
      %v3554 = vpop.permute.xlu0 %3553
      %3557 = vset.pattern.permute.xlu0 0
      %3558 = vperm.xlu0 %3557, %v3458
      %v3559 = vpop.permute.xlu0 %3558
      %3562 = vset.pattern.permute.xlu0 0
      %3563 = vperm.xlu0 %3562, %v3459
      %v3564 = vpop.permute.xlu0 %3563
      %3567 = vset.pattern.permute.xlu0 0
      %3568 = vperm.xlu0 %3567, %v3460
      %v3569 = vpop.permute.xlu0 %3568
      %3572 = vset.pattern.permute.xlu0 0
      %3573 = vperm.xlu0 %3572, %v3461
      %v3574 = vpop.permute.xlu0 %3573
      %3577 = vset.pattern.permute.xlu0 0
      %3578 = vperm.xlu0 %3577, %v3462
      %v3579 = vpop.permute.xlu0 %3578
      %3582 = vset.pattern.permute.xlu0 0
      %3583 = vperm.xlu0 %3582, %v3463
      %v3584 = vpop.permute.xlu0 %3583
      %3587 = vset.pattern.permute.xlu0 0
      %3588 = vperm.xlu0 %3587, %v3464
      %v3589 = vpop.permute.xlu0 %3588
      %3592 = vset.pattern.permute.xlu0 0
      %3593 = vperm.xlu0 %3592, %v3465
      %v3594 = vpop.permute.xlu0 %3593
      %3597 = vset.pattern.permute.xlu0 0
      %3598 = vperm.xlu0 %3597, %v3466
      %v3599 = vpop.permute.xlu0 %3598
      %3602 = vset.pattern.permute.xlu0 0
      %3603 = vperm.xlu0 %3602, %v3467
      %v3604 = vpop.permute.xlu0 %3603
      %3607 = vset.pattern.permute.xlu0 0
      %3608 = vperm.xlu0 %3607, %v3468
      %v3609 = vpop.permute.xlu0 %3608
      %3612 = vset.pattern.permute.xlu0 0
      %3613 = vperm.xlu0 %3612, %v3469
      %v3614 = vpop.permute.xlu0 %3613
      %3617 = vset.pattern.permute.xlu0 0
      %3618 = vperm.xlu0 %3617, %v3470
      %v3619 = vpop.permute.xlu0 %3618
      %3622 = vset.pattern.permute.xlu0 0
      %3623 = vperm.xlu0 %3622, %v3471
      %v3624 = vpop.permute.xlu0 %3623
      %3627 = vset.pattern.permute.xlu0 0
      %3628 = vperm.xlu0 %3627, %v3472
      %v3629 = vpop.permute.xlu0 %3628
      %3632 = vset.pattern.permute.xlu0 0
      %3633 = vperm.xlu0 %3632, %v3473
      %v3634 = vpop.permute.xlu0 %3633
      %v3637 = vperm.slane %v3475, 0
      %v3639 = vmul.f32 %v3479, %v3637
      %v3640 = vmul.f32 %v3484, %v3637
      %v3641 = vmul.f32 %v3489, %v3637
      %v3642 = vmul.f32 %v3494, %v3637
      %v3643 = vmul.f32 %v3499, %v3637
      %v3644 = vmul.f32 %v3504, %v3637
      %v3645 = vmul.f32 %v3509, %v3637
      %v3646 = vmul.f32 %v3514, %v3637
      %v3647 = vmul.f32 %v3519, %v3637
      %v3648 = vmul.f32 %v3524, %v3637
      %v3649 = vmul.f32 %v3529, %v3637
      %v3650 = vmul.f32 %v3534, %v3637
      %v3651 = vmul.f32 %v3539, %v3637
      %v3652 = vmul.f32 %v3544, %v3637
      %v3653 = vmul.f32 %v3549, %v3637
      %v3654 = vmul.f32 %v3554, %v3637
      %v3655 = vmul.f32 %v3559, %v3637
      %v3656 = vmul.f32 %v3564, %v3637
      %v3657 = vmul.f32 %v3569, %v3637
      %v3658 = vmul.f32 %v3574, %v3637
      %v3659 = vmul.f32 %v3579, %v3637
      %v3660 = vmul.f32 %v3584, %v3637
      %v3661 = vmul.f32 %v3589, %v3637
      %v3662 = vmul.f32 %v3594, %v3637
      %v3663 = vmul.f32 %v3599, %v3637
      %v3664 = vmul.f32 %v3604, %v3637
      %v3665 = vmul.f32 %v3609, %v3637
      %v3666 = vmul.f32 %v3614, %v3637
      %v3667 = vmul.f32 %v3619, %v3637
      %v3668 = vmul.f32 %v3624, %v3637
      %v3669 = vmul.f32 %v3629, %v3637
      %v3670 = vmul.f32 %v3634, %v3637
      %v3671 = vadd.f32 %v3410, %v3639
      %v3672 = vadd.f32 %v3411, %v3640
      %v3673 = vadd.f32 %v3412, %v3641
      %v3674 = vadd.f32 %v3413, %v3642
      %v3675 = vadd.f32 %v3414, %v3643
      %v3676 = vadd.f32 %v3415, %v3644
      %v3677 = vadd.f32 %v3416, %v3645
      %v3678 = vadd.f32 %v3417, %v3646
      %v3679 = vadd.f32 %v3418, %v3647
      %v3680 = vadd.f32 %v3419, %v3648
      %v3681 = vadd.f32 %v3420, %v3649
      %v3682 = vadd.f32 %v3421, %v3650
      %v3683 = vadd.f32 %v3422, %v3651
      %v3684 = vadd.f32 %v3423, %v3652
      %v3685 = vadd.f32 %v3424, %v3653
      %v3686 = vadd.f32 %v3425, %v3654
      %v3687 = vadd.f32 %v3426, %v3655
      %v3688 = vadd.f32 %v3427, %v3656
      %v3689 = vadd.f32 %v3428, %v3657
      %v3690 = vadd.f32 %v3429, %v3658
      %v3691 = vadd.f32 %v3430, %v3659
      %v3692 = vadd.f32 %v3431, %v3660
      %v3693 = vadd.f32 %v3432, %v3661
      %v3694 = vadd.f32 %v3433, %v3662
      %v3695 = vadd.f32 %v3434, %v3663
      %v3696 = vadd.f32 %v3435, %v3664
      %v3697 = vadd.f32 %v3436, %v3665
      %v3698 = vadd.f32 %v3437, %v3666
      %v3699 = vadd.f32 %v3438, %v3667
      %v3700 = vadd.f32 %v3439, %v3668
      %v3701 = vadd.f32 %v3440, %v3669
      %v3702 = vadd.f32 %v3441, %v3670
      %v3703 = vld [vmem:[%s3180 + $0x2] sm:$0xff]
      %v3704 = vld [vmem:[%s3180 + $0xa] sm:$0xff]
      %v3705 = vld [vmem:[%s3180 + $0x1a] sm:$0xff]
      %v3706 = vld [vmem:[%s3180 + $0x22] sm:$0xff]
      %v3707 = vld [vmem:[%s3180 + $0x32] sm:$0xff]
      %v3708 = vld [vmem:[%s3180 + $0x3a] sm:$0xff]
      %v3709 = vld [vmem:[%s3180 + $0x4a] sm:$0xff]
      %v3710 = vld [vmem:[%s3180 + $0x52] sm:$0xff]
      %v3711 = vld [vmem:[%s3180 + $0x62] sm:$0xff]
      %v3712 = vld [vmem:[%s3180 + $0x6a] sm:$0xff]
      %v3713 = vld [vmem:[%s3180 + $0x7a] sm:$0xff]
      %v3714 = vld [vmem:[%s3180 + $0x82] sm:$0xff]
      %v3715 = vld [vmem:[%s3180 + $0x92] sm:$0xff]
      %v3716 = vld [vmem:[%s3180 + $0x9a] sm:$0xff]
      %v3717 = vld [vmem:[%s3180 + $0xaa] sm:$0xff]
      %v3718 = vld [vmem:[%s3180 + $0xb2] sm:$0xff]
      %v3719 = vld [vmem:[%s3180 + $0xc2] sm:$0xff]
      %v3720 = vld [vmem:[%s3180 + $0xca] sm:$0xff]
      %v3721 = vld [vmem:[%s3180 + $0xda] sm:$0xff]
      %v3722 = vld [vmem:[%s3180 + $0xe2] sm:$0xff]
      %v3723 = vld [vmem:[%s3180 + $0xf2] sm:$0xff]
      %v3724 = vld [vmem:[%s3180 + $0xfa] sm:$0xff]
      %v3725 = vld [vmem:[%s3180 + $0x10a] sm:$0xff]
      %v3726 = vld [vmem:[%s3180 + $0x112] sm:$0xff]
      %v3727 = vld [vmem:[%s3180 + $0x122] sm:$0xff]
      %v3728 = vld [vmem:[%s3180 + $0x12a] sm:$0xff]
      %v3729 = vld [vmem:[%s3180 + $0x13a] sm:$0xff]
      %v3730 = vld [vmem:[%s3180 + $0x142] sm:$0xff]
      %v3731 = vld [vmem:[%s3180 + $0x152] sm:$0xff]
      %v3732 = vld [vmem:[%s3180 + $0x15a] sm:$0xff]
      %v3733 = vld [vmem:[%s3180 + $0x16a] sm:$0xff]
      %v3734 = vld [vmem:[%s3180 + $0x172] sm:$0xff]
      %s3735 = scalar_lea.vmem %s2, 12
      %v3736 = vld [vmem:[%s3735] sm:$0x1]
      %3738 = vset.pattern.permute.xlu0 0
      %3739 = vperm.xlu0 %3738, %v3703
      %v3740 = vpop.permute.xlu0 %3739
      %3743 = vset.pattern.permute.xlu0 0
      %3744 = vperm.xlu0 %3743, %v3704
      %v3745 = vpop.permute.xlu0 %3744
      %3748 = vset.pattern.permute.xlu0 0
      %3749 = vperm.xlu0 %3748, %v3705
      %v3750 = vpop.permute.xlu0 %3749
      %3753 = vset.pattern.permute.xlu0 0
      %3754 = vperm.xlu0 %3753, %v3706
      %v3755 = vpop.permute.xlu0 %3754
      %3758 = vset.pattern.permute.xlu0 0
      %3759 = vperm.xlu0 %3758, %v3707
      %v3760 = vpop.permute.xlu0 %3759
      %3763 = vset.pattern.permute.xlu0 0
      %3764 = vperm.xlu0 %3763, %v3708
      %v3765 = vpop.permute.xlu0 %3764
      %3768 = vset.pattern.permute.xlu0 0
      %3769 = vperm.xlu0 %3768, %v3709
      %v3770 = vpop.permute.xlu0 %3769
      %3773 = vset.pattern.permute.xlu0 0
      %3774 = vperm.xlu0 %3773, %v3710
      %v3775 = vpop.permute.xlu0 %3774
      %3778 = vset.pattern.permute.xlu0 0
      %3779 = vperm.xlu0 %3778, %v3711
      %v3780 = vpop.permute.xlu0 %3779
      %3783 = vset.pattern.permute.xlu0 0
      %3784 = vperm.xlu0 %3783, %v3712
      %v3785 = vpop.permute.xlu0 %3784
      %3788 = vset.pattern.permute.xlu0 0
      %3789 = vperm.xlu0 %3788, %v3713
      %v3790 = vpop.permute.xlu0 %3789
      %3793 = vset.pattern.permute.xlu0 0
      %3794 = vperm.xlu0 %3793, %v3714
      %v3795 = vpop.permute.xlu0 %3794
      %3798 = vset.pattern.permute.xlu0 0
      %3799 = vperm.xlu0 %3798, %v3715
      %v3800 = vpop.permute.xlu0 %3799
      %3803 = vset.pattern.permute.xlu0 0
      %3804 = vperm.xlu0 %3803, %v3716
      %v3805 = vpop.permute.xlu0 %3804
      %3808 = vset.pattern.permute.xlu0 0
      %3809 = vperm.xlu0 %3808, %v3717
      %v3810 = vpop.permute.xlu0 %3809
      %3813 = vset.pattern.permute.xlu0 0
      %3814 = vperm.xlu0 %3813, %v3718
      %v3815 = vpop.permute.xlu0 %3814
      %3818 = vset.pattern.permute.xlu0 0
      %3819 = vperm.xlu0 %3818, %v3719
      %v3820 = vpop.permute.xlu0 %3819
      %3823 = vset.pattern.permute.xlu0 0
      %3824 = vperm.xlu0 %3823, %v3720
      %v3825 = vpop.permute.xlu0 %3824
      %3828 = vset.pattern.permute.xlu0 0
      %3829 = vperm.xlu0 %3828, %v3721
      %v3830 = vpop.permute.xlu0 %3829
      %3833 = vset.pattern.permute.xlu0 0
      %3834 = vperm.xlu0 %3833, %v3722
      %v3835 = vpop.permute.xlu0 %3834
      %3838 = vset.pattern.permute.xlu0 0
      %3839 = vperm.xlu0 %3838, %v3723
      %v3840 = vpop.permute.xlu0 %3839
      %3843 = vset.pattern.permute.xlu0 0
      %3844 = vperm.xlu0 %3843, %v3724
      %v3845 = vpop.permute.xlu0 %3844
      %3848 = vset.pattern.permute.xlu0 0
      %3849 = vperm.xlu0 %3848, %v3725
      %v3850 = vpop.permute.xlu0 %3849
      %3853 = vset.pattern.permute.xlu0 0
      %3854 = vperm.xlu0 %3853, %v3726
      %v3855 = vpop.permute.xlu0 %3854
      %3858 = vset.pattern.permute.xlu0 0
      %3859 = vperm.xlu0 %3858, %v3727
      %v3860 = vpop.permute.xlu0 %3859
      %3863 = vset.pattern.permute.xlu0 0
      %3864 = vperm.xlu0 %3863, %v3728
      %v3865 = vpop.permute.xlu0 %3864
      %3868 = vset.pattern.permute.xlu0 0
      %3869 = vperm.xlu0 %3868, %v3729
      %v3870 = vpop.permute.xlu0 %3869
      %3873 = vset.pattern.permute.xlu0 0
      %3874 = vperm.xlu0 %3873, %v3730
      %v3875 = vpop.permute.xlu0 %3874
      %3878 = vset.pattern.permute.xlu0 0
      %3879 = vperm.xlu0 %3878, %v3731
      %v3880 = vpop.permute.xlu0 %3879
      %3883 = vset.pattern.permute.xlu0 0
      %3884 = vperm.xlu0 %3883, %v3732
      %v3885 = vpop.permute.xlu0 %3884
      %3888 = vset.pattern.permute.xlu0 0
      %3889 = vperm.xlu0 %3888, %v3733
      %v3890 = vpop.permute.xlu0 %3889
      %3893 = vset.pattern.permute.xlu0 0
      %3894 = vperm.xlu0 %3893, %v3734
      %v3895 = vpop.permute.xlu0 %3894
      %v3898 = vperm.slane %v3736, 0
      %v3900 = vmul.f32 %v3740, %v3898
      %v3901 = vmul.f32 %v3745, %v3898
      %v3902 = vmul.f32 %v3750, %v3898
      %v3903 = vmul.f32 %v3755, %v3898
      %v3904 = vmul.f32 %v3760, %v3898
      %v3905 = vmul.f32 %v3765, %v3898
      %v3906 = vmul.f32 %v3770, %v3898
      %v3907 = vmul.f32 %v3775, %v3898
      %v3908 = vmul.f32 %v3780, %v3898
      %v3909 = vmul.f32 %v3785, %v3898
      %v3910 = vmul.f32 %v3790, %v3898
      %v3911 = vmul.f32 %v3795, %v3898
      %v3912 = vmul.f32 %v3800, %v3898
      %v3913 = vmul.f32 %v3805, %v3898
      %v3914 = vmul.f32 %v3810, %v3898
      %v3915 = vmul.f32 %v3815, %v3898
      %v3916 = vmul.f32 %v3820, %v3898
      %v3917 = vmul.f32 %v3825, %v3898
      %v3918 = vmul.f32 %v3830, %v3898
      %v3919 = vmul.f32 %v3835, %v3898
      %v3920 = vmul.f32 %v3840, %v3898
      %v3921 = vmul.f32 %v3845, %v3898
      %v3922 = vmul.f32 %v3850, %v3898
      %v3923 = vmul.f32 %v3855, %v3898
      %v3924 = vmul.f32 %v3860, %v3898
      %v3925 = vmul.f32 %v3865, %v3898
      %v3926 = vmul.f32 %v3870, %v3898
      %v3927 = vmul.f32 %v3875, %v3898
      %v3928 = vmul.f32 %v3880, %v3898
      %v3929 = vmul.f32 %v3885, %v3898
      %v3930 = vmul.f32 %v3890, %v3898
      %v3931 = vmul.f32 %v3895, %v3898
      %v3932 = vadd.f32 %v3671, %v3900
      %v3933 = vadd.f32 %v3672, %v3901
      %v3934 = vadd.f32 %v3673, %v3902
      %v3935 = vadd.f32 %v3674, %v3903
      %v3936 = vadd.f32 %v3675, %v3904
      %v3937 = vadd.f32 %v3676, %v3905
      %v3938 = vadd.f32 %v3677, %v3906
      %v3939 = vadd.f32 %v3678, %v3907
      %v3940 = vadd.f32 %v3679, %v3908
      %v3941 = vadd.f32 %v3680, %v3909
      %v3942 = vadd.f32 %v3681, %v3910
      %v3943 = vadd.f32 %v3682, %v3911
      %v3944 = vadd.f32 %v3683, %v3912
      %v3945 = vadd.f32 %v3684, %v3913
      %v3946 = vadd.f32 %v3685, %v3914
      %v3947 = vadd.f32 %v3686, %v3915
      %v3948 = vadd.f32 %v3687, %v3916
      %v3949 = vadd.f32 %v3688, %v3917
      %v3950 = vadd.f32 %v3689, %v3918
      %v3951 = vadd.f32 %v3690, %v3919
      %v3952 = vadd.f32 %v3691, %v3920
      %v3953 = vadd.f32 %v3692, %v3921
      %v3954 = vadd.f32 %v3693, %v3922
      %v3955 = vadd.f32 %v3694, %v3923
      %v3956 = vadd.f32 %v3695, %v3924
      %v3957 = vadd.f32 %v3696, %v3925
      %v3958 = vadd.f32 %v3697, %v3926
      %v3959 = vadd.f32 %v3698, %v3927
      %v3960 = vadd.f32 %v3699, %v3928
      %v3961 = vadd.f32 %v3700, %v3929
      %v3962 = vadd.f32 %v3701, %v3930
      %v3963 = vadd.f32 %v3702, %v3931
      %v3964 = vld [vmem:[%s3180 + $0x3] sm:$0xff]
      %v3965 = vld [vmem:[%s3180 + $0xb] sm:$0xff]
      %v3966 = vld [vmem:[%s3180 + $0x1b] sm:$0xff]
      %v3967 = vld [vmem:[%s3180 + $0x23] sm:$0xff]
      %v3968 = vld [vmem:[%s3180 + $0x33] sm:$0xff]
      %v3969 = vld [vmem:[%s3180 + $0x3b] sm:$0xff]
      %v3970 = vld [vmem:[%s3180 + $0x4b] sm:$0xff]
      %v3971 = vld [vmem:[%s3180 + $0x53] sm:$0xff]
      %v3972 = vld [vmem:[%s3180 + $0x63] sm:$0xff]
      %v3973 = vld [vmem:[%s3180 + $0x6b] sm:$0xff]
      %v3974 = vld [vmem:[%s3180 + $0x7b] sm:$0xff]
      %v3975 = vld [vmem:[%s3180 + $0x83] sm:$0xff]
      %v3976 = vld [vmem:[%s3180 + $0x93] sm:$0xff]
      %v3977 = vld [vmem:[%s3180 + $0x9b] sm:$0xff]
      %v3978 = vld [vmem:[%s3180 + $0xab] sm:$0xff]
      %v3979 = vld [vmem:[%s3180 + $0xb3] sm:$0xff]
      %v3980 = vld [vmem:[%s3180 + $0xc3] sm:$0xff]
      %v3981 = vld [vmem:[%s3180 + $0xcb] sm:$0xff]
      %v3982 = vld [vmem:[%s3180 + $0xdb] sm:$0xff]
      %v3983 = vld [vmem:[%s3180 + $0xe3] sm:$0xff]
      %v3984 = vld [vmem:[%s3180 + $0xf3] sm:$0xff]
      %v3985 = vld [vmem:[%s3180 + $0xfb] sm:$0xff]
      %v3986 = vld [vmem:[%s3180 + $0x10b] sm:$0xff]
      %v3987 = vld [vmem:[%s3180 + $0x113] sm:$0xff]
      %v3988 = vld [vmem:[%s3180 + $0x123] sm:$0xff]
      %v3989 = vld [vmem:[%s3180 + $0x12b] sm:$0xff]
      %v3990 = vld [vmem:[%s3180 + $0x13b] sm:$0xff]
      %v3991 = vld [vmem:[%s3180 + $0x143] sm:$0xff]
      %v3992 = vld [vmem:[%s3180 + $0x153] sm:$0xff]
      %v3993 = vld [vmem:[%s3180 + $0x15b] sm:$0xff]
      %v3994 = vld [vmem:[%s3180 + $0x16b] sm:$0xff]
      %v3995 = vld [vmem:[%s3180 + $0x173] sm:$0xff]
      %s3996 = scalar_lea.vmem %s2, 13
      %v3997 = vld [vmem:[%s3996] sm:$0x1]
      %3999 = vset.pattern.permute.xlu0 0
      %4000 = vperm.xlu0 %3999, %v3964
      %v4001 = vpop.permute.xlu0 %4000
      %4004 = vset.pattern.permute.xlu0 0
      %4005 = vperm.xlu0 %4004, %v3965
      %v4006 = vpop.permute.xlu0 %4005
      %4009 = vset.pattern.permute.xlu0 0
      %4010 = vperm.xlu0 %4009, %v3966
      %v4011 = vpop.permute.xlu0 %4010
      %4014 = vset.pattern.permute.xlu0 0
      %4015 = vperm.xlu0 %4014, %v3967
      %v4016 = vpop.permute.xlu0 %4015
      %4019 = vset.pattern.permute.xlu0 0
      %4020 = vperm.xlu0 %4019, %v3968
      %v4021 = vpop.permute.xlu0 %4020
      %4024 = vset.pattern.permute.xlu0 0
      %4025 = vperm.xlu0 %4024, %v3969
      %v4026 = vpop.permute.xlu0 %4025
      %4029 = vset.pattern.permute.xlu0 0
      %4030 = vperm.xlu0 %4029, %v3970
      %v4031 = vpop.permute.xlu0 %4030
      %4034 = vset.pattern.permute.xlu0 0
      %4035 = vperm.xlu0 %4034, %v3971
      %v4036 = vpop.permute.xlu0 %4035
      %4039 = vset.pattern.permute.xlu0 0
      %4040 = vperm.xlu0 %4039, %v3972
      %v4041 = vpop.permute.xlu0 %4040
      %4044 = vset.pattern.permute.xlu0 0
      %4045 = vperm.xlu0 %4044, %v3973
      %v4046 = vpop.permute.xlu0 %4045
      %4049 = vset.pattern.permute.xlu0 0
      %4050 = vperm.xlu0 %4049, %v3974
      %v4051 = vpop.permute.xlu0 %4050
      %4054 = vset.pattern.permute.xlu0 0
      %4055 = vperm.xlu0 %4054, %v3975
      %v4056 = vpop.permute.xlu0 %4055
      %4059 = vset.pattern.permute.xlu0 0
      %4060 = vperm.xlu0 %4059, %v3976
      %v4061 = vpop.permute.xlu0 %4060
      %4064 = vset.pattern.permute.xlu0 0
      %4065 = vperm.xlu0 %4064, %v3977
      %v4066 = vpop.permute.xlu0 %4065
      %4069 = vset.pattern.permute.xlu0 0
      %4070 = vperm.xlu0 %4069, %v3978
      %v4071 = vpop.permute.xlu0 %4070
      %4074 = vset.pattern.permute.xlu0 0
      %4075 = vperm.xlu0 %4074, %v3979
      %v4076 = vpop.permute.xlu0 %4075
      %4079 = vset.pattern.permute.xlu0 0
      %4080 = vperm.xlu0 %4079, %v3980
      %v4081 = vpop.permute.xlu0 %4080
      %4084 = vset.pattern.permute.xlu0 0
      %4085 = vperm.xlu0 %4084, %v3981
      %v4086 = vpop.permute.xlu0 %4085
      %4089 = vset.pattern.permute.xlu0 0
      %4090 = vperm.xlu0 %4089, %v3982
      %v4091 = vpop.permute.xlu0 %4090
      %4094 = vset.pattern.permute.xlu0 0
      %4095 = vperm.xlu0 %4094, %v3983
      %v4096 = vpop.permute.xlu0 %4095
      %4099 = vset.pattern.permute.xlu0 0
      %4100 = vperm.xlu0 %4099, %v3984
      %v4101 = vpop.permute.xlu0 %4100
      %4104 = vset.pattern.permute.xlu0 0
      %4105 = vperm.xlu0 %4104, %v3985
      %v4106 = vpop.permute.xlu0 %4105
      %4109 = vset.pattern.permute.xlu0 0
      %4110 = vperm.xlu0 %4109, %v3986
      %v4111 = vpop.permute.xlu0 %4110
      %4114 = vset.pattern.permute.xlu0 0
      %4115 = vperm.xlu0 %4114, %v3987
      %v4116 = vpop.permute.xlu0 %4115
      %4119 = vset.pattern.permute.xlu0 0
      %4120 = vperm.xlu0 %4119, %v3988
      %v4121 = vpop.permute.xlu0 %4120
      %4124 = vset.pattern.permute.xlu0 0
      %4125 = vperm.xlu0 %4124, %v3989
      %v4126 = vpop.permute.xlu0 %4125
      %4129 = vset.pattern.permute.xlu0 0
      %4130 = vperm.xlu0 %4129, %v3990
      %v4131 = vpop.permute.xlu0 %4130
      %4134 = vset.pattern.permute.xlu0 0
      %4135 = vperm.xlu0 %4134, %v3991
      %v4136 = vpop.permute.xlu0 %4135
      %4139 = vset.pattern.permute.xlu0 0
      %4140 = vperm.xlu0 %4139, %v3992
      %v4141 = vpop.permute.xlu0 %4140
      %4144 = vset.pattern.permute.xlu0 0
      %4145 = vperm.xlu0 %4144, %v3993
      %v4146 = vpop.permute.xlu0 %4145
      %4149 = vset.pattern.permute.xlu0 0
      %4150 = vperm.xlu0 %4149, %v3994
      %v4151 = vpop.permute.xlu0 %4150
      %4154 = vset.pattern.permute.xlu0 0
      %4155 = vperm.xlu0 %4154, %v3995
      %v4156 = vpop.permute.xlu0 %4155
      %v4159 = vperm.slane %v3997, 0
      %v4161 = vmul.f32 %v4001, %v4159
      %v4162 = vmul.f32 %v4006, %v4159
      %v4163 = vmul.f32 %v4011, %v4159
      %v4164 = vmul.f32 %v4016, %v4159
      %v4165 = vmul.f32 %v4021, %v4159
      %v4166 = vmul.f32 %v4026, %v4159
      %v4167 = vmul.f32 %v4031, %v4159
      %v4168 = vmul.f32 %v4036, %v4159
      %v4169 = vmul.f32 %v4041, %v4159
      %v4170 = vmul.f32 %v4046, %v4159
      %v4171 = vmul.f32 %v4051, %v4159
      %v4172 = vmul.f32 %v4056, %v4159
      %v4173 = vmul.f32 %v4061, %v4159
      %v4174 = vmul.f32 %v4066, %v4159
      %v4175 = vmul.f32 %v4071, %v4159
      %v4176 = vmul.f32 %v4076, %v4159
      %v4177 = vmul.f32 %v4081, %v4159
      %v4178 = vmul.f32 %v4086, %v4159
      %v4179 = vmul.f32 %v4091, %v4159
      %v4180 = vmul.f32 %v4096, %v4159
      %v4181 = vmul.f32 %v4101, %v4159
      %v4182 = vmul.f32 %v4106, %v4159
      %v4183 = vmul.f32 %v4111, %v4159
      %v4184 = vmul.f32 %v4116, %v4159
      %v4185 = vmul.f32 %v4121, %v4159
      %v4186 = vmul.f32 %v4126, %v4159
      %v4187 = vmul.f32 %v4131, %v4159
      %v4188 = vmul.f32 %v4136, %v4159
      %v4189 = vmul.f32 %v4141, %v4159
      %v4190 = vmul.f32 %v4146, %v4159
      %v4191 = vmul.f32 %v4151, %v4159
      %v4192 = vmul.f32 %v4156, %v4159
      %v4193 = vadd.f32 %v3932, %v4161
      %v4194 = vadd.f32 %v3933, %v4162
      %v4195 = vadd.f32 %v3934, %v4163
      %v4196 = vadd.f32 %v3935, %v4164
      %v4197 = vadd.f32 %v3936, %v4165
      %v4198 = vadd.f32 %v3937, %v4166
      %v4199 = vadd.f32 %v3938, %v4167
      %v4200 = vadd.f32 %v3939, %v4168
      %v4201 = vadd.f32 %v3940, %v4169
      %v4202 = vadd.f32 %v3941, %v4170
      %v4203 = vadd.f32 %v3942, %v4171
      %v4204 = vadd.f32 %v3943, %v4172
      %v4205 = vadd.f32 %v3944, %v4173
      %v4206 = vadd.f32 %v3945, %v4174
      %v4207 = vadd.f32 %v3946, %v4175
      %v4208 = vadd.f32 %v3947, %v4176
      %v4209 = vadd.f32 %v3948, %v4177
      %v4210 = vadd.f32 %v3949, %v4178
      %v4211 = vadd.f32 %v3950, %v4179
      %v4212 = vadd.f32 %v3951, %v4180
      %v4213 = vadd.f32 %v3952, %v4181
      %v4214 = vadd.f32 %v3953, %v4182
      %v4215 = vadd.f32 %v3954, %v4183
      %v4216 = vadd.f32 %v3955, %v4184
      %v4217 = vadd.f32 %v3956, %v4185
      %v4218 = vadd.f32 %v3957, %v4186
      %v4219 = vadd.f32 %v3958, %v4187
      %v4220 = vadd.f32 %v3959, %v4188
      %v4221 = vadd.f32 %v3960, %v4189
      %v4222 = vadd.f32 %v3961, %v4190
      %v4223 = vadd.f32 %v3962, %v4191
      %v4224 = vadd.f32 %v3963, %v4192
      %v4225 = vld [vmem:[%s3180 + $0x4] sm:$0xff]
      %v4226 = vld [vmem:[%s3180 + $0xc] sm:$0xff]
      %v4227 = vld [vmem:[%s3180 + $0x1c] sm:$0xff]
      %v4228 = vld [vmem:[%s3180 + $0x24] sm:$0xff]
      %v4229 = vld [vmem:[%s3180 + $0x34] sm:$0xff]
      %v4230 = vld [vmem:[%s3180 + $0x3c] sm:$0xff]
      %v4231 = vld [vmem:[%s3180 + $0x4c] sm:$0xff]
      %v4232 = vld [vmem:[%s3180 + $0x54] sm:$0xff]
      %v4233 = vld [vmem:[%s3180 + $0x64] sm:$0xff]
      %v4234 = vld [vmem:[%s3180 + $0x6c] sm:$0xff]
      %v4235 = vld [vmem:[%s3180 + $0x7c] sm:$0xff]
      %v4236 = vld [vmem:[%s3180 + $0x84] sm:$0xff]
      %v4237 = vld [vmem:[%s3180 + $0x94] sm:$0xff]
      %v4238 = vld [vmem:[%s3180 + $0x9c] sm:$0xff]
      %v4239 = vld [vmem:[%s3180 + $0xac] sm:$0xff]
      %v4240 = vld [vmem:[%s3180 + $0xb4] sm:$0xff]
      %v4241 = vld [vmem:[%s3180 + $0xc4] sm:$0xff]
      %v4242 = vld [vmem:[%s3180 + $0xcc] sm:$0xff]
      %v4243 = vld [vmem:[%s3180 + $0xdc] sm:$0xff]
      %v4244 = vld [vmem:[%s3180 + $0xe4] sm:$0xff]
      %v4245 = vld [vmem:[%s3180 + $0xf4] sm:$0xff]
      %v4246 = vld [vmem:[%s3180 + $0xfc] sm:$0xff]
      %v4247 = vld [vmem:[%s3180 + $0x10c] sm:$0xff]
      %v4248 = vld [vmem:[%s3180 + $0x114] sm:$0xff]
      %v4249 = vld [vmem:[%s3180 + $0x124] sm:$0xff]
      %v4250 = vld [vmem:[%s3180 + $0x12c] sm:$0xff]
      %v4251 = vld [vmem:[%s3180 + $0x13c] sm:$0xff]
      %v4252 = vld [vmem:[%s3180 + $0x144] sm:$0xff]
      %v4253 = vld [vmem:[%s3180 + $0x154] sm:$0xff]
      %v4254 = vld [vmem:[%s3180 + $0x15c] sm:$0xff]
      %v4255 = vld [vmem:[%s3180 + $0x16c] sm:$0xff]
      %v4256 = vld [vmem:[%s3180 + $0x174] sm:$0xff]
      %s4257 = scalar_lea.vmem %s2, 14
      %v4258 = vld [vmem:[%s4257] sm:$0x1]
      %4260 = vset.pattern.permute.xlu0 0
      %4261 = vperm.xlu0 %4260, %v4225
      %v4262 = vpop.permute.xlu0 %4261
      %4265 = vset.pattern.permute.xlu0 0
      %4266 = vperm.xlu0 %4265, %v4226
      %v4267 = vpop.permute.xlu0 %4266
      %4270 = vset.pattern.permute.xlu0 0
      %4271 = vperm.xlu0 %4270, %v4227
      %v4272 = vpop.permute.xlu0 %4271
      %4275 = vset.pattern.permute.xlu0 0
      %4276 = vperm.xlu0 %4275, %v4228
      %v4277 = vpop.permute.xlu0 %4276
      %4280 = vset.pattern.permute.xlu0 0
      %4281 = vperm.xlu0 %4280, %v4229
      %v4282 = vpop.permute.xlu0 %4281
      %4285 = vset.pattern.permute.xlu0 0
      %4286 = vperm.xlu0 %4285, %v4230
      %v4287 = vpop.permute.xlu0 %4286
      %4290 = vset.pattern.permute.xlu0 0
      %4291 = vperm.xlu0 %4290, %v4231
      %v4292 = vpop.permute.xlu0 %4291
      %4295 = vset.pattern.permute.xlu0 0
      %4296 = vperm.xlu0 %4295, %v4232
      %v4297 = vpop.permute.xlu0 %4296
      %4300 = vset.pattern.permute.xlu0 0
      %4301 = vperm.xlu0 %4300, %v4233
      %v4302 = vpop.permute.xlu0 %4301
      %4305 = vset.pattern.permute.xlu0 0
      %4306 = vperm.xlu0 %4305, %v4234
      %v4307 = vpop.permute.xlu0 %4306
      %4310 = vset.pattern.permute.xlu0 0
      %4311 = vperm.xlu0 %4310, %v4235
      %v4312 = vpop.permute.xlu0 %4311
      %4315 = vset.pattern.permute.xlu0 0
      %4316 = vperm.xlu0 %4315, %v4236
      %v4317 = vpop.permute.xlu0 %4316
      %4320 = vset.pattern.permute.xlu0 0
      %4321 = vperm.xlu0 %4320, %v4237
      %v4322 = vpop.permute.xlu0 %4321
      %4325 = vset.pattern.permute.xlu0 0
      %4326 = vperm.xlu0 %4325, %v4238
      %v4327 = vpop.permute.xlu0 %4326
      %4330 = vset.pattern.permute.xlu0 0
      %4331 = vperm.xlu0 %4330, %v4239
      %v4332 = vpop.permute.xlu0 %4331
      %4335 = vset.pattern.permute.xlu0 0
      %4336 = vperm.xlu0 %4335, %v4240
      %v4337 = vpop.permute.xlu0 %4336
      %4340 = vset.pattern.permute.xlu0 0
      %4341 = vperm.xlu0 %4340, %v4241
      %v4342 = vpop.permute.xlu0 %4341
      %4345 = vset.pattern.permute.xlu0 0
      %4346 = vperm.xlu0 %4345, %v4242
      %v4347 = vpop.permute.xlu0 %4346
      %4350 = vset.pattern.permute.xlu0 0
      %4351 = vperm.xlu0 %4350, %v4243
      %v4352 = vpop.permute.xlu0 %4351
      %4355 = vset.pattern.permute.xlu0 0
      %4356 = vperm.xlu0 %4355, %v4244
      %v4357 = vpop.permute.xlu0 %4356
      %4360 = vset.pattern.permute.xlu0 0
      %4361 = vperm.xlu0 %4360, %v4245
      %v4362 = vpop.permute.xlu0 %4361
      %4365 = vset.pattern.permute.xlu0 0
      %4366 = vperm.xlu0 %4365, %v4246
      %v4367 = vpop.permute.xlu0 %4366
      %4370 = vset.pattern.permute.xlu0 0
      %4371 = vperm.xlu0 %4370, %v4247
      %v4372 = vpop.permute.xlu0 %4371
      %4375 = vset.pattern.permute.xlu0 0
      %4376 = vperm.xlu0 %4375, %v4248
      %v4377 = vpop.permute.xlu0 %4376
      %4380 = vset.pattern.permute.xlu0 0
      %4381 = vperm.xlu0 %4380, %v4249
      %v4382 = vpop.permute.xlu0 %4381
      %4385 = vset.pattern.permute.xlu0 0
      %4386 = vperm.xlu0 %4385, %v4250
      %v4387 = vpop.permute.xlu0 %4386
      %4390 = vset.pattern.permute.xlu0 0
      %4391 = vperm.xlu0 %4390, %v4251
      %v4392 = vpop.permute.xlu0 %4391
      %4395 = vset.pattern.permute.xlu0 0
      %4396 = vperm.xlu0 %4395, %v4252
      %v4397 = vpop.permute.xlu0 %4396
      %4400 = vset.pattern.permute.xlu0 0
      %4401 = vperm.xlu0 %4400, %v4253
      %v4402 = vpop.permute.xlu0 %4401
      %4405 = vset.pattern.permute.xlu0 0
      %4406 = vperm.xlu0 %4405, %v4254
      %v4407 = vpop.permute.xlu0 %4406
      %4410 = vset.pattern.permute.xlu0 0
      %4411 = vperm.xlu0 %4410, %v4255
      %v4412 = vpop.permute.xlu0 %4411
      %4415 = vset.pattern.permute.xlu0 0
      %4416 = vperm.xlu0 %4415, %v4256
      %v4417 = vpop.permute.xlu0 %4416
      %v4420 = vperm.slane %v4258, 0
      %v4422 = vmul.f32 %v4262, %v4420
      %v4423 = vmul.f32 %v4267, %v4420
      %v4424 = vmul.f32 %v4272, %v4420
      %v4425 = vmul.f32 %v4277, %v4420
      %v4426 = vmul.f32 %v4282, %v4420
      %v4427 = vmul.f32 %v4287, %v4420
      %v4428 = vmul.f32 %v4292, %v4420
      %v4429 = vmul.f32 %v4297, %v4420
      %v4430 = vmul.f32 %v4302, %v4420
      %v4431 = vmul.f32 %v4307, %v4420
      %v4432 = vmul.f32 %v4312, %v4420
      %v4433 = vmul.f32 %v4317, %v4420
      %v4434 = vmul.f32 %v4322, %v4420
      %v4435 = vmul.f32 %v4327, %v4420
      %v4436 = vmul.f32 %v4332, %v4420
      %v4437 = vmul.f32 %v4337, %v4420
      %v4438 = vmul.f32 %v4342, %v4420
      %v4439 = vmul.f32 %v4347, %v4420
      %v4440 = vmul.f32 %v4352, %v4420
      %v4441 = vmul.f32 %v4357, %v4420
      %v4442 = vmul.f32 %v4362, %v4420
      %v4443 = vmul.f32 %v4367, %v4420
      %v4444 = vmul.f32 %v4372, %v4420
      %v4445 = vmul.f32 %v4377, %v4420
      %v4446 = vmul.f32 %v4382, %v4420
      %v4447 = vmul.f32 %v4387, %v4420
      %v4448 = vmul.f32 %v4392, %v4420
      %v4449 = vmul.f32 %v4397, %v4420
      %v4450 = vmul.f32 %v4402, %v4420
      %v4451 = vmul.f32 %v4407, %v4420
      %v4452 = vmul.f32 %v4412, %v4420
      %v4453 = vmul.f32 %v4417, %v4420
      %v4454 = vadd.f32 %v4193, %v4422
      %v4455 = vadd.f32 %v4194, %v4423
      %v4456 = vadd.f32 %v4195, %v4424
      %v4457 = vadd.f32 %v4196, %v4425
      %v4458 = vadd.f32 %v4197, %v4426
      %v4459 = vadd.f32 %v4198, %v4427
      %v4460 = vadd.f32 %v4199, %v4428
      %v4461 = vadd.f32 %v4200, %v4429
      %v4462 = vadd.f32 %v4201, %v4430
      %v4463 = vadd.f32 %v4202, %v4431
      %v4464 = vadd.f32 %v4203, %v4432
      %v4465 = vadd.f32 %v4204, %v4433
      %v4466 = vadd.f32 %v4205, %v4434
      %v4467 = vadd.f32 %v4206, %v4435
      %v4468 = vadd.f32 %v4207, %v4436
      %v4469 = vadd.f32 %v4208, %v4437
      %v4470 = vadd.f32 %v4209, %v4438
      %v4471 = vadd.f32 %v4210, %v4439
      %v4472 = vadd.f32 %v4211, %v4440
      %v4473 = vadd.f32 %v4212, %v4441
      %v4474 = vadd.f32 %v4213, %v4442
      %v4475 = vadd.f32 %v4214, %v4443
      %v4476 = vadd.f32 %v4215, %v4444
      %v4477 = vadd.f32 %v4216, %v4445
      %v4478 = vadd.f32 %v4217, %v4446
      %v4479 = vadd.f32 %v4218, %v4447
      %v4480 = vadd.f32 %v4219, %v4448
      %v4481 = vadd.f32 %v4220, %v4449
      %v4482 = vadd.f32 %v4221, %v4450
      %v4483 = vadd.f32 %v4222, %v4451
      %v4484 = vadd.f32 %v4223, %v4452
      %v4485 = vadd.f32 %v4224, %v4453
      %s4486 = scalar_lea.vmem %s449, 72
      %v4487 = vld [vmem:[%s4486] sm:$0xff]
      %v4488 = vld [vmem:[%s4486 + $0x8] sm:$0xff]
      %v4489 = vld [vmem:[%s4486 + $0x18] sm:$0xff]
      %v4490 = vld [vmem:[%s4486 + $0x20] sm:$0xff]
      %v4491 = vld [vmem:[%s4486 + $0x30] sm:$0xff]
      %v4492 = vld [vmem:[%s4486 + $0x38] sm:$0xff]
      %v4493 = vld [vmem:[%s4486 + $0x48] sm:$0xff]
      %v4494 = vld [vmem:[%s4486 + $0x50] sm:$0xff]
      %v4495 = vld [vmem:[%s4486 + $0x60] sm:$0xff]
      %v4496 = vld [vmem:[%s4486 + $0x68] sm:$0xff]
      %v4497 = vld [vmem:[%s4486 + $0x78] sm:$0xff]
      %v4498 = vld [vmem:[%s4486 + $0x80] sm:$0xff]
      %v4499 = vld [vmem:[%s4486 + $0x90] sm:$0xff]
      %v4500 = vld [vmem:[%s4486 + $0x98] sm:$0xff]
      %v4501 = vld [vmem:[%s4486 + $0xa8] sm:$0xff]
      %v4502 = vld [vmem:[%s4486 + $0xb0] sm:$0xff]
      %v4503 = vld [vmem:[%s4486 + $0xc0] sm:$0xff]
      %v4504 = vld [vmem:[%s4486 + $0xc8] sm:$0xff]
      %v4505 = vld [vmem:[%s4486 + $0xd8] sm:$0xff]
      %v4506 = vld [vmem:[%s4486 + $0xe0] sm:$0xff]
      %v4507 = vld [vmem:[%s4486 + $0xf0] sm:$0xff]
      %v4508 = vld [vmem:[%s4486 + $0xf8] sm:$0xff]
      %v4509 = vld [vmem:[%s4486 + $0x108] sm:$0xff]
      %v4510 = vld [vmem:[%s4486 + $0x110] sm:$0xff]
      %v4511 = vld [vmem:[%s4486 + $0x120] sm:$0xff]
      %v4512 = vld [vmem:[%s4486 + $0x128] sm:$0xff]
      %v4513 = vld [vmem:[%s4486 + $0x138] sm:$0xff]
      %v4514 = vld [vmem:[%s4486 + $0x140] sm:$0xff]
      %v4515 = vld [vmem:[%s4486 + $0x150] sm:$0xff]
      %v4516 = vld [vmem:[%s4486 + $0x158] sm:$0xff]
      %v4517 = vld [vmem:[%s4486 + $0x168] sm:$0xff]
      %v4518 = vld [vmem:[%s4486 + $0x170] sm:$0xff]
      %s4519 = scalar_lea.vmem %s2, 15
      %v4520 = vld [vmem:[%s4519] sm:$0x1]
      %4522 = vset.pattern.permute.xlu0 0
      %4523 = vperm.xlu0 %4522, %v4487
      %v4524 = vpop.permute.xlu0 %4523
      %4527 = vset.pattern.permute.xlu0 0
      %4528 = vperm.xlu0 %4527, %v4488
      %v4529 = vpop.permute.xlu0 %4528
      %4532 = vset.pattern.permute.xlu0 0
      %4533 = vperm.xlu0 %4532, %v4489
      %v4534 = vpop.permute.xlu0 %4533
      %4537 = vset.pattern.permute.xlu0 0
      %4538 = vperm.xlu0 %4537, %v4490
      %v4539 = vpop.permute.xlu0 %4538
      %4542 = vset.pattern.permute.xlu0 0
      %4543 = vperm.xlu0 %4542, %v4491
      %v4544 = vpop.permute.xlu0 %4543
      %4547 = vset.pattern.permute.xlu0 0
      %4548 = vperm.xlu0 %4547, %v4492
      %v4549 = vpop.permute.xlu0 %4548
      %4552 = vset.pattern.permute.xlu0 0
      %4553 = vperm.xlu0 %4552, %v4493
      %v4554 = vpop.permute.xlu0 %4553
      %4557 = vset.pattern.permute.xlu0 0
      %4558 = vperm.xlu0 %4557, %v4494
      %v4559 = vpop.permute.xlu0 %4558
      %4562 = vset.pattern.permute.xlu0 0
      %4563 = vperm.xlu0 %4562, %v4495
      %v4564 = vpop.permute.xlu0 %4563
      %4567 = vset.pattern.permute.xlu0 0
      %4568 = vperm.xlu0 %4567, %v4496
      %v4569 = vpop.permute.xlu0 %4568
      %4572 = vset.pattern.permute.xlu0 0
      %4573 = vperm.xlu0 %4572, %v4497
      %v4574 = vpop.permute.xlu0 %4573
      %4577 = vset.pattern.permute.xlu0 0
      %4578 = vperm.xlu0 %4577, %v4498
      %v4579 = vpop.permute.xlu0 %4578
      %4582 = vset.pattern.permute.xlu0 0
      %4583 = vperm.xlu0 %4582, %v4499
      %v4584 = vpop.permute.xlu0 %4583
      %4587 = vset.pattern.permute.xlu0 0
      %4588 = vperm.xlu0 %4587, %v4500
      %v4589 = vpop.permute.xlu0 %4588
      %4592 = vset.pattern.permute.xlu0 0
      %4593 = vperm.xlu0 %4592, %v4501
      %v4594 = vpop.permute.xlu0 %4593
      %4597 = vset.pattern.permute.xlu0 0
      %4598 = vperm.xlu0 %4597, %v4502
      %v4599 = vpop.permute.xlu0 %4598
      %4602 = vset.pattern.permute.xlu0 0
      %4603 = vperm.xlu0 %4602, %v4503
      %v4604 = vpop.permute.xlu0 %4603
      %4607 = vset.pattern.permute.xlu0 0
      %4608 = vperm.xlu0 %4607, %v4504
      %v4609 = vpop.permute.xlu0 %4608
      %4612 = vset.pattern.permute.xlu0 0
      %4613 = vperm.xlu0 %4612, %v4505
      %v4614 = vpop.permute.xlu0 %4613
      %4617 = vset.pattern.permute.xlu0 0
      %4618 = vperm.xlu0 %4617, %v4506
      %v4619 = vpop.permute.xlu0 %4618
      %4622 = vset.pattern.permute.xlu0 0
      %4623 = vperm.xlu0 %4622, %v4507
      %v4624 = vpop.permute.xlu0 %4623
      %4627 = vset.pattern.permute.xlu0 0
      %4628 = vperm.xlu0 %4627, %v4508
      %v4629 = vpop.permute.xlu0 %4628
      %4632 = vset.pattern.permute.xlu0 0
      %4633 = vperm.xlu0 %4632, %v4509
      %v4634 = vpop.permute.xlu0 %4633
      %4637 = vset.pattern.permute.xlu0 0
      %4638 = vperm.xlu0 %4637, %v4510
      %v4639 = vpop.permute.xlu0 %4638
      %4642 = vset.pattern.permute.xlu0 0
      %4643 = vperm.xlu0 %4642, %v4511
      %v4644 = vpop.permute.xlu0 %4643
      %4647 = vset.pattern.permute.xlu0 0
      %4648 = vperm.xlu0 %4647, %v4512
      %v4649 = vpop.permute.xlu0 %4648
      %4652 = vset.pattern.permute.xlu0 0
      %4653 = vperm.xlu0 %4652, %v4513
      %v4654 = vpop.permute.xlu0 %4653
      %4657 = vset.pattern.permute.xlu0 0
      %4658 = vperm.xlu0 %4657, %v4514
      %v4659 = vpop.permute.xlu0 %4658
      %4662 = vset.pattern.permute.xlu0 0
      %4663 = vperm.xlu0 %4662, %v4515
      %v4664 = vpop.permute.xlu0 %4663
      %4667 = vset.pattern.permute.xlu0 0
      %4668 = vperm.xlu0 %4667, %v4516
      %v4669 = vpop.permute.xlu0 %4668
      %4672 = vset.pattern.permute.xlu0 0
      %4673 = vperm.xlu0 %4672, %v4517
      %v4674 = vpop.permute.xlu0 %4673
      %4677 = vset.pattern.permute.xlu0 0
      %4678 = vperm.xlu0 %4677, %v4518
      %v4679 = vpop.permute.xlu0 %4678
      %v4682 = vperm.slane %v4520, 0
      %v4684 = vmul.f32 %v4524, %v4682
      %v4685 = vmul.f32 %v4529, %v4682
      %v4686 = vmul.f32 %v4534, %v4682
      %v4687 = vmul.f32 %v4539, %v4682
      %v4688 = vmul.f32 %v4544, %v4682
      %v4689 = vmul.f32 %v4549, %v4682
      %v4690 = vmul.f32 %v4554, %v4682
      %v4691 = vmul.f32 %v4559, %v4682
      %v4692 = vmul.f32 %v4564, %v4682
      %v4693 = vmul.f32 %v4569, %v4682
      %v4694 = vmul.f32 %v4574, %v4682
      %v4695 = vmul.f32 %v4579, %v4682
      %v4696 = vmul.f32 %v4584, %v4682
      %v4697 = vmul.f32 %v4589, %v4682
      %v4698 = vmul.f32 %v4594, %v4682
      %v4699 = vmul.f32 %v4599, %v4682
      %v4700 = vmul.f32 %v4604, %v4682
      %v4701 = vmul.f32 %v4609, %v4682
      %v4702 = vmul.f32 %v4614, %v4682
      %v4703 = vmul.f32 %v4619, %v4682
      %v4704 = vmul.f32 %v4624, %v4682
      %v4705 = vmul.f32 %v4629, %v4682
      %v4706 = vmul.f32 %v4634, %v4682
      %v4707 = vmul.f32 %v4639, %v4682
      %v4708 = vmul.f32 %v4644, %v4682
      %v4709 = vmul.f32 %v4649, %v4682
      %v4710 = vmul.f32 %v4654, %v4682
      %v4711 = vmul.f32 %v4659, %v4682
      %v4712 = vmul.f32 %v4664, %v4682
      %v4713 = vmul.f32 %v4669, %v4682
      %v4714 = vmul.f32 %v4674, %v4682
      %v4715 = vmul.f32 %v4679, %v4682
      %v4716 = vadd.f32 %v4454, %v4684
      %v4717 = vadd.f32 %v4455, %v4685
      %v4718 = vadd.f32 %v4456, %v4686
      %v4719 = vadd.f32 %v4457, %v4687
      %v4720 = vadd.f32 %v4458, %v4688
      %v4721 = vadd.f32 %v4459, %v4689
      %v4722 = vadd.f32 %v4460, %v4690
      %v4723 = vadd.f32 %v4461, %v4691
      %v4724 = vadd.f32 %v4462, %v4692
      %v4725 = vadd.f32 %v4463, %v4693
      %v4726 = vadd.f32 %v4464, %v4694
      %v4727 = vadd.f32 %v4465, %v4695
      %v4728 = vadd.f32 %v4466, %v4696
      %v4729 = vadd.f32 %v4467, %v4697
      %v4730 = vadd.f32 %v4468, %v4698
      %v4731 = vadd.f32 %v4469, %v4699
      %v4732 = vadd.f32 %v4470, %v4700
      %v4733 = vadd.f32 %v4471, %v4701
      %v4734 = vadd.f32 %v4472, %v4702
      %v4735 = vadd.f32 %v4473, %v4703
      %v4736 = vadd.f32 %v4474, %v4704
      %v4737 = vadd.f32 %v4475, %v4705
      %v4738 = vadd.f32 %v4476, %v4706
      %v4739 = vadd.f32 %v4477, %v4707
      %v4740 = vadd.f32 %v4478, %v4708
      %v4741 = vadd.f32 %v4479, %v4709
      %v4742 = vadd.f32 %v4480, %v4710
      %v4743 = vadd.f32 %v4481, %v4711
      %v4744 = vadd.f32 %v4482, %v4712
      %v4745 = vadd.f32 %v4483, %v4713
      %v4746 = vadd.f32 %v4484, %v4714
      %v4747 = vadd.f32 %v4485, %v4715
      %v4748 = vld [vmem:[%s4486 + $0x1] sm:$0xff]
      %v4749 = vld [vmem:[%s4486 + $0x9] sm:$0xff]
      %v4750 = vld [vmem:[%s4486 + $0x19] sm:$0xff]
      %v4751 = vld [vmem:[%s4486 + $0x21] sm:$0xff]
      %v4752 = vld [vmem:[%s4486 + $0x31] sm:$0xff]
      %v4753 = vld [vmem:[%s4486 + $0x39] sm:$0xff]
      %v4754 = vld [vmem:[%s4486 + $0x49] sm:$0xff]
      %v4755 = vld [vmem:[%s4486 + $0x51] sm:$0xff]
      %v4756 = vld [vmem:[%s4486 + $0x61] sm:$0xff]
      %v4757 = vld [vmem:[%s4486 + $0x69] sm:$0xff]
      %v4758 = vld [vmem:[%s4486 + $0x79] sm:$0xff]
      %v4759 = vld [vmem:[%s4486 + $0x81] sm:$0xff]
      %v4760 = vld [vmem:[%s4486 + $0x91] sm:$0xff]
      %v4761 = vld [vmem:[%s4486 + $0x99] sm:$0xff]
      %v4762 = vld [vmem:[%s4486 + $0xa9] sm:$0xff]
      %v4763 = vld [vmem:[%s4486 + $0xb1] sm:$0xff]
      %v4764 = vld [vmem:[%s4486 + $0xc1] sm:$0xff]
      %v4765 = vld [vmem:[%s4486 + $0xc9] sm:$0xff]
      %v4766 = vld [vmem:[%s4486 + $0xd9] sm:$0xff]
      %v4767 = vld [vmem:[%s4486 + $0xe1] sm:$0xff]
      %v4768 = vld [vmem:[%s4486 + $0xf1] sm:$0xff]
      %v4769 = vld [vmem:[%s4486 + $0xf9] sm:$0xff]
      %v4770 = vld [vmem:[%s4486 + $0x109] sm:$0xff]
      %v4771 = vld [vmem:[%s4486 + $0x111] sm:$0xff]
      %v4772 = vld [vmem:[%s4486 + $0x121] sm:$0xff]
      %v4773 = vld [vmem:[%s4486 + $0x129] sm:$0xff]
      %v4774 = vld [vmem:[%s4486 + $0x139] sm:$0xff]
      %v4775 = vld [vmem:[%s4486 + $0x141] sm:$0xff]
      %v4776 = vld [vmem:[%s4486 + $0x151] sm:$0xff]
      %v4777 = vld [vmem:[%s4486 + $0x159] sm:$0xff]
      %v4778 = vld [vmem:[%s4486 + $0x169] sm:$0xff]
      %v4779 = vld [vmem:[%s4486 + $0x171] sm:$0xff]
      %s4780 = scalar_lea.vmem %s2, 16
      %v4781 = vld [vmem:[%s4780] sm:$0x1]
      %4783 = vset.pattern.permute.xlu0 0
      %4784 = vperm.xlu0 %4783, %v4748
      %v4785 = vpop.permute.xlu0 %4784
      %4788 = vset.pattern.permute.xlu0 0
      %4789 = vperm.xlu0 %4788, %v4749
      %v4790 = vpop.permute.xlu0 %4789
      %4793 = vset.pattern.permute.xlu0 0
      %4794 = vperm.xlu0 %4793, %v4750
      %v4795 = vpop.permute.xlu0 %4794
      %4798 = vset.pattern.permute.xlu0 0
      %4799 = vperm.xlu0 %4798, %v4751
      %v4800 = vpop.permute.xlu0 %4799
      %4803 = vset.pattern.permute.xlu0 0
      %4804 = vperm.xlu0 %4803, %v4752
      %v4805 = vpop.permute.xlu0 %4804
      %4808 = vset.pattern.permute.xlu0 0
      %4809 = vperm.xlu0 %4808, %v4753
      %v4810 = vpop.permute.xlu0 %4809
      %4813 = vset.pattern.permute.xlu0 0
      %4814 = vperm.xlu0 %4813, %v4754
      %v4815 = vpop.permute.xlu0 %4814
      %4818 = vset.pattern.permute.xlu0 0
      %4819 = vperm.xlu0 %4818, %v4755
      %v4820 = vpop.permute.xlu0 %4819
      %4823 = vset.pattern.permute.xlu0 0
      %4824 = vperm.xlu0 %4823, %v4756
      %v4825 = vpop.permute.xlu0 %4824
      %4828 = vset.pattern.permute.xlu0 0
      %4829 = vperm.xlu0 %4828, %v4757
      %v4830 = vpop.permute.xlu0 %4829
      %4833 = vset.pattern.permute.xlu0 0
      %4834 = vperm.xlu0 %4833, %v4758
      %v4835 = vpop.permute.xlu0 %4834
      %4838 = vset.pattern.permute.xlu0 0
      %4839 = vperm.xlu0 %4838, %v4759
      %v4840 = vpop.permute.xlu0 %4839
      %4843 = vset.pattern.permute.xlu0 0
      %4844 = vperm.xlu0 %4843, %v4760
      %v4845 = vpop.permute.xlu0 %4844
      %4848 = vset.pattern.permute.xlu0 0
      %4849 = vperm.xlu0 %4848, %v4761
      %v4850 = vpop.permute.xlu0 %4849
      %4853 = vset.pattern.permute.xlu0 0
      %4854 = vperm.xlu0 %4853, %v4762
      %v4855 = vpop.permute.xlu0 %4854
      %4858 = vset.pattern.permute.xlu0 0
      %4859 = vperm.xlu0 %4858, %v4763
      %v4860 = vpop.permute.xlu0 %4859
      %4863 = vset.pattern.permute.xlu0 0
      %4864 = vperm.xlu0 %4863, %v4764
      %v4865 = vpop.permute.xlu0 %4864
      %4868 = vset.pattern.permute.xlu0 0
      %4869 = vperm.xlu0 %4868, %v4765
      %v4870 = vpop.permute.xlu0 %4869
      %4873 = vset.pattern.permute.xlu0 0
      %4874 = vperm.xlu0 %4873, %v4766
      %v4875 = vpop.permute.xlu0 %4874
      %4878 = vset.pattern.permute.xlu0 0
      %4879 = vperm.xlu0 %4878, %v4767
      %v4880 = vpop.permute.xlu0 %4879
      %4883 = vset.pattern.permute.xlu0 0
      %4884 = vperm.xlu0 %4883, %v4768
      %v4885 = vpop.permute.xlu0 %4884
      %4888 = vset.pattern.permute.xlu0 0
      %4889 = vperm.xlu0 %4888, %v4769
      %v4890 = vpop.permute.xlu0 %4889
      %4893 = vset.pattern.permute.xlu0 0
      %4894 = vperm.xlu0 %4893, %v4770
      %v4895 = vpop.permute.xlu0 %4894
      %4898 = vset.pattern.permute.xlu0 0
      %4899 = vperm.xlu0 %4898, %v4771
      %v4900 = vpop.permute.xlu0 %4899
      %4903 = vset.pattern.permute.xlu0 0
      %4904 = vperm.xlu0 %4903, %v4772
      %v4905 = vpop.permute.xlu0 %4904
      %4908 = vset.pattern.permute.xlu0 0
      %4909 = vperm.xlu0 %4908, %v4773
      %v4910 = vpop.permute.xlu0 %4909
      %4913 = vset.pattern.permute.xlu0 0
      %4914 = vperm.xlu0 %4913, %v4774
      %v4915 = vpop.permute.xlu0 %4914
      %4918 = vset.pattern.permute.xlu0 0
      %4919 = vperm.xlu0 %4918, %v4775
      %v4920 = vpop.permute.xlu0 %4919
      %4923 = vset.pattern.permute.xlu0 0
      %4924 = vperm.xlu0 %4923, %v4776
      %v4925 = vpop.permute.xlu0 %4924
      %4928 = vset.pattern.permute.xlu0 0
      %4929 = vperm.xlu0 %4928, %v4777
      %v4930 = vpop.permute.xlu0 %4929
      %4933 = vset.pattern.permute.xlu0 0
      %4934 = vperm.xlu0 %4933, %v4778
      %v4935 = vpop.permute.xlu0 %4934
      %4938 = vset.pattern.permute.xlu0 0
      %4939 = vperm.xlu0 %4938, %v4779
      %v4940 = vpop.permute.xlu0 %4939
      %v4943 = vperm.slane %v4781, 0
      %v4945 = vmul.f32 %v4785, %v4943
      %v4946 = vmul.f32 %v4790, %v4943
      %v4947 = vmul.f32 %v4795, %v4943
      %v4948 = vmul.f32 %v4800, %v4943
      %v4949 = vmul.f32 %v4805, %v4943
      %v4950 = vmul.f32 %v4810, %v4943
      %v4951 = vmul.f32 %v4815, %v4943
      %v4952 = vmul.f32 %v4820, %v4943
      %v4953 = vmul.f32 %v4825, %v4943
      %v4954 = vmul.f32 %v4830, %v4943
      %v4955 = vmul.f32 %v4835, %v4943
      %v4956 = vmul.f32 %v4840, %v4943
      %v4957 = vmul.f32 %v4845, %v4943
      %v4958 = vmul.f32 %v4850, %v4943
      %v4959 = vmul.f32 %v4855, %v4943
      %v4960 = vmul.f32 %v4860, %v4943
      %v4961 = vmul.f32 %v4865, %v4943
      %v4962 = vmul.f32 %v4870, %v4943
      %v4963 = vmul.f32 %v4875, %v4943
      %v4964 = vmul.f32 %v4880, %v4943
      %v4965 = vmul.f32 %v4885, %v4943
      %v4966 = vmul.f32 %v4890, %v4943
      %v4967 = vmul.f32 %v4895, %v4943
      %v4968 = vmul.f32 %v4900, %v4943
      %v4969 = vmul.f32 %v4905, %v4943
      %v4970 = vmul.f32 %v4910, %v4943
      %v4971 = vmul.f32 %v4915, %v4943
      %v4972 = vmul.f32 %v4920, %v4943
      %v4973 = vmul.f32 %v4925, %v4943
      %v4974 = vmul.f32 %v4930, %v4943
      %v4975 = vmul.f32 %v4935, %v4943
      %v4976 = vmul.f32 %v4940, %v4943
      %v4977 = vadd.f32 %v4716, %v4945
      %v4978 = vadd.f32 %v4717, %v4946
      %v4979 = vadd.f32 %v4718, %v4947
      %v4980 = vadd.f32 %v4719, %v4948
      %v4981 = vadd.f32 %v4720, %v4949
      %v4982 = vadd.f32 %v4721, %v4950
      %v4983 = vadd.f32 %v4722, %v4951
      %v4984 = vadd.f32 %v4723, %v4952
      %v4985 = vadd.f32 %v4724, %v4953
      %v4986 = vadd.f32 %v4725, %v4954
      %v4987 = vadd.f32 %v4726, %v4955
      %v4988 = vadd.f32 %v4727, %v4956
      %v4989 = vadd.f32 %v4728, %v4957
      %v4990 = vadd.f32 %v4729, %v4958
      %v4991 = vadd.f32 %v4730, %v4959
      %v4992 = vadd.f32 %v4731, %v4960
      %v4993 = vadd.f32 %v4732, %v4961
      %v4994 = vadd.f32 %v4733, %v4962
      %v4995 = vadd.f32 %v4734, %v4963
      %v4996 = vadd.f32 %v4735, %v4964
      %v4997 = vadd.f32 %v4736, %v4965
      %v4998 = vadd.f32 %v4737, %v4966
      %v4999 = vadd.f32 %v4738, %v4967
      %v5000 = vadd.f32 %v4739, %v4968
      %v5001 = vadd.f32 %v4740, %v4969
      %v5002 = vadd.f32 %v4741, %v4970
      %v5003 = vadd.f32 %v4742, %v4971
      %v5004 = vadd.f32 %v4743, %v4972
      %v5005 = vadd.f32 %v4744, %v4973
      %v5006 = vadd.f32 %v4745, %v4974
      %v5007 = vadd.f32 %v4746, %v4975
      %v5008 = vadd.f32 %v4747, %v4976
      %v5009 = vld [vmem:[%s4486 + $0x2] sm:$0xff]
      %v5010 = vld [vmem:[%s4486 + $0xa] sm:$0xff]
      %v5011 = vld [vmem:[%s4486 + $0x1a] sm:$0xff]
      %v5012 = vld [vmem:[%s4486 + $0x22] sm:$0xff]
      %v5013 = vld [vmem:[%s4486 + $0x32] sm:$0xff]
      %v5014 = vld [vmem:[%s4486 + $0x3a] sm:$0xff]
      %v5015 = vld [vmem:[%s4486 + $0x4a] sm:$0xff]
      %v5016 = vld [vmem:[%s4486 + $0x52] sm:$0xff]
      %v5017 = vld [vmem:[%s4486 + $0x62] sm:$0xff]
      %v5018 = vld [vmem:[%s4486 + $0x6a] sm:$0xff]
      %v5019 = vld [vmem:[%s4486 + $0x7a] sm:$0xff]
      %v5020 = vld [vmem:[%s4486 + $0x82] sm:$0xff]
      %v5021 = vld [vmem:[%s4486 + $0x92] sm:$0xff]
      %v5022 = vld [vmem:[%s4486 + $0x9a] sm:$0xff]
      %v5023 = vld [vmem:[%s4486 + $0xaa] sm:$0xff]
      %v5024 = vld [vmem:[%s4486 + $0xb2] sm:$0xff]
      %v5025 = vld [vmem:[%s4486 + $0xc2] sm:$0xff]
      %v5026 = vld [vmem:[%s4486 + $0xca] sm:$0xff]
      %v5027 = vld [vmem:[%s4486 + $0xda] sm:$0xff]
      %v5028 = vld [vmem:[%s4486 + $0xe2] sm:$0xff]
      %v5029 = vld [vmem:[%s4486 + $0xf2] sm:$0xff]
      %v5030 = vld [vmem:[%s4486 + $0xfa] sm:$0xff]
      %v5031 = vld [vmem:[%s4486 + $0x10a] sm:$0xff]
      %v5032 = vld [vmem:[%s4486 + $0x112] sm:$0xff]
      %v5033 = vld [vmem:[%s4486 + $0x122] sm:$0xff]
      %v5034 = vld [vmem:[%s4486 + $0x12a] sm:$0xff]
      %v5035 = vld [vmem:[%s4486 + $0x13a] sm:$0xff]
      %v5036 = vld [vmem:[%s4486 + $0x142] sm:$0xff]
      %v5037 = vld [vmem:[%s4486 + $0x152] sm:$0xff]
      %v5038 = vld [vmem:[%s4486 + $0x15a] sm:$0xff]
      %v5039 = vld [vmem:[%s4486 + $0x16a] sm:$0xff]
      %v5040 = vld [vmem:[%s4486 + $0x172] sm:$0xff]
      %s5041 = scalar_lea.vmem %s2, 17
      %v5042 = vld [vmem:[%s5041] sm:$0x1]
      %5044 = vset.pattern.permute.xlu0 0
      %5045 = vperm.xlu0 %5044, %v5009
      %v5046 = vpop.permute.xlu0 %5045
      %5049 = vset.pattern.permute.xlu0 0
      %5050 = vperm.xlu0 %5049, %v5010
      %v5051 = vpop.permute.xlu0 %5050
      %5054 = vset.pattern.permute.xlu0 0
      %5055 = vperm.xlu0 %5054, %v5011
      %v5056 = vpop.permute.xlu0 %5055
      %5059 = vset.pattern.permute.xlu0 0
      %5060 = vperm.xlu0 %5059, %v5012
      %v5061 = vpop.permute.xlu0 %5060
      %5064 = vset.pattern.permute.xlu0 0
      %5065 = vperm.xlu0 %5064, %v5013
      %v5066 = vpop.permute.xlu0 %5065
      %5069 = vset.pattern.permute.xlu0 0
      %5070 = vperm.xlu0 %5069, %v5014
      %v5071 = vpop.permute.xlu0 %5070
      %5074 = vset.pattern.permute.xlu0 0
      %5075 = vperm.xlu0 %5074, %v5015
      %v5076 = vpop.permute.xlu0 %5075
      %5079 = vset.pattern.permute.xlu0 0
      %5080 = vperm.xlu0 %5079, %v5016
      %v5081 = vpop.permute.xlu0 %5080
      %5084 = vset.pattern.permute.xlu0 0
      %5085 = vperm.xlu0 %5084, %v5017
      %v5086 = vpop.permute.xlu0 %5085
      %5089 = vset.pattern.permute.xlu0 0
      %5090 = vperm.xlu0 %5089, %v5018
      %v5091 = vpop.permute.xlu0 %5090
      %5094 = vset.pattern.permute.xlu0 0
      %5095 = vperm.xlu0 %5094, %v5019
      %v5096 = vpop.permute.xlu0 %5095
      %5099 = vset.pattern.permute.xlu0 0
      %5100 = vperm.xlu0 %5099, %v5020
      %v5101 = vpop.permute.xlu0 %5100
      %5104 = vset.pattern.permute.xlu0 0
      %5105 = vperm.xlu0 %5104, %v5021
      %v5106 = vpop.permute.xlu0 %5105
      %5109 = vset.pattern.permute.xlu0 0
      %5110 = vperm.xlu0 %5109, %v5022
      %v5111 = vpop.permute.xlu0 %5110
      %5114 = vset.pattern.permute.xlu0 0
      %5115 = vperm.xlu0 %5114, %v5023
      %v5116 = vpop.permute.xlu0 %5115
      %5119 = vset.pattern.permute.xlu0 0
      %5120 = vperm.xlu0 %5119, %v5024
      %v5121 = vpop.permute.xlu0 %5120
      %5124 = vset.pattern.permute.xlu0 0
      %5125 = vperm.xlu0 %5124, %v5025
      %v5126 = vpop.permute.xlu0 %5125
      %5129 = vset.pattern.permute.xlu0 0
      %5130 = vperm.xlu0 %5129, %v5026
      %v5131 = vpop.permute.xlu0 %5130
      %5134 = vset.pattern.permute.xlu0 0
      %5135 = vperm.xlu0 %5134, %v5027
      %v5136 = vpop.permute.xlu0 %5135
      %5139 = vset.pattern.permute.xlu0 0
      %5140 = vperm.xlu0 %5139, %v5028
      %v5141 = vpop.permute.xlu0 %5140
      %5144 = vset.pattern.permute.xlu0 0
      %5145 = vperm.xlu0 %5144, %v5029
      %v5146 = vpop.permute.xlu0 %5145
      %5149 = vset.pattern.permute.xlu0 0
      %5150 = vperm.xlu0 %5149, %v5030
      %v5151 = vpop.permute.xlu0 %5150
      %5154 = vset.pattern.permute.xlu0 0
      %5155 = vperm.xlu0 %5154, %v5031
      %v5156 = vpop.permute.xlu0 %5155
      %5159 = vset.pattern.permute.xlu0 0
      %5160 = vperm.xlu0 %5159, %v5032
      %v5161 = vpop.permute.xlu0 %5160
      %5164 = vset.pattern.permute.xlu0 0
      %5165 = vperm.xlu0 %5164, %v5033
      %v5166 = vpop.permute.xlu0 %5165
      %5169 = vset.pattern.permute.xlu0 0
      %5170 = vperm.xlu0 %5169, %v5034
      %v5171 = vpop.permute.xlu0 %5170
      %5174 = vset.pattern.permute.xlu0 0
      %5175 = vperm.xlu0 %5174, %v5035
      %v5176 = vpop.permute.xlu0 %5175
      %5179 = vset.pattern.permute.xlu0 0
      %5180 = vperm.xlu0 %5179, %v5036
      %v5181 = vpop.permute.xlu0 %5180
      %5184 = vset.pattern.permute.xlu0 0
      %5185 = vperm.xlu0 %5184, %v5037
      %v5186 = vpop.permute.xlu0 %5185
      %5189 = vset.pattern.permute.xlu0 0
      %5190 = vperm.xlu0 %5189, %v5038
      %v5191 = vpop.permute.xlu0 %5190
      %5194 = vset.pattern.permute.xlu0 0
      %5195 = vperm.xlu0 %5194, %v5039
      %v5196 = vpop.permute.xlu0 %5195
      %5199 = vset.pattern.permute.xlu0 0
      %5200 = vperm.xlu0 %5199, %v5040
      %v5201 = vpop.permute.xlu0 %5200
      %v5204 = vperm.slane %v5042, 0
      %v5206 = vmul.f32 %v5046, %v5204
      %v5207 = vmul.f32 %v5051, %v5204
      %v5208 = vmul.f32 %v5056, %v5204
      %v5209 = vmul.f32 %v5061, %v5204
      %v5210 = vmul.f32 %v5066, %v5204
      %v5211 = vmul.f32 %v5071, %v5204
      %v5212 = vmul.f32 %v5076, %v5204
      %v5213 = vmul.f32 %v5081, %v5204
      %v5214 = vmul.f32 %v5086, %v5204
      %v5215 = vmul.f32 %v5091, %v5204
      %v5216 = vmul.f32 %v5096, %v5204
      %v5217 = vmul.f32 %v5101, %v5204
      %v5218 = vmul.f32 %v5106, %v5204
      %v5219 = vmul.f32 %v5111, %v5204
      %v5220 = vmul.f32 %v5116, %v5204
      %v5221 = vmul.f32 %v5121, %v5204
      %v5222 = vmul.f32 %v5126, %v5204
      %v5223 = vmul.f32 %v5131, %v5204
      %v5224 = vmul.f32 %v5136, %v5204
      %v5225 = vmul.f32 %v5141, %v5204
      %v5226 = vmul.f32 %v5146, %v5204
      %v5227 = vmul.f32 %v5151, %v5204
      %v5228 = vmul.f32 %v5156, %v5204
      %v5229 = vmul.f32 %v5161, %v5204
      %v5230 = vmul.f32 %v5166, %v5204
      %v5231 = vmul.f32 %v5171, %v5204
      %v5232 = vmul.f32 %v5176, %v5204
      %v5233 = vmul.f32 %v5181, %v5204
      %v5234 = vmul.f32 %v5186, %v5204
      %v5235 = vmul.f32 %v5191, %v5204
      %v5236 = vmul.f32 %v5196, %v5204
      %v5237 = vmul.f32 %v5201, %v5204
      %v5238 = vadd.f32 %v4977, %v5206
      %v5239 = vadd.f32 %v4978, %v5207
      %v5240 = vadd.f32 %v4979, %v5208
      %v5241 = vadd.f32 %v4980, %v5209
      %v5242 = vadd.f32 %v4981, %v5210
      %v5243 = vadd.f32 %v4982, %v5211
      %v5244 = vadd.f32 %v4983, %v5212
      %v5245 = vadd.f32 %v4984, %v5213
      %v5246 = vadd.f32 %v4985, %v5214
      %v5247 = vadd.f32 %v4986, %v5215
      %v5248 = vadd.f32 %v4987, %v5216
      %v5249 = vadd.f32 %v4988, %v5217
      %v5250 = vadd.f32 %v4989, %v5218
      %v5251 = vadd.f32 %v4990, %v5219
      %v5252 = vadd.f32 %v4991, %v5220
      %v5253 = vadd.f32 %v4992, %v5221
      %v5254 = vadd.f32 %v4993, %v5222
      %v5255 = vadd.f32 %v4994, %v5223
      %v5256 = vadd.f32 %v4995, %v5224
      %v5257 = vadd.f32 %v4996, %v5225
      %v5258 = vadd.f32 %v4997, %v5226
      %v5259 = vadd.f32 %v4998, %v5227
      %v5260 = vadd.f32 %v4999, %v5228
      %v5261 = vadd.f32 %v5000, %v5229
      %v5262 = vadd.f32 %v5001, %v5230
      %v5263 = vadd.f32 %v5002, %v5231
      %v5264 = vadd.f32 %v5003, %v5232
      %v5265 = vadd.f32 %v5004, %v5233
      %v5266 = vadd.f32 %v5005, %v5234
      %v5267 = vadd.f32 %v5006, %v5235
      %v5268 = vadd.f32 %v5007, %v5236
      %v5269 = vadd.f32 %v5008, %v5237
      %v5270 = vld [vmem:[%s4486 + $0x3] sm:$0xff]
      %v5271 = vld [vmem:[%s4486 + $0xb] sm:$0xff]
      %v5272 = vld [vmem:[%s4486 + $0x1b] sm:$0xff]
      %v5273 = vld [vmem:[%s4486 + $0x23] sm:$0xff]
      %v5274 = vld [vmem:[%s4486 + $0x33] sm:$0xff]
      %v5275 = vld [vmem:[%s4486 + $0x3b] sm:$0xff]
      %v5276 = vld [vmem:[%s4486 + $0x4b] sm:$0xff]
      %v5277 = vld [vmem:[%s4486 + $0x53] sm:$0xff]
      %v5278 = vld [vmem:[%s4486 + $0x63] sm:$0xff]
      %v5279 = vld [vmem:[%s4486 + $0x6b] sm:$0xff]
      %v5280 = vld [vmem:[%s4486 + $0x7b] sm:$0xff]
      %v5281 = vld [vmem:[%s4486 + $0x83] sm:$0xff]
      %v5282 = vld [vmem:[%s4486 + $0x93] sm:$0xff]
      %v5283 = vld [vmem:[%s4486 + $0x9b] sm:$0xff]
      %v5284 = vld [vmem:[%s4486 + $0xab] sm:$0xff]
      %v5285 = vld [vmem:[%s4486 + $0xb3] sm:$0xff]
      %v5286 = vld [vmem:[%s4486 + $0xc3] sm:$0xff]
      %v5287 = vld [vmem:[%s4486 + $0xcb] sm:$0xff]
      %v5288 = vld [vmem:[%s4486 + $0xdb] sm:$0xff]
      %v5289 = vld [vmem:[%s4486 + $0xe3] sm:$0xff]
      %v5290 = vld [vmem:[%s4486 + $0xf3] sm:$0xff]
      %v5291 = vld [vmem:[%s4486 + $0xfb] sm:$0xff]
      %v5292 = vld [vmem:[%s4486 + $0x10b] sm:$0xff]
      %v5293 = vld [vmem:[%s4486 + $0x113] sm:$0xff]
      %v5294 = vld [vmem:[%s4486 + $0x123] sm:$0xff]
      %v5295 = vld [vmem:[%s4486 + $0x12b] sm:$0xff]
      %v5296 = vld [vmem:[%s4486 + $0x13b] sm:$0xff]
      %v5297 = vld [vmem:[%s4486 + $0x143] sm:$0xff]
      %v5298 = vld [vmem:[%s4486 + $0x153] sm:$0xff]
      %v5299 = vld [vmem:[%s4486 + $0x15b] sm:$0xff]
      %v5300 = vld [vmem:[%s4486 + $0x16b] sm:$0xff]
      %v5301 = vld [vmem:[%s4486 + $0x173] sm:$0xff]
      %s5302 = scalar_lea.vmem %s2, 18
      %v5303 = vld [vmem:[%s5302] sm:$0x1]
      %5305 = vset.pattern.permute.xlu0 0
      %5306 = vperm.xlu0 %5305, %v5270
      %v5307 = vpop.permute.xlu0 %5306
      %5310 = vset.pattern.permute.xlu0 0
      %5311 = vperm.xlu0 %5310, %v5271
      %v5312 = vpop.permute.xlu0 %5311
      %5315 = vset.pattern.permute.xlu0 0
      %5316 = vperm.xlu0 %5315, %v5272
      %v5317 = vpop.permute.xlu0 %5316
      %5320 = vset.pattern.permute.xlu0 0
      %5321 = vperm.xlu0 %5320, %v5273
      %v5322 = vpop.permute.xlu0 %5321
      %5325 = vset.pattern.permute.xlu0 0
      %5326 = vperm.xlu0 %5325, %v5274
      %v5327 = vpop.permute.xlu0 %5326
      %5330 = vset.pattern.permute.xlu0 0
      %5331 = vperm.xlu0 %5330, %v5275
      %v5332 = vpop.permute.xlu0 %5331
      %5335 = vset.pattern.permute.xlu0 0
      %5336 = vperm.xlu0 %5335, %v5276
      %v5337 = vpop.permute.xlu0 %5336
      %5340 = vset.pattern.permute.xlu0 0
      %5341 = vperm.xlu0 %5340, %v5277
      %v5342 = vpop.permute.xlu0 %5341
      %5345 = vset.pattern.permute.xlu0 0
      %5346 = vperm.xlu0 %5345, %v5278
      %v5347 = vpop.permute.xlu0 %5346
      %5350 = vset.pattern.permute.xlu0 0
      %5351 = vperm.xlu0 %5350, %v5279
      %v5352 = vpop.permute.xlu0 %5351
      %5355 = vset.pattern.permute.xlu0 0
      %5356 = vperm.xlu0 %5355, %v5280
      %v5357 = vpop.permute.xlu0 %5356
      %5360 = vset.pattern.permute.xlu0 0
      %5361 = vperm.xlu0 %5360, %v5281
      %v5362 = vpop.permute.xlu0 %5361
      %5365 = vset.pattern.permute.xlu0 0
      %5366 = vperm.xlu0 %5365, %v5282
      %v5367 = vpop.permute.xlu0 %5366
      %5370 = vset.pattern.permute.xlu0 0
      %5371 = vperm.xlu0 %5370, %v5283
      %v5372 = vpop.permute.xlu0 %5371
      %5375 = vset.pattern.permute.xlu0 0
      %5376 = vperm.xlu0 %5375, %v5284
      %v5377 = vpop.permute.xlu0 %5376
      %5380 = vset.pattern.permute.xlu0 0
      %5381 = vperm.xlu0 %5380, %v5285
      %v5382 = vpop.permute.xlu0 %5381
      %5385 = vset.pattern.permute.xlu0 0
      %5386 = vperm.xlu0 %5385, %v5286
      %v5387 = vpop.permute.xlu0 %5386
      %5390 = vset.pattern.permute.xlu0 0
      %5391 = vperm.xlu0 %5390, %v5287
      %v5392 = vpop.permute.xlu0 %5391
      %5395 = vset.pattern.permute.xlu0 0
      %5396 = vperm.xlu0 %5395, %v5288
      %v5397 = vpop.permute.xlu0 %5396
      %5400 = vset.pattern.permute.xlu0 0
      %5401 = vperm.xlu0 %5400, %v5289
      %v5402 = vpop.permute.xlu0 %5401
      %5405 = vset.pattern.permute.xlu0 0
      %5406 = vperm.xlu0 %5405, %v5290
      %v5407 = vpop.permute.xlu0 %5406
      %5410 = vset.pattern.permute.xlu0 0
      %5411 = vperm.xlu0 %5410, %v5291
      %v5412 = vpop.permute.xlu0 %5411
      %5415 = vset.pattern.permute.xlu0 0
      %5416 = vperm.xlu0 %5415, %v5292
      %v5417 = vpop.permute.xlu0 %5416
      %5420 = vset.pattern.permute.xlu0 0
      %5421 = vperm.xlu0 %5420, %v5293
      %v5422 = vpop.permute.xlu0 %5421
      %5425 = vset.pattern.permute.xlu0 0
      %5426 = vperm.xlu0 %5425, %v5294
      %v5427 = vpop.permute.xlu0 %5426
      %5430 = vset.pattern.permute.xlu0 0
      %5431 = vperm.xlu0 %5430, %v5295
      %v5432 = vpop.permute.xlu0 %5431
      %5435 = vset.pattern.permute.xlu0 0
      %5436 = vperm.xlu0 %5435, %v5296
      %v5437 = vpop.permute.xlu0 %5436
      %5440 = vset.pattern.permute.xlu0 0
      %5441 = vperm.xlu0 %5440, %v5297
      %v5442 = vpop.permute.xlu0 %5441
      %5445 = vset.pattern.permute.xlu0 0
      %5446 = vperm.xlu0 %5445, %v5298
      %v5447 = vpop.permute.xlu0 %5446
      %5450 = vset.pattern.permute.xlu0 0
      %5451 = vperm.xlu0 %5450, %v5299
      %v5452 = vpop.permute.xlu0 %5451
      %5455 = vset.pattern.permute.xlu0 0
      %5456 = vperm.xlu0 %5455, %v5300
      %v5457 = vpop.permute.xlu0 %5456
      %5460 = vset.pattern.permute.xlu0 0
      %5461 = vperm.xlu0 %5460, %v5301
      %v5462 = vpop.permute.xlu0 %5461
      %v5465 = vperm.slane %v5303, 0
      %v5467 = vmul.f32 %v5307, %v5465
      %v5468 = vmul.f32 %v5312, %v5465
      %v5469 = vmul.f32 %v5317, %v5465
      %v5470 = vmul.f32 %v5322, %v5465
      %v5471 = vmul.f32 %v5327, %v5465
      %v5472 = vmul.f32 %v5332, %v5465
      %v5473 = vmul.f32 %v5337, %v5465
      %v5474 = vmul.f32 %v5342, %v5465
      %v5475 = vmul.f32 %v5347, %v5465
      %v5476 = vmul.f32 %v5352, %v5465
      %v5477 = vmul.f32 %v5357, %v5465
      %v5478 = vmul.f32 %v5362, %v5465
      %v5479 = vmul.f32 %v5367, %v5465
      %v5480 = vmul.f32 %v5372, %v5465
      %v5481 = vmul.f32 %v5377, %v5465
      %v5482 = vmul.f32 %v5382, %v5465
      %v5483 = vmul.f32 %v5387, %v5465
      %v5484 = vmul.f32 %v5392, %v5465
      %v5485 = vmul.f32 %v5397, %v5465
      %v5486 = vmul.f32 %v5402, %v5465
      %v5487 = vmul.f32 %v5407, %v5465
      %v5488 = vmul.f32 %v5412, %v5465
      %v5489 = vmul.f32 %v5417, %v5465
      %v5490 = vmul.f32 %v5422, %v5465
      %v5491 = vmul.f32 %v5427, %v5465
      %v5492 = vmul.f32 %v5432, %v5465
      %v5493 = vmul.f32 %v5437, %v5465
      %v5494 = vmul.f32 %v5442, %v5465
      %v5495 = vmul.f32 %v5447, %v5465
      %v5496 = vmul.f32 %v5452, %v5465
      %v5497 = vmul.f32 %v5457, %v5465
      %v5498 = vmul.f32 %v5462, %v5465
      %v5499 = vadd.f32 %v5238, %v5467
      %v5500 = vadd.f32 %v5239, %v5468
      %v5501 = vadd.f32 %v5240, %v5469
      %v5502 = vadd.f32 %v5241, %v5470
      %v5503 = vadd.f32 %v5242, %v5471
      %v5504 = vadd.f32 %v5243, %v5472
      %v5505 = vadd.f32 %v5244, %v5473
      %v5506 = vadd.f32 %v5245, %v5474
      %v5507 = vadd.f32 %v5246, %v5475
      %v5508 = vadd.f32 %v5247, %v5476
      %v5509 = vadd.f32 %v5248, %v5477
      %v5510 = vadd.f32 %v5249, %v5478
      %v5511 = vadd.f32 %v5250, %v5479
      %v5512 = vadd.f32 %v5251, %v5480
      %v5513 = vadd.f32 %v5252, %v5481
      %v5514 = vadd.f32 %v5253, %v5482
      %v5515 = vadd.f32 %v5254, %v5483
      %v5516 = vadd.f32 %v5255, %v5484
      %v5517 = vadd.f32 %v5256, %v5485
      %v5518 = vadd.f32 %v5257, %v5486
      %v5519 = vadd.f32 %v5258, %v5487
      %v5520 = vadd.f32 %v5259, %v5488
      %v5521 = vadd.f32 %v5260, %v5489
      %v5522 = vadd.f32 %v5261, %v5490
      %v5523 = vadd.f32 %v5262, %v5491
      %v5524 = vadd.f32 %v5263, %v5492
      %v5525 = vadd.f32 %v5264, %v5493
      %v5526 = vadd.f32 %v5265, %v5494
      %v5527 = vadd.f32 %v5266, %v5495
      %v5528 = vadd.f32 %v5267, %v5496
      %v5529 = vadd.f32 %v5268, %v5497
      %v5530 = vadd.f32 %v5269, %v5498
      %v5531 = vld [vmem:[%s4486 + $0x4] sm:$0xff]
      %v5532 = vld [vmem:[%s4486 + $0xc] sm:$0xff]
      %v5533 = vld [vmem:[%s4486 + $0x1c] sm:$0xff]
      %v5534 = vld [vmem:[%s4486 + $0x24] sm:$0xff]
      %v5535 = vld [vmem:[%s4486 + $0x34] sm:$0xff]
      %v5536 = vld [vmem:[%s4486 + $0x3c] sm:$0xff]
      %v5537 = vld [vmem:[%s4486 + $0x4c] sm:$0xff]
      %v5538 = vld [vmem:[%s4486 + $0x54] sm:$0xff]
      %v5539 = vld [vmem:[%s4486 + $0x64] sm:$0xff]
      %v5540 = vld [vmem:[%s4486 + $0x6c] sm:$0xff]
      %v5541 = vld [vmem:[%s4486 + $0x7c] sm:$0xff]
      %v5542 = vld [vmem:[%s4486 + $0x84] sm:$0xff]
      %v5543 = vld [vmem:[%s4486 + $0x94] sm:$0xff]
      %v5544 = vld [vmem:[%s4486 + $0x9c] sm:$0xff]
      %v5545 = vld [vmem:[%s4486 + $0xac] sm:$0xff]
      %v5546 = vld [vmem:[%s4486 + $0xb4] sm:$0xff]
      %v5547 = vld [vmem:[%s4486 + $0xc4] sm:$0xff]
      %v5548 = vld [vmem:[%s4486 + $0xcc] sm:$0xff]
      %v5549 = vld [vmem:[%s4486 + $0xdc] sm:$0xff]
      %v5550 = vld [vmem:[%s4486 + $0xe4] sm:$0xff]
      %v5551 = vld [vmem:[%s4486 + $0xf4] sm:$0xff]
      %v5552 = vld [vmem:[%s4486 + $0xfc] sm:$0xff]
      %v5553 = vld [vmem:[%s4486 + $0x10c] sm:$0xff]
      %v5554 = vld [vmem:[%s4486 + $0x114] sm:$0xff]
      %v5555 = vld [vmem:[%s4486 + $0x124] sm:$0xff]
      %v5556 = vld [vmem:[%s4486 + $0x12c] sm:$0xff]
      %v5557 = vld [vmem:[%s4486 + $0x13c] sm:$0xff]
      %v5558 = vld [vmem:[%s4486 + $0x144] sm:$0xff]
      %v5559 = vld [vmem:[%s4486 + $0x154] sm:$0xff]
      %v5560 = vld [vmem:[%s4486 + $0x15c] sm:$0xff]
      %v5561 = vld [vmem:[%s4486 + $0x16c] sm:$0xff]
      %v5562 = vld [vmem:[%s4486 + $0x174] sm:$0xff]
      %s5563 = scalar_lea.vmem %s2, 19
      %v5564 = vld [vmem:[%s5563] sm:$0x1]
      %5566 = vset.pattern.permute.xlu0 0
      %5567 = vperm.xlu0 %5566, %v5531
      %v5568 = vpop.permute.xlu0 %5567
      %5571 = vset.pattern.permute.xlu0 0
      %5572 = vperm.xlu0 %5571, %v5532
      %v5573 = vpop.permute.xlu0 %5572
      %5576 = vset.pattern.permute.xlu0 0
      %5577 = vperm.xlu0 %5576, %v5533
      %v5578 = vpop.permute.xlu0 %5577
      %5581 = vset.pattern.permute.xlu0 0
      %5582 = vperm.xlu0 %5581, %v5534
      %v5583 = vpop.permute.xlu0 %5582
      %5586 = vset.pattern.permute.xlu0 0
      %5587 = vperm.xlu0 %5586, %v5535
      %v5588 = vpop.permute.xlu0 %5587
      %5591 = vset.pattern.permute.xlu0 0
      %5592 = vperm.xlu0 %5591, %v5536
      %v5593 = vpop.permute.xlu0 %5592
      %5596 = vset.pattern.permute.xlu0 0
      %5597 = vperm.xlu0 %5596, %v5537
      %v5598 = vpop.permute.xlu0 %5597
      %5601 = vset.pattern.permute.xlu0 0
      %5602 = vperm.xlu0 %5601, %v5538
      %v5603 = vpop.permute.xlu0 %5602
      %5606 = vset.pattern.permute.xlu0 0
      %5607 = vperm.xlu0 %5606, %v5539
      %v5608 = vpop.permute.xlu0 %5607
      %5611 = vset.pattern.permute.xlu0 0
      %5612 = vperm.xlu0 %5611, %v5540
      %v5613 = vpop.permute.xlu0 %5612
      %5616 = vset.pattern.permute.xlu0 0
      %5617 = vperm.xlu0 %5616, %v5541
      %v5618 = vpop.permute.xlu0 %5617
      %5621 = vset.pattern.permute.xlu0 0
      %5622 = vperm.xlu0 %5621, %v5542
      %v5623 = vpop.permute.xlu0 %5622
      %5626 = vset.pattern.permute.xlu0 0
      %5627 = vperm.xlu0 %5626, %v5543
      %v5628 = vpop.permute.xlu0 %5627
      %5631 = vset.pattern.permute.xlu0 0
      %5632 = vperm.xlu0 %5631, %v5544
      %v5633 = vpop.permute.xlu0 %5632
      %5636 = vset.pattern.permute.xlu0 0
      %5637 = vperm.xlu0 %5636, %v5545
      %v5638 = vpop.permute.xlu0 %5637
      %5641 = vset.pattern.permute.xlu0 0
      %5642 = vperm.xlu0 %5641, %v5546
      %v5643 = vpop.permute.xlu0 %5642
      %5646 = vset.pattern.permute.xlu0 0
      %5647 = vperm.xlu0 %5646, %v5547
      %v5648 = vpop.permute.xlu0 %5647
      %5651 = vset.pattern.permute.xlu0 0
      %5652 = vperm.xlu0 %5651, %v5548
      %v5653 = vpop.permute.xlu0 %5652
      %5656 = vset.pattern.permute.xlu0 0
      %5657 = vperm.xlu0 %5656, %v5549
      %v5658 = vpop.permute.xlu0 %5657
      %5661 = vset.pattern.permute.xlu0 0
      %5662 = vperm.xlu0 %5661, %v5550
      %v5663 = vpop.permute.xlu0 %5662
      %5666 = vset.pattern.permute.xlu0 0
      %5667 = vperm.xlu0 %5666, %v5551
      %v5668 = vpop.permute.xlu0 %5667
      %5671 = vset.pattern.permute.xlu0 0
      %5672 = vperm.xlu0 %5671, %v5552
      %v5673 = vpop.permute.xlu0 %5672
      %5676 = vset.pattern.permute.xlu0 0
      %5677 = vperm.xlu0 %5676, %v5553
      %v5678 = vpop.permute.xlu0 %5677
      %5681 = vset.pattern.permute.xlu0 0
      %5682 = vperm.xlu0 %5681, %v5554
      %v5683 = vpop.permute.xlu0 %5682
      %5686 = vset.pattern.permute.xlu0 0
      %5687 = vperm.xlu0 %5686, %v5555
      %v5688 = vpop.permute.xlu0 %5687
      %5691 = vset.pattern.permute.xlu0 0
      %5692 = vperm.xlu0 %5691, %v5556
      %v5693 = vpop.permute.xlu0 %5692
      %5696 = vset.pattern.permute.xlu0 0
      %5697 = vperm.xlu0 %5696, %v5557
      %v5698 = vpop.permute.xlu0 %5697
      %5701 = vset.pattern.permute.xlu0 0
      %5702 = vperm.xlu0 %5701, %v5558
      %v5703 = vpop.permute.xlu0 %5702
      %5706 = vset.pattern.permute.xlu0 0
      %5707 = vperm.xlu0 %5706, %v5559
      %v5708 = vpop.permute.xlu0 %5707
      %5711 = vset.pattern.permute.xlu0 0
      %5712 = vperm.xlu0 %5711, %v5560
      %v5713 = vpop.permute.xlu0 %5712
      %5716 = vset.pattern.permute.xlu0 0
      %5717 = vperm.xlu0 %5716, %v5561
      %v5718 = vpop.permute.xlu0 %5717
      %5721 = vset.pattern.permute.xlu0 0
      %5722 = vperm.xlu0 %5721, %v5562
      %v5723 = vpop.permute.xlu0 %5722
      %v5726 = vperm.slane %v5564, 0
      %v5728 = vmul.f32 %v5568, %v5726
      %v5729 = vmul.f32 %v5573, %v5726
      %v5730 = vmul.f32 %v5578, %v5726
      %v5731 = vmul.f32 %v5583, %v5726
      %v5732 = vmul.f32 %v5588, %v5726
      %v5733 = vmul.f32 %v5593, %v5726
      %v5734 = vmul.f32 %v5598, %v5726
      %v5735 = vmul.f32 %v5603, %v5726
      %v5736 = vmul.f32 %v5608, %v5726
      %v5737 = vmul.f32 %v5613, %v5726
      %v5738 = vmul.f32 %v5618, %v5726
      %v5739 = vmul.f32 %v5623, %v5726
      %v5740 = vmul.f32 %v5628, %v5726
      %v5741 = vmul.f32 %v5633, %v5726
      %v5742 = vmul.f32 %v5638, %v5726
      %v5743 = vmul.f32 %v5643, %v5726
      %v5744 = vmul.f32 %v5648, %v5726
      %v5745 = vmul.f32 %v5653, %v5726
      %v5746 = vmul.f32 %v5658, %v5726
      %v5747 = vmul.f32 %v5663, %v5726
      %v5748 = vmul.f32 %v5668, %v5726
      %v5749 = vmul.f32 %v5673, %v5726
      %v5750 = vmul.f32 %v5678, %v5726
      %v5751 = vmul.f32 %v5683, %v5726
      %v5752 = vmul.f32 %v5688, %v5726
      %v5753 = vmul.f32 %v5693, %v5726
      %v5754 = vmul.f32 %v5698, %v5726
      %v5755 = vmul.f32 %v5703, %v5726
      %v5756 = vmul.f32 %v5708, %v5726
      %v5757 = vmul.f32 %v5713, %v5726
      %v5758 = vmul.f32 %v5718, %v5726
      %v5759 = vmul.f32 %v5723, %v5726
      %v5760 = vadd.f32 %v5499, %v5728
      %v5761 = vadd.f32 %v5500, %v5729
      %v5762 = vadd.f32 %v5501, %v5730
      %v5763 = vadd.f32 %v5502, %v5731
      %v5764 = vadd.f32 %v5503, %v5732
      %v5765 = vadd.f32 %v5504, %v5733
      %v5766 = vadd.f32 %v5505, %v5734
      %v5767 = vadd.f32 %v5506, %v5735
      %v5768 = vadd.f32 %v5507, %v5736
      %v5769 = vadd.f32 %v5508, %v5737
      %v5770 = vadd.f32 %v5509, %v5738
      %v5771 = vadd.f32 %v5510, %v5739
      %v5772 = vadd.f32 %v5511, %v5740
      %v5773 = vadd.f32 %v5512, %v5741
      %v5774 = vadd.f32 %v5513, %v5742
      %v5775 = vadd.f32 %v5514, %v5743
      %v5776 = vadd.f32 %v5515, %v5744
      %v5777 = vadd.f32 %v5516, %v5745
      %v5778 = vadd.f32 %v5517, %v5746
      %v5779 = vadd.f32 %v5518, %v5747
      %v5780 = vadd.f32 %v5519, %v5748
      %v5781 = vadd.f32 %v5520, %v5749
      %v5782 = vadd.f32 %v5521, %v5750
      %v5783 = vadd.f32 %v5522, %v5751
      %v5784 = vadd.f32 %v5523, %v5752
      %v5785 = vadd.f32 %v5524, %v5753
      %v5786 = vadd.f32 %v5525, %v5754
      %v5787 = vadd.f32 %v5526, %v5755
      %v5788 = vadd.f32 %v5527, %v5756
      %v5789 = vadd.f32 %v5528, %v5757
      %v5790 = vadd.f32 %v5529, %v5758
      %v5791 = vadd.f32 %v5530, %v5759
      %s5792 = scalar_lea.vmem %s449, 96
      %v5793 = vld [vmem:[%s5792] sm:$0xff]
      %v5794 = vld [vmem:[%s5792 + $0x8] sm:$0xff]
      %v5795 = vld [vmem:[%s5792 + $0x18] sm:$0xff]
      %v5796 = vld [vmem:[%s5792 + $0x20] sm:$0xff]
      %v5797 = vld [vmem:[%s5792 + $0x30] sm:$0xff]
      %v5798 = vld [vmem:[%s5792 + $0x38] sm:$0xff]
      %v5799 = vld [vmem:[%s5792 + $0x48] sm:$0xff]
      %v5800 = vld [vmem:[%s5792 + $0x50] sm:$0xff]
      %v5801 = vld [vmem:[%s5792 + $0x60] sm:$0xff]
      %v5802 = vld [vmem:[%s5792 + $0x68] sm:$0xff]
      %v5803 = vld [vmem:[%s5792 + $0x78] sm:$0xff]
      %v5804 = vld [vmem:[%s5792 + $0x80] sm:$0xff]
      %v5805 = vld [vmem:[%s5792 + $0x90] sm:$0xff]
      %v5806 = vld [vmem:[%s5792 + $0x98] sm:$0xff]
      %v5807 = vld [vmem:[%s5792 + $0xa8] sm:$0xff]
      %v5808 = vld [vmem:[%s5792 + $0xb0] sm:$0xff]
      %v5809 = vld [vmem:[%s5792 + $0xc0] sm:$0xff]
      %v5810 = vld [vmem:[%s5792 + $0xc8] sm:$0xff]
      %v5811 = vld [vmem:[%s5792 + $0xd8] sm:$0xff]
      %v5812 = vld [vmem:[%s5792 + $0xe0] sm:$0xff]
      %v5813 = vld [vmem:[%s5792 + $0xf0] sm:$0xff]
      %v5814 = vld [vmem:[%s5792 + $0xf8] sm:$0xff]
      %v5815 = vld [vmem:[%s5792 + $0x108] sm:$0xff]
      %v5816 = vld [vmem:[%s5792 + $0x110] sm:$0xff]
      %v5817 = vld [vmem:[%s5792 + $0x120] sm:$0xff]
      %v5818 = vld [vmem:[%s5792 + $0x128] sm:$0xff]
      %v5819 = vld [vmem:[%s5792 + $0x138] sm:$0xff]
      %v5820 = vld [vmem:[%s5792 + $0x140] sm:$0xff]
      %v5821 = vld [vmem:[%s5792 + $0x150] sm:$0xff]
      %v5822 = vld [vmem:[%s5792 + $0x158] sm:$0xff]
      %v5823 = vld [vmem:[%s5792 + $0x168] sm:$0xff]
      %v5824 = vld [vmem:[%s5792 + $0x170] sm:$0xff]
      %s5825 = scalar_lea.vmem %s2, 20
      %v5826 = vld [vmem:[%s5825] sm:$0x1]
      %5828 = vset.pattern.permute.xlu0 0
      %5829 = vperm.xlu0 %5828, %v5793
      %v5830 = vpop.permute.xlu0 %5829
      %5833 = vset.pattern.permute.xlu0 0
      %5834 = vperm.xlu0 %5833, %v5794
      %v5835 = vpop.permute.xlu0 %5834
      %5838 = vset.pattern.permute.xlu0 0
      %5839 = vperm.xlu0 %5838, %v5795
      %v5840 = vpop.permute.xlu0 %5839
      %5843 = vset.pattern.permute.xlu0 0
      %5844 = vperm.xlu0 %5843, %v5796
      %v5845 = vpop.permute.xlu0 %5844
      %5848 = vset.pattern.permute.xlu0 0
      %5849 = vperm.xlu0 %5848, %v5797
      %v5850 = vpop.permute.xlu0 %5849
      %5853 = vset.pattern.permute.xlu0 0
      %5854 = vperm.xlu0 %5853, %v5798
      %v5855 = vpop.permute.xlu0 %5854
      %5858 = vset.pattern.permute.xlu0 0
      %5859 = vperm.xlu0 %5858, %v5799
      %v5860 = vpop.permute.xlu0 %5859
      %5863 = vset.pattern.permute.xlu0 0
      %5864 = vperm.xlu0 %5863, %v5800
      %v5865 = vpop.permute.xlu0 %5864
      %5868 = vset.pattern.permute.xlu0 0
      %5869 = vperm.xlu0 %5868, %v5801
      %v5870 = vpop.permute.xlu0 %5869
      %5873 = vset.pattern.permute.xlu0 0
      %5874 = vperm.xlu0 %5873, %v5802
      %v5875 = vpop.permute.xlu0 %5874
      %5878 = vset.pattern.permute.xlu0 0
      %5879 = vperm.xlu0 %5878, %v5803
      %v5880 = vpop.permute.xlu0 %5879
      %5883 = vset.pattern.permute.xlu0 0
      %5884 = vperm.xlu0 %5883, %v5804
      %v5885 = vpop.permute.xlu0 %5884
      %5888 = vset.pattern.permute.xlu0 0
      %5889 = vperm.xlu0 %5888, %v5805
      %v5890 = vpop.permute.xlu0 %5889
      %5893 = vset.pattern.permute.xlu0 0
      %5894 = vperm.xlu0 %5893, %v5806
      %v5895 = vpop.permute.xlu0 %5894
      %5898 = vset.pattern.permute.xlu0 0
      %5899 = vperm.xlu0 %5898, %v5807
      %v5900 = vpop.permute.xlu0 %5899
      %5903 = vset.pattern.permute.xlu0 0
      %5904 = vperm.xlu0 %5903, %v5808
      %v5905 = vpop.permute.xlu0 %5904
      %5908 = vset.pattern.permute.xlu0 0
      %5909 = vperm.xlu0 %5908, %v5809
      %v5910 = vpop.permute.xlu0 %5909
      %5913 = vset.pattern.permute.xlu0 0
      %5914 = vperm.xlu0 %5913, %v5810
      %v5915 = vpop.permute.xlu0 %5914
      %5918 = vset.pattern.permute.xlu0 0
      %5919 = vperm.xlu0 %5918, %v5811
      %v5920 = vpop.permute.xlu0 %5919
      %5923 = vset.pattern.permute.xlu0 0
      %5924 = vperm.xlu0 %5923, %v5812
      %v5925 = vpop.permute.xlu0 %5924
      %5928 = vset.pattern.permute.xlu0 0
      %5929 = vperm.xlu0 %5928, %v5813
      %v5930 = vpop.permute.xlu0 %5929
      %5933 = vset.pattern.permute.xlu0 0
      %5934 = vperm.xlu0 %5933, %v5814
      %v5935 = vpop.permute.xlu0 %5934
      %5938 = vset.pattern.permute.xlu0 0
      %5939 = vperm.xlu0 %5938, %v5815
      %v5940 = vpop.permute.xlu0 %5939
      %5943 = vset.pattern.permute.xlu0 0
      %5944 = vperm.xlu0 %5943, %v5816
      %v5945 = vpop.permute.xlu0 %5944
      %5948 = vset.pattern.permute.xlu0 0
      %5949 = vperm.xlu0 %5948, %v5817
      %v5950 = vpop.permute.xlu0 %5949
      %5953 = vset.pattern.permute.xlu0 0
      %5954 = vperm.xlu0 %5953, %v5818
      %v5955 = vpop.permute.xlu0 %5954
      %5958 = vset.pattern.permute.xlu0 0
      %5959 = vperm.xlu0 %5958, %v5819
      %v5960 = vpop.permute.xlu0 %5959
      %5963 = vset.pattern.permute.xlu0 0
      %5964 = vperm.xlu0 %5963, %v5820
      %v5965 = vpop.permute.xlu0 %5964
      %5968 = vset.pattern.permute.xlu0 0
      %5969 = vperm.xlu0 %5968, %v5821
      %v5970 = vpop.permute.xlu0 %5969
      %5973 = vset.pattern.permute.xlu0 0
      %5974 = vperm.xlu0 %5973, %v5822
      %v5975 = vpop.permute.xlu0 %5974
      %5978 = vset.pattern.permute.xlu0 0
      %5979 = vperm.xlu0 %5978, %v5823
      %v5980 = vpop.permute.xlu0 %5979
      %5983 = vset.pattern.permute.xlu0 0
      %5984 = vperm.xlu0 %5983, %v5824
      %v5985 = vpop.permute.xlu0 %5984
      %v5988 = vperm.slane %v5826, 0
      %v5990 = vmul.f32 %v5830, %v5988
      %v5991 = vmul.f32 %v5835, %v5988
      %v5992 = vmul.f32 %v5840, %v5988
      %v5993 = vmul.f32 %v5845, %v5988
      %v5994 = vmul.f32 %v5850, %v5988
      %v5995 = vmul.f32 %v5855, %v5988
      %v5996 = vmul.f32 %v5860, %v5988
      %v5997 = vmul.f32 %v5865, %v5988
      %v5998 = vmul.f32 %v5870, %v5988
      %v5999 = vmul.f32 %v5875, %v5988
      %v6000 = vmul.f32 %v5880, %v5988
      %v6001 = vmul.f32 %v5885, %v5988
      %v6002 = vmul.f32 %v5890, %v5988
      %v6003 = vmul.f32 %v5895, %v5988
      %v6004 = vmul.f32 %v5900, %v5988
      %v6005 = vmul.f32 %v5905, %v5988
      %v6006 = vmul.f32 %v5910, %v5988
      %v6007 = vmul.f32 %v5915, %v5988
      %v6008 = vmul.f32 %v5920, %v5988
      %v6009 = vmul.f32 %v5925, %v5988
      %v6010 = vmul.f32 %v5930, %v5988
      %v6011 = vmul.f32 %v5935, %v5988
      %v6012 = vmul.f32 %v5940, %v5988
      %v6013 = vmul.f32 %v5945, %v5988
      %v6014 = vmul.f32 %v5950, %v5988
      %v6015 = vmul.f32 %v5955, %v5988
      %v6016 = vmul.f32 %v5960, %v5988
      %v6017 = vmul.f32 %v5965, %v5988
      %v6018 = vmul.f32 %v5970, %v5988
      %v6019 = vmul.f32 %v5975, %v5988
      %v6020 = vmul.f32 %v5980, %v5988
      %v6021 = vmul.f32 %v5985, %v5988
      %v6022 = vadd.f32 %v5760, %v5990
      %v6023 = vadd.f32 %v5761, %v5991
      %v6024 = vadd.f32 %v5762, %v5992
      %v6025 = vadd.f32 %v5763, %v5993
      %v6026 = vadd.f32 %v5764, %v5994
      %v6027 = vadd.f32 %v5765, %v5995
      %v6028 = vadd.f32 %v5766, %v5996
      %v6029 = vadd.f32 %v5767, %v5997
      %v6030 = vadd.f32 %v5768, %v5998
      %v6031 = vadd.f32 %v5769, %v5999
      %v6032 = vadd.f32 %v5770, %v6000
      %v6033 = vadd.f32 %v5771, %v6001
      %v6034 = vadd.f32 %v5772, %v6002
      %v6035 = vadd.f32 %v5773, %v6003
      %v6036 = vadd.f32 %v5774, %v6004
      %v6037 = vadd.f32 %v5775, %v6005
      %v6038 = vadd.f32 %v5776, %v6006
      %v6039 = vadd.f32 %v5777, %v6007
      %v6040 = vadd.f32 %v5778, %v6008
      %v6041 = vadd.f32 %v5779, %v6009
      %v6042 = vadd.f32 %v5780, %v6010
      %v6043 = vadd.f32 %v5781, %v6011
      %v6044 = vadd.f32 %v5782, %v6012
      %v6045 = vadd.f32 %v5783, %v6013
      %v6046 = vadd.f32 %v5784, %v6014
      %v6047 = vadd.f32 %v5785, %v6015
      %v6048 = vadd.f32 %v5786, %v6016
      %v6049 = vadd.f32 %v5787, %v6017
      %v6050 = vadd.f32 %v5788, %v6018
      %v6051 = vadd.f32 %v5789, %v6019
      %v6052 = vadd.f32 %v5790, %v6020
      %v6053 = vadd.f32 %v5791, %v6021
      %v6054 = vld [vmem:[%s5792 + $0x1] sm:$0xff]
      %v6055 = vld [vmem:[%s5792 + $0x9] sm:$0xff]
      %v6056 = vld [vmem:[%s5792 + $0x19] sm:$0xff]
      %v6057 = vld [vmem:[%s5792 + $0x21] sm:$0xff]
      %v6058 = vld [vmem:[%s5792 + $0x31] sm:$0xff]
      %v6059 = vld [vmem:[%s5792 + $0x39] sm:$0xff]
      %v6060 = vld [vmem:[%s5792 + $0x49] sm:$0xff]
      %v6061 = vld [vmem:[%s5792 + $0x51] sm:$0xff]
      %v6062 = vld [vmem:[%s5792 + $0x61] sm:$0xff]
      %v6063 = vld [vmem:[%s5792 + $0x69] sm:$0xff]
      %v6064 = vld [vmem:[%s5792 + $0x79] sm:$0xff]
      %v6065 = vld [vmem:[%s5792 + $0x81] sm:$0xff]
      %v6066 = vld [vmem:[%s5792 + $0x91] sm:$0xff]
      %v6067 = vld [vmem:[%s5792 + $0x99] sm:$0xff]
      %v6068 = vld [vmem:[%s5792 + $0xa9] sm:$0xff]
      %v6069 = vld [vmem:[%s5792 + $0xb1] sm:$0xff]
      %v6070 = vld [vmem:[%s5792 + $0xc1] sm:$0xff]
      %v6071 = vld [vmem:[%s5792 + $0xc9] sm:$0xff]
      %v6072 = vld [vmem:[%s5792 + $0xd9] sm:$0xff]
      %v6073 = vld [vmem:[%s5792 + $0xe1] sm:$0xff]
      %v6074 = vld [vmem:[%s5792 + $0xf1] sm:$0xff]
      %v6075 = vld [vmem:[%s5792 + $0xf9] sm:$0xff]
      %v6076 = vld [vmem:[%s5792 + $0x109] sm:$0xff]
      %v6077 = vld [vmem:[%s5792 + $0x111] sm:$0xff]
      %v6078 = vld [vmem:[%s5792 + $0x121] sm:$0xff]
      %v6079 = vld [vmem:[%s5792 + $0x129] sm:$0xff]
      %v6080 = vld [vmem:[%s5792 + $0x139] sm:$0xff]
      %v6081 = vld [vmem:[%s5792 + $0x141] sm:$0xff]
      %v6082 = vld [vmem:[%s5792 + $0x151] sm:$0xff]
      %v6083 = vld [vmem:[%s5792 + $0x159] sm:$0xff]
      %v6084 = vld [vmem:[%s5792 + $0x169] sm:$0xff]
      %v6085 = vld [vmem:[%s5792 + $0x171] sm:$0xff]
      %s6086 = scalar_lea.vmem %s2, 21
      %v6087 = vld [vmem:[%s6086] sm:$0x1]
      %6089 = vset.pattern.permute.xlu0 0
      %6090 = vperm.xlu0 %6089, %v6054
      %v6091 = vpop.permute.xlu0 %6090
      %6094 = vset.pattern.permute.xlu0 0
      %6095 = vperm.xlu0 %6094, %v6055
      %v6096 = vpop.permute.xlu0 %6095
      %6099 = vset.pattern.permute.xlu0 0
      %6100 = vperm.xlu0 %6099, %v6056
      %v6101 = vpop.permute.xlu0 %6100
      %6104 = vset.pattern.permute.xlu0 0
      %6105 = vperm.xlu0 %6104, %v6057
      %v6106 = vpop.permute.xlu0 %6105
      %6109 = vset.pattern.permute.xlu0 0
      %6110 = vperm.xlu0 %6109, %v6058
      %v6111 = vpop.permute.xlu0 %6110
      %6114 = vset.pattern.permute.xlu0 0
      %6115 = vperm.xlu0 %6114, %v6059
      %v6116 = vpop.permute.xlu0 %6115
      %6119 = vset.pattern.permute.xlu0 0
      %6120 = vperm.xlu0 %6119, %v6060
      %v6121 = vpop.permute.xlu0 %6120
      %6124 = vset.pattern.permute.xlu0 0
      %6125 = vperm.xlu0 %6124, %v6061
      %v6126 = vpop.permute.xlu0 %6125
      %6129 = vset.pattern.permute.xlu0 0
      %6130 = vperm.xlu0 %6129, %v6062
      %v6131 = vpop.permute.xlu0 %6130
      %6134 = vset.pattern.permute.xlu0 0
      %6135 = vperm.xlu0 %6134, %v6063
      %v6136 = vpop.permute.xlu0 %6135
      %6139 = vset.pattern.permute.xlu0 0
      %6140 = vperm.xlu0 %6139, %v6064
      %v6141 = vpop.permute.xlu0 %6140
      %6144 = vset.pattern.permute.xlu0 0
      %6145 = vperm.xlu0 %6144, %v6065
      %v6146 = vpop.permute.xlu0 %6145
      %6149 = vset.pattern.permute.xlu0 0
      %6150 = vperm.xlu0 %6149, %v6066
      %v6151 = vpop.permute.xlu0 %6150
      %6154 = vset.pattern.permute.xlu0 0
      %6155 = vperm.xlu0 %6154, %v6067
      %v6156 = vpop.permute.xlu0 %6155
      %6159 = vset.pattern.permute.xlu0 0
      %6160 = vperm.xlu0 %6159, %v6068
      %v6161 = vpop.permute.xlu0 %6160
      %6164 = vset.pattern.permute.xlu0 0
      %6165 = vperm.xlu0 %6164, %v6069
      %v6166 = vpop.permute.xlu0 %6165
      %6169 = vset.pattern.permute.xlu0 0
      %6170 = vperm.xlu0 %6169, %v6070
      %v6171 = vpop.permute.xlu0 %6170
      %6174 = vset.pattern.permute.xlu0 0
      %6175 = vperm.xlu0 %6174, %v6071
      %v6176 = vpop.permute.xlu0 %6175
      %6179 = vset.pattern.permute.xlu0 0
      %6180 = vperm.xlu0 %6179, %v6072
      %v6181 = vpop.permute.xlu0 %6180
      %6184 = vset.pattern.permute.xlu0 0
      %6185 = vperm.xlu0 %6184, %v6073
      %v6186 = vpop.permute.xlu0 %6185
      %6189 = vset.pattern.permute.xlu0 0
      %6190 = vperm.xlu0 %6189, %v6074
      %v6191 = vpop.permute.xlu0 %6190
      %6194 = vset.pattern.permute.xlu0 0
      %6195 = vperm.xlu0 %6194, %v6075
      %v6196 = vpop.permute.xlu0 %6195
      %6199 = vset.pattern.permute.xlu0 0
      %6200 = vperm.xlu0 %6199, %v6076
      %v6201 = vpop.permute.xlu0 %6200
      %6204 = vset.pattern.permute.xlu0 0
      %6205 = vperm.xlu0 %6204, %v6077
      %v6206 = vpop.permute.xlu0 %6205
      %6209 = vset.pattern.permute.xlu0 0
      %6210 = vperm.xlu0 %6209, %v6078
      %v6211 = vpop.permute.xlu0 %6210
      %6214 = vset.pattern.permute.xlu0 0
      %6215 = vperm.xlu0 %6214, %v6079
      %v6216 = vpop.permute.xlu0 %6215
      %6219 = vset.pattern.permute.xlu0 0
      %6220 = vperm.xlu0 %6219, %v6080
      %v6221 = vpop.permute.xlu0 %6220
      %6224 = vset.pattern.permute.xlu0 0
      %6225 = vperm.xlu0 %6224, %v6081
      %v6226 = vpop.permute.xlu0 %6225
      %6229 = vset.pattern.permute.xlu0 0
      %6230 = vperm.xlu0 %6229, %v6082
      %v6231 = vpop.permute.xlu0 %6230
      %6234 = vset.pattern.permute.xlu0 0
      %6235 = vperm.xlu0 %6234, %v6083
      %v6236 = vpop.permute.xlu0 %6235
      %6239 = vset.pattern.permute.xlu0 0
      %6240 = vperm.xlu0 %6239, %v6084
      %v6241 = vpop.permute.xlu0 %6240
      %6244 = vset.pattern.permute.xlu0 0
      %6245 = vperm.xlu0 %6244, %v6085
      %v6246 = vpop.permute.xlu0 %6245
      %v6249 = vperm.slane %v6087, 0
      %v6251 = vmul.f32 %v6091, %v6249
      %v6252 = vmul.f32 %v6096, %v6249
      %v6253 = vmul.f32 %v6101, %v6249
      %v6254 = vmul.f32 %v6106, %v6249
      %v6255 = vmul.f32 %v6111, %v6249
      %v6256 = vmul.f32 %v6116, %v6249
      %v6257 = vmul.f32 %v6121, %v6249
      %v6258 = vmul.f32 %v6126, %v6249
      %v6259 = vmul.f32 %v6131, %v6249
      %v6260 = vmul.f32 %v6136, %v6249
      %v6261 = vmul.f32 %v6141, %v6249
      %v6262 = vmul.f32 %v6146, %v6249
      %v6263 = vmul.f32 %v6151, %v6249
      %v6264 = vmul.f32 %v6156, %v6249
      %v6265 = vmul.f32 %v6161, %v6249
      %v6266 = vmul.f32 %v6166, %v6249
      %v6267 = vmul.f32 %v6171, %v6249
      %v6268 = vmul.f32 %v6176, %v6249
      %v6269 = vmul.f32 %v6181, %v6249
      %v6270 = vmul.f32 %v6186, %v6249
      %v6271 = vmul.f32 %v6191, %v6249
      %v6272 = vmul.f32 %v6196, %v6249
      %v6273 = vmul.f32 %v6201, %v6249
      %v6274 = vmul.f32 %v6206, %v6249
      %v6275 = vmul.f32 %v6211, %v6249
      %v6276 = vmul.f32 %v6216, %v6249
      %v6277 = vmul.f32 %v6221, %v6249
      %v6278 = vmul.f32 %v6226, %v6249
      %v6279 = vmul.f32 %v6231, %v6249
      %v6280 = vmul.f32 %v6236, %v6249
      %v6281 = vmul.f32 %v6241, %v6249
      %v6282 = vmul.f32 %v6246, %v6249
      %v6283 = vadd.f32 %v6022, %v6251
      %v6284 = vadd.f32 %v6023, %v6252
      %v6285 = vadd.f32 %v6024, %v6253
      %v6286 = vadd.f32 %v6025, %v6254
      %v6287 = vadd.f32 %v6026, %v6255
      %v6288 = vadd.f32 %v6027, %v6256
      %v6289 = vadd.f32 %v6028, %v6257
      %v6290 = vadd.f32 %v6029, %v6258
      %v6291 = vadd.f32 %v6030, %v6259
      %v6292 = vadd.f32 %v6031, %v6260
      %v6293 = vadd.f32 %v6032, %v6261
      %v6294 = vadd.f32 %v6033, %v6262
      %v6295 = vadd.f32 %v6034, %v6263
      %v6296 = vadd.f32 %v6035, %v6264
      %v6297 = vadd.f32 %v6036, %v6265
      %v6298 = vadd.f32 %v6037, %v6266
      %v6299 = vadd.f32 %v6038, %v6267
      %v6300 = vadd.f32 %v6039, %v6268
      %v6301 = vadd.f32 %v6040, %v6269
      %v6302 = vadd.f32 %v6041, %v6270
      %v6303 = vadd.f32 %v6042, %v6271
      %v6304 = vadd.f32 %v6043, %v6272
      %v6305 = vadd.f32 %v6044, %v6273
      %v6306 = vadd.f32 %v6045, %v6274
      %v6307 = vadd.f32 %v6046, %v6275
      %v6308 = vadd.f32 %v6047, %v6276
      %v6309 = vadd.f32 %v6048, %v6277
      %v6310 = vadd.f32 %v6049, %v6278
      %v6311 = vadd.f32 %v6050, %v6279
      %v6312 = vadd.f32 %v6051, %v6280
      %v6313 = vadd.f32 %v6052, %v6281
      %v6314 = vadd.f32 %v6053, %v6282
      %v6315 = vld [vmem:[%s5792 + $0x2] sm:$0xff]
      %v6316 = vld [vmem:[%s5792 + $0xa] sm:$0xff]
      %v6317 = vld [vmem:[%s5792 + $0x1a] sm:$0xff]
      %v6318 = vld [vmem:[%s5792 + $0x22] sm:$0xff]
      %v6319 = vld [vmem:[%s5792 + $0x32] sm:$0xff]
      %v6320 = vld [vmem:[%s5792 + $0x3a] sm:$0xff]
      %v6321 = vld [vmem:[%s5792 + $0x4a] sm:$0xff]
      %v6322 = vld [vmem:[%s5792 + $0x52] sm:$0xff]
      %v6323 = vld [vmem:[%s5792 + $0x62] sm:$0xff]
      %v6324 = vld [vmem:[%s5792 + $0x6a] sm:$0xff]
      %v6325 = vld [vmem:[%s5792 + $0x7a] sm:$0xff]
      %v6326 = vld [vmem:[%s5792 + $0x82] sm:$0xff]
      %v6327 = vld [vmem:[%s5792 + $0x92] sm:$0xff]
      %v6328 = vld [vmem:[%s5792 + $0x9a] sm:$0xff]
      %v6329 = vld [vmem:[%s5792 + $0xaa] sm:$0xff]
      %v6330 = vld [vmem:[%s5792 + $0xb2] sm:$0xff]
      %v6331 = vld [vmem:[%s5792 + $0xc2] sm:$0xff]
      %v6332 = vld [vmem:[%s5792 + $0xca] sm:$0xff]
      %v6333 = vld [vmem:[%s5792 + $0xda] sm:$0xff]
      %v6334 = vld [vmem:[%s5792 + $0xe2] sm:$0xff]
      %v6335 = vld [vmem:[%s5792 + $0xf2] sm:$0xff]
      %v6336 = vld [vmem:[%s5792 + $0xfa] sm:$0xff]
      %v6337 = vld [vmem:[%s5792 + $0x10a] sm:$0xff]
      %v6338 = vld [vmem:[%s5792 + $0x112] sm:$0xff]
      %v6339 = vld [vmem:[%s5792 + $0x122] sm:$0xff]
      %v6340 = vld [vmem:[%s5792 + $0x12a] sm:$0xff]
      %v6341 = vld [vmem:[%s5792 + $0x13a] sm:$0xff]
      %v6342 = vld [vmem:[%s5792 + $0x142] sm:$0xff]
      %v6343 = vld [vmem:[%s5792 + $0x152] sm:$0xff]
      %v6344 = vld [vmem:[%s5792 + $0x15a] sm:$0xff]
      %v6345 = vld [vmem:[%s5792 + $0x16a] sm:$0xff]
      %v6346 = vld [vmem:[%s5792 + $0x172] sm:$0xff]
      %s6347 = scalar_lea.vmem %s2, 22
      %v6348 = vld [vmem:[%s6347] sm:$0x1]
      %6350 = vset.pattern.permute.xlu0 0
      %6351 = vperm.xlu0 %6350, %v6315
      %v6352 = vpop.permute.xlu0 %6351
      %6355 = vset.pattern.permute.xlu0 0
      %6356 = vperm.xlu0 %6355, %v6316
      %v6357 = vpop.permute.xlu0 %6356
      %6360 = vset.pattern.permute.xlu0 0
      %6361 = vperm.xlu0 %6360, %v6317
      %v6362 = vpop.permute.xlu0 %6361
      %6365 = vset.pattern.permute.xlu0 0
      %6366 = vperm.xlu0 %6365, %v6318
      %v6367 = vpop.permute.xlu0 %6366
      %6370 = vset.pattern.permute.xlu0 0
      %6371 = vperm.xlu0 %6370, %v6319
      %v6372 = vpop.permute.xlu0 %6371
      %6375 = vset.pattern.permute.xlu0 0
      %6376 = vperm.xlu0 %6375, %v6320
      %v6377 = vpop.permute.xlu0 %6376
      %6380 = vset.pattern.permute.xlu0 0
      %6381 = vperm.xlu0 %6380, %v6321
      %v6382 = vpop.permute.xlu0 %6381
      %6385 = vset.pattern.permute.xlu0 0
      %6386 = vperm.xlu0 %6385, %v6322
      %v6387 = vpop.permute.xlu0 %6386
      %6390 = vset.pattern.permute.xlu0 0
      %6391 = vperm.xlu0 %6390, %v6323
      %v6392 = vpop.permute.xlu0 %6391
      %6395 = vset.pattern.permute.xlu0 0
      %6396 = vperm.xlu0 %6395, %v6324
      %v6397 = vpop.permute.xlu0 %6396
      %6400 = vset.pattern.permute.xlu0 0
      %6401 = vperm.xlu0 %6400, %v6325
      %v6402 = vpop.permute.xlu0 %6401
      %6405 = vset.pattern.permute.xlu0 0
      %6406 = vperm.xlu0 %6405, %v6326
      %v6407 = vpop.permute.xlu0 %6406
      %6410 = vset.pattern.permute.xlu0 0
      %6411 = vperm.xlu0 %6410, %v6327
      %v6412 = vpop.permute.xlu0 %6411
      %6415 = vset.pattern.permute.xlu0 0
      %6416 = vperm.xlu0 %6415, %v6328
      %v6417 = vpop.permute.xlu0 %6416
      %6420 = vset.pattern.permute.xlu0 0
      %6421 = vperm.xlu0 %6420, %v6329
      %v6422 = vpop.permute.xlu0 %6421
      %6425 = vset.pattern.permute.xlu0 0
      %6426 = vperm.xlu0 %6425, %v6330
      %v6427 = vpop.permute.xlu0 %6426
      %6430 = vset.pattern.permute.xlu0 0
      %6431 = vperm.xlu0 %6430, %v6331
      %v6432 = vpop.permute.xlu0 %6431
      %6435 = vset.pattern.permute.xlu0 0
      %6436 = vperm.xlu0 %6435, %v6332
      %v6437 = vpop.permute.xlu0 %6436
      %6440 = vset.pattern.permute.xlu0 0
      %6441 = vperm.xlu0 %6440, %v6333
      %v6442 = vpop.permute.xlu0 %6441
      %6445 = vset.pattern.permute.xlu0 0
      %6446 = vperm.xlu0 %6445, %v6334
      %v6447 = vpop.permute.xlu0 %6446
      %6450 = vset.pattern.permute.xlu0 0
      %6451 = vperm.xlu0 %6450, %v6335
      %v6452 = vpop.permute.xlu0 %6451
      %6455 = vset.pattern.permute.xlu0 0
      %6456 = vperm.xlu0 %6455, %v6336
      %v6457 = vpop.permute.xlu0 %6456
      %6460 = vset.pattern.permute.xlu0 0
      %6461 = vperm.xlu0 %6460, %v6337
      %v6462 = vpop.permute.xlu0 %6461
      %6465 = vset.pattern.permute.xlu0 0
      %6466 = vperm.xlu0 %6465, %v6338
      %v6467 = vpop.permute.xlu0 %6466
      %6470 = vset.pattern.permute.xlu0 0
      %6471 = vperm.xlu0 %6470, %v6339
      %v6472 = vpop.permute.xlu0 %6471
      %6475 = vset.pattern.permute.xlu0 0
      %6476 = vperm.xlu0 %6475, %v6340
      %v6477 = vpop.permute.xlu0 %6476
      %6480 = vset.pattern.permute.xlu0 0
      %6481 = vperm.xlu0 %6480, %v6341
      %v6482 = vpop.permute.xlu0 %6481
      %6485 = vset.pattern.permute.xlu0 0
      %6486 = vperm.xlu0 %6485, %v6342
      %v6487 = vpop.permute.xlu0 %6486
      %6490 = vset.pattern.permute.xlu0 0
      %6491 = vperm.xlu0 %6490, %v6343
      %v6492 = vpop.permute.xlu0 %6491
      %6495 = vset.pattern.permute.xlu0 0
      %6496 = vperm.xlu0 %6495, %v6344
      %v6497 = vpop.permute.xlu0 %6496
      %6500 = vset.pattern.permute.xlu0 0
      %6501 = vperm.xlu0 %6500, %v6345
      %v6502 = vpop.permute.xlu0 %6501
      %6505 = vset.pattern.permute.xlu0 0
      %6506 = vperm.xlu0 %6505, %v6346
      %v6507 = vpop.permute.xlu0 %6506
      %v6510 = vperm.slane %v6348, 0
      %v6512 = vmul.f32 %v6352, %v6510
      %v6513 = vmul.f32 %v6357, %v6510
      %v6514 = vmul.f32 %v6362, %v6510
      %v6515 = vmul.f32 %v6367, %v6510
      %v6516 = vmul.f32 %v6372, %v6510
      %v6517 = vmul.f32 %v6377, %v6510
      %v6518 = vmul.f32 %v6382, %v6510
      %v6519 = vmul.f32 %v6387, %v6510
      %v6520 = vmul.f32 %v6392, %v6510
      %v6521 = vmul.f32 %v6397, %v6510
      %v6522 = vmul.f32 %v6402, %v6510
      %v6523 = vmul.f32 %v6407, %v6510
      %v6524 = vmul.f32 %v6412, %v6510
      %v6525 = vmul.f32 %v6417, %v6510
      %v6526 = vmul.f32 %v6422, %v6510
      %v6527 = vmul.f32 %v6427, %v6510
      %v6528 = vmul.f32 %v6432, %v6510
      %v6529 = vmul.f32 %v6437, %v6510
      %v6530 = vmul.f32 %v6442, %v6510
      %v6531 = vmul.f32 %v6447, %v6510
      %v6532 = vmul.f32 %v6452, %v6510
      %v6533 = vmul.f32 %v6457, %v6510
      %v6534 = vmul.f32 %v6462, %v6510
      %v6535 = vmul.f32 %v6467, %v6510
      %v6536 = vmul.f32 %v6472, %v6510
      %v6537 = vmul.f32 %v6477, %v6510
      %v6538 = vmul.f32 %v6482, %v6510
      %v6539 = vmul.f32 %v6487, %v6510
      %v6540 = vmul.f32 %v6492, %v6510
      %v6541 = vmul.f32 %v6497, %v6510
      %v6542 = vmul.f32 %v6502, %v6510
      %v6543 = vmul.f32 %v6507, %v6510
      %v6544 = vadd.f32 %v6283, %v6512
      %v6545 = vadd.f32 %v6284, %v6513
      %v6546 = vadd.f32 %v6285, %v6514
      %v6547 = vadd.f32 %v6286, %v6515
      %v6548 = vadd.f32 %v6287, %v6516
      %v6549 = vadd.f32 %v6288, %v6517
      %v6550 = vadd.f32 %v6289, %v6518
      %v6551 = vadd.f32 %v6290, %v6519
      %v6552 = vadd.f32 %v6291, %v6520
      %v6553 = vadd.f32 %v6292, %v6521
      %v6554 = vadd.f32 %v6293, %v6522
      %v6555 = vadd.f32 %v6294, %v6523
      %v6556 = vadd.f32 %v6295, %v6524
      %v6557 = vadd.f32 %v6296, %v6525
      %v6558 = vadd.f32 %v6297, %v6526
      %v6559 = vadd.f32 %v6298, %v6527
      %v6560 = vadd.f32 %v6299, %v6528
      %v6561 = vadd.f32 %v6300, %v6529
      %v6562 = vadd.f32 %v6301, %v6530
      %v6563 = vadd.f32 %v6302, %v6531
      %v6564 = vadd.f32 %v6303, %v6532
      %v6565 = vadd.f32 %v6304, %v6533
      %v6566 = vadd.f32 %v6305, %v6534
      %v6567 = vadd.f32 %v6306, %v6535
      %v6568 = vadd.f32 %v6307, %v6536
      %v6569 = vadd.f32 %v6308, %v6537
      %v6570 = vadd.f32 %v6309, %v6538
      %v6571 = vadd.f32 %v6310, %v6539
      %v6572 = vadd.f32 %v6311, %v6540
      %v6573 = vadd.f32 %v6312, %v6541
      %v6574 = vadd.f32 %v6313, %v6542
      %v6575 = vadd.f32 %v6314, %v6543
      %v6576 = vld [vmem:[%s5792 + $0x3] sm:$0xff]
      %v6577 = vld [vmem:[%s5792 + $0xb] sm:$0xff]
      %v6578 = vld [vmem:[%s5792 + $0x1b] sm:$0xff]
      %v6579 = vld [vmem:[%s5792 + $0x23] sm:$0xff]
      %v6580 = vld [vmem:[%s5792 + $0x33] sm:$0xff]
      %v6581 = vld [vmem:[%s5792 + $0x3b] sm:$0xff]
      %v6582 = vld [vmem:[%s5792 + $0x4b] sm:$0xff]
      %v6583 = vld [vmem:[%s5792 + $0x53] sm:$0xff]
      %v6584 = vld [vmem:[%s5792 + $0x63] sm:$0xff]
      %v6585 = vld [vmem:[%s5792 + $0x6b] sm:$0xff]
      %v6586 = vld [vmem:[%s5792 + $0x7b] sm:$0xff]
      %v6587 = vld [vmem:[%s5792 + $0x83] sm:$0xff]
      %v6588 = vld [vmem:[%s5792 + $0x93] sm:$0xff]
      %v6589 = vld [vmem:[%s5792 + $0x9b] sm:$0xff]
      %v6590 = vld [vmem:[%s5792 + $0xab] sm:$0xff]
      %v6591 = vld [vmem:[%s5792 + $0xb3] sm:$0xff]
      %v6592 = vld [vmem:[%s5792 + $0xc3] sm:$0xff]
      %v6593 = vld [vmem:[%s5792 + $0xcb] sm:$0xff]
      %v6594 = vld [vmem:[%s5792 + $0xdb] sm:$0xff]
      %v6595 = vld [vmem:[%s5792 + $0xe3] sm:$0xff]
      %v6596 = vld [vmem:[%s5792 + $0xf3] sm:$0xff]
      %v6597 = vld [vmem:[%s5792 + $0xfb] sm:$0xff]
      %v6598 = vld [vmem:[%s5792 + $0x10b] sm:$0xff]
      %v6599 = vld [vmem:[%s5792 + $0x113] sm:$0xff]
      %v6600 = vld [vmem:[%s5792 + $0x123] sm:$0xff]
      %v6601 = vld [vmem:[%s5792 + $0x12b] sm:$0xff]
      %v6602 = vld [vmem:[%s5792 + $0x13b] sm:$0xff]
      %v6603 = vld [vmem:[%s5792 + $0x143] sm:$0xff]
      %v6604 = vld [vmem:[%s5792 + $0x153] sm:$0xff]
      %v6605 = vld [vmem:[%s5792 + $0x15b] sm:$0xff]
      %v6606 = vld [vmem:[%s5792 + $0x16b] sm:$0xff]
      %v6607 = vld [vmem:[%s5792 + $0x173] sm:$0xff]
      %s6608 = scalar_lea.vmem %s2, 23
      %v6609 = vld [vmem:[%s6608] sm:$0x1]
      %6611 = vset.pattern.permute.xlu0 0
      %6612 = vperm.xlu0 %6611, %v6576
      %v6613 = vpop.permute.xlu0 %6612
      %6616 = vset.pattern.permute.xlu0 0
      %6617 = vperm.xlu0 %6616, %v6577
      %v6618 = vpop.permute.xlu0 %6617
      %6621 = vset.pattern.permute.xlu0 0
      %6622 = vperm.xlu0 %6621, %v6578
      %v6623 = vpop.permute.xlu0 %6622
      %6626 = vset.pattern.permute.xlu0 0
      %6627 = vperm.xlu0 %6626, %v6579
      %v6628 = vpop.permute.xlu0 %6627
      %6631 = vset.pattern.permute.xlu0 0
      %6632 = vperm.xlu0 %6631, %v6580
      %v6633 = vpop.permute.xlu0 %6632
      %6636 = vset.pattern.permute.xlu0 0
      %6637 = vperm.xlu0 %6636, %v6581
      %v6638 = vpop.permute.xlu0 %6637
      %6641 = vset.pattern.permute.xlu0 0
      %6642 = vperm.xlu0 %6641, %v6582
      %v6643 = vpop.permute.xlu0 %6642
      %6646 = vset.pattern.permute.xlu0 0
      %6647 = vperm.xlu0 %6646, %v6583
      %v6648 = vpop.permute.xlu0 %6647
      %6651 = vset.pattern.permute.xlu0 0
      %6652 = vperm.xlu0 %6651, %v6584
      %v6653 = vpop.permute.xlu0 %6652
      %6656 = vset.pattern.permute.xlu0 0
      %6657 = vperm.xlu0 %6656, %v6585
      %v6658 = vpop.permute.xlu0 %6657
      %6661 = vset.pattern.permute.xlu0 0
      %6662 = vperm.xlu0 %6661, %v6586
      %v6663 = vpop.permute.xlu0 %6662
      %6666 = vset.pattern.permute.xlu0 0
      %6667 = vperm.xlu0 %6666, %v6587
      %v6668 = vpop.permute.xlu0 %6667
      %6671 = vset.pattern.permute.xlu0 0
      %6672 = vperm.xlu0 %6671, %v6588
      %v6673 = vpop.permute.xlu0 %6672
      %6676 = vset.pattern.permute.xlu0 0
      %6677 = vperm.xlu0 %6676, %v6589
      %v6678 = vpop.permute.xlu0 %6677
      %6681 = vset.pattern.permute.xlu0 0
      %6682 = vperm.xlu0 %6681, %v6590
      %v6683 = vpop.permute.xlu0 %6682
      %6686 = vset.pattern.permute.xlu0 0
      %6687 = vperm.xlu0 %6686, %v6591
      %v6688 = vpop.permute.xlu0 %6687
      %6691 = vset.pattern.permute.xlu0 0
      %6692 = vperm.xlu0 %6691, %v6592
      %v6693 = vpop.permute.xlu0 %6692
      %6696 = vset.pattern.permute.xlu0 0
      %6697 = vperm.xlu0 %6696, %v6593
      %v6698 = vpop.permute.xlu0 %6697
      %6701 = vset.pattern.permute.xlu0 0
      %6702 = vperm.xlu0 %6701, %v6594
      %v6703 = vpop.permute.xlu0 %6702
      %6706 = vset.pattern.permute.xlu0 0
      %6707 = vperm.xlu0 %6706, %v6595
      %v6708 = vpop.permute.xlu0 %6707
      %6711 = vset.pattern.permute.xlu0 0
      %6712 = vperm.xlu0 %6711, %v6596
      %v6713 = vpop.permute.xlu0 %6712
      %6716 = vset.pattern.permute.xlu0 0
      %6717 = vperm.xlu0 %6716, %v6597
      %v6718 = vpop.permute.xlu0 %6717
      %6721 = vset.pattern.permute.xlu0 0
      %6722 = vperm.xlu0 %6721, %v6598
      %v6723 = vpop.permute.xlu0 %6722
      %6726 = vset.pattern.permute.xlu0 0
      %6727 = vperm.xlu0 %6726, %v6599
      %v6728 = vpop.permute.xlu0 %6727
      %6731 = vset.pattern.permute.xlu0 0
      %6732 = vperm.xlu0 %6731, %v6600
      %v6733 = vpop.permute.xlu0 %6732
      %6736 = vset.pattern.permute.xlu0 0
      %6737 = vperm.xlu0 %6736, %v6601
      %v6738 = vpop.permute.xlu0 %6737
      %6741 = vset.pattern.permute.xlu0 0
      %6742 = vperm.xlu0 %6741, %v6602
      %v6743 = vpop.permute.xlu0 %6742
      %6746 = vset.pattern.permute.xlu0 0
      %6747 = vperm.xlu0 %6746, %v6603
      %v6748 = vpop.permute.xlu0 %6747
      %6751 = vset.pattern.permute.xlu0 0
      %6752 = vperm.xlu0 %6751, %v6604
      %v6753 = vpop.permute.xlu0 %6752
      %6756 = vset.pattern.permute.xlu0 0
      %6757 = vperm.xlu0 %6756, %v6605
      %v6758 = vpop.permute.xlu0 %6757
      %6761 = vset.pattern.permute.xlu0 0
      %6762 = vperm.xlu0 %6761, %v6606
      %v6763 = vpop.permute.xlu0 %6762
      %6766 = vset.pattern.permute.xlu0 0
      %6767 = vperm.xlu0 %6766, %v6607
      %v6768 = vpop.permute.xlu0 %6767
      %v6771 = vperm.slane %v6609, 0
      %v6773 = vmul.f32 %v6613, %v6771
      %v6774 = vmul.f32 %v6618, %v6771
      %v6775 = vmul.f32 %v6623, %v6771
      %v6776 = vmul.f32 %v6628, %v6771
      %v6777 = vmul.f32 %v6633, %v6771
      %v6778 = vmul.f32 %v6638, %v6771
      %v6779 = vmul.f32 %v6643, %v6771
      %v6780 = vmul.f32 %v6648, %v6771
      %v6781 = vmul.f32 %v6653, %v6771
      %v6782 = vmul.f32 %v6658, %v6771
      %v6783 = vmul.f32 %v6663, %v6771
      %v6784 = vmul.f32 %v6668, %v6771
      %v6785 = vmul.f32 %v6673, %v6771
      %v6786 = vmul.f32 %v6678, %v6771
      %v6787 = vmul.f32 %v6683, %v6771
      %v6788 = vmul.f32 %v6688, %v6771
      %v6789 = vmul.f32 %v6693, %v6771
      %v6790 = vmul.f32 %v6698, %v6771
      %v6791 = vmul.f32 %v6703, %v6771
      %v6792 = vmul.f32 %v6708, %v6771
      %v6793 = vmul.f32 %v6713, %v6771
      %v6794 = vmul.f32 %v6718, %v6771
      %v6795 = vmul.f32 %v6723, %v6771
      %v6796 = vmul.f32 %v6728, %v6771
      %v6797 = vmul.f32 %v6733, %v6771
      %v6798 = vmul.f32 %v6738, %v6771
      %v6799 = vmul.f32 %v6743, %v6771
      %v6800 = vmul.f32 %v6748, %v6771
      %v6801 = vmul.f32 %v6753, %v6771
      %v6802 = vmul.f32 %v6758, %v6771
      %v6803 = vmul.f32 %v6763, %v6771
      %v6804 = vmul.f32 %v6768, %v6771
      %v6805 = vadd.f32 %v6544, %v6773
      %v6806 = vadd.f32 %v6545, %v6774
      %v6807 = vadd.f32 %v6546, %v6775
      %v6808 = vadd.f32 %v6547, %v6776
      %v6809 = vadd.f32 %v6548, %v6777
      %v6810 = vadd.f32 %v6549, %v6778
      %v6811 = vadd.f32 %v6550, %v6779
      %v6812 = vadd.f32 %v6551, %v6780
      %v6813 = vadd.f32 %v6552, %v6781
      %v6814 = vadd.f32 %v6553, %v6782
      %v6815 = vadd.f32 %v6554, %v6783
      %v6816 = vadd.f32 %v6555, %v6784
      %v6817 = vadd.f32 %v6556, %v6785
      %v6818 = vadd.f32 %v6557, %v6786
      %v6819 = vadd.f32 %v6558, %v6787
      %v6820 = vadd.f32 %v6559, %v6788
      %v6821 = vadd.f32 %v6560, %v6789
      %v6822 = vadd.f32 %v6561, %v6790
      %v6823 = vadd.f32 %v6562, %v6791
      %v6824 = vadd.f32 %v6563, %v6792
      %v6825 = vadd.f32 %v6564, %v6793
      %v6826 = vadd.f32 %v6565, %v6794
      %v6827 = vadd.f32 %v6566, %v6795
      %v6828 = vadd.f32 %v6567, %v6796
      %v6829 = vadd.f32 %v6568, %v6797
      %v6830 = vadd.f32 %v6569, %v6798
      %v6831 = vadd.f32 %v6570, %v6799
      %v6832 = vadd.f32 %v6571, %v6800
      %v6833 = vadd.f32 %v6572, %v6801
      %v6834 = vadd.f32 %v6573, %v6802
      %v6835 = vadd.f32 %v6574, %v6803
      %v6836 = vadd.f32 %v6575, %v6804
      %v6837 = vld [vmem:[%s5792 + $0x4] sm:$0xff]
      %v6838 = vld [vmem:[%s5792 + $0xc] sm:$0xff]
      %v6839 = vld [vmem:[%s5792 + $0x1c] sm:$0xff]
      %v6840 = vld [vmem:[%s5792 + $0x24] sm:$0xff]
      %v6841 = vld [vmem:[%s5792 + $0x34] sm:$0xff]
      %v6842 = vld [vmem:[%s5792 + $0x3c] sm:$0xff]
      %v6843 = vld [vmem:[%s5792 + $0x4c] sm:$0xff]
      %v6844 = vld [vmem:[%s5792 + $0x54] sm:$0xff]
      %v6845 = vld [vmem:[%s5792 + $0x64] sm:$0xff]
      %v6846 = vld [vmem:[%s5792 + $0x6c] sm:$0xff]
      %v6847 = vld [vmem:[%s5792 + $0x7c] sm:$0xff]
      %v6848 = vld [vmem:[%s5792 + $0x84] sm:$0xff]
      %v6849 = vld [vmem:[%s5792 + $0x94] sm:$0xff]
      %v6850 = vld [vmem:[%s5792 + $0x9c] sm:$0xff]
      %v6851 = vld [vmem:[%s5792 + $0xac] sm:$0xff]
      %v6852 = vld [vmem:[%s5792 + $0xb4] sm:$0xff]
      %v6853 = vld [vmem:[%s5792 + $0xc4] sm:$0xff]
      %v6854 = vld [vmem:[%s5792 + $0xcc] sm:$0xff]
      %v6855 = vld [vmem:[%s5792 + $0xdc] sm:$0xff]
      %v6856 = vld [vmem:[%s5792 + $0xe4] sm:$0xff]
      %v6857 = vld [vmem:[%s5792 + $0xf4] sm:$0xff]
      %v6858 = vld [vmem:[%s5792 + $0xfc] sm:$0xff]
      %v6859 = vld [vmem:[%s5792 + $0x10c] sm:$0xff]
      %v6860 = vld [vmem:[%s5792 + $0x114] sm:$0xff]
      %v6861 = vld [vmem:[%s5792 + $0x124] sm:$0xff]
      %v6862 = vld [vmem:[%s5792 + $0x12c] sm:$0xff]
      %v6863 = vld [vmem:[%s5792 + $0x13c] sm:$0xff]
      %v6864 = vld [vmem:[%s5792 + $0x144] sm:$0xff]
      %v6865 = vld [vmem:[%s5792 + $0x154] sm:$0xff]
      %v6866 = vld [vmem:[%s5792 + $0x15c] sm:$0xff]
      %v6867 = vld [vmem:[%s5792 + $0x16c] sm:$0xff]
      %v6868 = vld [vmem:[%s5792 + $0x174] sm:$0xff]
      %s6869 = scalar_lea.vmem %s2, 24
      %v6870 = vld [vmem:[%s6869] sm:$0x1]
      %6872 = vset.pattern.permute.xlu0 0
      %6873 = vperm.xlu0 %6872, %v6837
      %v6874 = vpop.permute.xlu0 %6873
      %6877 = vset.pattern.permute.xlu0 0
      %6878 = vperm.xlu0 %6877, %v6838
      %v6879 = vpop.permute.xlu0 %6878
      %6882 = vset.pattern.permute.xlu0 0
      %6883 = vperm.xlu0 %6882, %v6839
      %v6884 = vpop.permute.xlu0 %6883
      %6887 = vset.pattern.permute.xlu0 0
      %6888 = vperm.xlu0 %6887, %v6840
      %v6889 = vpop.permute.xlu0 %6888
      %6892 = vset.pattern.permute.xlu0 0
      %6893 = vperm.xlu0 %6892, %v6841
      %v6894 = vpop.permute.xlu0 %6893
      %6897 = vset.pattern.permute.xlu0 0
      %6898 = vperm.xlu0 %6897, %v6842
      %v6899 = vpop.permute.xlu0 %6898
      %6902 = vset.pattern.permute.xlu0 0
      %6903 = vperm.xlu0 %6902, %v6843
      %v6904 = vpop.permute.xlu0 %6903
      %6907 = vset.pattern.permute.xlu0 0
      %6908 = vperm.xlu0 %6907, %v6844
      %v6909 = vpop.permute.xlu0 %6908
      %6912 = vset.pattern.permute.xlu0 0
      %6913 = vperm.xlu0 %6912, %v6845
      %v6914 = vpop.permute.xlu0 %6913
      %6917 = vset.pattern.permute.xlu0 0
      %6918 = vperm.xlu0 %6917, %v6846
      %v6919 = vpop.permute.xlu0 %6918
      %6922 = vset.pattern.permute.xlu0 0
      %6923 = vperm.xlu0 %6922, %v6847
      %v6924 = vpop.permute.xlu0 %6923
      %6927 = vset.pattern.permute.xlu0 0
      %6928 = vperm.xlu0 %6927, %v6848
      %v6929 = vpop.permute.xlu0 %6928
      %6932 = vset.pattern.permute.xlu0 0
      %6933 = vperm.xlu0 %6932, %v6849
      %v6934 = vpop.permute.xlu0 %6933
      %6937 = vset.pattern.permute.xlu0 0
      %6938 = vperm.xlu0 %6937, %v6850
      %v6939 = vpop.permute.xlu0 %6938
      %6942 = vset.pattern.permute.xlu0 0
      %6943 = vperm.xlu0 %6942, %v6851
      %v6944 = vpop.permute.xlu0 %6943
      %6947 = vset.pattern.permute.xlu0 0
      %6948 = vperm.xlu0 %6947, %v6852
      %v6949 = vpop.permute.xlu0 %6948
      %6952 = vset.pattern.permute.xlu0 0
      %6953 = vperm.xlu0 %6952, %v6853
      %v6954 = vpop.permute.xlu0 %6953
      %6957 = vset.pattern.permute.xlu0 0
      %6958 = vperm.xlu0 %6957, %v6854
      %v6959 = vpop.permute.xlu0 %6958
      %6962 = vset.pattern.permute.xlu0 0
      %6963 = vperm.xlu0 %6962, %v6855
      %v6964 = vpop.permute.xlu0 %6963
      %6967 = vset.pattern.permute.xlu0 0
      %6968 = vperm.xlu0 %6967, %v6856
      %v6969 = vpop.permute.xlu0 %6968
      %6972 = vset.pattern.permute.xlu0 0
      %6973 = vperm.xlu0 %6972, %v6857
      %v6974 = vpop.permute.xlu0 %6973
      %6977 = vset.pattern.permute.xlu0 0
      %6978 = vperm.xlu0 %6977, %v6858
      %v6979 = vpop.permute.xlu0 %6978
      %6982 = vset.pattern.permute.xlu0 0
      %6983 = vperm.xlu0 %6982, %v6859
      %v6984 = vpop.permute.xlu0 %6983
      %6987 = vset.pattern.permute.xlu0 0
      %6988 = vperm.xlu0 %6987, %v6860
      %v6989 = vpop.permute.xlu0 %6988
      %6992 = vset.pattern.permute.xlu0 0
      %6993 = vperm.xlu0 %6992, %v6861
      %v6994 = vpop.permute.xlu0 %6993
      %6997 = vset.pattern.permute.xlu0 0
      %6998 = vperm.xlu0 %6997, %v6862
      %v6999 = vpop.permute.xlu0 %6998
      %7002 = vset.pattern.permute.xlu0 0
      %7003 = vperm.xlu0 %7002, %v6863
      %v7004 = vpop.permute.xlu0 %7003
      %7007 = vset.pattern.permute.xlu0 0
      %7008 = vperm.xlu0 %7007, %v6864
      %v7009 = vpop.permute.xlu0 %7008
      %7012 = vset.pattern.permute.xlu0 0
      %7013 = vperm.xlu0 %7012, %v6865
      %v7014 = vpop.permute.xlu0 %7013
      %7017 = vset.pattern.permute.xlu0 0
      %7018 = vperm.xlu0 %7017, %v6866
      %v7019 = vpop.permute.xlu0 %7018
      %7022 = vset.pattern.permute.xlu0 0
      %7023 = vperm.xlu0 %7022, %v6867
      %v7024 = vpop.permute.xlu0 %7023
      %7027 = vset.pattern.permute.xlu0 0
      %7028 = vperm.xlu0 %7027, %v6868
      %v7029 = vpop.permute.xlu0 %7028
      %v7032 = vperm.slane %v6870, 0
      %v7034 = vmul.f32 %v6874, %v7032
      %v7035 = vmul.f32 %v6879, %v7032
      %v7036 = vmul.f32 %v6884, %v7032
      %v7037 = vmul.f32 %v6889, %v7032
      %v7038 = vmul.f32 %v6894, %v7032
      %v7039 = vmul.f32 %v6899, %v7032
      %v7040 = vmul.f32 %v6904, %v7032
      %v7041 = vmul.f32 %v6909, %v7032
      %v7042 = vmul.f32 %v6914, %v7032
      %v7043 = vmul.f32 %v6919, %v7032
      %v7044 = vmul.f32 %v6924, %v7032
      %v7045 = vmul.f32 %v6929, %v7032
      %v7046 = vmul.f32 %v6934, %v7032
      %v7047 = vmul.f32 %v6939, %v7032
      %v7048 = vmul.f32 %v6944, %v7032
      %v7049 = vmul.f32 %v6949, %v7032
      %v7050 = vmul.f32 %v6954, %v7032
      %v7051 = vmul.f32 %v6959, %v7032
      %v7052 = vmul.f32 %v6964, %v7032
      %v7053 = vmul.f32 %v6969, %v7032
      %v7054 = vmul.f32 %v6974, %v7032
      %v7055 = vmul.f32 %v6979, %v7032
      %v7056 = vmul.f32 %v6984, %v7032
      %v7057 = vmul.f32 %v6989, %v7032
      %v7058 = vmul.f32 %v6994, %v7032
      %v7059 = vmul.f32 %v6999, %v7032
      %v7060 = vmul.f32 %v7004, %v7032
      %v7061 = vmul.f32 %v7009, %v7032
      %v7062 = vmul.f32 %v7014, %v7032
      %v7063 = vmul.f32 %v7019, %v7032
      %v7064 = vmul.f32 %v7024, %v7032
      %v7065 = vmul.f32 %v7029, %v7032
      %v7066 = vadd.f32 %v6805, %v7034
      %v7067 = vadd.f32 %v6806, %v7035
      %v7068 = vadd.f32 %v6807, %v7036
      %v7069 = vadd.f32 %v6808, %v7037
      %v7070 = vadd.f32 %v6809, %v7038
      %v7071 = vadd.f32 %v6810, %v7039
      %v7072 = vadd.f32 %v6811, %v7040
      %v7073 = vadd.f32 %v6812, %v7041
      %v7074 = vadd.f32 %v6813, %v7042
      %v7075 = vadd.f32 %v6814, %v7043
      %v7076 = vadd.f32 %v6815, %v7044
      %v7077 = vadd.f32 %v6816, %v7045
      %v7078 = vadd.f32 %v6817, %v7046
      %v7079 = vadd.f32 %v6818, %v7047
      %v7080 = vadd.f32 %v6819, %v7048
      %v7081 = vadd.f32 %v6820, %v7049
      %v7082 = vadd.f32 %v6821, %v7050
      %v7083 = vadd.f32 %v6822, %v7051
      %v7084 = vadd.f32 %v6823, %v7052
      %v7085 = vadd.f32 %v6824, %v7053
      %v7086 = vadd.f32 %v6825, %v7054
      %v7087 = vadd.f32 %v6826, %v7055
      %v7088 = vadd.f32 %v6827, %v7056
      %v7089 = vadd.f32 %v6828, %v7057
      %v7090 = vadd.f32 %v6829, %v7058
      %v7091 = vadd.f32 %v6830, %v7059
      %v7092 = vadd.f32 %v6831, %v7060
      %v7093 = vadd.f32 %v6832, %v7061
      %v7094 = vadd.f32 %v6833, %v7062
      %v7095 = vadd.f32 %v6834, %v7063
      %v7096 = vadd.f32 %v6835, %v7064
      %v7097 = vadd.f32 %v6836, %v7065
      %v7098 = vld [vmem:[%s3] sm:$0x1]
      %v7100 = vperm.slane %v7098, 0
      %v7102 = vmul.f32 %v7066, %v7100
      %v7103 = vmul.f32 %v7067, %v7100
      %v7104 = vmul.f32 %v7068, %v7100
      %v7105 = vmul.f32 %v7069, %v7100
      %v7106 = vmul.f32 %v7070, %v7100
      %v7107 = vmul.f32 %v7071, %v7100
      %v7108 = vmul.f32 %v7072, %v7100
      %v7109 = vmul.f32 %v7073, %v7100
      %v7110 = vmul.f32 %v7074, %v7100
      %v7111 = vmul.f32 %v7075, %v7100
      %v7112 = vmul.f32 %v7076, %v7100
      %v7113 = vmul.f32 %v7077, %v7100
      %v7114 = vmul.f32 %v7078, %v7100
      %v7115 = vmul.f32 %v7079, %v7100
      %v7116 = vmul.f32 %v7080, %v7100
      %v7117 = vmul.f32 %v7081, %v7100
      %v7118 = vmul.f32 %v7082, %v7100
      %v7119 = vmul.f32 %v7083, %v7100
      %v7120 = vmul.f32 %v7084, %v7100
      %v7121 = vmul.f32 %v7085, %v7100
      %v7122 = vmul.f32 %v7086, %v7100
      %v7123 = vmul.f32 %v7087, %v7100
      %v7124 = vmul.f32 %v7088, %v7100
      %v7125 = vmul.f32 %v7089, %v7100
      %v7126 = vmul.f32 %v7090, %v7100
      %v7127 = vmul.f32 %v7091, %v7100
      %v7128 = vmul.f32 %v7092, %v7100
      %v7129 = vmul.f32 %v7093, %v7100
      %v7130 = vmul.f32 %v7094, %v7100
      %v7131 = vmul.f32 %v7095, %v7100
      %v7132 = vmul.f32 %v7096, %v7100
      %v7133 = vmul.f32 %v7097, %v7100
      %v7134 = vld [vmem:[%s4] sm:$0x1]
      %v7136 = vperm.slane %v7134, 0
      %v7138 = vadd.f32 %v7102, %v7136
      %v7139 = vadd.f32 %v7103, %v7136
      %v7140 = vadd.f32 %v7104, %v7136
      %v7141 = vadd.f32 %v7105, %v7136
      %v7142 = vadd.f32 %v7106, %v7136
      %v7143 = vadd.f32 %v7107, %v7136
      %v7144 = vadd.f32 %v7108, %v7136
      %v7145 = vadd.f32 %v7109, %v7136
      %v7146 = vadd.f32 %v7110, %v7136
      %v7147 = vadd.f32 %v7111, %v7136
      %v7148 = vadd.f32 %v7112, %v7136
      %v7149 = vadd.f32 %v7113, %v7136
      %v7150 = vadd.f32 %v7114, %v7136
      %v7151 = vadd.f32 %v7115, %v7136
      %v7152 = vadd.f32 %v7116, %v7136
      %v7153 = vadd.f32 %v7117, %v7136
      %v7154 = vadd.f32 %v7118, %v7136
      %v7155 = vadd.f32 %v7119, %v7136
      %v7156 = vadd.f32 %v7120, %v7136
      %v7157 = vadd.f32 %v7121, %v7136
      %v7158 = vadd.f32 %v7122, %v7136
      %v7159 = vadd.f32 %v7123, %v7136
      %v7160 = vadd.f32 %v7124, %v7136
      %v7161 = vadd.f32 %v7125, %v7136
      %v7162 = vadd.f32 %v7126, %v7136
      %v7163 = vadd.f32 %v7127, %v7136
      %v7164 = vadd.f32 %v7128, %v7136
      %v7165 = vadd.f32 %v7129, %v7136
      %v7166 = vadd.f32 %v7130, %v7136
      %v7167 = vadd.f32 %v7131, %v7136
      %v7168 = vadd.f32 %v7132, %v7136
      %v7169 = vadd.f32 %v7133, %v7136
      %v7170 = vmax.f32 %v7138, 0.0
      %v7171 = vmax.f32 %v7139, 0.0
      %v7172 = vmax.f32 %v7140, 0.0
      %v7173 = vmax.f32 %v7141, 0.0
      %v7174 = vmax.f32 %v7142, 0.0
      %v7175 = vmax.f32 %v7143, 0.0
      %v7176 = vmax.f32 %v7144, 0.0
      %v7177 = vmax.f32 %v7145, 0.0
      %v7178 = vmax.f32 %v7146, 0.0
      %v7179 = vmax.f32 %v7147, 0.0
      %v7180 = vmax.f32 %v7148, 0.0
      %v7181 = vmax.f32 %v7149, 0.0
      %v7182 = vmax.f32 %v7150, 0.0
      %v7183 = vmax.f32 %v7151, 0.0
      %v7184 = vmax.f32 %v7152, 0.0
      %v7185 = vmax.f32 %v7153, 0.0
      %v7186 = vmax.f32 %v7154, 0.0
      %v7187 = vmax.f32 %v7155, 0.0
      %v7188 = vmax.f32 %v7156, 0.0
      %v7189 = vmax.f32 %v7157, 0.0
      %v7190 = vmax.f32 %v7158, 0.0
      %v7191 = vmax.f32 %v7159, 0.0
      %v7192 = vmax.f32 %v7160, 0.0
      %v7193 = vmax.f32 %v7161, 0.0
      %v7194 = vmax.f32 %v7162, 0.0
      %v7195 = vmax.f32 %v7163, 0.0
      %v7196 = vmax.f32 %v7164, 0.0
      %v7197 = vmax.f32 %v7165, 0.0
      %v7198 = vmax.f32 %v7166, 0.0
      %v7199 = vmax.f32 %v7167, 0.0
      %v7200 = vmax.f32 %v7168, 0.0
      %v7201 = vmax.f32 %v7169, 0.0
      %s7202 = scalar_lea.vmem [#allocation2], 24
      %7203 = vst.msk [vmem:[%s7202 + $0x1] sm:$0xff] %vm458, %v7170
      %7204 = vst.msk [vmem:[%s7202 + $0x9] sm:$0xff] %vm458, %v7171
      %7205 = vst.msk [vmem:[%s7202 + $0x19] sm:$0xff] %vm458, %v7172
      %7206 = vst.msk [vmem:[%s7202 + $0x21] sm:$0xff] %vm458, %v7173
      %7207 = vst.msk [vmem:[%s7202 + $0x31] sm:$0xff] %vm458, %v7174
      %7208 = vst.msk [vmem:[%s7202 + $0x39] sm:$0xff] %vm458, %v7175
      %7209 = vst.msk [vmem:[%s7202 + $0x49] sm:$0xff] %vm458, %v7176
      %7210 = vst.msk [vmem:[%s7202 + $0x51] sm:$0xff] %vm458, %v7177
      %7211 = vst.msk [vmem:[%s7202 + $0x61] sm:$0xff] %vm458, %v7178
      %7212 = vst.msk [vmem:[%s7202 + $0x69] sm:$0xff] %vm458, %v7179
      %7213 = vst.msk [vmem:[%s7202 + $0x79] sm:$0xff] %vm458, %v7180
      %7214 = vst.msk [vmem:[%s7202 + $0x81] sm:$0xff] %vm458, %v7181
      %7215 = vst.msk [vmem:[%s7202 + $0x91] sm:$0xff] %vm458, %v7182
      %7216 = vst.msk [vmem:[%s7202 + $0x99] sm:$0xff] %vm458, %v7183
      %7217 = vst.msk [vmem:[%s7202 + $0xa9] sm:$0xff] %vm458, %v7184
      %7218 = vst.msk [vmem:[%s7202 + $0xb1] sm:$0xff] %vm458, %v7185
      %7219 = vst.msk [vmem:[%s7202 + $0xc1] sm:$0xff] %vm458, %v7186
      %7220 = vst.msk [vmem:[%s7202 + $0xc9] sm:$0xff] %vm458, %v7187
      %7221 = vst.msk [vmem:[%s7202 + $0xd9] sm:$0xff] %vm458, %v7188
      %7222 = vst.msk [vmem:[%s7202 + $0xe1] sm:$0xff] %vm458, %v7189
      %7223 = vst.msk [vmem:[%s7202 + $0xf1] sm:$0xff] %vm458, %v7190
      %7224 = vst.msk [vmem:[%s7202 + $0xf9] sm:$0xff] %vm458, %v7191
      %7225 = vst.msk [vmem:[%s7202 + $0x109] sm:$0xff] %vm458, %v7192
      %7226 = vst.msk [vmem:[%s7202 + $0x111] sm:$0xff] %vm458, %v7193
      %7227 = vst.msk [vmem:[%s7202 + $0x121] sm:$0xff] %vm458, %v7194
      %7228 = vst.msk [vmem:[%s7202 + $0x129] sm:$0xff] %vm458, %v7195
      %7229 = vst.msk [vmem:[%s7202 + $0x139] sm:$0xff] %vm458, %v7196
      %7230 = vst.msk [vmem:[%s7202 + $0x141] sm:$0xff] %vm458, %v7197
      %7231 = vst.msk [vmem:[%s7202 + $0x151] sm:$0xff] %vm458, %v7198
      %7232 = vst.msk [vmem:[%s7202 + $0x159] sm:$0xff] %vm458, %v7199
      %7233 = vst.msk [vmem:[%s7202 + $0x169] sm:$0xff] %vm458, %v7200
      %7234 = vst.msk [vmem:[%s7202 + $0x171] sm:$0xff] %vm458, %v7201
      %v7235 = vld [vmem:[#allocation2] sm:$0xff]
      %v7236 = vld [vmem:[#allocation2 + $0x8] sm:$0xff]
      %v7237 = vld [vmem:[#allocation2 + $0x18] sm:$0xff]
      %v7238 = vld [vmem:[#allocation2 + $0x20] sm:$0xff]
      %v7239 = vld [vmem:[#allocation2 + $0x30] sm:$0xff]
      %v7240 = vld [vmem:[#allocation2 + $0x38] sm:$0xff]
      %v7241 = vld [vmem:[#allocation2 + $0x48] sm:$0xff]
      %v7242 = vld [vmem:[#allocation2 + $0x50] sm:$0xff]
      %v7243 = vld [vmem:[#allocation2 + $0x60] sm:$0xff]
      %v7244 = vld [vmem:[#allocation2 + $0x68] sm:$0xff]
      %v7245 = vld [vmem:[#allocation2 + $0x78] sm:$0xff]
      %v7246 = vld [vmem:[#allocation2 + $0x80] sm:$0xff]
      %v7247 = vld [vmem:[#allocation2 + $0x90] sm:$0xff]
      %v7248 = vld [vmem:[#allocation2 + $0x98] sm:$0xff]
      %v7249 = vld [vmem:[#allocation2 + $0xa8] sm:$0xff]
      %v7250 = vld [vmem:[#allocation2 + $0xb0] sm:$0xff]
      %v7251 = vld [vmem:[#allocation2 + $0xc0] sm:$0xff]
      %v7252 = vld [vmem:[#allocation2 + $0xc8] sm:$0xff]
      %v7253 = vld [vmem:[#allocation2 + $0xd8] sm:$0xff]
      %v7254 = vld [vmem:[#allocation2 + $0xe0] sm:$0xff]
      %v7255 = vld [vmem:[#allocation2 + $0xf0] sm:$0xff]
      %v7256 = vld [vmem:[#allocation2 + $0xf8] sm:$0xff]
      %v7257 = vld [vmem:[#allocation2 + $0x108] sm:$0xff]
      %v7258 = vld [vmem:[#allocation2 + $0x110] sm:$0xff]
      %v7259 = vld [vmem:[#allocation2 + $0x120] sm:$0xff]
      %v7260 = vld [vmem:[#allocation2 + $0x128] sm:$0xff]
      %v7261 = vld [vmem:[#allocation2 + $0x138] sm:$0xff]
      %v7262 = vld [vmem:[#allocation2 + $0x140] sm:$0xff]
      %v7263 = vld [vmem:[#allocation2 + $0x150] sm:$0xff]
      %v7264 = vld [vmem:[#allocation2 + $0x158] sm:$0xff]
      %v7265 = vld [vmem:[#allocation2 + $0x168] sm:$0xff]
      %v7266 = vld [vmem:[#allocation2 + $0x170] sm:$0xff]
      %v7267 = vld [vmem:[#allocation2 + $0x1] sm:$0xff]
      %v7268 = vld [vmem:[#allocation2 + $0x9] sm:$0xff]
      %v7269 = vld [vmem:[#allocation2 + $0x19] sm:$0xff]
      %v7270 = vld [vmem:[#allocation2 + $0x21] sm:$0xff]
      %v7271 = vld [vmem:[#allocation2 + $0x31] sm:$0xff]
      %v7272 = vld [vmem:[#allocation2 + $0x39] sm:$0xff]
      %v7273 = vld [vmem:[#allocation2 + $0x49] sm:$0xff]
      %v7274 = vld [vmem:[#allocation2 + $0x51] sm:$0xff]
      %v7275 = vld [vmem:[#allocation2 + $0x61] sm:$0xff]
      %v7276 = vld [vmem:[#allocation2 + $0x69] sm:$0xff]
      %v7277 = vld [vmem:[#allocation2 + $0x79] sm:$0xff]
      %v7278 = vld [vmem:[#allocation2 + $0x81] sm:$0xff]
      %v7279 = vld [vmem:[#allocation2 + $0x91] sm:$0xff]
      %v7280 = vld [vmem:[#allocation2 + $0x99] sm:$0xff]
      %v7281 = vld [vmem:[#allocation2 + $0xa9] sm:$0xff]
      %v7282 = vld [vmem:[#allocation2 + $0xb1] sm:$0xff]
      %v7283 = vld [vmem:[#allocation2 + $0xc1] sm:$0xff]
      %v7284 = vld [vmem:[#allocation2 + $0xc9] sm:$0xff]
      %v7285 = vld [vmem:[#allocation2 + $0xd9] sm:$0xff]
      %v7286 = vld [vmem:[#allocation2 + $0xe1] sm:$0xff]
      %v7287 = vld [vmem:[#allocation2 + $0xf1] sm:$0xff]
      %v7288 = vld [vmem:[#allocation2 + $0xf9] sm:$0xff]
      %v7289 = vld [vmem:[#allocation2 + $0x109] sm:$0xff]
      %v7290 = vld [vmem:[#allocation2 + $0x111] sm:$0xff]
      %v7291 = vld [vmem:[#allocation2 + $0x121] sm:$0xff]
      %v7292 = vld [vmem:[#allocation2 + $0x129] sm:$0xff]
      %v7293 = vld [vmem:[#allocation2 + $0x139] sm:$0xff]
      %v7294 = vld [vmem:[#allocation2 + $0x141] sm:$0xff]
      %v7295 = vld [vmem:[#allocation2 + $0x151] sm:$0xff]
      %v7296 = vld [vmem:[#allocation2 + $0x159] sm:$0xff]
      %v7297 = vld [vmem:[#allocation2 + $0x169] sm:$0xff]
      %v7298 = vld [vmem:[#allocation2 + $0x171] sm:$0xff]
      %v7299 = vld [vmem:[#allocation2 + $0x2] sm:$0xff]
      %v7300 = vld [vmem:[#allocation2 + $0xa] sm:$0xff]
      %v7301 = vld [vmem:[#allocation2 + $0x1a] sm:$0xff]
      %v7302 = vld [vmem:[#allocation2 + $0x22] sm:$0xff]
      %v7303 = vld [vmem:[#allocation2 + $0x32] sm:$0xff]
      %v7304 = vld [vmem:[#allocation2 + $0x3a] sm:$0xff]
      %v7305 = vld [vmem:[#allocation2 + $0x4a] sm:$0xff]
      %v7306 = vld [vmem:[#allocation2 + $0x52] sm:$0xff]
      %v7307 = vld [vmem:[#allocation2 + $0x62] sm:$0xff]
      %v7308 = vld [vmem:[#allocation2 + $0x6a] sm:$0xff]
      %v7309 = vld [vmem:[#allocation2 + $0x7a] sm:$0xff]
      %v7310 = vld [vmem:[#allocation2 + $0x82] sm:$0xff]
      %v7311 = vld [vmem:[#allocation2 + $0x92] sm:$0xff]
      %v7312 = vld [vmem:[#allocation2 + $0x9a] sm:$0xff]
      %v7313 = vld [vmem:[#allocation2 + $0xaa] sm:$0xff]
      %v7314 = vld [vmem:[#allocation2 + $0xb2] sm:$0xff]
      %v7315 = vld [vmem:[#allocation2 + $0xc2] sm:$0xff]
      %v7316 = vld [vmem:[#allocation2 + $0xca] sm:$0xff]
      %v7317 = vld [vmem:[#allocation2 + $0xda] sm:$0xff]
      %v7318 = vld [vmem:[#allocation2 + $0xe2] sm:$0xff]
      %v7319 = vld [vmem:[#allocation2 + $0xf2] sm:$0xff]
      %v7320 = vld [vmem:[#allocation2 + $0xfa] sm:$0xff]
      %v7321 = vld [vmem:[#allocation2 + $0x10a] sm:$0xff]
      %v7322 = vld [vmem:[#allocation2 + $0x112] sm:$0xff]
      %v7323 = vld [vmem:[#allocation2 + $0x122] sm:$0xff]
      %v7324 = vld [vmem:[#allocation2 + $0x12a] sm:$0xff]
      %v7325 = vld [vmem:[#allocation2 + $0x13a] sm:$0xff]
      %v7326 = vld [vmem:[#allocation2 + $0x142] sm:$0xff]
      %v7327 = vld [vmem:[#allocation2 + $0x152] sm:$0xff]
      %v7328 = vld [vmem:[#allocation2 + $0x15a] sm:$0xff]
      %v7329 = vld [vmem:[#allocation2 + $0x16a] sm:$0xff]
      %v7330 = vld [vmem:[#allocation2 + $0x172] sm:$0xff]
      %v7331 = vld [vmem:[%s7202] sm:$0xff]
      %v7332 = vld [vmem:[%s7202 + $0x8] sm:$0xff]
      %v7333 = vld [vmem:[%s7202 + $0x18] sm:$0xff]
      %v7334 = vld [vmem:[%s7202 + $0x20] sm:$0xff]
      %v7335 = vld [vmem:[%s7202 + $0x30] sm:$0xff]
      %v7336 = vld [vmem:[%s7202 + $0x38] sm:$0xff]
      %v7337 = vld [vmem:[%s7202 + $0x48] sm:$0xff]
      %v7338 = vld [vmem:[%s7202 + $0x50] sm:$0xff]
      %v7339 = vld [vmem:[%s7202 + $0x60] sm:$0xff]
      %v7340 = vld [vmem:[%s7202 + $0x68] sm:$0xff]
      %v7341 = vld [vmem:[%s7202 + $0x78] sm:$0xff]
      %v7342 = vld [vmem:[%s7202 + $0x80] sm:$0xff]
      %v7343 = vld [vmem:[%s7202 + $0x90] sm:$0xff]
      %v7344 = vld [vmem:[%s7202 + $0x98] sm:$0xff]
      %v7345 = vld [vmem:[%s7202 + $0xa8] sm:$0xff]
      %v7346 = vld [vmem:[%s7202 + $0xb0] sm:$0xff]
      %v7347 = vld [vmem:[%s7202 + $0xc0] sm:$0xff]
      %v7348 = vld [vmem:[%s7202 + $0xc8] sm:$0xff]
      %v7349 = vld [vmem:[%s7202 + $0xd8] sm:$0xff]
      %v7350 = vld [vmem:[%s7202 + $0xe0] sm:$0xff]
      %v7351 = vld [vmem:[%s7202 + $0xf0] sm:$0xff]
      %v7352 = vld [vmem:[%s7202 + $0xf8] sm:$0xff]
      %v7353 = vld [vmem:[%s7202 + $0x108] sm:$0xff]
      %v7354 = vld [vmem:[%s7202 + $0x110] sm:$0xff]
      %v7355 = vld [vmem:[%s7202 + $0x120] sm:$0xff]
      %v7356 = vld [vmem:[%s7202 + $0x128] sm:$0xff]
      %v7357 = vld [vmem:[%s7202 + $0x138] sm:$0xff]
      %v7358 = vld [vmem:[%s7202 + $0x140] sm:$0xff]
      %v7359 = vld [vmem:[%s7202 + $0x150] sm:$0xff]
      %v7360 = vld [vmem:[%s7202 + $0x158] sm:$0xff]
      %v7361 = vld [vmem:[%s7202 + $0x168] sm:$0xff]
      %v7362 = vld [vmem:[%s7202 + $0x170] sm:$0xff]
      %v7363 = vld [vmem:[%s7202 + $0x1] sm:$0xff]
      %v7364 = vld [vmem:[%s7202 + $0x9] sm:$0xff]
      %v7365 = vld [vmem:[%s7202 + $0x19] sm:$0xff]
      %v7366 = vld [vmem:[%s7202 + $0x21] sm:$0xff]
      %v7367 = vld [vmem:[%s7202 + $0x31] sm:$0xff]
      %v7368 = vld [vmem:[%s7202 + $0x39] sm:$0xff]
      %v7369 = vld [vmem:[%s7202 + $0x49] sm:$0xff]
      %v7370 = vld [vmem:[%s7202 + $0x51] sm:$0xff]
      %v7371 = vld [vmem:[%s7202 + $0x61] sm:$0xff]
      %v7372 = vld [vmem:[%s7202 + $0x69] sm:$0xff]
      %v7373 = vld [vmem:[%s7202 + $0x79] sm:$0xff]
      %v7374 = vld [vmem:[%s7202 + $0x81] sm:$0xff]
      %v7375 = vld [vmem:[%s7202 + $0x91] sm:$0xff]
      %v7376 = vld [vmem:[%s7202 + $0x99] sm:$0xff]
      %v7377 = vld [vmem:[%s7202 + $0xa9] sm:$0xff]
      %v7378 = vld [vmem:[%s7202 + $0xb1] sm:$0xff]
      %v7379 = vld [vmem:[%s7202 + $0xc1] sm:$0xff]
      %v7380 = vld [vmem:[%s7202 + $0xc9] sm:$0xff]
      %v7381 = vld [vmem:[%s7202 + $0xd9] sm:$0xff]
      %v7382 = vld [vmem:[%s7202 + $0xe1] sm:$0xff]
      %v7383 = vld [vmem:[%s7202 + $0xf1] sm:$0xff]
      %v7384 = vld [vmem:[%s7202 + $0xf9] sm:$0xff]
      %v7385 = vld [vmem:[%s7202 + $0x109] sm:$0xff]
      %v7386 = vld [vmem:[%s7202 + $0x111] sm:$0xff]
      %v7387 = vld [vmem:[%s7202 + $0x121] sm:$0xff]
      %v7388 = vld [vmem:[%s7202 + $0x129] sm:$0xff]
      %v7389 = vld [vmem:[%s7202 + $0x139] sm:$0xff]
      %v7390 = vld [vmem:[%s7202 + $0x141] sm:$0xff]
      %v7391 = vld [vmem:[%s7202 + $0x151] sm:$0xff]
      %v7392 = vld [vmem:[%s7202 + $0x159] sm:$0xff]
      %v7393 = vld [vmem:[%s7202 + $0x169] sm:$0xff]
      %v7394 = vld [vmem:[%s7202 + $0x171] sm:$0xff]
      %v7395 = vld [vmem:[%s7202 + $0x2] sm:$0xff]
      %v7396 = vld [vmem:[%s7202 + $0xa] sm:$0xff]
      %v7397 = vld [vmem:[%s7202 + $0x1a] sm:$0xff]
      %v7398 = vld [vmem:[%s7202 + $0x22] sm:$0xff]
      %v7399 = vld [vmem:[%s7202 + $0x32] sm:$0xff]
      %v7400 = vld [vmem:[%s7202 + $0x3a] sm:$0xff]
      %v7401 = vld [vmem:[%s7202 + $0x4a] sm:$0xff]
      %v7402 = vld [vmem:[%s7202 + $0x52] sm:$0xff]
      %v7403 = vld [vmem:[%s7202 + $0x62] sm:$0xff]
      %v7404 = vld [vmem:[%s7202 + $0x6a] sm:$0xff]
      %v7405 = vld [vmem:[%s7202 + $0x7a] sm:$0xff]
      %v7406 = vld [vmem:[%s7202 + $0x82] sm:$0xff]
      %v7407 = vld [vmem:[%s7202 + $0x92] sm:$0xff]
      %v7408 = vld [vmem:[%s7202 + $0x9a] sm:$0xff]
      %v7409 = vld [vmem:[%s7202 + $0xaa] sm:$0xff]
      %v7410 = vld [vmem:[%s7202 + $0xb2] sm:$0xff]
      %v7411 = vld [vmem:[%s7202 + $0xc2] sm:$0xff]
      %v7412 = vld [vmem:[%s7202 + $0xca] sm:$0xff]
      %v7413 = vld [vmem:[%s7202 + $0xda] sm:$0xff]
      %v7414 = vld [vmem:[%s7202 + $0xe2] sm:$0xff]
      %v7415 = vld [vmem:[%s7202 + $0xf2] sm:$0xff]
      %v7416 = vld [vmem:[%s7202 + $0xfa] sm:$0xff]
      %v7417 = vld [vmem:[%s7202 + $0x10a] sm:$0xff]
      %v7418 = vld [vmem:[%s7202 + $0x112] sm:$0xff]
      %v7419 = vld [vmem:[%s7202 + $0x122] sm:$0xff]
      %v7420 = vld [vmem:[%s7202 + $0x12a] sm:$0xff]
      %v7421 = vld [vmem:[%s7202 + $0x13a] sm:$0xff]
      %v7422 = vld [vmem:[%s7202 + $0x142] sm:$0xff]
      %v7423 = vld [vmem:[%s7202 + $0x152] sm:$0xff]
      %v7424 = vld [vmem:[%s7202 + $0x15a] sm:$0xff]
      %v7425 = vld [vmem:[%s7202 + $0x16a] sm:$0xff]
      %v7426 = vld [vmem:[%s7202 + $0x172] sm:$0xff]
      %s7427 = scalar_lea.vmem [#allocation2], 48
      %v7428 = vld [vmem:[%s7427] sm:$0xff]
      %v7429 = vld [vmem:[%s7427 + $0x8] sm:$0xff]
      %v7430 = vld [vmem:[%s7427 + $0x18] sm:$0xff]
      %v7431 = vld [vmem:[%s7427 + $0x20] sm:$0xff]
      %v7432 = vld [vmem:[%s7427 + $0x30] sm:$0xff]
      %v7433 = vld [vmem:[%s7427 + $0x38] sm:$0xff]
      %v7434 = vld [vmem:[%s7427 + $0x48] sm:$0xff]
      %v7435 = vld [vmem:[%s7427 + $0x50] sm:$0xff]
      %v7436 = vld [vmem:[%s7427 + $0x60] sm:$0xff]
      %v7437 = vld [vmem:[%s7427 + $0x68] sm:$0xff]
      %v7438 = vld [vmem:[%s7427 + $0x78] sm:$0xff]
      %v7439 = vld [vmem:[%s7427 + $0x80] sm:$0xff]
      %v7440 = vld [vmem:[%s7427 + $0x90] sm:$0xff]
      %v7441 = vld [vmem:[%s7427 + $0x98] sm:$0xff]
      %v7442 = vld [vmem:[%s7427 + $0xa8] sm:$0xff]
      %v7443 = vld [vmem:[%s7427 + $0xb0] sm:$0xff]
      %v7444 = vld [vmem:[%s7427 + $0xc0] sm:$0xff]
      %v7445 = vld [vmem:[%s7427 + $0xc8] sm:$0xff]
      %v7446 = vld [vmem:[%s7427 + $0xd8] sm:$0xff]
      %v7447 = vld [vmem:[%s7427 + $0xe0] sm:$0xff]
      %v7448 = vld [vmem:[%s7427 + $0xf0] sm:$0xff]
      %v7449 = vld [vmem:[%s7427 + $0xf8] sm:$0xff]
      %v7450 = vld [vmem:[%s7427 + $0x108] sm:$0xff]
      %v7451 = vld [vmem:[%s7427 + $0x110] sm:$0xff]
      %v7452 = vld [vmem:[%s7427 + $0x120] sm:$0xff]
      %v7453 = vld [vmem:[%s7427 + $0x128] sm:$0xff]
      %v7454 = vld [vmem:[%s7427 + $0x138] sm:$0xff]
      %v7455 = vld [vmem:[%s7427 + $0x140] sm:$0xff]
      %v7456 = vld [vmem:[%s7427 + $0x150] sm:$0xff]
      %v7457 = vld [vmem:[%s7427 + $0x158] sm:$0xff]
      %v7458 = vld [vmem:[%s7427 + $0x168] sm:$0xff]
      %v7459 = vld [vmem:[%s7427 + $0x170] sm:$0xff]
      %v7460 = vld [vmem:[%s7427 + $0x1] sm:$0xff]
      %v7461 = vld [vmem:[%s7427 + $0x9] sm:$0xff]
      %v7462 = vld [vmem:[%s7427 + $0x19] sm:$0xff]
      %v7463 = vld [vmem:[%s7427 + $0x21] sm:$0xff]
      %v7464 = vld [vmem:[%s7427 + $0x31] sm:$0xff]
      %v7465 = vld [vmem:[%s7427 + $0x39] sm:$0xff]
      %v7466 = vld [vmem:[%s7427 + $0x49] sm:$0xff]
      %v7467 = vld [vmem:[%s7427 + $0x51] sm:$0xff]
      %v7468 = vld [vmem:[%s7427 + $0x61] sm:$0xff]
      %v7469 = vld [vmem:[%s7427 + $0x69] sm:$0xff]
      %v7470 = vld [vmem:[%s7427 + $0x79] sm:$0xff]
      %v7471 = vld [vmem:[%s7427 + $0x81] sm:$0xff]
      %v7472 = vld [vmem:[%s7427 + $0x91] sm:$0xff]
      %v7473 = vld [vmem:[%s7427 + $0x99] sm:$0xff]
      %v7474 = vld [vmem:[%s7427 + $0xa9] sm:$0xff]
      %v7475 = vld [vmem:[%s7427 + $0xb1] sm:$0xff]
      %v7476 = vld [vmem:[%s7427 + $0xc1] sm:$0xff]
      %v7477 = vld [vmem:[%s7427 + $0xc9] sm:$0xff]
      %v7478 = vld [vmem:[%s7427 + $0xd9] sm:$0xff]
      %v7479 = vld [vmem:[%s7427 + $0xe1] sm:$0xff]
      %v7480 = vld [vmem:[%s7427 + $0xf1] sm:$0xff]
      %v7481 = vld [vmem:[%s7427 + $0xf9] sm:$0xff]
      %v7482 = vld [vmem:[%s7427 + $0x109] sm:$0xff]
      %v7483 = vld [vmem:[%s7427 + $0x111] sm:$0xff]
      %v7484 = vld [vmem:[%s7427 + $0x121] sm:$0xff]
      %v7485 = vld [vmem:[%s7427 + $0x129] sm:$0xff]
      %v7486 = vld [vmem:[%s7427 + $0x139] sm:$0xff]
      %v7487 = vld [vmem:[%s7427 + $0x141] sm:$0xff]
      %v7488 = vld [vmem:[%s7427 + $0x151] sm:$0xff]
      %v7489 = vld [vmem:[%s7427 + $0x159] sm:$0xff]
      %v7490 = vld [vmem:[%s7427 + $0x169] sm:$0xff]
      %v7491 = vld [vmem:[%s7427 + $0x171] sm:$0xff]
      %v7492 = vld [vmem:[%s7427 + $0x2] sm:$0xff]
      %v7493 = vld [vmem:[%s7427 + $0xa] sm:$0xff]
      %v7494 = vld [vmem:[%s7427 + $0x1a] sm:$0xff]
      %v7495 = vld [vmem:[%s7427 + $0x22] sm:$0xff]
      %v7496 = vld [vmem:[%s7427 + $0x32] sm:$0xff]
      %v7497 = vld [vmem:[%s7427 + $0x3a] sm:$0xff]
      %v7498 = vld [vmem:[%s7427 + $0x4a] sm:$0xff]
      %v7499 = vld [vmem:[%s7427 + $0x52] sm:$0xff]
      %v7500 = vld [vmem:[%s7427 + $0x62] sm:$0xff]
      %v7501 = vld [vmem:[%s7427 + $0x6a] sm:$0xff]
      %v7502 = vld [vmem:[%s7427 + $0x7a] sm:$0xff]
      %v7503 = vld [vmem:[%s7427 + $0x82] sm:$0xff]
      %v7504 = vld [vmem:[%s7427 + $0x92] sm:$0xff]
      %v7505 = vld [vmem:[%s7427 + $0x9a] sm:$0xff]
      %v7506 = vld [vmem:[%s7427 + $0xaa] sm:$0xff]
      %v7507 = vld [vmem:[%s7427 + $0xb2] sm:$0xff]
      %v7508 = vld [vmem:[%s7427 + $0xc2] sm:$0xff]
      %v7509 = vld [vmem:[%s7427 + $0xca] sm:$0xff]
      %v7510 = vld [vmem:[%s7427 + $0xda] sm:$0xff]
      %v7511 = vld [vmem:[%s7427 + $0xe2] sm:$0xff]
      %v7512 = vld [vmem:[%s7427 + $0xf2] sm:$0xff]
      %v7513 = vld [vmem:[%s7427 + $0xfa] sm:$0xff]
      %v7514 = vld [vmem:[%s7427 + $0x10a] sm:$0xff]
      %v7515 = vld [vmem:[%s7427 + $0x112] sm:$0xff]
      %v7516 = vld [vmem:[%s7427 + $0x122] sm:$0xff]
      %v7517 = vld [vmem:[%s7427 + $0x12a] sm:$0xff]
      %v7518 = vld [vmem:[%s7427 + $0x13a] sm:$0xff]
      %v7519 = vld [vmem:[%s7427 + $0x142] sm:$0xff]
      %v7520 = vld [vmem:[%s7427 + $0x152] sm:$0xff]
      %v7521 = vld [vmem:[%s7427 + $0x15a] sm:$0xff]
      %v7522 = vld [vmem:[%s7427 + $0x16a] sm:$0xff]
      %v7523 = vld [vmem:[%s7427 + $0x172] sm:$0xff]
      %7556 = vrot.lane.b32.xlu0 %v7267, 32
      %v7557 = vpop.permute.xlu0 %7556
      %7558 = vrot.lane.b32.xlu0 %v7268, 32
      %v7559 = vpop.permute.xlu0 %7558
      %7560 = vrot.lane.b32.xlu0 %v7269, 32
      %v7561 = vpop.permute.xlu0 %7560
      %7562 = vrot.lane.b32.xlu0 %v7270, 32
      %v7563 = vpop.permute.xlu0 %7562
      %7564 = vrot.lane.b32.xlu0 %v7271, 32
      %v7565 = vpop.permute.xlu0 %7564
      %7566 = vrot.lane.b32.xlu0 %v7272, 32
      %v7567 = vpop.permute.xlu0 %7566
      %7568 = vrot.lane.b32.xlu0 %v7273, 32
      %v7569 = vpop.permute.xlu0 %7568
      %7570 = vrot.lane.b32.xlu0 %v7274, 32
      %v7571 = vpop.permute.xlu0 %7570
      %7572 = vrot.lane.b32.xlu0 %v7275, 32
      %v7573 = vpop.permute.xlu0 %7572
      %7574 = vrot.lane.b32.xlu0 %v7276, 32
      %v7575 = vpop.permute.xlu0 %7574
      %7576 = vrot.lane.b32.xlu0 %v7277, 32
      %v7577 = vpop.permute.xlu0 %7576
      %7578 = vrot.lane.b32.xlu0 %v7278, 32
      %v7579 = vpop.permute.xlu0 %7578
      %7580 = vrot.lane.b32.xlu0 %v7279, 32
      %v7581 = vpop.permute.xlu0 %7580
      %7582 = vrot.lane.b32.xlu0 %v7280, 32
      %v7583 = vpop.permute.xlu0 %7582
      %7584 = vrot.lane.b32.xlu0 %v7281, 32
      %v7585 = vpop.permute.xlu0 %7584
      %7586 = vrot.lane.b32.xlu0 %v7282, 32
      %v7587 = vpop.permute.xlu0 %7586
      %7588 = vrot.lane.b32.xlu0 %v7283, 32
      %v7589 = vpop.permute.xlu0 %7588
      %7590 = vrot.lane.b32.xlu0 %v7284, 32
      %v7591 = vpop.permute.xlu0 %7590
      %7592 = vrot.lane.b32.xlu0 %v7285, 32
      %v7593 = vpop.permute.xlu0 %7592
      %7594 = vrot.lane.b32.xlu0 %v7286, 32
      %v7595 = vpop.permute.xlu0 %7594
      %7596 = vrot.lane.b32.xlu0 %v7287, 32
      %v7597 = vpop.permute.xlu0 %7596
      %7598 = vrot.lane.b32.xlu0 %v7288, 32
      %v7599 = vpop.permute.xlu0 %7598
      %7600 = vrot.lane.b32.xlu0 %v7289, 32
      %v7601 = vpop.permute.xlu0 %7600
      %7602 = vrot.lane.b32.xlu0 %v7290, 32
      %v7603 = vpop.permute.xlu0 %7602
      %7604 = vrot.lane.b32.xlu0 %v7291, 32
      %v7605 = vpop.permute.xlu0 %7604
      %7606 = vrot.lane.b32.xlu0 %v7292, 32
      %v7607 = vpop.permute.xlu0 %7606
      %7608 = vrot.lane.b32.xlu0 %v7293, 32
      %v7609 = vpop.permute.xlu0 %7608
      %7610 = vrot.lane.b32.xlu0 %v7294, 32
      %v7611 = vpop.permute.xlu0 %7610
      %7612 = vrot.lane.b32.xlu0 %v7295, 32
      %v7613 = vpop.permute.xlu0 %7612
      %7614 = vrot.lane.b32.xlu0 %v7296, 32
      %v7615 = vpop.permute.xlu0 %7614
      %7616 = vrot.lane.b32.xlu0 %v7297, 32
      %v7617 = vpop.permute.xlu0 %7616
      %7618 = vrot.lane.b32.xlu0 %v7298, 32
      %v7619 = vpop.permute.xlu0 %7618
      %7684 = vrot.lane.b32.xlu0 %v7299, 64
      %v7685 = vpop.permute.xlu0 %7684
      %7686 = vrot.lane.b32.xlu0 %v7300, 64
      %v7687 = vpop.permute.xlu0 %7686
      %7688 = vrot.lane.b32.xlu0 %v7301, 64
      %v7689 = vpop.permute.xlu0 %7688
      %7690 = vrot.lane.b32.xlu0 %v7302, 64
      %v7691 = vpop.permute.xlu0 %7690
      %7692 = vrot.lane.b32.xlu0 %v7303, 64
      %v7693 = vpop.permute.xlu0 %7692
      %7694 = vrot.lane.b32.xlu0 %v7304, 64
      %v7695 = vpop.permute.xlu0 %7694
      %7696 = vrot.lane.b32.xlu0 %v7305, 64
      %v7697 = vpop.permute.xlu0 %7696
      %7698 = vrot.lane.b32.xlu0 %v7306, 64
      %v7699 = vpop.permute.xlu0 %7698
      %7700 = vrot.lane.b32.xlu0 %v7307, 64
      %v7701 = vpop.permute.xlu0 %7700
      %7702 = vrot.lane.b32.xlu0 %v7308, 64
      %v7703 = vpop.permute.xlu0 %7702
      %7704 = vrot.lane.b32.xlu0 %v7309, 64
      %v7705 = vpop.permute.xlu0 %7704
      %7706 = vrot.lane.b32.xlu0 %v7310, 64
      %v7707 = vpop.permute.xlu0 %7706
      %7708 = vrot.lane.b32.xlu0 %v7311, 64
      %v7709 = vpop.permute.xlu0 %7708
      %7710 = vrot.lane.b32.xlu0 %v7312, 64
      %v7711 = vpop.permute.xlu0 %7710
      %7712 = vrot.lane.b32.xlu0 %v7313, 64
      %v7713 = vpop.permute.xlu0 %7712
      %7714 = vrot.lane.b32.xlu0 %v7314, 64
      %v7715 = vpop.permute.xlu0 %7714
      %7716 = vrot.lane.b32.xlu0 %v7315, 64
      %v7717 = vpop.permute.xlu0 %7716
      %7718 = vrot.lane.b32.xlu0 %v7316, 64
      %v7719 = vpop.permute.xlu0 %7718
      %7720 = vrot.lane.b32.xlu0 %v7317, 64
      %v7721 = vpop.permute.xlu0 %7720
      %7722 = vrot.lane.b32.xlu0 %v7318, 64
      %v7723 = vpop.permute.xlu0 %7722
      %7724 = vrot.lane.b32.xlu0 %v7319, 64
      %v7725 = vpop.permute.xlu0 %7724
      %7726 = vrot.lane.b32.xlu0 %v7320, 64
      %v7727 = vpop.permute.xlu0 %7726
      %7728 = vrot.lane.b32.xlu0 %v7321, 64
      %v7729 = vpop.permute.xlu0 %7728
      %7730 = vrot.lane.b32.xlu0 %v7322, 64
      %v7731 = vpop.permute.xlu0 %7730
      %7732 = vrot.lane.b32.xlu0 %v7323, 64
      %v7733 = vpop.permute.xlu0 %7732
      %7734 = vrot.lane.b32.xlu0 %v7324, 64
      %v7735 = vpop.permute.xlu0 %7734
      %7736 = vrot.lane.b32.xlu0 %v7325, 64
      %v7737 = vpop.permute.xlu0 %7736
      %7738 = vrot.lane.b32.xlu0 %v7326, 64
      %v7739 = vpop.permute.xlu0 %7738
      %7740 = vrot.lane.b32.xlu0 %v7327, 64
      %v7741 = vpop.permute.xlu0 %7740
      %7742 = vrot.lane.b32.xlu0 %v7328, 64
      %v7743 = vpop.permute.xlu0 %7742
      %7744 = vrot.lane.b32.xlu0 %v7329, 64
      %v7745 = vpop.permute.xlu0 %7744
      %7746 = vrot.lane.b32.xlu0 %v7330, 64
      %v7747 = vpop.permute.xlu0 %7746
      %7812 = vrot.lane.b32.xlu0 %v7331, 96
      %v7813 = vpop.permute.xlu0 %7812
      %7814 = vrot.lane.b32.xlu0 %v7332, 96
      %v7815 = vpop.permute.xlu0 %7814
      %7816 = vrot.lane.b32.xlu0 %v7333, 96
      %v7817 = vpop.permute.xlu0 %7816
      %7818 = vrot.lane.b32.xlu0 %v7334, 96
      %v7819 = vpop.permute.xlu0 %7818
      %7820 = vrot.lane.b32.xlu0 %v7335, 96
      %v7821 = vpop.permute.xlu0 %7820
      %7822 = vrot.lane.b32.xlu0 %v7336, 96
      %v7823 = vpop.permute.xlu0 %7822
      %7824 = vrot.lane.b32.xlu0 %v7337, 96
      %v7825 = vpop.permute.xlu0 %7824
      %7826 = vrot.lane.b32.xlu0 %v7338, 96
      %v7827 = vpop.permute.xlu0 %7826
      %7828 = vrot.lane.b32.xlu0 %v7339, 96
      %v7829 = vpop.permute.xlu0 %7828
      %7830 = vrot.lane.b32.xlu0 %v7340, 96
      %v7831 = vpop.permute.xlu0 %7830
      %7832 = vrot.lane.b32.xlu0 %v7341, 96
      %v7833 = vpop.permute.xlu0 %7832
      %7834 = vrot.lane.b32.xlu0 %v7342, 96
      %v7835 = vpop.permute.xlu0 %7834
      %7836 = vrot.lane.b32.xlu0 %v7343, 96
      %v7837 = vpop.permute.xlu0 %7836
      %7838 = vrot.lane.b32.xlu0 %v7344, 96
      %v7839 = vpop.permute.xlu0 %7838
      %7840 = vrot.lane.b32.xlu0 %v7345, 96
      %v7841 = vpop.permute.xlu0 %7840
      %7842 = vrot.lane.b32.xlu0 %v7346, 96
      %v7843 = vpop.permute.xlu0 %7842
      %7844 = vrot.lane.b32.xlu0 %v7347, 96
      %v7845 = vpop.permute.xlu0 %7844
      %7846 = vrot.lane.b32.xlu0 %v7348, 96
      %v7847 = vpop.permute.xlu0 %7846
      %7848 = vrot.lane.b32.xlu0 %v7349, 96
      %v7849 = vpop.permute.xlu0 %7848
      %7850 = vrot.lane.b32.xlu0 %v7350, 96
      %v7851 = vpop.permute.xlu0 %7850
      %7852 = vrot.lane.b32.xlu0 %v7351, 96
      %v7853 = vpop.permute.xlu0 %7852
      %7854 = vrot.lane.b32.xlu0 %v7352, 96
      %v7855 = vpop.permute.xlu0 %7854
      %7856 = vrot.lane.b32.xlu0 %v7353, 96
      %v7857 = vpop.permute.xlu0 %7856
      %7858 = vrot.lane.b32.xlu0 %v7354, 96
      %v7859 = vpop.permute.xlu0 %7858
      %7860 = vrot.lane.b32.xlu0 %v7355, 96
      %v7861 = vpop.permute.xlu0 %7860
      %7862 = vrot.lane.b32.xlu0 %v7356, 96
      %v7863 = vpop.permute.xlu0 %7862
      %7864 = vrot.lane.b32.xlu0 %v7357, 96
      %v7865 = vpop.permute.xlu0 %7864
      %7866 = vrot.lane.b32.xlu0 %v7358, 96
      %v7867 = vpop.permute.xlu0 %7866
      %7868 = vrot.lane.b32.xlu0 %v7359, 96
      %v7869 = vpop.permute.xlu0 %7868
      %7870 = vrot.lane.b32.xlu0 %v7360, 96
      %v7871 = vpop.permute.xlu0 %7870
      %7872 = vrot.lane.b32.xlu0 %v7361, 96
      %v7873 = vpop.permute.xlu0 %7872
      %7874 = vrot.lane.b32.xlu0 %v7362, 96
      %v7875 = vpop.permute.xlu0 %7874
      %7940 = vrot.lane.b32.xlu0 %v7395, 32
      %v7941 = vpop.permute.xlu0 %7940
      %7942 = vrot.lane.b32.xlu0 %v7396, 32
      %v7943 = vpop.permute.xlu0 %7942
      %7944 = vrot.lane.b32.xlu0 %v7397, 32
      %v7945 = vpop.permute.xlu0 %7944
      %7946 = vrot.lane.b32.xlu0 %v7398, 32
      %v7947 = vpop.permute.xlu0 %7946
      %7948 = vrot.lane.b32.xlu0 %v7399, 32
      %v7949 = vpop.permute.xlu0 %7948
      %7950 = vrot.lane.b32.xlu0 %v7400, 32
      %v7951 = vpop.permute.xlu0 %7950
      %7952 = vrot.lane.b32.xlu0 %v7401, 32
      %v7953 = vpop.permute.xlu0 %7952
      %7954 = vrot.lane.b32.xlu0 %v7402, 32
      %v7955 = vpop.permute.xlu0 %7954
      %7956 = vrot.lane.b32.xlu0 %v7403, 32
      %v7957 = vpop.permute.xlu0 %7956
      %7958 = vrot.lane.b32.xlu0 %v7404, 32
      %v7959 = vpop.permute.xlu0 %7958
      %7960 = vrot.lane.b32.xlu0 %v7405, 32
      %v7961 = vpop.permute.xlu0 %7960
      %7962 = vrot.lane.b32.xlu0 %v7406, 32
      %v7963 = vpop.permute.xlu0 %7962
      %7964 = vrot.lane.b32.xlu0 %v7407, 32
      %v7965 = vpop.permute.xlu0 %7964
      %7966 = vrot.lane.b32.xlu0 %v7408, 32
      %v7967 = vpop.permute.xlu0 %7966
      %7968 = vrot.lane.b32.xlu0 %v7409, 32
      %v7969 = vpop.permute.xlu0 %7968
      %7970 = vrot.lane.b32.xlu0 %v7410, 32
      %v7971 = vpop.permute.xlu0 %7970
      %7972 = vrot.lane.b32.xlu0 %v7411, 32
      %v7973 = vpop.permute.xlu0 %7972
      %7974 = vrot.lane.b32.xlu0 %v7412, 32
      %v7975 = vpop.permute.xlu0 %7974
      %7976 = vrot.lane.b32.xlu0 %v7413, 32
      %v7977 = vpop.permute.xlu0 %7976
      %7978 = vrot.lane.b32.xlu0 %v7414, 32
      %v7979 = vpop.permute.xlu0 %7978
      %7980 = vrot.lane.b32.xlu0 %v7415, 32
      %v7981 = vpop.permute.xlu0 %7980
      %7982 = vrot.lane.b32.xlu0 %v7416, 32
      %v7983 = vpop.permute.xlu0 %7982
      %7984 = vrot.lane.b32.xlu0 %v7417, 32
      %v7985 = vpop.permute.xlu0 %7984
      %7986 = vrot.lane.b32.xlu0 %v7418, 32
      %v7987 = vpop.permute.xlu0 %7986
      %7988 = vrot.lane.b32.xlu0 %v7419, 32
      %v7989 = vpop.permute.xlu0 %7988
      %7990 = vrot.lane.b32.xlu0 %v7420, 32
      %v7991 = vpop.permute.xlu0 %7990
      %7992 = vrot.lane.b32.xlu0 %v7421, 32
      %v7993 = vpop.permute.xlu0 %7992
      %7994 = vrot.lane.b32.xlu0 %v7422, 32
      %v7995 = vpop.permute.xlu0 %7994
      %7996 = vrot.lane.b32.xlu0 %v7423, 32
      %v7997 = vpop.permute.xlu0 %7996
      %7998 = vrot.lane.b32.xlu0 %v7424, 32
      %v7999 = vpop.permute.xlu0 %7998
      %8000 = vrot.lane.b32.xlu0 %v7425, 32
      %v8001 = vpop.permute.xlu0 %8000
      %8002 = vrot.lane.b32.xlu0 %v7426, 32
      %v8003 = vpop.permute.xlu0 %8002
      %8068 = vrot.lane.b32.xlu0 %v7428, 64
      %v8069 = vpop.permute.xlu0 %8068
      %8070 = vrot.lane.b32.xlu0 %v7429, 64
      %v8071 = vpop.permute.xlu0 %8070
      %8072 = vrot.lane.b32.xlu0 %v7430, 64
      %v8073 = vpop.permute.xlu0 %8072
      %8074 = vrot.lane.b32.xlu0 %v7431, 64
      %v8075 = vpop.permute.xlu0 %8074
      %8076 = vrot.lane.b32.xlu0 %v7432, 64
      %v8077 = vpop.permute.xlu0 %8076
      %8078 = vrot.lane.b32.xlu0 %v7433, 64
      %v8079 = vpop.permute.xlu0 %8078
      %8080 = vrot.lane.b32.xlu0 %v7434, 64
      %v8081 = vpop.permute.xlu0 %8080
      %8082 = vrot.lane.b32.xlu0 %v7435, 64
      %v8083 = vpop.permute.xlu0 %8082
      %8084 = vrot.lane.b32.xlu0 %v7436, 64
      %v8085 = vpop.permute.xlu0 %8084
      %8086 = vrot.lane.b32.xlu0 %v7437, 64
      %v8087 = vpop.permute.xlu0 %8086
      %8088 = vrot.lane.b32.xlu0 %v7438, 64
      %v8089 = vpop.permute.xlu0 %8088
      %8090 = vrot.lane.b32.xlu0 %v7439, 64
      %v8091 = vpop.permute.xlu0 %8090
      %8092 = vrot.lane.b32.xlu0 %v7440, 64
      %v8093 = vpop.permute.xlu0 %8092
      %8094 = vrot.lane.b32.xlu0 %v7441, 64
      %v8095 = vpop.permute.xlu0 %8094
      %8096 = vrot.lane.b32.xlu0 %v7442, 64
      %v8097 = vpop.permute.xlu0 %8096
      %8098 = vrot.lane.b32.xlu0 %v7443, 64
      %v8099 = vpop.permute.xlu0 %8098
      %8100 = vrot.lane.b32.xlu0 %v7444, 64
      %v8101 = vpop.permute.xlu0 %8100
      %8102 = vrot.lane.b32.xlu0 %v7445, 64
      %v8103 = vpop.permute.xlu0 %8102
      %8104 = vrot.lane.b32.xlu0 %v7446, 64
      %v8105 = vpop.permute.xlu0 %8104
      %8106 = vrot.lane.b32.xlu0 %v7447, 64
      %v8107 = vpop.permute.xlu0 %8106
      %8108 = vrot.lane.b32.xlu0 %v7448, 64
      %v8109 = vpop.permute.xlu0 %8108
      %8110 = vrot.lane.b32.xlu0 %v7449, 64
      %v8111 = vpop.permute.xlu0 %8110
      %8112 = vrot.lane.b32.xlu0 %v7450, 64
      %v8113 = vpop.permute.xlu0 %8112
      %8114 = vrot.lane.b32.xlu0 %v7451, 64
      %v8115 = vpop.permute.xlu0 %8114
      %8116 = vrot.lane.b32.xlu0 %v7452, 64
      %v8117 = vpop.permute.xlu0 %8116
      %8118 = vrot.lane.b32.xlu0 %v7453, 64
      %v8119 = vpop.permute.xlu0 %8118
      %8120 = vrot.lane.b32.xlu0 %v7454, 64
      %v8121 = vpop.permute.xlu0 %8120
      %8122 = vrot.lane.b32.xlu0 %v7455, 64
      %v8123 = vpop.permute.xlu0 %8122
      %8124 = vrot.lane.b32.xlu0 %v7456, 64
      %v8125 = vpop.permute.xlu0 %8124
      %8126 = vrot.lane.b32.xlu0 %v7457, 64
      %v8127 = vpop.permute.xlu0 %8126
      %8128 = vrot.lane.b32.xlu0 %v7458, 64
      %v8129 = vpop.permute.xlu0 %8128
      %8130 = vrot.lane.b32.xlu0 %v7459, 64
      %v8131 = vpop.permute.xlu0 %8130
      %8196 = vrot.lane.b32.xlu0 %v7460, 96
      %v8197 = vpop.permute.xlu0 %8196
      %8198 = vrot.lane.b32.xlu0 %v7461, 96
      %v8199 = vpop.permute.xlu0 %8198
      %8200 = vrot.lane.b32.xlu0 %v7462, 96
      %v8201 = vpop.permute.xlu0 %8200
      %8202 = vrot.lane.b32.xlu0 %v7463, 96
      %v8203 = vpop.permute.xlu0 %8202
      %8204 = vrot.lane.b32.xlu0 %v7464, 96
      %v8205 = vpop.permute.xlu0 %8204
      %8206 = vrot.lane.b32.xlu0 %v7465, 96
      %v8207 = vpop.permute.xlu0 %8206
      %8208 = vrot.lane.b32.xlu0 %v7466, 96
      %v8209 = vpop.permute.xlu0 %8208
      %8210 = vrot.lane.b32.xlu0 %v7467, 96
      %v8211 = vpop.permute.xlu0 %8210
      %8212 = vrot.lane.b32.xlu0 %v7468, 96
      %v8213 = vpop.permute.xlu0 %8212
      %8214 = vrot.lane.b32.xlu0 %v7469, 96
      %v8215 = vpop.permute.xlu0 %8214
      %8216 = vrot.lane.b32.xlu0 %v7470, 96
      %v8217 = vpop.permute.xlu0 %8216
      %8218 = vrot.lane.b32.xlu0 %v7471, 96
      %v8219 = vpop.permute.xlu0 %8218
      %8220 = vrot.lane.b32.xlu0 %v7472, 96
      %v8221 = vpop.permute.xlu0 %8220
      %8222 = vrot.lane.b32.xlu0 %v7473, 96
      %v8223 = vpop.permute.xlu0 %8222
      %8224 = vrot.lane.b32.xlu0 %v7474, 96
      %v8225 = vpop.permute.xlu0 %8224
      %8226 = vrot.lane.b32.xlu0 %v7475, 96
      %v8227 = vpop.permute.xlu0 %8226
      %8228 = vrot.lane.b32.xlu0 %v7476, 96
      %v8229 = vpop.permute.xlu0 %8228
      %8230 = vrot.lane.b32.xlu0 %v7477, 96
      %v8231 = vpop.permute.xlu0 %8230
      %8232 = vrot.lane.b32.xlu0 %v7478, 96
      %v8233 = vpop.permute.xlu0 %8232
      %8234 = vrot.lane.b32.xlu0 %v7479, 96
      %v8235 = vpop.permute.xlu0 %8234
      %8236 = vrot.lane.b32.xlu0 %v7480, 96
      %v8237 = vpop.permute.xlu0 %8236
      %8238 = vrot.lane.b32.xlu0 %v7481, 96
      %v8239 = vpop.permute.xlu0 %8238
      %8240 = vrot.lane.b32.xlu0 %v7482, 96
      %v8241 = vpop.permute.xlu0 %8240
      %8242 = vrot.lane.b32.xlu0 %v7483, 96
      %v8243 = vpop.permute.xlu0 %8242
      %8244 = vrot.lane.b32.xlu0 %v7484, 96
      %v8245 = vpop.permute.xlu0 %8244
      %8246 = vrot.lane.b32.xlu0 %v7485, 96
      %v8247 = vpop.permute.xlu0 %8246
      %8248 = vrot.lane.b32.xlu0 %v7486, 96
      %v8249 = vpop.permute.xlu0 %8248
      %8250 = vrot.lane.b32.xlu0 %v7487, 96
      %v8251 = vpop.permute.xlu0 %8250
      %8252 = vrot.lane.b32.xlu0 %v7488, 96
      %v8253 = vpop.permute.xlu0 %8252
      %8254 = vrot.lane.b32.xlu0 %v7489, 96
      %v8255 = vpop.permute.xlu0 %8254
      %8256 = vrot.lane.b32.xlu0 %v7490, 96
      %v8257 = vpop.permute.xlu0 %8256
      %8258 = vrot.lane.b32.xlu0 %v7491, 96
      %v8259 = vpop.permute.xlu0 %8258
      %v8292 = vsel %vm458, %v7235, %v7557
      %v8293 = vsel %vm458, %v7236, %v7559
      %v8294 = vsel %vm458, %v7237, %v7561
      %v8295 = vsel %vm458, %v7238, %v7563
      %v8296 = vsel %vm458, %v7239, %v7565
      %v8297 = vsel %vm458, %v7240, %v7567
      %v8298 = vsel %vm458, %v7241, %v7569
      %v8299 = vsel %vm458, %v7242, %v7571
      %v8300 = vsel %vm458, %v7243, %v7573
      %v8301 = vsel %vm458, %v7244, %v7575
      %v8302 = vsel %vm458, %v7245, %v7577
      %v8303 = vsel %vm458, %v7246, %v7579
      %v8304 = vsel %vm458, %v7247, %v7581
      %v8305 = vsel %vm458, %v7248, %v7583
      %v8306 = vsel %vm458, %v7249, %v7585
      %v8307 = vsel %vm458, %v7250, %v7587
      %v8308 = vsel %vm458, %v7251, %v7589
      %v8309 = vsel %vm458, %v7252, %v7591
      %v8310 = vsel %vm458, %v7253, %v7593
      %v8311 = vsel %vm458, %v7254, %v7595
      %v8312 = vsel %vm458, %v7255, %v7597
      %v8313 = vsel %vm458, %v7256, %v7599
      %v8314 = vsel %vm458, %v7257, %v7601
      %v8315 = vsel %vm458, %v7258, %v7603
      %v8316 = vsel %vm458, %v7259, %v7605
      %v8317 = vsel %vm458, %v7260, %v7607
      %v8318 = vsel %vm458, %v7261, %v7609
      %v8319 = vsel %vm458, %v7262, %v7611
      %v8320 = vsel %vm458, %v7263, %v7613
      %v8321 = vsel %vm458, %v7264, %v7615
      %v8322 = vsel %vm458, %v7265, %v7617
      %v8323 = vsel %vm458, %v7266, %v7619
      %v8324 = vsel %vm514, %v8292, %v7685
      %v8325 = vsel %vm514, %v8293, %v7687
      %v8326 = vsel %vm514, %v8294, %v7689
      %v8327 = vsel %vm514, %v8295, %v7691
      %v8328 = vsel %vm514, %v8296, %v7693
      %v8329 = vsel %vm514, %v8297, %v7695
      %v8330 = vsel %vm514, %v8298, %v7697
      %v8331 = vsel %vm514, %v8299, %v7699
      %v8332 = vsel %vm514, %v8300, %v7701
      %v8333 = vsel %vm514, %v8301, %v7703
      %v8334 = vsel %vm514, %v8302, %v7705
      %v8335 = vsel %vm514, %v8303, %v7707
      %v8336 = vsel %vm514, %v8304, %v7709
      %v8337 = vsel %vm514, %v8305, %v7711
      %v8338 = vsel %vm514, %v8306, %v7713
      %v8339 = vsel %vm514, %v8307, %v7715
      %v8340 = vsel %vm514, %v8308, %v7717
      %v8341 = vsel %vm514, %v8309, %v7719
      %v8342 = vsel %vm514, %v8310, %v7721
      %v8343 = vsel %vm514, %v8311, %v7723
      %v8344 = vsel %vm514, %v8312, %v7725
      %v8345 = vsel %vm514, %v8313, %v7727
      %v8346 = vsel %vm514, %v8314, %v7729
      %v8347 = vsel %vm514, %v8315, %v7731
      %v8348 = vsel %vm514, %v8316, %v7733
      %v8349 = vsel %vm514, %v8317, %v7735
      %v8350 = vsel %vm514, %v8318, %v7737
      %v8351 = vsel %vm514, %v8319, %v7739
      %v8352 = vsel %vm514, %v8320, %v7741
      %v8353 = vsel %vm514, %v8321, %v7743
      %v8354 = vsel %vm514, %v8322, %v7745
      %v8355 = vsel %vm514, %v8323, %v7747
      %vm8356 = vcmask 785408
      %v8357 = vsel %vm8356, %v8324, %v7813
      %v8358 = vsel %vm8356, %v8325, %v7815
      %v8359 = vsel %vm8356, %v8326, %v7817
      %v8360 = vsel %vm8356, %v8327, %v7819
      %v8361 = vsel %vm8356, %v8328, %v7821
      %v8362 = vsel %vm8356, %v8329, %v7823
      %v8363 = vsel %vm8356, %v8330, %v7825
      %v8364 = vsel %vm8356, %v8331, %v7827
      %v8365 = vsel %vm8356, %v8332, %v7829
      %v8366 = vsel %vm8356, %v8333, %v7831
      %v8367 = vsel %vm8356, %v8334, %v7833
      %v8368 = vsel %vm8356, %v8335, %v7835
      %v8369 = vsel %vm8356, %v8336, %v7837
      %v8370 = vsel %vm8356, %v8337, %v7839
      %v8371 = vsel %vm8356, %v8338, %v7841
      %v8372 = vsel %vm8356, %v8339, %v7843
      %v8373 = vsel %vm8356, %v8340, %v7845
      %v8374 = vsel %vm8356, %v8341, %v7847
      %v8375 = vsel %vm8356, %v8342, %v7849
      %v8376 = vsel %vm8356, %v8343, %v7851
      %v8377 = vsel %vm8356, %v8344, %v7853
      %v8378 = vsel %vm8356, %v8345, %v7855
      %v8379 = vsel %vm8356, %v8346, %v7857
      %v8380 = vsel %vm8356, %v8347, %v7859
      %v8381 = vsel %vm8356, %v8348, %v7861
      %v8382 = vsel %vm8356, %v8349, %v7863
      %v8383 = vsel %vm8356, %v8350, %v7865
      %v8384 = vsel %vm8356, %v8351, %v7867
      %v8385 = vsel %vm8356, %v8352, %v7869
      %v8386 = vsel %vm8356, %v8353, %v7871
      %v8387 = vsel %vm8356, %v8354, %v7873
      %v8388 = vsel %vm8356, %v8355, %v7875
      %v8389 = vsel %vm458, %v7363, %v7941
      %v8390 = vsel %vm458, %v7364, %v7943
      %v8391 = vsel %vm458, %v7365, %v7945
      %v8392 = vsel %vm458, %v7366, %v7947
      %v8393 = vsel %vm458, %v7367, %v7949
      %v8394 = vsel %vm458, %v7368, %v7951
      %v8395 = vsel %vm458, %v7369, %v7953
      %v8396 = vsel %vm458, %v7370, %v7955
      %v8397 = vsel %vm458, %v7371, %v7957
      %v8398 = vsel %vm458, %v7372, %v7959
      %v8399 = vsel %vm458, %v7373, %v7961
      %v8400 = vsel %vm458, %v7374, %v7963
      %v8401 = vsel %vm458, %v7375, %v7965
      %v8402 = vsel %vm458, %v7376, %v7967
      %v8403 = vsel %vm458, %v7377, %v7969
      %v8404 = vsel %vm458, %v7378, %v7971
      %v8405 = vsel %vm458, %v7379, %v7973
      %v8406 = vsel %vm458, %v7380, %v7975
      %v8407 = vsel %vm458, %v7381, %v7977
      %v8408 = vsel %vm458, %v7382, %v7979
      %v8409 = vsel %vm458, %v7383, %v7981
      %v8410 = vsel %vm458, %v7384, %v7983
      %v8411 = vsel %vm458, %v7385, %v7985
      %v8412 = vsel %vm458, %v7386, %v7987
      %v8413 = vsel %vm458, %v7387, %v7989
      %v8414 = vsel %vm458, %v7388, %v7991
      %v8415 = vsel %vm458, %v7389, %v7993
      %v8416 = vsel %vm458, %v7390, %v7995
      %v8417 = vsel %vm458, %v7391, %v7997
      %v8418 = vsel %vm458, %v7392, %v7999
      %v8419 = vsel %vm458, %v7393, %v8001
      %v8420 = vsel %vm458, %v7394, %v8003
      %v8421 = vsel %vm514, %v8389, %v8069
      %v8422 = vsel %vm514, %v8390, %v8071
      %v8423 = vsel %vm514, %v8391, %v8073
      %v8424 = vsel %vm514, %v8392, %v8075
      %v8425 = vsel %vm514, %v8393, %v8077
      %v8426 = vsel %vm514, %v8394, %v8079
      %v8427 = vsel %vm514, %v8395, %v8081
      %v8428 = vsel %vm514, %v8396, %v8083
      %v8429 = vsel %vm514, %v8397, %v8085
      %v8430 = vsel %vm514, %v8398, %v8087
      %v8431 = vsel %vm514, %v8399, %v8089
      %v8432 = vsel %vm514, %v8400, %v8091
      %v8433 = vsel %vm514, %v8401, %v8093
      %v8434 = vsel %vm514, %v8402, %v8095
      %v8435 = vsel %vm514, %v8403, %v8097
      %v8436 = vsel %vm514, %v8404, %v8099
      %v8437 = vsel %vm514, %v8405, %v8101
      %v8438 = vsel %vm514, %v8406, %v8103
      %v8439 = vsel %vm514, %v8407, %v8105
      %v8440 = vsel %vm514, %v8408, %v8107
      %v8441 = vsel %vm514, %v8409, %v8109
      %v8442 = vsel %vm514, %v8410, %v8111
      %v8443 = vsel %vm514, %v8411, %v8113
      %v8444 = vsel %vm514, %v8412, %v8115
      %v8445 = vsel %vm514, %v8413, %v8117
      %v8446 = vsel %vm514, %v8414, %v8119
      %v8447 = vsel %vm514, %v8415, %v8121
      %v8448 = vsel %vm514, %v8416, %v8123
      %v8449 = vsel %vm514, %v8417, %v8125
      %v8450 = vsel %vm514, %v8418, %v8127
      %v8451 = vsel %vm514, %v8419, %v8129
      %v8452 = vsel %vm514, %v8420, %v8131
      %v8453 = vsel %vm8356, %v8421, %v8197
      %v8454 = vsel %vm8356, %v8422, %v8199
      %v8455 = vsel %vm8356, %v8423, %v8201
      %v8456 = vsel %vm8356, %v8424, %v8203
      %v8457 = vsel %vm8356, %v8425, %v8205
      %v8458 = vsel %vm8356, %v8426, %v8207
      %v8459 = vsel %vm8356, %v8427, %v8209
      %v8460 = vsel %vm8356, %v8428, %v8211
      %v8461 = vsel %vm8356, %v8429, %v8213
      %v8462 = vsel %vm8356, %v8430, %v8215
      %v8463 = vsel %vm8356, %v8431, %v8217
      %v8464 = vsel %vm8356, %v8432, %v8219
      %v8465 = vsel %vm8356, %v8433, %v8221
      %v8466 = vsel %vm8356, %v8434, %v8223
      %v8467 = vsel %vm8356, %v8435, %v8225
      %v8468 = vsel %vm8356, %v8436, %v8227
      %v8469 = vsel %vm8356, %v8437, %v8229
      %v8470 = vsel %vm8356, %v8438, %v8231
      %v8471 = vsel %vm8356, %v8439, %v8233
      %v8472 = vsel %vm8356, %v8440, %v8235
      %v8473 = vsel %vm8356, %v8441, %v8237
      %v8474 = vsel %vm8356, %v8442, %v8239
      %v8475 = vsel %vm8356, %v8443, %v8241
      %v8476 = vsel %vm8356, %v8444, %v8243
      %v8477 = vsel %vm8356, %v8445, %v8245
      %v8478 = vsel %vm8356, %v8446, %v8247
      %v8479 = vsel %vm8356, %v8447, %v8249
      %v8480 = vsel %vm8356, %v8448, %v8251
      %v8481 = vsel %vm8356, %v8449, %v8253
      %v8482 = vsel %vm8356, %v8450, %v8255
      %v8483 = vsel %vm8356, %v8451, %v8257
      %v8484 = vsel %vm8356, %v8452, %v8259
      %v8485 = vld [vmem:[%s5] sm:$0xff]
      %v8486 = vld [vmem:[%s5 + $0x8] sm:$0xff]
      %v8487 = vld [vmem:[%s5 + $0x10] sm:$0xff]
      %v8488 = vld [vmem:[%s5 + $0x18] sm:$0xff]
      %v8489 = vld [vmem:[%s5 + $0x20] sm:$0xff]
      %v8490 = vld [vmem:[%s5 + $0x28] sm:$0xff]
      %v8491 = vld [vmem:[%s5 + $0x30] sm:$0xff]
      %v8492 = vld [vmem:[%s5 + $0x38] sm:$0xff]
      %v8493 = vld [vmem:[%s5 + $0x40] sm:$0xff]
      %v8494 = vld [vmem:[%s5 + $0x48] sm:$0xff]
      %v8495 = vld [vmem:[%s5 + $0x50] sm:$0xff]
      %v8496 = vld [vmem:[%s5 + $0x58] sm:$0xff]
      %v8497 = vld [vmem:[%s5 + $0x60] sm:$0xff]
      %v8498 = vld [vmem:[%s5 + $0x68] sm:$0xff]
      %v8499 = vld [vmem:[%s5 + $0x70] sm:$0xff]
      %v8500 = vld [vmem:[%s5 + $0x78] sm:$0xff]
      %v8501 = vld [vmem:[%s5 + $0x80] sm:$0xff]
      %v8502 = vld [vmem:[%s5 + $0x88] sm:$0xff]
      %v8503 = vld [vmem:[%s5 + $0x90] sm:$0xff]
      %v8504 = vld [vmem:[%s5 + $0x98] sm:$0xff]
      %v8505 = vld [vmem:[%s5 + $0xa0] sm:$0xff]
      %v8506 = vld [vmem:[%s5 + $0xa8] sm:$0xff]
      %v8507 = vld [vmem:[%s5 + $0xb0] sm:$0xff]
      %v8508 = vld [vmem:[%s5 + $0xb8] sm:$0xff]
      %v8509 = vld [vmem:[%s5 + $0xc0] sm:$0xff]
      %v8510 = vld [vmem:[%s5 + $0xc8] sm:$0xff]
      %v8511 = vld [vmem:[%s5 + $0xd0] sm:$0xff]
      %v8512 = vld [vmem:[%s5 + $0xd8] sm:$0xff]
      %v8513 = vld [vmem:[%s5 + $0xe0] sm:$0xff]
      %v8514 = vld [vmem:[%s5 + $0xe8] sm:$0xff]
      %v8515 = vld [vmem:[%s5 + $0xf0] sm:$0xff]
      %v8516 = vld [vmem:[%s5 + $0xf8] sm:$0xff]
      %v8517 = vld [vmem:[%s5 + $0x100] sm:$0xff]
      %v8518 = vld [vmem:[%s5 + $0x108] sm:$0xff]
      %v8519 = vld [vmem:[%s5 + $0x110] sm:$0xff]
      %v8520 = vld [vmem:[%s5 + $0x118] sm:$0xff]
      %v8522 = vsel %vm458, %v7492, 0
      %v8525 = vsel %vm458, %v7493, 0
      %v8528 = vsel %vm458, %v7494, 0
      %v8531 = vsel %vm458, %v7495, 0
      %v8534 = vsel %vm458, %v7496, 0
      %v8537 = vsel %vm458, %v7497, 0
      %v8540 = vsel %vm458, %v7498, 0
      %v8543 = vsel %vm458, %v7499, 0
      %v8546 = vsel %vm458, %v7500, 0
      %v8549 = vsel %vm458, %v7501, 0
      %v8552 = vsel %vm458, %v7502, 0
      %v8555 = vsel %vm458, %v7503, 0
      %v8558 = vsel %vm458, %v7504, 0
      %v8561 = vsel %vm458, %v7505, 0
      %v8564 = vsel %vm458, %v7506, 0
      %v8567 = vsel %vm458, %v7507, 0
      %v8570 = vsel %vm458, %v7508, 0
      %v8573 = vsel %vm458, %v7509, 0
      %v8576 = vsel %vm458, %v7510, 0
      %v8579 = vsel %vm458, %v7511, 0
      %v8582 = vsel %vm458, %v7512, 0
      %v8585 = vsel %vm458, %v7513, 0
      %v8588 = vsel %vm458, %v7514, 0
      %v8591 = vsel %vm458, %v7515, 0
      %v8594 = vsel %vm458, %v7516, 0
      %v8597 = vsel %vm458, %v7517, 0
      %v8600 = vsel %vm458, %v7518, 0
      %v8603 = vsel %vm458, %v7519, 0
      %v8606 = vsel %vm458, %v7520, 0
      %v8609 = vsel %vm458, %v7521, 0
      %v8612 = vsel %vm458, %v7522, 0
      %v8615 = vsel %vm458, %v7523, 0
      %8617 = vmatpush.msra.mxu0 %v8500
      %8618 = vmatpush.msra.mxu0 %v8499
      %8619 = vmatpush.msra.mxu0 %v8498
      %8620 = vmatpush.msra.mxu0 %v8497
      %8621 = vmatpush.msra.mxu0 %v8496
      %8622 = vmatpush.msra.mxu0 %v8495
      %8623 = vmatpush.msra.mxu0 %v8494
      %8624 = vmatpush.msra.mxu0 %v8493
      %8625 = vmatpush.msra.mxu0 %v8492
      %8626 = vmatpush.msra.mxu0 %v8491
      %8627 = vmatpush.msra.mxu0 %v8490
      %8628 = vmatpush.msra.mxu0 %v8489
      %8629 = vmatpush.msra.mxu0 %v8488
      %8630 = vmatpush.msra.mxu0 %v8487
      %8631 = vmatpush.msra.mxu0 %v8486
      %8632 = vmatpush.msra.mxu0 %v8485
      %8633 = vmatmul.f32.gmra.mxu0 %v8357
      %v8634 = vpop.f32.mrf.mxu0
      %v8635 = vadd.f32 0.0, %v8634
      %8636 = vmatmul.f32.gmra.mxu0 %v8358
      %v8637 = vpop.f32.mrf.mxu0
      %v8638 = vadd.f32 0.0, %v8637
      %8639 = vmatmul.f32.gmra.mxu0 %v8359
      %v8640 = vpop.f32.mrf.mxu0
      %v8641 = vadd.f32 0.0, %v8640
      %8642 = vmatmul.f32.gmra.mxu0 %v8360
      %v8643 = vpop.f32.mrf.mxu0
      %v8644 = vadd.f32 0.0, %v8643
      %8645 = vmatmul.f32.gmra.mxu0 %v8361
      %v8646 = vpop.f32.mrf.mxu0
      %v8647 = vadd.f32 0.0, %v8646
      %8648 = vmatmul.f32.gmra.mxu0 %v8362
      %v8649 = vpop.f32.mrf.mxu0
      %v8650 = vadd.f32 0.0, %v8649
      %8651 = vmatmul.f32.gmra.mxu0 %v8363
      %v8652 = vpop.f32.mrf.mxu0
      %v8653 = vadd.f32 0.0, %v8652
      %8654 = vmatmul.f32.gmra.mxu0 %v8364
      %v8655 = vpop.f32.mrf.mxu0
      %v8656 = vadd.f32 0.0, %v8655
      %8657 = vmatmul.f32.gmra.mxu0 %v8365
      %v8658 = vpop.f32.mrf.mxu0
      %v8659 = vadd.f32 0.0, %v8658
      %8660 = vmatmul.f32.gmra.mxu0 %v8366
      %v8661 = vpop.f32.mrf.mxu0
      %v8662 = vadd.f32 0.0, %v8661
      %8663 = vmatmul.f32.gmra.mxu0 %v8367
      %v8664 = vpop.f32.mrf.mxu0
      %v8665 = vadd.f32 0.0, %v8664
      %8666 = vmatmul.f32.gmra.mxu0 %v8368
      %v8667 = vpop.f32.mrf.mxu0
      %v8668 = vadd.f32 0.0, %v8667
      %8669 = vmatmul.f32.gmra.mxu0 %v8369
      %v8670 = vpop.f32.mrf.mxu0
      %v8671 = vadd.f32 0.0, %v8670
      %8672 = vmatmul.f32.gmra.mxu0 %v8370
      %v8673 = vpop.f32.mrf.mxu0
      %v8674 = vadd.f32 0.0, %v8673
      %8675 = vmatmul.f32.gmra.mxu0 %v8371
      %v8676 = vpop.f32.mrf.mxu0
      %v8677 = vadd.f32 0.0, %v8676
      %8678 = vmatmul.f32.gmra.mxu0 %v8372
      %v8679 = vpop.f32.mrf.mxu0
      %v8680 = vadd.f32 0.0, %v8679
      %8681 = vmatmul.f32.gmra.mxu0 %v8373
      %v8682 = vpop.f32.mrf.mxu0
      %v8683 = vadd.f32 0.0, %v8682
      %8684 = vmatmul.f32.gmra.mxu0 %v8374
      %v8685 = vpop.f32.mrf.mxu0
      %v8686 = vadd.f32 0.0, %v8685
      %8687 = vmatmul.f32.gmra.mxu0 %v8375
      %v8688 = vpop.f32.mrf.mxu0
      %v8689 = vadd.f32 0.0, %v8688
      %8690 = vmatmul.f32.gmra.mxu0 %v8376
      %v8691 = vpop.f32.mrf.mxu0
      %v8692 = vadd.f32 0.0, %v8691
      %8693 = vmatmul.f32.gmra.mxu0 %v8377
      %v8694 = vpop.f32.mrf.mxu0
      %v8695 = vadd.f32 0.0, %v8694
      %8696 = vmatmul.f32.gmra.mxu0 %v8378
      %v8697 = vpop.f32.mrf.mxu0
      %v8698 = vadd.f32 0.0, %v8697
      %8699 = vmatmul.f32.gmra.mxu0 %v8379
      %v8700 = vpop.f32.mrf.mxu0
      %v8701 = vadd.f32 0.0, %v8700
      %8702 = vmatmul.f32.gmra.mxu0 %v8380
      %v8703 = vpop.f32.mrf.mxu0
      %v8704 = vadd.f32 0.0, %v8703
      %8705 = vmatmul.f32.gmra.mxu0 %v8381
      %v8706 = vpop.f32.mrf.mxu0
      %v8707 = vadd.f32 0.0, %v8706
      %8708 = vmatmul.f32.gmra.mxu0 %v8382
      %v8709 = vpop.f32.mrf.mxu0
      %v8710 = vadd.f32 0.0, %v8709
      %8711 = vmatmul.f32.gmra.mxu0 %v8383
      %v8712 = vpop.f32.mrf.mxu0
      %v8713 = vadd.f32 0.0, %v8712
      %8714 = vmatmul.f32.gmra.mxu0 %v8384
      %v8715 = vpop.f32.mrf.mxu0
      %v8716 = vadd.f32 0.0, %v8715
      %8717 = vmatmul.f32.gmra.mxu0 %v8385
      %v8718 = vpop.f32.mrf.mxu0
      %v8719 = vadd.f32 0.0, %v8718
      %8720 = vmatmul.f32.gmra.mxu0 %v8386
      %v8721 = vpop.f32.mrf.mxu0
      %v8722 = vadd.f32 0.0, %v8721
      %8723 = vmatmul.f32.gmra.mxu0 %v8387
      %v8724 = vpop.f32.mrf.mxu0
      %v8725 = vadd.f32 0.0, %v8724
      %8726 = vmatmul.f32.gmra.mxu0 %v8388
      %v8727 = vpop.f32.mrf.mxu0
      %v8728 = vadd.f32 0.0, %v8727
      %8729 = vdwg.mxu0
      %8730 = vmatpush.msra.mxu0 %v8516
      %8731 = vmatpush.msra.mxu0 %v8515
      %8732 = vmatpush.msra.mxu0 %v8514
      %8733 = vmatpush.msra.mxu0 %v8513
      %8734 = vmatpush.msra.mxu0 %v8512
      %8735 = vmatpush.msra.mxu0 %v8511
      %8736 = vmatpush.msra.mxu0 %v8510
      %8737 = vmatpush.msra.mxu0 %v8509
      %8738 = vmatpush.msra.mxu0 %v8508
      %8739 = vmatpush.msra.mxu0 %v8507
      %8740 = vmatpush.msra.mxu0 %v8506
      %8741 = vmatpush.msra.mxu0 %v8505
      %8742 = vmatpush.msra.mxu0 %v8504
      %8743 = vmatpush.msra.mxu0 %v8503
      %8744 = vmatpush.msra.mxu0 %v8502
      %8745 = vmatpush.msra.mxu0 %v8501
      %8746 = vmatmul.f32.gmra.mxu0 %v8453
      %v8747 = vpop.f32.mrf.mxu0
      %v8748 = vadd.f32 %v8635, %v8747
      %8749 = vmatmul.f32.gmra.mxu0 %v8454
      %v8750 = vpop.f32.mrf.mxu0
      %v8751 = vadd.f32 %v8638, %v8750
      %8752 = vmatmul.f32.gmra.mxu0 %v8455
      %v8753 = vpop.f32.mrf.mxu0
      %v8754 = vadd.f32 %v8641, %v8753
      %8755 = vmatmul.f32.gmra.mxu0 %v8456
      %v8756 = vpop.f32.mrf.mxu0
      %v8757 = vadd.f32 %v8644, %v8756
      %8758 = vmatmul.f32.gmra.mxu0 %v8457
      %v8759 = vpop.f32.mrf.mxu0
      %v8760 = vadd.f32 %v8647, %v8759
      %8761 = vmatmul.f32.gmra.mxu0 %v8458
      %v8762 = vpop.f32.mrf.mxu0
      %v8763 = vadd.f32 %v8650, %v8762
      %8764 = vmatmul.f32.gmra.mxu0 %v8459
      %v8765 = vpop.f32.mrf.mxu0
      %v8766 = vadd.f32 %v8653, %v8765
      %8767 = vmatmul.f32.gmra.mxu0 %v8460
      %v8768 = vpop.f32.mrf.mxu0
      %v8769 = vadd.f32 %v8656, %v8768
      %8770 = vmatmul.f32.gmra.mxu0 %v8461
      %v8771 = vpop.f32.mrf.mxu0
      %v8772 = vadd.f32 %v8659, %v8771
      %8773 = vmatmul.f32.gmra.mxu0 %v8462
      %v8774 = vpop.f32.mrf.mxu0
      %v8775 = vadd.f32 %v8662, %v8774
      %8776 = vmatmul.f32.gmra.mxu0 %v8463
      %v8777 = vpop.f32.mrf.mxu0
      %v8778 = vadd.f32 %v8665, %v8777
      %8779 = vmatmul.f32.gmra.mxu0 %v8464
      %v8780 = vpop.f32.mrf.mxu0
      %v8781 = vadd.f32 %v8668, %v8780
      %8782 = vmatmul.f32.gmra.mxu0 %v8465
      %v8783 = vpop.f32.mrf.mxu0
      %v8784 = vadd.f32 %v8671, %v8783
      %8785 = vmatmul.f32.gmra.mxu0 %v8466
      %v8786 = vpop.f32.mrf.mxu0
      %v8787 = vadd.f32 %v8674, %v8786
      %8788 = vmatmul.f32.gmra.mxu0 %v8467
      %v8789 = vpop.f32.mrf.mxu0
      %v8790 = vadd.f32 %v8677, %v8789
      %8791 = vmatmul.f32.gmra.mxu0 %v8468
      %v8792 = vpop.f32.mrf.mxu0
      %v8793 = vadd.f32 %v8680, %v8792
      %8794 = vmatmul.f32.gmra.mxu0 %v8469
      %v8795 = vpop.f32.mrf.mxu0
      %v8796 = vadd.f32 %v8683, %v8795
      %8797 = vmatmul.f32.gmra.mxu0 %v8470
      %v8798 = vpop.f32.mrf.mxu0
      %v8799 = vadd.f32 %v8686, %v8798
      %8800 = vmatmul.f32.gmra.mxu0 %v8471
      %v8801 = vpop.f32.mrf.mxu0
      %v8802 = vadd.f32 %v8689, %v8801
      %8803 = vmatmul.f32.gmra.mxu0 %v8472
      %v8804 = vpop.f32.mrf.mxu0
      %v8805 = vadd.f32 %v8692, %v8804
      %8806 = vmatmul.f32.gmra.mxu0 %v8473
      %v8807 = vpop.f32.mrf.mxu0
      %v8808 = vadd.f32 %v8695, %v8807
      %8809 = vmatmul.f32.gmra.mxu0 %v8474
      %v8810 = vpop.f32.mrf.mxu0
      %v8811 = vadd.f32 %v8698, %v8810
      %8812 = vmatmul.f32.gmra.mxu0 %v8475
      %v8813 = vpop.f32.mrf.mxu0
      %v8814 = vadd.f32 %v8701, %v8813
      %8815 = vmatmul.f32.gmra.mxu0 %v8476
      %v8816 = vpop.f32.mrf.mxu0
      %v8817 = vadd.f32 %v8704, %v8816
      %8818 = vmatmul.f32.gmra.mxu0 %v8477
      %v8819 = vpop.f32.mrf.mxu0
      %v8820 = vadd.f32 %v8707, %v8819
      %8821 = vmatmul.f32.gmra.mxu0 %v8478
      %v8822 = vpop.f32.mrf.mxu0
      %v8823 = vadd.f32 %v8710, %v8822
      %8824 = vmatmul.f32.gmra.mxu0 %v8479
      %v8825 = vpop.f32.mrf.mxu0
      %v8826 = vadd.f32 %v8713, %v8825
      %8827 = vmatmul.f32.gmra.mxu0 %v8480
      %v8828 = vpop.f32.mrf.mxu0
      %v8829 = vadd.f32 %v8716, %v8828
      %8830 = vmatmul.f32.gmra.mxu0 %v8481
      %v8831 = vpop.f32.mrf.mxu0
      %v8832 = vadd.f32 %v8719, %v8831
      %8833 = vmatmul.f32.gmra.mxu0 %v8482
      %v8834 = vpop.f32.mrf.mxu0
      %v8835 = vadd.f32 %v8722, %v8834
      %8836 = vmatmul.f32.gmra.mxu0 %v8483
      %v8837 = vpop.f32.mrf.mxu0
      %v8838 = vadd.f32 %v8725, %v8837
      %8839 = vmatmul.f32.gmra.mxu0 %v8484
      %v8840 = vpop.f32.mrf.mxu0
      %v8841 = vadd.f32 %v8728, %v8840
      %8842 = vdwg.mxu0
      %8843 = vmatpush.msra.mxu0 0.0
      %8844 = vmatpush.msra.mxu0 0.0
      %8845 = vmatpush.msra.mxu0 0.0
      %8846 = vmatpush.msra.mxu0 0.0
      %8847 = vmatpush.msra.mxu0 0.0
      %8848 = vmatpush.msra.mxu0 0.0
      %8849 = vmatpush.msra.mxu0 0.0
      %8850 = vmatpush.msra.mxu0 0.0
      %8851 = vmatpush.msra.mxu0 0.0
      %8852 = vmatpush.msra.mxu0 0.0
      %8853 = vmatpush.msra.mxu0 0.0
      %8854 = vmatpush.msra.mxu0 0.0
      %8855 = vmatpush.msra.mxu0 %v8520
      %8856 = vmatpush.msra.mxu0 %v8519
      %8857 = vmatpush.msra.mxu0 %v8518
      %8858 = vmatpush.msra.mxu0 %v8517
      %8859 = vmatmul.f32.gmra.mxu0 %v8522
      %v8860 = vpop.f32.mrf.mxu0
      %v8861 = vadd.f32 %v8748, %v8860
      %8862 = vmatmul.f32.gmra.mxu0 %v8525
      %v8863 = vpop.f32.mrf.mxu0
      %v8864 = vadd.f32 %v8751, %v8863
      %8865 = vmatmul.f32.gmra.mxu0 %v8528
      %v8866 = vpop.f32.mrf.mxu0
      %v8867 = vadd.f32 %v8754, %v8866
      %8868 = vmatmul.f32.gmra.mxu0 %v8531
      %v8869 = vpop.f32.mrf.mxu0
      %v8870 = vadd.f32 %v8757, %v8869
      %8871 = vmatmul.f32.gmra.mxu0 %v8534
      %v8872 = vpop.f32.mrf.mxu0
      %v8873 = vadd.f32 %v8760, %v8872
      %8874 = vmatmul.f32.gmra.mxu0 %v8537
      %v8875 = vpop.f32.mrf.mxu0
      %v8876 = vadd.f32 %v8763, %v8875
      %8877 = vmatmul.f32.gmra.mxu0 %v8540
      %v8878 = vpop.f32.mrf.mxu0
      %v8879 = vadd.f32 %v8766, %v8878
      %8880 = vmatmul.f32.gmra.mxu0 %v8543
      %v8881 = vpop.f32.mrf.mxu0
      %v8882 = vadd.f32 %v8769, %v8881
      %8883 = vmatmul.f32.gmra.mxu0 %v8546
      %v8884 = vpop.f32.mrf.mxu0
      %v8885 = vadd.f32 %v8772, %v8884
      %8886 = vmatmul.f32.gmra.mxu0 %v8549
      %v8887 = vpop.f32.mrf.mxu0
      %v8888 = vadd.f32 %v8775, %v8887
      %8889 = vmatmul.f32.gmra.mxu0 %v8552
      %v8890 = vpop.f32.mrf.mxu0
      %v8891 = vadd.f32 %v8778, %v8890
      %8892 = vmatmul.f32.gmra.mxu0 %v8555
      %v8893 = vpop.f32.mrf.mxu0
      %v8894 = vadd.f32 %v8781, %v8893
      %8895 = vmatmul.f32.gmra.mxu0 %v8558
      %v8896 = vpop.f32.mrf.mxu0
      %v8897 = vadd.f32 %v8784, %v8896
      %8898 = vmatmul.f32.gmra.mxu0 %v8561
      %v8899 = vpop.f32.mrf.mxu0
      %v8900 = vadd.f32 %v8787, %v8899
      %8901 = vmatmul.f32.gmra.mxu0 %v8564
      %v8902 = vpop.f32.mrf.mxu0
      %v8903 = vadd.f32 %v8790, %v8902
      %8904 = vmatmul.f32.gmra.mxu0 %v8567
      %v8905 = vpop.f32.mrf.mxu0
      %v8906 = vadd.f32 %v8793, %v8905
      %8907 = vmatmul.f32.gmra.mxu0 %v8570
      %v8908 = vpop.f32.mrf.mxu0
      %v8909 = vadd.f32 %v8796, %v8908
      %8910 = vmatmul.f32.gmra.mxu0 %v8573
      %v8911 = vpop.f32.mrf.mxu0
      %v8912 = vadd.f32 %v8799, %v8911
      %8913 = vmatmul.f32.gmra.mxu0 %v8576
      %v8914 = vpop.f32.mrf.mxu0
      %v8915 = vadd.f32 %v8802, %v8914
      %8916 = vmatmul.f32.gmra.mxu0 %v8579
      %v8917 = vpop.f32.mrf.mxu0
      %v8918 = vadd.f32 %v8805, %v8917
      %8919 = vmatmul.f32.gmra.mxu0 %v8582
      %v8920 = vpop.f32.mrf.mxu0
      %v8921 = vadd.f32 %v8808, %v8920
      %8922 = vmatmul.f32.gmra.mxu0 %v8585
      %v8923 = vpop.f32.mrf.mxu0
      %v8924 = vadd.f32 %v8811, %v8923
      %8925 = vmatmul.f32.gmra.mxu0 %v8588
      %v8926 = vpop.f32.mrf.mxu0
      %v8927 = vadd.f32 %v8814, %v8926
      %8928 = vmatmul.f32.gmra.mxu0 %v8591
      %v8929 = vpop.f32.mrf.mxu0
      %v8930 = vadd.f32 %v8817, %v8929
      %8931 = vmatmul.f32.gmra.mxu0 %v8594
      %v8932 = vpop.f32.mrf.mxu0
      %v8933 = vadd.f32 %v8820, %v8932
      %8934 = vmatmul.f32.gmra.mxu0 %v8597
      %v8935 = vpop.f32.mrf.mxu0
      %v8936 = vadd.f32 %v8823, %v8935
      %8937 = vmatmul.f32.gmra.mxu0 %v8600
      %v8938 = vpop.f32.mrf.mxu0
      %v8939 = vadd.f32 %v8826, %v8938
      %8940 = vmatmul.f32.gmra.mxu0 %v8603
      %v8941 = vpop.f32.mrf.mxu0
      %v8942 = vadd.f32 %v8829, %v8941
      %8943 = vmatmul.f32.gmra.mxu0 %v8606
      %v8944 = vpop.f32.mrf.mxu0
      %v8945 = vadd.f32 %v8832, %v8944
      %8946 = vmatmul.f32.gmra.mxu0 %v8609
      %v8947 = vpop.f32.mrf.mxu0
      %v8948 = vadd.f32 %v8835, %v8947
      %8949 = vmatmul.f32.gmra.mxu0 %v8612
      %v8950 = vpop.f32.mrf.mxu0
      %v8951 = vadd.f32 %v8838, %v8950
      %8952 = vmatmul.f32.gmra.mxu0 %v8615
      %v8953 = vpop.f32.mrf.mxu0
      %v8954 = vadd.f32 %v8841, %v8953
      %8955 = vdwg.mxu0
      %v8956 = vld [vmem:[%s6] sm:$0x1]
      %v8958 = vperm.slane %v8956, 0
      %v8960 = vmul.f32 %v8861, %v8958
      %v8961 = vmul.f32 %v8864, %v8958
      %v8962 = vmul.f32 %v8867, %v8958
      %v8963 = vmul.f32 %v8870, %v8958
      %v8964 = vmul.f32 %v8873, %v8958
      %v8965 = vmul.f32 %v8876, %v8958
      %v8966 = vmul.f32 %v8879, %v8958
      %v8967 = vmul.f32 %v8882, %v8958
      %v8968 = vmul.f32 %v8885, %v8958
      %v8969 = vmul.f32 %v8888, %v8958
      %v8970 = vmul.f32 %v8891, %v8958
      %v8971 = vmul.f32 %v8894, %v8958
      %v8972 = vmul.f32 %v8897, %v8958
      %v8973 = vmul.f32 %v8900, %v8958
      %v8974 = vmul.f32 %v8903, %v8958
      %v8975 = vmul.f32 %v8906, %v8958
      %v8976 = vmul.f32 %v8909, %v8958
      %v8977 = vmul.f32 %v8912, %v8958
      %v8978 = vmul.f32 %v8915, %v8958
      %v8979 = vmul.f32 %v8918, %v8958
      %v8980 = vmul.f32 %v8921, %v8958
      %v8981 = vmul.f32 %v8924, %v8958
      %v8982 = vmul.f32 %v8927, %v8958
      %v8983 = vmul.f32 %v8930, %v8958
      %v8984 = vmul.f32 %v8933, %v8958
      %v8985 = vmul.f32 %v8936, %v8958
      %v8986 = vmul.f32 %v8939, %v8958
      %v8987 = vmul.f32 %v8942, %v8958
      %v8988 = vmul.f32 %v8945, %v8958
      %v8989 = vmul.f32 %v8948, %v8958
      %v8990 = vmul.f32 %v8951, %v8958
      %v8991 = vmul.f32 %v8954, %v8958
      %v8992 = vld [vmem:[%s7] sm:$0x1]
      %v8994 = vperm.slane %v8992, 0
      %v8996 = vadd.f32 %v8960, %v8994
      %v8997 = vadd.f32 %v8961, %v8994
      %v8998 = vadd.f32 %v8962, %v8994
      %v8999 = vadd.f32 %v8963, %v8994
      %v9000 = vadd.f32 %v8964, %v8994
      %v9001 = vadd.f32 %v8965, %v8994
      %v9002 = vadd.f32 %v8966, %v8994
      %v9003 = vadd.f32 %v8967, %v8994
      %v9004 = vadd.f32 %v8968, %v8994
      %v9005 = vadd.f32 %v8969, %v8994
      %v9006 = vadd.f32 %v8970, %v8994
      %v9007 = vadd.f32 %v8971, %v8994
      %v9008 = vadd.f32 %v8972, %v8994
      %v9009 = vadd.f32 %v8973, %v8994
      %v9010 = vadd.f32 %v8974, %v8994
      %v9011 = vadd.f32 %v8975, %v8994
      %v9012 = vadd.f32 %v8976, %v8994
      %v9013 = vadd.f32 %v8977, %v8994
      %v9014 = vadd.f32 %v8978, %v8994
      %v9015 = vadd.f32 %v8979, %v8994
      %v9016 = vadd.f32 %v8980, %v8994
      %v9017 = vadd.f32 %v8981, %v8994
      %v9018 = vadd.f32 %v8982, %v8994
      %v9019 = vadd.f32 %v8983, %v8994
      %v9020 = vadd.f32 %v8984, %v8994
      %v9021 = vadd.f32 %v8985, %v8994
      %v9022 = vadd.f32 %v8986, %v8994
      %v9023 = vadd.f32 %v8987, %v8994
      %v9024 = vadd.f32 %v8988, %v8994
      %v9025 = vadd.f32 %v8989, %v8994
      %v9026 = vadd.f32 %v8990, %v8994
      %v9027 = vadd.f32 %v8991, %v8994
      %v9028 = vmax.f32 %v8996, 0.0
      %v9029 = vmax.f32 %v8997, 0.0
      %v9030 = vmax.f32 %v8998, 0.0
      %v9031 = vmax.f32 %v8999, 0.0
      %v9032 = vmax.f32 %v9000, 0.0
      %v9033 = vmax.f32 %v9001, 0.0
      %v9034 = vmax.f32 %v9002, 0.0
      %v9035 = vmax.f32 %v9003, 0.0
      %v9036 = vmax.f32 %v9004, 0.0
      %v9037 = vmax.f32 %v9005, 0.0
      %v9038 = vmax.f32 %v9006, 0.0
      %v9039 = vmax.f32 %v9007, 0.0
      %v9040 = vmax.f32 %v9008, 0.0
      %v9041 = vmax.f32 %v9009, 0.0
      %v9042 = vmax.f32 %v9010, 0.0
      %v9043 = vmax.f32 %v9011, 0.0
      %v9044 = vmax.f32 %v9012, 0.0
      %v9045 = vmax.f32 %v9013, 0.0
      %v9046 = vmax.f32 %v9014, 0.0
      %v9047 = vmax.f32 %v9015, 0.0
      %v9048 = vmax.f32 %v9016, 0.0
      %v9049 = vmax.f32 %v9017, 0.0
      %v9050 = vmax.f32 %v9018, 0.0
      %v9051 = vmax.f32 %v9019, 0.0
      %v9052 = vmax.f32 %v9020, 0.0
      %v9053 = vmax.f32 %v9021, 0.0
      %v9054 = vmax.f32 %v9022, 0.0
      %v9055 = vmax.f32 %v9023, 0.0
      %v9056 = vmax.f32 %v9024, 0.0
      %v9057 = vmax.f32 %v9025, 0.0
      %v9058 = vmax.f32 %v9026, 0.0
      %v9059 = vmax.f32 %v9027, 0.0
      %s9060 = scalar_lea.vmem [#allocation3], 24
      %9061 = vst.msk [vmem:[%s9060 + $0x1] sm:$0xff] %vm514, %v9028
      %9062 = vst.msk [vmem:[%s9060 + $0x9] sm:$0xff] %vm514, %v9029
      %9063 = vst.msk [vmem:[%s9060 + $0x19] sm:$0xff] %vm514, %v9030
      %9064 = vst.msk [vmem:[%s9060 + $0x21] sm:$0xff] %vm514, %v9031
      %9065 = vst.msk [vmem:[%s9060 + $0x31] sm:$0xff] %vm514, %v9032
      %9066 = vst.msk [vmem:[%s9060 + $0x39] sm:$0xff] %vm514, %v9033
      %9067 = vst.msk [vmem:[%s9060 + $0x49] sm:$0xff] %vm514, %v9034
      %9068 = vst.msk [vmem:[%s9060 + $0x51] sm:$0xff] %vm514, %v9035
      %9069 = vst.msk [vmem:[%s9060 + $0x61] sm:$0xff] %vm514, %v9036
      %9070 = vst.msk [vmem:[%s9060 + $0x69] sm:$0xff] %vm514, %v9037
      %9071 = vst.msk [vmem:[%s9060 + $0x79] sm:$0xff] %vm514, %v9038
      %9072 = vst.msk [vmem:[%s9060 + $0x81] sm:$0xff] %vm514, %v9039
      %9073 = vst.msk [vmem:[%s9060 + $0x91] sm:$0xff] %vm514, %v9040
      %9074 = vst.msk [vmem:[%s9060 + $0x99] sm:$0xff] %vm514, %v9041
      %9075 = vst.msk [vmem:[%s9060 + $0xa9] sm:$0xff] %vm514, %v9042
      %9076 = vst.msk [vmem:[%s9060 + $0xb1] sm:$0xff] %vm514, %v9043
      %9077 = vst.msk [vmem:[%s9060 + $0xc1] sm:$0xff] %vm514, %v9044
      %9078 = vst.msk [vmem:[%s9060 + $0xc9] sm:$0xff] %vm514, %v9045
      %9079 = vst.msk [vmem:[%s9060 + $0xd9] sm:$0xff] %vm514, %v9046
      %9080 = vst.msk [vmem:[%s9060 + $0xe1] sm:$0xff] %vm514, %v9047
      %9081 = vst.msk [vmem:[%s9060 + $0xf1] sm:$0xff] %vm514, %v9048
      %9082 = vst.msk [vmem:[%s9060 + $0xf9] sm:$0xff] %vm514, %v9049
      %9083 = vst.msk [vmem:[%s9060 + $0x109] sm:$0xff] %vm514, %v9050
      %9084 = vst.msk [vmem:[%s9060 + $0x111] sm:$0xff] %vm514, %v9051
      %9085 = vst.msk [vmem:[%s9060 + $0x121] sm:$0xff] %vm514, %v9052
      %9086 = vst.msk [vmem:[%s9060 + $0x129] sm:$0xff] %vm514, %v9053
      %9087 = vst.msk [vmem:[%s9060 + $0x139] sm:$0xff] %vm514, %v9054
      %9088 = vst.msk [vmem:[%s9060 + $0x141] sm:$0xff] %vm514, %v9055
      %9089 = vst.msk [vmem:[%s9060 + $0x151] sm:$0xff] %vm514, %v9056
      %9090 = vst.msk [vmem:[%s9060 + $0x159] sm:$0xff] %vm514, %v9057
      %9091 = vst.msk [vmem:[%s9060 + $0x169] sm:$0xff] %vm514, %v9058
      %9092 = vst.msk [vmem:[%s9060 + $0x171] sm:$0xff] %vm514, %v9059
      %v9093 = vld [vmem:[#allocation3] sm:$0xff]
      %v9094 = vld [vmem:[#allocation3 + $0x8] sm:$0xff]
      %v9095 = vld [vmem:[#allocation3 + $0x18] sm:$0xff]
      %v9096 = vld [vmem:[#allocation3 + $0x20] sm:$0xff]
      %v9097 = vld [vmem:[#allocation3 + $0x30] sm:$0xff]
      %v9098 = vld [vmem:[#allocation3 + $0x38] sm:$0xff]
      %v9099 = vld [vmem:[#allocation3 + $0x48] sm:$0xff]
      %v9100 = vld [vmem:[#allocation3 + $0x50] sm:$0xff]
      %v9101 = vld [vmem:[#allocation3 + $0x60] sm:$0xff]
      %v9102 = vld [vmem:[#allocation3 + $0x68] sm:$0xff]
      %v9103 = vld [vmem:[#allocation3 + $0x78] sm:$0xff]
      %v9104 = vld [vmem:[#allocation3 + $0x80] sm:$0xff]
      %v9105 = vld [vmem:[#allocation3 + $0x90] sm:$0xff]
      %v9106 = vld [vmem:[#allocation3 + $0x98] sm:$0xff]
      %v9107 = vld [vmem:[#allocation3 + $0xa8] sm:$0xff]
      %v9108 = vld [vmem:[#allocation3 + $0xb0] sm:$0xff]
      %v9109 = vld [vmem:[#allocation3 + $0xc0] sm:$0xff]
      %v9110 = vld [vmem:[#allocation3 + $0xc8] sm:$0xff]
      %v9111 = vld [vmem:[#allocation3 + $0xd8] sm:$0xff]
      %v9112 = vld [vmem:[#allocation3 + $0xe0] sm:$0xff]
      %v9113 = vld [vmem:[#allocation3 + $0xf0] sm:$0xff]
      %v9114 = vld [vmem:[#allocation3 + $0xf8] sm:$0xff]
      %v9115 = vld [vmem:[#allocation3 + $0x108] sm:$0xff]
      %v9116 = vld [vmem:[#allocation3 + $0x110] sm:$0xff]
      %v9117 = vld [vmem:[#allocation3 + $0x120] sm:$0xff]
      %v9118 = vld [vmem:[#allocation3 + $0x128] sm:$0xff]
      %v9119 = vld [vmem:[#allocation3 + $0x138] sm:$0xff]
      %v9120 = vld [vmem:[#allocation3 + $0x140] sm:$0xff]
      %v9121 = vld [vmem:[#allocation3 + $0x150] sm:$0xff]
      %v9122 = vld [vmem:[#allocation3 + $0x158] sm:$0xff]
      %v9123 = vld [vmem:[#allocation3 + $0x168] sm:$0xff]
      %v9124 = vld [vmem:[#allocation3 + $0x170] sm:$0xff]
      %v9125 = vld [vmem:[#allocation3 + $0x1] sm:$0xff]
      %v9126 = vld [vmem:[#allocation3 + $0x9] sm:$0xff]
      %v9127 = vld [vmem:[#allocation3 + $0x19] sm:$0xff]
      %v9128 = vld [vmem:[#allocation3 + $0x21] sm:$0xff]
      %v9129 = vld [vmem:[#allocation3 + $0x31] sm:$0xff]
      %v9130 = vld [vmem:[#allocation3 + $0x39] sm:$0xff]
      %v9131 = vld [vmem:[#allocation3 + $0x49] sm:$0xff]
      %v9132 = vld [vmem:[#allocation3 + $0x51] sm:$0xff]
      %v9133 = vld [vmem:[#allocation3 + $0x61] sm:$0xff]
      %v9134 = vld [vmem:[#allocation3 + $0x69] sm:$0xff]
      %v9135 = vld [vmem:[#allocation3 + $0x79] sm:$0xff]
      %v9136 = vld [vmem:[#allocation3 + $0x81] sm:$0xff]
      %v9137 = vld [vmem:[#allocation3 + $0x91] sm:$0xff]
      %v9138 = vld [vmem:[#allocation3 + $0x99] sm:$0xff]
      %v9139 = vld [vmem:[#allocation3 + $0xa9] sm:$0xff]
      %v9140 = vld [vmem:[#allocation3 + $0xb1] sm:$0xff]
      %v9141 = vld [vmem:[#allocation3 + $0xc1] sm:$0xff]
      %v9142 = vld [vmem:[#allocation3 + $0xc9] sm:$0xff]
      %v9143 = vld [vmem:[#allocation3 + $0xd9] sm:$0xff]
      %v9144 = vld [vmem:[#allocation3 + $0xe1] sm:$0xff]
      %v9145 = vld [vmem:[#allocation3 + $0xf1] sm:$0xff]
      %v9146 = vld [vmem:[#allocation3 + $0xf9] sm:$0xff]
      %v9147 = vld [vmem:[#allocation3 + $0x109] sm:$0xff]
      %v9148 = vld [vmem:[#allocation3 + $0x111] sm:$0xff]
      %v9149 = vld [vmem:[#allocation3 + $0x121] sm:$0xff]
      %v9150 = vld [vmem:[#allocation3 + $0x129] sm:$0xff]
      %v9151 = vld [vmem:[#allocation3 + $0x139] sm:$0xff]
      %v9152 = vld [vmem:[#allocation3 + $0x141] sm:$0xff]
      %v9153 = vld [vmem:[#allocation3 + $0x151] sm:$0xff]
      %v9154 = vld [vmem:[#allocation3 + $0x159] sm:$0xff]
      %v9155 = vld [vmem:[#allocation3 + $0x169] sm:$0xff]
      %v9156 = vld [vmem:[#allocation3 + $0x171] sm:$0xff]
      %v9157 = vld [vmem:[#allocation3 + $0x2] sm:$0xff]
      %v9158 = vld [vmem:[#allocation3 + $0xa] sm:$0xff]
      %v9159 = vld [vmem:[#allocation3 + $0x1a] sm:$0xff]
      %v9160 = vld [vmem:[#allocation3 + $0x22] sm:$0xff]
      %v9161 = vld [vmem:[#allocation3 + $0x32] sm:$0xff]
      %v9162 = vld [vmem:[#allocation3 + $0x3a] sm:$0xff]
      %v9163 = vld [vmem:[#allocation3 + $0x4a] sm:$0xff]
      %v9164 = vld [vmem:[#allocation3 + $0x52] sm:$0xff]
      %v9165 = vld [vmem:[#allocation3 + $0x62] sm:$0xff]
      %v9166 = vld [vmem:[#allocation3 + $0x6a] sm:$0xff]
      %v9167 = vld [vmem:[#allocation3 + $0x7a] sm:$0xff]
      %v9168 = vld [vmem:[#allocation3 + $0x82] sm:$0xff]
      %v9169 = vld [vmem:[#allocation3 + $0x92] sm:$0xff]
      %v9170 = vld [vmem:[#allocation3 + $0x9a] sm:$0xff]
      %v9171 = vld [vmem:[#allocation3 + $0xaa] sm:$0xff]
      %v9172 = vld [vmem:[#allocation3 + $0xb2] sm:$0xff]
      %v9173 = vld [vmem:[#allocation3 + $0xc2] sm:$0xff]
      %v9174 = vld [vmem:[#allocation3 + $0xca] sm:$0xff]
      %v9175 = vld [vmem:[#allocation3 + $0xda] sm:$0xff]
      %v9176 = vld [vmem:[#allocation3 + $0xe2] sm:$0xff]
      %v9177 = vld [vmem:[#allocation3 + $0xf2] sm:$0xff]
      %v9178 = vld [vmem:[#allocation3 + $0xfa] sm:$0xff]
      %v9179 = vld [vmem:[#allocation3 + $0x10a] sm:$0xff]
      %v9180 = vld [vmem:[#allocation3 + $0x112] sm:$0xff]
      %v9181 = vld [vmem:[#allocation3 + $0x122] sm:$0xff]
      %v9182 = vld [vmem:[#allocation3 + $0x12a] sm:$0xff]
      %v9183 = vld [vmem:[#allocation3 + $0x13a] sm:$0xff]
      %v9184 = vld [vmem:[#allocation3 + $0x142] sm:$0xff]
      %v9185 = vld [vmem:[#allocation3 + $0x152] sm:$0xff]
      %v9186 = vld [vmem:[#allocation3 + $0x15a] sm:$0xff]
      %v9187 = vld [vmem:[#allocation3 + $0x16a] sm:$0xff]
      %v9188 = vld [vmem:[#allocation3 + $0x172] sm:$0xff]
      %v9189 = vld [vmem:[%s9060] sm:$0xff]
      %v9190 = vld [vmem:[%s9060 + $0x8] sm:$0xff]
      %v9191 = vld [vmem:[%s9060 + $0x18] sm:$0xff]
      %v9192 = vld [vmem:[%s9060 + $0x20] sm:$0xff]
      %v9193 = vld [vmem:[%s9060 + $0x30] sm:$0xff]
      %v9194 = vld [vmem:[%s9060 + $0x38] sm:$0xff]
      %v9195 = vld [vmem:[%s9060 + $0x48] sm:$0xff]
      %v9196 = vld [vmem:[%s9060 + $0x50] sm:$0xff]
      %v9197 = vld [vmem:[%s9060 + $0x60] sm:$0xff]
      %v9198 = vld [vmem:[%s9060 + $0x68] sm:$0xff]
      %v9199 = vld [vmem:[%s9060 + $0x78] sm:$0xff]
      %v9200 = vld [vmem:[%s9060 + $0x80] sm:$0xff]
      %v9201 = vld [vmem:[%s9060 + $0x90] sm:$0xff]
      %v9202 = vld [vmem:[%s9060 + $0x98] sm:$0xff]
      %v9203 = vld [vmem:[%s9060 + $0xa8] sm:$0xff]
      %v9204 = vld [vmem:[%s9060 + $0xb0] sm:$0xff]
      %v9205 = vld [vmem:[%s9060 + $0xc0] sm:$0xff]
      %v9206 = vld [vmem:[%s9060 + $0xc8] sm:$0xff]
      %v9207 = vld [vmem:[%s9060 + $0xd8] sm:$0xff]
      %v9208 = vld [vmem:[%s9060 + $0xe0] sm:$0xff]
      %v9209 = vld [vmem:[%s9060 + $0xf0] sm:$0xff]
      %v9210 = vld [vmem:[%s9060 + $0xf8] sm:$0xff]
      %v9211 = vld [vmem:[%s9060 + $0x108] sm:$0xff]
      %v9212 = vld [vmem:[%s9060 + $0x110] sm:$0xff]
      %v9213 = vld [vmem:[%s9060 + $0x120] sm:$0xff]
      %v9214 = vld [vmem:[%s9060 + $0x128] sm:$0xff]
      %v9215 = vld [vmem:[%s9060 + $0x138] sm:$0xff]
      %v9216 = vld [vmem:[%s9060 + $0x140] sm:$0xff]
      %v9217 = vld [vmem:[%s9060 + $0x150] sm:$0xff]
      %v9218 = vld [vmem:[%s9060 + $0x158] sm:$0xff]
      %v9219 = vld [vmem:[%s9060 + $0x168] sm:$0xff]
      %v9220 = vld [vmem:[%s9060 + $0x170] sm:$0xff]
      %v9221 = vld [vmem:[%s9060 + $0x1] sm:$0xff]
      %v9222 = vld [vmem:[%s9060 + $0x9] sm:$0xff]
      %v9223 = vld [vmem:[%s9060 + $0x19] sm:$0xff]
      %v9224 = vld [vmem:[%s9060 + $0x21] sm:$0xff]
      %v9225 = vld [vmem:[%s9060 + $0x31] sm:$0xff]
      %v9226 = vld [vmem:[%s9060 + $0x39] sm:$0xff]
      %v9227 = vld [vmem:[%s9060 + $0x49] sm:$0xff]
      %v9228 = vld [vmem:[%s9060 + $0x51] sm:$0xff]
      %v9229 = vld [vmem:[%s9060 + $0x61] sm:$0xff]
      %v9230 = vld [vmem:[%s9060 + $0x69] sm:$0xff]
      %v9231 = vld [vmem:[%s9060 + $0x79] sm:$0xff]
      %v9232 = vld [vmem:[%s9060 + $0x81] sm:$0xff]
      %v9233 = vld [vmem:[%s9060 + $0x91] sm:$0xff]
      %v9234 = vld [vmem:[%s9060 + $0x99] sm:$0xff]
      %v9235 = vld [vmem:[%s9060 + $0xa9] sm:$0xff]
      %v9236 = vld [vmem:[%s9060 + $0xb1] sm:$0xff]
      %v9237 = vld [vmem:[%s9060 + $0xc1] sm:$0xff]
      %v9238 = vld [vmem:[%s9060 + $0xc9] sm:$0xff]
      %v9239 = vld [vmem:[%s9060 + $0xd9] sm:$0xff]
      %v9240 = vld [vmem:[%s9060 + $0xe1] sm:$0xff]
      %v9241 = vld [vmem:[%s9060 + $0xf1] sm:$0xff]
      %v9242 = vld [vmem:[%s9060 + $0xf9] sm:$0xff]
      %v9243 = vld [vmem:[%s9060 + $0x109] sm:$0xff]
      %v9244 = vld [vmem:[%s9060 + $0x111] sm:$0xff]
      %v9245 = vld [vmem:[%s9060 + $0x121] sm:$0xff]
      %v9246 = vld [vmem:[%s9060 + $0x129] sm:$0xff]
      %v9247 = vld [vmem:[%s9060 + $0x139] sm:$0xff]
      %v9248 = vld [vmem:[%s9060 + $0x141] sm:$0xff]
      %v9249 = vld [vmem:[%s9060 + $0x151] sm:$0xff]
      %v9250 = vld [vmem:[%s9060 + $0x159] sm:$0xff]
      %v9251 = vld [vmem:[%s9060 + $0x169] sm:$0xff]
      %v9252 = vld [vmem:[%s9060 + $0x171] sm:$0xff]
      %v9253 = vld [vmem:[%s9060 + $0x2] sm:$0xff]
      %v9254 = vld [vmem:[%s9060 + $0xa] sm:$0xff]
      %v9255 = vld [vmem:[%s9060 + $0x1a] sm:$0xff]
      %v9256 = vld [vmem:[%s9060 + $0x22] sm:$0xff]
      %v9257 = vld [vmem:[%s9060 + $0x32] sm:$0xff]
      %v9258 = vld [vmem:[%s9060 + $0x3a] sm:$0xff]
      %v9259 = vld [vmem:[%s9060 + $0x4a] sm:$0xff]
      %v9260 = vld [vmem:[%s9060 + $0x52] sm:$0xff]
      %v9261 = vld [vmem:[%s9060 + $0x62] sm:$0xff]
      %v9262 = vld [vmem:[%s9060 + $0x6a] sm:$0xff]
      %v9263 = vld [vmem:[%s9060 + $0x7a] sm:$0xff]
      %v9264 = vld [vmem:[%s9060 + $0x82] sm:$0xff]
      %v9265 = vld [vmem:[%s9060 + $0x92] sm:$0xff]
      %v9266 = vld [vmem:[%s9060 + $0x9a] sm:$0xff]
      %v9267 = vld [vmem:[%s9060 + $0xaa] sm:$0xff]
      %v9268 = vld [vmem:[%s9060 + $0xb2] sm:$0xff]
      %v9269 = vld [vmem:[%s9060 + $0xc2] sm:$0xff]
      %v9270 = vld [vmem:[%s9060 + $0xca] sm:$0xff]
      %v9271 = vld [vmem:[%s9060 + $0xda] sm:$0xff]
      %v9272 = vld [vmem:[%s9060 + $0xe2] sm:$0xff]
      %v9273 = vld [vmem:[%s9060 + $0xf2] sm:$0xff]
      %v9274 = vld [vmem:[%s9060 + $0xfa] sm:$0xff]
      %v9275 = vld [vmem:[%s9060 + $0x10a] sm:$0xff]
      %v9276 = vld [vmem:[%s9060 + $0x112] sm:$0xff]
      %v9277 = vld [vmem:[%s9060 + $0x122] sm:$0xff]
      %v9278 = vld [vmem:[%s9060 + $0x12a] sm:$0xff]
      %v9279 = vld [vmem:[%s9060 + $0x13a] sm:$0xff]
      %v9280 = vld [vmem:[%s9060 + $0x142] sm:$0xff]
      %v9281 = vld [vmem:[%s9060 + $0x152] sm:$0xff]
      %v9282 = vld [vmem:[%s9060 + $0x15a] sm:$0xff]
      %v9283 = vld [vmem:[%s9060 + $0x16a] sm:$0xff]
      %v9284 = vld [vmem:[%s9060 + $0x172] sm:$0xff]
      %s9285 = scalar_lea.vmem [#allocation3], 48
      %v9286 = vld [vmem:[%s9285] sm:$0xff]
      %v9287 = vld [vmem:[%s9285 + $0x8] sm:$0xff]
      %v9288 = vld [vmem:[%s9285 + $0x18] sm:$0xff]
      %v9289 = vld [vmem:[%s9285 + $0x20] sm:$0xff]
      %v9290 = vld [vmem:[%s9285 + $0x30] sm:$0xff]
      %v9291 = vld [vmem:[%s9285 + $0x38] sm:$0xff]
      %v9292 = vld [vmem:[%s9285 + $0x48] sm:$0xff]
      %v9293 = vld [vmem:[%s9285 + $0x50] sm:$0xff]
      %v9294 = vld [vmem:[%s9285 + $0x60] sm:$0xff]
      %v9295 = vld [vmem:[%s9285 + $0x68] sm:$0xff]
      %v9296 = vld [vmem:[%s9285 + $0x78] sm:$0xff]
      %v9297 = vld [vmem:[%s9285 + $0x80] sm:$0xff]
      %v9298 = vld [vmem:[%s9285 + $0x90] sm:$0xff]
      %v9299 = vld [vmem:[%s9285 + $0x98] sm:$0xff]
      %v9300 = vld [vmem:[%s9285 + $0xa8] sm:$0xff]
      %v9301 = vld [vmem:[%s9285 + $0xb0] sm:$0xff]
      %v9302 = vld [vmem:[%s9285 + $0xc0] sm:$0xff]
      %v9303 = vld [vmem:[%s9285 + $0xc8] sm:$0xff]
      %v9304 = vld [vmem:[%s9285 + $0xd8] sm:$0xff]
      %v9305 = vld [vmem:[%s9285 + $0xe0] sm:$0xff]
      %v9306 = vld [vmem:[%s9285 + $0xf0] sm:$0xff]
      %v9307 = vld [vmem:[%s9285 + $0xf8] sm:$0xff]
      %v9308 = vld [vmem:[%s9285 + $0x108] sm:$0xff]
      %v9309 = vld [vmem:[%s9285 + $0x110] sm:$0xff]
      %v9310 = vld [vmem:[%s9285 + $0x120] sm:$0xff]
      %v9311 = vld [vmem:[%s9285 + $0x128] sm:$0xff]
      %v9312 = vld [vmem:[%s9285 + $0x138] sm:$0xff]
      %v9313 = vld [vmem:[%s9285 + $0x140] sm:$0xff]
      %v9314 = vld [vmem:[%s9285 + $0x150] sm:$0xff]
      %v9315 = vld [vmem:[%s9285 + $0x158] sm:$0xff]
      %v9316 = vld [vmem:[%s9285 + $0x168] sm:$0xff]
      %v9317 = vld [vmem:[%s9285 + $0x170] sm:$0xff]
      %v9318 = vld [vmem:[%s9285 + $0x1] sm:$0xff]
      %v9319 = vld [vmem:[%s9285 + $0x9] sm:$0xff]
      %v9320 = vld [vmem:[%s9285 + $0x19] sm:$0xff]
      %v9321 = vld [vmem:[%s9285 + $0x21] sm:$0xff]
      %v9322 = vld [vmem:[%s9285 + $0x31] sm:$0xff]
      %v9323 = vld [vmem:[%s9285 + $0x39] sm:$0xff]
      %v9324 = vld [vmem:[%s9285 + $0x49] sm:$0xff]
      %v9325 = vld [vmem:[%s9285 + $0x51] sm:$0xff]
      %v9326 = vld [vmem:[%s9285 + $0x61] sm:$0xff]
      %v9327 = vld [vmem:[%s9285 + $0x69] sm:$0xff]
      %v9328 = vld [vmem:[%s9285 + $0x79] sm:$0xff]
      %v9329 = vld [vmem:[%s9285 + $0x81] sm:$0xff]
      %v9330 = vld [vmem:[%s9285 + $0x91] sm:$0xff]
      %v9331 = vld [vmem:[%s9285 + $0x99] sm:$0xff]
      %v9332 = vld [vmem:[%s9285 + $0xa9] sm:$0xff]
      %v9333 = vld [vmem:[%s9285 + $0xb1] sm:$0xff]
      %v9334 = vld [vmem:[%s9285 + $0xc1] sm:$0xff]
      %v9335 = vld [vmem:[%s9285 + $0xc9] sm:$0xff]
      %v9336 = vld [vmem:[%s9285 + $0xd9] sm:$0xff]
      %v9337 = vld [vmem:[%s9285 + $0xe1] sm:$0xff]
      %v9338 = vld [vmem:[%s9285 + $0xf1] sm:$0xff]
      %v9339 = vld [vmem:[%s9285 + $0xf9] sm:$0xff]
      %v9340 = vld [vmem:[%s9285 + $0x109] sm:$0xff]
      %v9341 = vld [vmem:[%s9285 + $0x111] sm:$0xff]
      %v9342 = vld [vmem:[%s9285 + $0x121] sm:$0xff]
      %v9343 = vld [vmem:[%s9285 + $0x129] sm:$0xff]
      %v9344 = vld [vmem:[%s9285 + $0x139] sm:$0xff]
      %v9345 = vld [vmem:[%s9285 + $0x141] sm:$0xff]
      %v9346 = vld [vmem:[%s9285 + $0x151] sm:$0xff]
      %v9347 = vld [vmem:[%s9285 + $0x159] sm:$0xff]
      %v9348 = vld [vmem:[%s9285 + $0x169] sm:$0xff]
      %v9349 = vld [vmem:[%s9285 + $0x171] sm:$0xff]
      %v9350 = vld [vmem:[%s9285 + $0x2] sm:$0xff]
      %v9351 = vld [vmem:[%s9285 + $0xa] sm:$0xff]
      %v9352 = vld [vmem:[%s9285 + $0x1a] sm:$0xff]
      %v9353 = vld [vmem:[%s9285 + $0x22] sm:$0xff]
      %v9354 = vld [vmem:[%s9285 + $0x32] sm:$0xff]
      %v9355 = vld [vmem:[%s9285 + $0x3a] sm:$0xff]
      %v9356 = vld [vmem:[%s9285 + $0x4a] sm:$0xff]
      %v9357 = vld [vmem:[%s9285 + $0x52] sm:$0xff]
      %v9358 = vld [vmem:[%s9285 + $0x62] sm:$0xff]
      %v9359 = vld [vmem:[%s9285 + $0x6a] sm:$0xff]
      %v9360 = vld [vmem:[%s9285 + $0x7a] sm:$0xff]
      %v9361 = vld [vmem:[%s9285 + $0x82] sm:$0xff]
      %v9362 = vld [vmem:[%s9285 + $0x92] sm:$0xff]
      %v9363 = vld [vmem:[%s9285 + $0x9a] sm:$0xff]
      %v9364 = vld [vmem:[%s9285 + $0xaa] sm:$0xff]
      %v9365 = vld [vmem:[%s9285 + $0xb2] sm:$0xff]
      %v9366 = vld [vmem:[%s9285 + $0xc2] sm:$0xff]
      %v9367 = vld [vmem:[%s9285 + $0xca] sm:$0xff]
      %v9368 = vld [vmem:[%s9285 + $0xda] sm:$0xff]
      %v9369 = vld [vmem:[%s9285 + $0xe2] sm:$0xff]
      %v9370 = vld [vmem:[%s9285 + $0xf2] sm:$0xff]
      %v9371 = vld [vmem:[%s9285 + $0xfa] sm:$0xff]
      %v9372 = vld [vmem:[%s9285 + $0x10a] sm:$0xff]
      %v9373 = vld [vmem:[%s9285 + $0x112] sm:$0xff]
      %v9374 = vld [vmem:[%s9285 + $0x122] sm:$0xff]
      %v9375 = vld [vmem:[%s9285 + $0x12a] sm:$0xff]
      %v9376 = vld [vmem:[%s9285 + $0x13a] sm:$0xff]
      %v9377 = vld [vmem:[%s9285 + $0x142] sm:$0xff]
      %v9378 = vld [vmem:[%s9285 + $0x152] sm:$0xff]
      %v9379 = vld [vmem:[%s9285 + $0x15a] sm:$0xff]
      %v9380 = vld [vmem:[%s9285 + $0x16a] sm:$0xff]
      %v9381 = vld [vmem:[%s9285 + $0x172] sm:$0xff]
      %9414 = vrot.lane.b32.xlu0 %v9125, 64
      %v9415 = vpop.permute.xlu0 %9414
      %9416 = vrot.lane.b32.xlu0 %v9126, 64
      %v9417 = vpop.permute.xlu0 %9416
      %9418 = vrot.lane.b32.xlu0 %v9127, 64
      %v9419 = vpop.permute.xlu0 %9418
      %9420 = vrot.lane.b32.xlu0 %v9128, 64
      %v9421 = vpop.permute.xlu0 %9420
      %9422 = vrot.lane.b32.xlu0 %v9129, 64
      %v9423 = vpop.permute.xlu0 %9422
      %9424 = vrot.lane.b32.xlu0 %v9130, 64
      %v9425 = vpop.permute.xlu0 %9424
      %9426 = vrot.lane.b32.xlu0 %v9131, 64
      %v9427 = vpop.permute.xlu0 %9426
      %9428 = vrot.lane.b32.xlu0 %v9132, 64
      %v9429 = vpop.permute.xlu0 %9428
      %9430 = vrot.lane.b32.xlu0 %v9133, 64
      %v9431 = vpop.permute.xlu0 %9430
      %9432 = vrot.lane.b32.xlu0 %v9134, 64
      %v9433 = vpop.permute.xlu0 %9432
      %9434 = vrot.lane.b32.xlu0 %v9135, 64
      %v9435 = vpop.permute.xlu0 %9434
      %9436 = vrot.lane.b32.xlu0 %v9136, 64
      %v9437 = vpop.permute.xlu0 %9436
      %9438 = vrot.lane.b32.xlu0 %v9137, 64
      %v9439 = vpop.permute.xlu0 %9438
      %9440 = vrot.lane.b32.xlu0 %v9138, 64
      %v9441 = vpop.permute.xlu0 %9440
      %9442 = vrot.lane.b32.xlu0 %v9139, 64
      %v9443 = vpop.permute.xlu0 %9442
      %9444 = vrot.lane.b32.xlu0 %v9140, 64
      %v9445 = vpop.permute.xlu0 %9444
      %9446 = vrot.lane.b32.xlu0 %v9141, 64
      %v9447 = vpop.permute.xlu0 %9446
      %9448 = vrot.lane.b32.xlu0 %v9142, 64
      %v9449 = vpop.permute.xlu0 %9448
      %9450 = vrot.lane.b32.xlu0 %v9143, 64
      %v9451 = vpop.permute.xlu0 %9450
      %9452 = vrot.lane.b32.xlu0 %v9144, 64
      %v9453 = vpop.permute.xlu0 %9452
      %9454 = vrot.lane.b32.xlu0 %v9145, 64
      %v9455 = vpop.permute.xlu0 %9454
      %9456 = vrot.lane.b32.xlu0 %v9146, 64
      %v9457 = vpop.permute.xlu0 %9456
      %9458 = vrot.lane.b32.xlu0 %v9147, 64
      %v9459 = vpop.permute.xlu0 %9458
      %9460 = vrot.lane.b32.xlu0 %v9148, 64
      %v9461 = vpop.permute.xlu0 %9460
      %9462 = vrot.lane.b32.xlu0 %v9149, 64
      %v9463 = vpop.permute.xlu0 %9462
      %9464 = vrot.lane.b32.xlu0 %v9150, 64
      %v9465 = vpop.permute.xlu0 %9464
      %9466 = vrot.lane.b32.xlu0 %v9151, 64
      %v9467 = vpop.permute.xlu0 %9466
      %9468 = vrot.lane.b32.xlu0 %v9152, 64
      %v9469 = vpop.permute.xlu0 %9468
      %9470 = vrot.lane.b32.xlu0 %v9153, 64
      %v9471 = vpop.permute.xlu0 %9470
      %9472 = vrot.lane.b32.xlu0 %v9154, 64
      %v9473 = vpop.permute.xlu0 %9472
      %9474 = vrot.lane.b32.xlu0 %v9155, 64
      %v9475 = vpop.permute.xlu0 %9474
      %9476 = vrot.lane.b32.xlu0 %v9156, 64
      %v9477 = vpop.permute.xlu0 %9476
      %9542 = vrot.lane.b32.xlu0 %v9189, 64
      %v9543 = vpop.permute.xlu0 %9542
      %9544 = vrot.lane.b32.xlu0 %v9190, 64
      %v9545 = vpop.permute.xlu0 %9544
      %9546 = vrot.lane.b32.xlu0 %v9191, 64
      %v9547 = vpop.permute.xlu0 %9546
      %9548 = vrot.lane.b32.xlu0 %v9192, 64
      %v9549 = vpop.permute.xlu0 %9548
      %9550 = vrot.lane.b32.xlu0 %v9193, 64
      %v9551 = vpop.permute.xlu0 %9550
      %9552 = vrot.lane.b32.xlu0 %v9194, 64
      %v9553 = vpop.permute.xlu0 %9552
      %9554 = vrot.lane.b32.xlu0 %v9195, 64
      %v9555 = vpop.permute.xlu0 %9554
      %9556 = vrot.lane.b32.xlu0 %v9196, 64
      %v9557 = vpop.permute.xlu0 %9556
      %9558 = vrot.lane.b32.xlu0 %v9197, 64
      %v9559 = vpop.permute.xlu0 %9558
      %9560 = vrot.lane.b32.xlu0 %v9198, 64
      %v9561 = vpop.permute.xlu0 %9560
      %9562 = vrot.lane.b32.xlu0 %v9199, 64
      %v9563 = vpop.permute.xlu0 %9562
      %9564 = vrot.lane.b32.xlu0 %v9200, 64
      %v9565 = vpop.permute.xlu0 %9564
      %9566 = vrot.lane.b32.xlu0 %v9201, 64
      %v9567 = vpop.permute.xlu0 %9566
      %9568 = vrot.lane.b32.xlu0 %v9202, 64
      %v9569 = vpop.permute.xlu0 %9568
      %9570 = vrot.lane.b32.xlu0 %v9203, 64
      %v9571 = vpop.permute.xlu0 %9570
      %9572 = vrot.lane.b32.xlu0 %v9204, 64
      %v9573 = vpop.permute.xlu0 %9572
      %9574 = vrot.lane.b32.xlu0 %v9205, 64
      %v9575 = vpop.permute.xlu0 %9574
      %9576 = vrot.lane.b32.xlu0 %v9206, 64
      %v9577 = vpop.permute.xlu0 %9576
      %9578 = vrot.lane.b32.xlu0 %v9207, 64
      %v9579 = vpop.permute.xlu0 %9578
      %9580 = vrot.lane.b32.xlu0 %v9208, 64
      %v9581 = vpop.permute.xlu0 %9580
      %9582 = vrot.lane.b32.xlu0 %v9209, 64
      %v9583 = vpop.permute.xlu0 %9582
      %9584 = vrot.lane.b32.xlu0 %v9210, 64
      %v9585 = vpop.permute.xlu0 %9584
      %9586 = vrot.lane.b32.xlu0 %v9211, 64
      %v9587 = vpop.permute.xlu0 %9586
      %9588 = vrot.lane.b32.xlu0 %v9212, 64
      %v9589 = vpop.permute.xlu0 %9588
      %9590 = vrot.lane.b32.xlu0 %v9213, 64
      %v9591 = vpop.permute.xlu0 %9590
      %9592 = vrot.lane.b32.xlu0 %v9214, 64
      %v9593 = vpop.permute.xlu0 %9592
      %9594 = vrot.lane.b32.xlu0 %v9215, 64
      %v9595 = vpop.permute.xlu0 %9594
      %9596 = vrot.lane.b32.xlu0 %v9216, 64
      %v9597 = vpop.permute.xlu0 %9596
      %9598 = vrot.lane.b32.xlu0 %v9217, 64
      %v9599 = vpop.permute.xlu0 %9598
      %9600 = vrot.lane.b32.xlu0 %v9218, 64
      %v9601 = vpop.permute.xlu0 %9600
      %9602 = vrot.lane.b32.xlu0 %v9219, 64
      %v9603 = vpop.permute.xlu0 %9602
      %9604 = vrot.lane.b32.xlu0 %v9220, 64
      %v9605 = vpop.permute.xlu0 %9604
      %9670 = vrot.lane.b32.xlu0 %v9253, 64
      %v9671 = vpop.permute.xlu0 %9670
      %9672 = vrot.lane.b32.xlu0 %v9254, 64
      %v9673 = vpop.permute.xlu0 %9672
      %9674 = vrot.lane.b32.xlu0 %v9255, 64
      %v9675 = vpop.permute.xlu0 %9674
      %9676 = vrot.lane.b32.xlu0 %v9256, 64
      %v9677 = vpop.permute.xlu0 %9676
      %9678 = vrot.lane.b32.xlu0 %v9257, 64
      %v9679 = vpop.permute.xlu0 %9678
      %9680 = vrot.lane.b32.xlu0 %v9258, 64
      %v9681 = vpop.permute.xlu0 %9680
      %9682 = vrot.lane.b32.xlu0 %v9259, 64
      %v9683 = vpop.permute.xlu0 %9682
      %9684 = vrot.lane.b32.xlu0 %v9260, 64
      %v9685 = vpop.permute.xlu0 %9684
      %9686 = vrot.lane.b32.xlu0 %v9261, 64
      %v9687 = vpop.permute.xlu0 %9686
      %9688 = vrot.lane.b32.xlu0 %v9262, 64
      %v9689 = vpop.permute.xlu0 %9688
      %9690 = vrot.lane.b32.xlu0 %v9263, 64
      %v9691 = vpop.permute.xlu0 %9690
      %9692 = vrot.lane.b32.xlu0 %v9264, 64
      %v9693 = vpop.permute.xlu0 %9692
      %9694 = vrot.lane.b32.xlu0 %v9265, 64
      %v9695 = vpop.permute.xlu0 %9694
      %9696 = vrot.lane.b32.xlu0 %v9266, 64
      %v9697 = vpop.permute.xlu0 %9696
      %9698 = vrot.lane.b32.xlu0 %v9267, 64
      %v9699 = vpop.permute.xlu0 %9698
      %9700 = vrot.lane.b32.xlu0 %v9268, 64
      %v9701 = vpop.permute.xlu0 %9700
      %9702 = vrot.lane.b32.xlu0 %v9269, 64
      %v9703 = vpop.permute.xlu0 %9702
      %9704 = vrot.lane.b32.xlu0 %v9270, 64
      %v9705 = vpop.permute.xlu0 %9704
      %9706 = vrot.lane.b32.xlu0 %v9271, 64
      %v9707 = vpop.permute.xlu0 %9706
      %9708 = vrot.lane.b32.xlu0 %v9272, 64
      %v9709 = vpop.permute.xlu0 %9708
      %9710 = vrot.lane.b32.xlu0 %v9273, 64
      %v9711 = vpop.permute.xlu0 %9710
      %9712 = vrot.lane.b32.xlu0 %v9274, 64
      %v9713 = vpop.permute.xlu0 %9712
      %9714 = vrot.lane.b32.xlu0 %v9275, 64
      %v9715 = vpop.permute.xlu0 %9714
      %9716 = vrot.lane.b32.xlu0 %v9276, 64
      %v9717 = vpop.permute.xlu0 %9716
      %9718 = vrot.lane.b32.xlu0 %v9277, 64
      %v9719 = vpop.permute.xlu0 %9718
      %9720 = vrot.lane.b32.xlu0 %v9278, 64
      %v9721 = vpop.permute.xlu0 %9720
      %9722 = vrot.lane.b32.xlu0 %v9279, 64
      %v9723 = vpop.permute.xlu0 %9722
      %9724 = vrot.lane.b32.xlu0 %v9280, 64
      %v9725 = vpop.permute.xlu0 %9724
      %9726 = vrot.lane.b32.xlu0 %v9281, 64
      %v9727 = vpop.permute.xlu0 %9726
      %9728 = vrot.lane.b32.xlu0 %v9282, 64
      %v9729 = vpop.permute.xlu0 %9728
      %9730 = vrot.lane.b32.xlu0 %v9283, 64
      %v9731 = vpop.permute.xlu0 %9730
      %9732 = vrot.lane.b32.xlu0 %v9284, 64
      %v9733 = vpop.permute.xlu0 %9732
      %9798 = vrot.lane.b32.xlu0 %v9318, 64
      %v9799 = vpop.permute.xlu0 %9798
      %9800 = vrot.lane.b32.xlu0 %v9319, 64
      %v9801 = vpop.permute.xlu0 %9800
      %9802 = vrot.lane.b32.xlu0 %v9320, 64
      %v9803 = vpop.permute.xlu0 %9802
      %9804 = vrot.lane.b32.xlu0 %v9321, 64
      %v9805 = vpop.permute.xlu0 %9804
      %9806 = vrot.lane.b32.xlu0 %v9322, 64
      %v9807 = vpop.permute.xlu0 %9806
      %9808 = vrot.lane.b32.xlu0 %v9323, 64
      %v9809 = vpop.permute.xlu0 %9808
      %9810 = vrot.lane.b32.xlu0 %v9324, 64
      %v9811 = vpop.permute.xlu0 %9810
      %9812 = vrot.lane.b32.xlu0 %v9325, 64
      %v9813 = vpop.permute.xlu0 %9812
      %9814 = vrot.lane.b32.xlu0 %v9326, 64
      %v9815 = vpop.permute.xlu0 %9814
      %9816 = vrot.lane.b32.xlu0 %v9327, 64
      %v9817 = vpop.permute.xlu0 %9816
      %9818 = vrot.lane.b32.xlu0 %v9328, 64
      %v9819 = vpop.permute.xlu0 %9818
      %9820 = vrot.lane.b32.xlu0 %v9329, 64
      %v9821 = vpop.permute.xlu0 %9820
      %9822 = vrot.lane.b32.xlu0 %v9330, 64
      %v9823 = vpop.permute.xlu0 %9822
      %9824 = vrot.lane.b32.xlu0 %v9331, 64
      %v9825 = vpop.permute.xlu0 %9824
      %9826 = vrot.lane.b32.xlu0 %v9332, 64
      %v9827 = vpop.permute.xlu0 %9826
      %9828 = vrot.lane.b32.xlu0 %v9333, 64
      %v9829 = vpop.permute.xlu0 %9828
      %9830 = vrot.lane.b32.xlu0 %v9334, 64
      %v9831 = vpop.permute.xlu0 %9830
      %9832 = vrot.lane.b32.xlu0 %v9335, 64
      %v9833 = vpop.permute.xlu0 %9832
      %9834 = vrot.lane.b32.xlu0 %v9336, 64
      %v9835 = vpop.permute.xlu0 %9834
      %9836 = vrot.lane.b32.xlu0 %v9337, 64
      %v9837 = vpop.permute.xlu0 %9836
      %9838 = vrot.lane.b32.xlu0 %v9338, 64
      %v9839 = vpop.permute.xlu0 %9838
      %9840 = vrot.lane.b32.xlu0 %v9339, 64
      %v9841 = vpop.permute.xlu0 %9840
      %9842 = vrot.lane.b32.xlu0 %v9340, 64
      %v9843 = vpop.permute.xlu0 %9842
      %9844 = vrot.lane.b32.xlu0 %v9341, 64
      %v9845 = vpop.permute.xlu0 %9844
      %9846 = vrot.lane.b32.xlu0 %v9342, 64
      %v9847 = vpop.permute.xlu0 %9846
      %9848 = vrot.lane.b32.xlu0 %v9343, 64
      %v9849 = vpop.permute.xlu0 %9848
      %9850 = vrot.lane.b32.xlu0 %v9344, 64
      %v9851 = vpop.permute.xlu0 %9850
      %9852 = vrot.lane.b32.xlu0 %v9345, 64
      %v9853 = vpop.permute.xlu0 %9852
      %9854 = vrot.lane.b32.xlu0 %v9346, 64
      %v9855 = vpop.permute.xlu0 %9854
      %9856 = vrot.lane.b32.xlu0 %v9347, 64
      %v9857 = vpop.permute.xlu0 %9856
      %9858 = vrot.lane.b32.xlu0 %v9348, 64
      %v9859 = vpop.permute.xlu0 %9858
      %9860 = vrot.lane.b32.xlu0 %v9349, 64
      %v9861 = vpop.permute.xlu0 %9860
      %v9894 = vsel %vm514, %v9093, %v9415
      %v9895 = vsel %vm514, %v9094, %v9417
      %v9896 = vsel %vm514, %v9095, %v9419
      %v9897 = vsel %vm514, %v9096, %v9421
      %v9898 = vsel %vm514, %v9097, %v9423
      %v9899 = vsel %vm514, %v9098, %v9425
      %v9900 = vsel %vm514, %v9099, %v9427
      %v9901 = vsel %vm514, %v9100, %v9429
      %v9902 = vsel %vm514, %v9101, %v9431
      %v9903 = vsel %vm514, %v9102, %v9433
      %v9904 = vsel %vm514, %v9103, %v9435
      %v9905 = vsel %vm514, %v9104, %v9437
      %v9906 = vsel %vm514, %v9105, %v9439
      %v9907 = vsel %vm514, %v9106, %v9441
      %v9908 = vsel %vm514, %v9107, %v9443
      %v9909 = vsel %vm514, %v9108, %v9445
      %v9910 = vsel %vm514, %v9109, %v9447
      %v9911 = vsel %vm514, %v9110, %v9449
      %v9912 = vsel %vm514, %v9111, %v9451
      %v9913 = vsel %vm514, %v9112, %v9453
      %v9914 = vsel %vm514, %v9113, %v9455
      %v9915 = vsel %vm514, %v9114, %v9457
      %v9916 = vsel %vm514, %v9115, %v9459
      %v9917 = vsel %vm514, %v9116, %v9461
      %v9918 = vsel %vm514, %v9117, %v9463
      %v9919 = vsel %vm514, %v9118, %v9465
      %v9920 = vsel %vm514, %v9119, %v9467
      %v9921 = vsel %vm514, %v9120, %v9469
      %v9922 = vsel %vm514, %v9121, %v9471
      %v9923 = vsel %vm514, %v9122, %v9473
      %v9924 = vsel %vm514, %v9123, %v9475
      %v9925 = vsel %vm514, %v9124, %v9477
      %v9926 = vsel %vm514, %v9157, %v9543
      %v9927 = vsel %vm514, %v9158, %v9545
      %v9928 = vsel %vm514, %v9159, %v9547
      %v9929 = vsel %vm514, %v9160, %v9549
      %v9930 = vsel %vm514, %v9161, %v9551
      %v9931 = vsel %vm514, %v9162, %v9553
      %v9932 = vsel %vm514, %v9163, %v9555
      %v9933 = vsel %vm514, %v9164, %v9557
      %v9934 = vsel %vm514, %v9165, %v9559
      %v9935 = vsel %vm514, %v9166, %v9561
      %v9936 = vsel %vm514, %v9167, %v9563
      %v9937 = vsel %vm514, %v9168, %v9565
      %v9938 = vsel %vm514, %v9169, %v9567
      %v9939 = vsel %vm514, %v9170, %v9569
      %v9940 = vsel %vm514, %v9171, %v9571
      %v9941 = vsel %vm514, %v9172, %v9573
      %v9942 = vsel %vm514, %v9173, %v9575
      %v9943 = vsel %vm514, %v9174, %v9577
      %v9944 = vsel %vm514, %v9175, %v9579
      %v9945 = vsel %vm514, %v9176, %v9581
      %v9946 = vsel %vm514, %v9177, %v9583
      %v9947 = vsel %vm514, %v9178, %v9585
      %v9948 = vsel %vm514, %v9179, %v9587
      %v9949 = vsel %vm514, %v9180, %v9589
      %v9950 = vsel %vm514, %v9181, %v9591
      %v9951 = vsel %vm514, %v9182, %v9593
      %v9952 = vsel %vm514, %v9183, %v9595
      %v9953 = vsel %vm514, %v9184, %v9597
      %v9954 = vsel %vm514, %v9185, %v9599
      %v9955 = vsel %vm514, %v9186, %v9601
      %v9956 = vsel %vm514, %v9187, %v9603
      %v9957 = vsel %vm514, %v9188, %v9605
      %v9958 = vsel %vm514, %v9221, %v9671
      %v9959 = vsel %vm514, %v9222, %v9673
      %v9960 = vsel %vm514, %v9223, %v9675
      %v9961 = vsel %vm514, %v9224, %v9677
      %v9962 = vsel %vm514, %v9225, %v9679
      %v9963 = vsel %vm514, %v9226, %v9681
      %v9964 = vsel %vm514, %v9227, %v9683
      %v9965 = vsel %vm514, %v9228, %v9685
      %v9966 = vsel %vm514, %v9229, %v9687
      %v9967 = vsel %vm514, %v9230, %v9689
      %v9968 = vsel %vm514, %v9231, %v9691
      %v9969 = vsel %vm514, %v9232, %v9693
      %v9970 = vsel %vm514, %v9233, %v9695
      %v9971 = vsel %vm514, %v9234, %v9697
      %v9972 = vsel %vm514, %v9235, %v9699
      %v9973 = vsel %vm514, %v9236, %v9701
      %v9974 = vsel %vm514, %v9237, %v9703
      %v9975 = vsel %vm514, %v9238, %v9705
      %v9976 = vsel %vm514, %v9239, %v9707
      %v9977 = vsel %vm514, %v9240, %v9709
      %v9978 = vsel %vm514, %v9241, %v9711
      %v9979 = vsel %vm514, %v9242, %v9713
      %v9980 = vsel %vm514, %v9243, %v9715
      %v9981 = vsel %vm514, %v9244, %v9717
      %v9982 = vsel %vm514, %v9245, %v9719
      %v9983 = vsel %vm514, %v9246, %v9721
      %v9984 = vsel %vm514, %v9247, %v9723
      %v9985 = vsel %vm514, %v9248, %v9725
      %v9986 = vsel %vm514, %v9249, %v9727
      %v9987 = vsel %vm514, %v9250, %v9729
      %v9988 = vsel %vm514, %v9251, %v9731
      %v9989 = vsel %vm514, %v9252, %v9733
      %v9990 = vsel %vm514, %v9286, %v9799
      %v9991 = vsel %vm514, %v9287, %v9801
      %v9992 = vsel %vm514, %v9288, %v9803
      %v9993 = vsel %vm514, %v9289, %v9805
      %v9994 = vsel %vm514, %v9290, %v9807
      %v9995 = vsel %vm514, %v9291, %v9809
      %v9996 = vsel %vm514, %v9292, %v9811
      %v9997 = vsel %vm514, %v9293, %v9813
      %v9998 = vsel %vm514, %v9294, %v9815
      %v9999 = vsel %vm514, %v9295, %v9817
      %v10000 = vsel %vm514, %v9296, %v9819
      %v10001 = vsel %vm514, %v9297, %v9821
      %v10002 = vsel %vm514, %v9298, %v9823
      %v10003 = vsel %vm514, %v9299, %v9825
      %v10004 = vsel %vm514, %v9300, %v9827
      %v10005 = vsel %vm514, %v9301, %v9829
      %v10006 = vsel %vm514, %v9302, %v9831
      %v10007 = vsel %vm514, %v9303, %v9833
      %v10008 = vsel %vm514, %v9304, %v9835
      %v10009 = vsel %vm514, %v9305, %v9837
      %v10010 = vsel %vm514, %v9306, %v9839
      %v10011 = vsel %vm514, %v9307, %v9841
      %v10012 = vsel %vm514, %v9308, %v9843
      %v10013 = vsel %vm514, %v9309, %v9845
      %v10014 = vsel %vm514, %v9310, %v9847
      %v10015 = vsel %vm514, %v9311, %v9849
      %v10016 = vsel %vm514, %v9312, %v9851
      %v10017 = vsel %vm514, %v9313, %v9853
      %v10018 = vsel %vm514, %v9314, %v9855
      %v10019 = vsel %vm514, %v9315, %v9857
      %v10020 = vsel %vm514, %v9316, %v9859
      %v10021 = vsel %vm514, %v9317, %v9861
      %v10022 = vld [vmem:[%s8] sm:$0xff]
      %v10023 = vld [vmem:[%s8 + $0x8] sm:$0xff]
      %v10024 = vld [vmem:[%s8 + $0x10] sm:$0xff]
      %v10025 = vld [vmem:[%s8 + $0x18] sm:$0xff]
      %v10026 = vld [vmem:[%s8 + $0x20] sm:$0xff]
      %v10027 = vld [vmem:[%s8 + $0x28] sm:$0xff]
      %v10028 = vld [vmem:[%s8 + $0x30] sm:$0xff]
      %v10029 = vld [vmem:[%s8 + $0x38] sm:$0xff]
      %v10030 = vld [vmem:[%s8 + $0x40] sm:$0xff]
      %v10031 = vld [vmem:[%s8 + $0x48] sm:$0xff]
      %v10032 = vld [vmem:[%s8 + $0x50] sm:$0xff]
      %v10033 = vld [vmem:[%s8 + $0x58] sm:$0xff]
      %v10034 = vld [vmem:[%s8 + $0x60] sm:$0xff]
      %v10035 = vld [vmem:[%s8 + $0x68] sm:$0xff]
      %v10036 = vld [vmem:[%s8 + $0x70] sm:$0xff]
      %v10037 = vld [vmem:[%s8 + $0x78] sm:$0xff]
      %v10038 = vld [vmem:[%s8 + $0x80] sm:$0xff]
      %v10039 = vld [vmem:[%s8 + $0x88] sm:$0xff]
      %v10040 = vld [vmem:[%s8 + $0x90] sm:$0xff]
      %v10041 = vld [vmem:[%s8 + $0x98] sm:$0xff]
      %v10042 = vld [vmem:[%s8 + $0xa0] sm:$0xff]
      %v10043 = vld [vmem:[%s8 + $0xa8] sm:$0xff]
      %v10044 = vld [vmem:[%s8 + $0xb0] sm:$0xff]
      %v10045 = vld [vmem:[%s8 + $0xb8] sm:$0xff]
      %v10046 = vld [vmem:[%s8 + $0xc0] sm:$0xff]
      %v10047 = vld [vmem:[%s8 + $0xc8] sm:$0xff]
      %v10048 = vld [vmem:[%s8 + $0xd0] sm:$0xff]
      %v10049 = vld [vmem:[%s8 + $0xd8] sm:$0xff]
      %v10050 = vld [vmem:[%s8 + $0xe0] sm:$0xff]
      %v10051 = vld [vmem:[%s8 + $0xe8] sm:$0xff]
      %v10052 = vld [vmem:[%s8 + $0xf0] sm:$0xff]
      %v10053 = vld [vmem:[%s8 + $0xf8] sm:$0xff]
      %v10054 = vld [vmem:[%s8 + $0x100] sm:$0xff]
      %v10055 = vld [vmem:[%s8 + $0x108] sm:$0xff]
      %v10056 = vld [vmem:[%s8 + $0x110] sm:$0xff]
      %v10057 = vld [vmem:[%s8 + $0x118] sm:$0xff]
      %v10058 = vld [vmem:[%s8 + $0x120] sm:$0xff]
      %v10059 = vld [vmem:[%s8 + $0x128] sm:$0xff]
      %v10060 = vld [vmem:[%s8 + $0x130] sm:$0xff]
      %v10061 = vld [vmem:[%s8 + $0x138] sm:$0xff]
      %v10062 = vld [vmem:[%s8 + $0x140] sm:$0xff]
      %v10063 = vld [vmem:[%s8 + $0x148] sm:$0xff]
      %v10064 = vld [vmem:[%s8 + $0x150] sm:$0xff]
      %v10065 = vld [vmem:[%s8 + $0x158] sm:$0xff]
      %v10066 = vld [vmem:[%s8 + $0x160] sm:$0xff]
      %v10067 = vld [vmem:[%s8 + $0x168] sm:$0xff]
      %v10068 = vld [vmem:[%s8 + $0x170] sm:$0xff]
      %v10069 = vld [vmem:[%s8 + $0x178] sm:$0xff]
      %v10070 = vld [vmem:[%s8 + $0x180] sm:$0xff]
      %v10071 = vld [vmem:[%s8 + $0x188] sm:$0xff]
      %v10072 = vld [vmem:[%s8 + $0x190] sm:$0xff]
      %v10073 = vld [vmem:[%s8 + $0x198] sm:$0xff]
      %v10074 = vld [vmem:[%s8 + $0x1a0] sm:$0xff]
      %v10075 = vld [vmem:[%s8 + $0x1a8] sm:$0xff]
      %v10076 = vld [vmem:[%s8 + $0x1b0] sm:$0xff]
      %v10077 = vld [vmem:[%s8 + $0x1b8] sm:$0xff]
      %v10078 = vld [vmem:[%s8 + $0x1c0] sm:$0xff]
      %v10079 = vld [vmem:[%s8 + $0x1c8] sm:$0xff]
      %v10080 = vld [vmem:[%s8 + $0x1d0] sm:$0xff]
      %v10081 = vld [vmem:[%s8 + $0x1d8] sm:$0xff]
      %v10082 = vld [vmem:[%s8 + $0x1e0] sm:$0xff]
      %v10083 = vld [vmem:[%s8 + $0x1e8] sm:$0xff]
      %v10084 = vld [vmem:[%s8 + $0x1f0] sm:$0xff]
      %v10085 = vld [vmem:[%s8 + $0x1f8] sm:$0xff]
      %v10086 = vld [vmem:[%s8 + $0x200] sm:$0xff]
      %v10087 = vld [vmem:[%s8 + $0x208] sm:$0xff]
      %v10088 = vld [vmem:[%s8 + $0x210] sm:$0xff]
      %v10089 = vld [vmem:[%s8 + $0x218] sm:$0xff]
      %v10090 = vld [vmem:[%s8 + $0x220] sm:$0xff]
      %v10091 = vld [vmem:[%s8 + $0x228] sm:$0xff]
      %v10092 = vld [vmem:[%s8 + $0x230] sm:$0xff]
      %v10093 = vld [vmem:[%s8 + $0x238] sm:$0xff]
      %v10095 = vsel %vm514, %v9350, 0
      %v10098 = vsel %vm514, %v9351, 0
      %v10101 = vsel %vm514, %v9352, 0
      %v10104 = vsel %vm514, %v9353, 0
      %v10107 = vsel %vm514, %v9354, 0
      %v10110 = vsel %vm514, %v9355, 0
      %v10113 = vsel %vm514, %v9356, 0
      %v10116 = vsel %vm514, %v9357, 0
      %v10119 = vsel %vm514, %v9358, 0
      %v10122 = vsel %vm514, %v9359, 0
      %v10125 = vsel %vm514, %v9360, 0
      %v10128 = vsel %vm514, %v9361, 0
      %v10131 = vsel %vm514, %v9362, 0
      %v10134 = vsel %vm514, %v9363, 0
      %v10137 = vsel %vm514, %v9364, 0
      %v10140 = vsel %vm514, %v9365, 0
      %v10143 = vsel %vm514, %v9366, 0
      %v10146 = vsel %vm514, %v9367, 0
      %v10149 = vsel %vm514, %v9368, 0
      %v10152 = vsel %vm514, %v9369, 0
      %v10155 = vsel %vm514, %v9370, 0
      %v10158 = vsel %vm514, %v9371, 0
      %v10161 = vsel %vm514, %v9372, 0
      %v10164 = vsel %vm514, %v9373, 0
      %v10167 = vsel %vm514, %v9374, 0
      %v10170 = vsel %vm514, %v9375, 0
      %v10173 = vsel %vm514, %v9376, 0
      %v10176 = vsel %vm514, %v9377, 0
      %v10179 = vsel %vm514, %v9378, 0
      %v10182 = vsel %vm514, %v9379, 0
      %v10185 = vsel %vm514, %v9380, 0
      %v10188 = vsel %vm514, %v9381, 0
      %10190 = vmatpush.msra.mxu0 %v10037
      %10191 = vmatpush.msra.mxu0 %v10036
      %10192 = vmatpush.msra.mxu0 %v10035
      %10193 = vmatpush.msra.mxu0 %v10034
      %10194 = vmatpush.msra.mxu0 %v10033
      %10195 = vmatpush.msra.mxu0 %v10032
      %10196 = vmatpush.msra.mxu0 %v10031
      %10197 = vmatpush.msra.mxu0 %v10030
      %10198 = vmatpush.msra.mxu0 %v10029
      %10199 = vmatpush.msra.mxu0 %v10028
      %10200 = vmatpush.msra.mxu0 %v10027
      %10201 = vmatpush.msra.mxu0 %v10026
      %10202 = vmatpush.msra.mxu0 %v10025
      %10203 = vmatpush.msra.mxu0 %v10024
      %10204 = vmatpush.msra.mxu0 %v10023
      %10205 = vmatpush.msra.mxu0 %v10022
      %10206 = vmatmul.f32.gmra.mxu0 %v9894
      %v10207 = vpop.f32.mrf.mxu0
      %v10208 = vadd.f32 0.0, %v10207
      %10209 = vmatmul.f32.gmra.mxu0 %v9895
      %v10210 = vpop.f32.mrf.mxu0
      %v10211 = vadd.f32 0.0, %v10210
      %10212 = vmatmul.f32.gmra.mxu0 %v9896
      %v10213 = vpop.f32.mrf.mxu0
      %v10214 = vadd.f32 0.0, %v10213
      %10215 = vmatmul.f32.gmra.mxu0 %v9897
      %v10216 = vpop.f32.mrf.mxu0
      %v10217 = vadd.f32 0.0, %v10216
      %10218 = vmatmul.f32.gmra.mxu0 %v9898
      %v10219 = vpop.f32.mrf.mxu0
      %v10220 = vadd.f32 0.0, %v10219
      %10221 = vmatmul.f32.gmra.mxu0 %v9899
      %v10222 = vpop.f32.mrf.mxu0
      %v10223 = vadd.f32 0.0, %v10222
      %10224 = vmatmul.f32.gmra.mxu0 %v9900
      %v10225 = vpop.f32.mrf.mxu0
      %v10226 = vadd.f32 0.0, %v10225
      %10227 = vmatmul.f32.gmra.mxu0 %v9901
      %v10228 = vpop.f32.mrf.mxu0
      %v10229 = vadd.f32 0.0, %v10228
      %10230 = vmatmul.f32.gmra.mxu0 %v9902
      %v10231 = vpop.f32.mrf.mxu0
      %v10232 = vadd.f32 0.0, %v10231
      %10233 = vmatmul.f32.gmra.mxu0 %v9903
      %v10234 = vpop.f32.mrf.mxu0
      %v10235 = vadd.f32 0.0, %v10234
      %10236 = vmatmul.f32.gmra.mxu0 %v9904
      %v10237 = vpop.f32.mrf.mxu0
      %v10238 = vadd.f32 0.0, %v10237
      %10239 = vmatmul.f32.gmra.mxu0 %v9905
      %v10240 = vpop.f32.mrf.mxu0
      %v10241 = vadd.f32 0.0, %v10240
      %10242 = vmatmul.f32.gmra.mxu0 %v9906
      %v10243 = vpop.f32.mrf.mxu0
      %v10244 = vadd.f32 0.0, %v10243
      %10245 = vmatmul.f32.gmra.mxu0 %v9907
      %v10246 = vpop.f32.mrf.mxu0
      %v10247 = vadd.f32 0.0, %v10246
      %10248 = vmatmul.f32.gmra.mxu0 %v9908
      %v10249 = vpop.f32.mrf.mxu0
      %v10250 = vadd.f32 0.0, %v10249
      %10251 = vmatmul.f32.gmra.mxu0 %v9909
      %v10252 = vpop.f32.mrf.mxu0
      %v10253 = vadd.f32 0.0, %v10252
      %10254 = vmatmul.f32.gmra.mxu0 %v9910
      %v10255 = vpop.f32.mrf.mxu0
      %v10256 = vadd.f32 0.0, %v10255
      %10257 = vmatmul.f32.gmra.mxu0 %v9911
      %v10258 = vpop.f32.mrf.mxu0
      %v10259 = vadd.f32 0.0, %v10258
      %10260 = vmatmul.f32.gmra.mxu0 %v9912
      %v10261 = vpop.f32.mrf.mxu0
      %v10262 = vadd.f32 0.0, %v10261
      %10263 = vmatmul.f32.gmra.mxu0 %v9913
      %v10264 = vpop.f32.mrf.mxu0
      %v10265 = vadd.f32 0.0, %v10264
      %10266 = vmatmul.f32.gmra.mxu0 %v9914
      %v10267 = vpop.f32.mrf.mxu0
      %v10268 = vadd.f32 0.0, %v10267
      %10269 = vmatmul.f32.gmra.mxu0 %v9915
      %v10270 = vpop.f32.mrf.mxu0
      %v10271 = vadd.f32 0.0, %v10270
      %10272 = vmatmul.f32.gmra.mxu0 %v9916
      %v10273 = vpop.f32.mrf.mxu0
      %v10274 = vadd.f32 0.0, %v10273
      %10275 = vmatmul.f32.gmra.mxu0 %v9917
      %v10276 = vpop.f32.mrf.mxu0
      %v10277 = vadd.f32 0.0, %v10276
      %10278 = vmatmul.f32.gmra.mxu0 %v9918
      %v10279 = vpop.f32.mrf.mxu0
      %v10280 = vadd.f32 0.0, %v10279
      %10281 = vmatmul.f32.gmra.mxu0 %v9919
      %v10282 = vpop.f32.mrf.mxu0
      %v10283 = vadd.f32 0.0, %v10282
      %10284 = vmatmul.f32.gmra.mxu0 %v9920
      %v10285 = vpop.f32.mrf.mxu0
      %v10286 = vadd.f32 0.0, %v10285
      %10287 = vmatmul.f32.gmra.mxu0 %v9921
      %v10288 = vpop.f32.mrf.mxu0
      %v10289 = vadd.f32 0.0, %v10288
      %10290 = vmatmul.f32.gmra.mxu0 %v9922
      %v10291 = vpop.f32.mrf.mxu0
      %v10292 = vadd.f32 0.0, %v10291
      %10293 = vmatmul.f32.gmra.mxu0 %v9923
      %v10294 = vpop.f32.mrf.mxu0
      %v10295 = vadd.f32 0.0, %v10294
      %10296 = vmatmul.f32.gmra.mxu0 %v9924
      %v10297 = vpop.f32.mrf.mxu0
      %v10298 = vadd.f32 0.0, %v10297
      %10299 = vmatmul.f32.gmra.mxu0 %v9925
      %v10300 = vpop.f32.mrf.mxu0
      %v10301 = vadd.f32 0.0, %v10300
      %10302 = vdwg.mxu0
      %10303 = vmatpush.msra.mxu0 %v10053
      %10304 = vmatpush.msra.mxu0 %v10052
      %10305 = vmatpush.msra.mxu0 %v10051
      %10306 = vmatpush.msra.mxu0 %v10050
      %10307 = vmatpush.msra.mxu0 %v10049
      %10308 = vmatpush.msra.mxu0 %v10048
      %10309 = vmatpush.msra.mxu0 %v10047
      %10310 = vmatpush.msra.mxu0 %v10046
      %10311 = vmatpush.msra.mxu0 %v10045
      %10312 = vmatpush.msra.mxu0 %v10044
      %10313 = vmatpush.msra.mxu0 %v10043
      %10314 = vmatpush.msra.mxu0 %v10042
      %10315 = vmatpush.msra.mxu0 %v10041
      %10316 = vmatpush.msra.mxu0 %v10040
      %10317 = vmatpush.msra.mxu0 %v10039
      %10318 = vmatpush.msra.mxu0 %v10038
      %10319 = vmatmul.f32.gmra.mxu0 %v9926
      %v10320 = vpop.f32.mrf.mxu0
      %v10321 = vadd.f32 %v10208, %v10320
      %10322 = vmatmul.f32.gmra.mxu0 %v9927
      %v10323 = vpop.f32.mrf.mxu0
      %v10324 = vadd.f32 %v10211, %v10323
      %10325 = vmatmul.f32.gmra.mxu0 %v9928
      %v10326 = vpop.f32.mrf.mxu0
      %v10327 = vadd.f32 %v10214, %v10326
      %10328 = vmatmul.f32.gmra.mxu0 %v9929
      %v10329 = vpop.f32.mrf.mxu0
      %v10330 = vadd.f32 %v10217, %v10329
      %10331 = vmatmul.f32.gmra.mxu0 %v9930
      %v10332 = vpop.f32.mrf.mxu0
      %v10333 = vadd.f32 %v10220, %v10332
      %10334 = vmatmul.f32.gmra.mxu0 %v9931
      %v10335 = vpop.f32.mrf.mxu0
      %v10336 = vadd.f32 %v10223, %v10335
      %10337 = vmatmul.f32.gmra.mxu0 %v9932
      %v10338 = vpop.f32.mrf.mxu0
      %v10339 = vadd.f32 %v10226, %v10338
      %10340 = vmatmul.f32.gmra.mxu0 %v9933
      %v10341 = vpop.f32.mrf.mxu0
      %v10342 = vadd.f32 %v10229, %v10341
      %10343 = vmatmul.f32.gmra.mxu0 %v9934
      %v10344 = vpop.f32.mrf.mxu0
      %v10345 = vadd.f32 %v10232, %v10344
      %10346 = vmatmul.f32.gmra.mxu0 %v9935
      %v10347 = vpop.f32.mrf.mxu0
      %v10348 = vadd.f32 %v10235, %v10347
      %10349 = vmatmul.f32.gmra.mxu0 %v9936
      %v10350 = vpop.f32.mrf.mxu0
      %v10351 = vadd.f32 %v10238, %v10350
      %10352 = vmatmul.f32.gmra.mxu0 %v9937
      %v10353 = vpop.f32.mrf.mxu0
      %v10354 = vadd.f32 %v10241, %v10353
      %10355 = vmatmul.f32.gmra.mxu0 %v9938
      %v10356 = vpop.f32.mrf.mxu0
      %v10357 = vadd.f32 %v10244, %v10356
      %10358 = vmatmul.f32.gmra.mxu0 %v9939
      %v10359 = vpop.f32.mrf.mxu0
      %v10360 = vadd.f32 %v10247, %v10359
      %10361 = vmatmul.f32.gmra.mxu0 %v9940
      %v10362 = vpop.f32.mrf.mxu0
      %v10363 = vadd.f32 %v10250, %v10362
      %10364 = vmatmul.f32.gmra.mxu0 %v9941
      %v10365 = vpop.f32.mrf.mxu0
      %v10366 = vadd.f32 %v10253, %v10365
      %10367 = vmatmul.f32.gmra.mxu0 %v9942
      %v10368 = vpop.f32.mrf.mxu0
      %v10369 = vadd.f32 %v10256, %v10368
      %10370 = vmatmul.f32.gmra.mxu0 %v9943
      %v10371 = vpop.f32.mrf.mxu0
      %v10372 = vadd.f32 %v10259, %v10371
      %10373 = vmatmul.f32.gmra.mxu0 %v9944
      %v10374 = vpop.f32.mrf.mxu0
      %v10375 = vadd.f32 %v10262, %v10374
      %10376 = vmatmul.f32.gmra.mxu0 %v9945
      %v10377 = vpop.f32.mrf.mxu0
      %v10378 = vadd.f32 %v10265, %v10377
      %10379 = vmatmul.f32.gmra.mxu0 %v9946
      %v10380 = vpop.f32.mrf.mxu0
      %v10381 = vadd.f32 %v10268, %v10380
      %10382 = vmatmul.f32.gmra.mxu0 %v9947
      %v10383 = vpop.f32.mrf.mxu0
      %v10384 = vadd.f32 %v10271, %v10383
      %10385 = vmatmul.f32.gmra.mxu0 %v9948
      %v10386 = vpop.f32.mrf.mxu0
      %v10387 = vadd.f32 %v10274, %v10386
      %10388 = vmatmul.f32.gmra.mxu0 %v9949
      %v10389 = vpop.f32.mrf.mxu0
      %v10390 = vadd.f32 %v10277, %v10389
      %10391 = vmatmul.f32.gmra.mxu0 %v9950
      %v10392 = vpop.f32.mrf.mxu0
      %v10393 = vadd.f32 %v10280, %v10392
      %10394 = vmatmul.f32.gmra.mxu0 %v9951
      %v10395 = vpop.f32.mrf.mxu0
      %v10396 = vadd.f32 %v10283, %v10395
      %10397 = vmatmul.f32.gmra.mxu0 %v9952
      %v10398 = vpop.f32.mrf.mxu0
      %v10399 = vadd.f32 %v10286, %v10398
      %10400 = vmatmul.f32.gmra.mxu0 %v9953
      %v10401 = vpop.f32.mrf.mxu0
      %v10402 = vadd.f32 %v10289, %v10401
      %10403 = vmatmul.f32.gmra.mxu0 %v9954
      %v10404 = vpop.f32.mrf.mxu0
      %v10405 = vadd.f32 %v10292, %v10404
      %10406 = vmatmul.f32.gmra.mxu0 %v9955
      %v10407 = vpop.f32.mrf.mxu0
      %v10408 = vadd.f32 %v10295, %v10407
      %10409 = vmatmul.f32.gmra.mxu0 %v9956
      %v10410 = vpop.f32.mrf.mxu0
      %v10411 = vadd.f32 %v10298, %v10410
      %10412 = vmatmul.f32.gmra.mxu0 %v9957
      %v10413 = vpop.f32.mrf.mxu0
      %v10414 = vadd.f32 %v10301, %v10413
      %10415 = vdwg.mxu0
      %10416 = vmatpush.msra.mxu0 %v10069
      %10417 = vmatpush.msra.mxu0 %v10068
      %10418 = vmatpush.msra.mxu0 %v10067
      %10419 = vmatpush.msra.mxu0 %v10066
      %10420 = vmatpush.msra.mxu0 %v10065
      %10421 = vmatpush.msra.mxu0 %v10064
      %10422 = vmatpush.msra.mxu0 %v10063
      %10423 = vmatpush.msra.mxu0 %v10062
      %10424 = vmatpush.msra.mxu0 %v10061
      %10425 = vmatpush.msra.mxu0 %v10060
      %10426 = vmatpush.msra.mxu0 %v10059
      %10427 = vmatpush.msra.mxu0 %v10058
      %10428 = vmatpush.msra.mxu0 %v10057
      %10429 = vmatpush.msra.mxu0 %v10056
      %10430 = vmatpush.msra.mxu0 %v10055
      %10431 = vmatpush.msra.mxu0 %v10054
      %10432 = vmatmul.f32.gmra.mxu0 %v9958
      %v10433 = vpop.f32.mrf.mxu0
      %v10434 = vadd.f32 %v10321, %v10433
      %10435 = vmatmul.f32.gmra.mxu0 %v9959
      %v10436 = vpop.f32.mrf.mxu0
      %v10437 = vadd.f32 %v10324, %v10436
      %10438 = vmatmul.f32.gmra.mxu0 %v9960
      %v10439 = vpop.f32.mrf.mxu0
      %v10440 = vadd.f32 %v10327, %v10439
      %10441 = vmatmul.f32.gmra.mxu0 %v9961
      %v10442 = vpop.f32.mrf.mxu0
      %v10443 = vadd.f32 %v10330, %v10442
      %10444 = vmatmul.f32.gmra.mxu0 %v9962
      %v10445 = vpop.f32.mrf.mxu0
      %v10446 = vadd.f32 %v10333, %v10445
      %10447 = vmatmul.f32.gmra.mxu0 %v9963
      %v10448 = vpop.f32.mrf.mxu0
      %v10449 = vadd.f32 %v10336, %v10448
      %10450 = vmatmul.f32.gmra.mxu0 %v9964
      %v10451 = vpop.f32.mrf.mxu0
      %v10452 = vadd.f32 %v10339, %v10451
      %10453 = vmatmul.f32.gmra.mxu0 %v9965
      %v10454 = vpop.f32.mrf.mxu0
      %v10455 = vadd.f32 %v10342, %v10454
      %10456 = vmatmul.f32.gmra.mxu0 %v9966
      %v10457 = vpop.f32.mrf.mxu0
      %v10458 = vadd.f32 %v10345, %v10457
      %10459 = vmatmul.f32.gmra.mxu0 %v9967
      %v10460 = vpop.f32.mrf.mxu0
      %v10461 = vadd.f32 %v10348, %v10460
      %10462 = vmatmul.f32.gmra.mxu0 %v9968
      %v10463 = vpop.f32.mrf.mxu0
      %v10464 = vadd.f32 %v10351, %v10463
      %10465 = vmatmul.f32.gmra.mxu0 %v9969
      %v10466 = vpop.f32.mrf.mxu0
      %v10467 = vadd.f32 %v10354, %v10466
      %10468 = vmatmul.f32.gmra.mxu0 %v9970
      %v10469 = vpop.f32.mrf.mxu0
      %v10470 = vadd.f32 %v10357, %v10469
      %10471 = vmatmul.f32.gmra.mxu0 %v9971
      %v10472 = vpop.f32.mrf.mxu0
      %v10473 = vadd.f32 %v10360, %v10472
      %10474 = vmatmul.f32.gmra.mxu0 %v9972
      %v10475 = vpop.f32.mrf.mxu0
      %v10476 = vadd.f32 %v10363, %v10475
      %10477 = vmatmul.f32.gmra.mxu0 %v9973
      %v10478 = vpop.f32.mrf.mxu0
      %v10479 = vadd.f32 %v10366, %v10478
      %10480 = vmatmul.f32.gmra.mxu0 %v9974
      %v10481 = vpop.f32.mrf.mxu0
      %v10482 = vadd.f32 %v10369, %v10481
      %10483 = vmatmul.f32.gmra.mxu0 %v9975
      %v10484 = vpop.f32.mrf.mxu0
      %v10485 = vadd.f32 %v10372, %v10484
      %10486 = vmatmul.f32.gmra.mxu0 %v9976
      %v10487 = vpop.f32.mrf.mxu0
      %v10488 = vadd.f32 %v10375, %v10487
      %10489 = vmatmul.f32.gmra.mxu0 %v9977
      %v10490 = vpop.f32.mrf.mxu0
      %v10491 = vadd.f32 %v10378, %v10490
      %10492 = vmatmul.f32.gmra.mxu0 %v9978
      %v10493 = vpop.f32.mrf.mxu0
      %v10494 = vadd.f32 %v10381, %v10493
      %10495 = vmatmul.f32.gmra.mxu0 %v9979
      %v10496 = vpop.f32.mrf.mxu0
      %v10497 = vadd.f32 %v10384, %v10496
      %10498 = vmatmul.f32.gmra.mxu0 %v9980
      %v10499 = vpop.f32.mrf.mxu0
      %v10500 = vadd.f32 %v10387, %v10499
      %10501 = vmatmul.f32.gmra.mxu0 %v9981
      %v10502 = vpop.f32.mrf.mxu0
      %v10503 = vadd.f32 %v10390, %v10502
      %10504 = vmatmul.f32.gmra.mxu0 %v9982
      %v10505 = vpop.f32.mrf.mxu0
      %v10506 = vadd.f32 %v10393, %v10505
      %10507 = vmatmul.f32.gmra.mxu0 %v9983
      %v10508 = vpop.f32.mrf.mxu0
      %v10509 = vadd.f32 %v10396, %v10508
      %10510 = vmatmul.f32.gmra.mxu0 %v9984
      %v10511 = vpop.f32.mrf.mxu0
      %v10512 = vadd.f32 %v10399, %v10511
      %10513 = vmatmul.f32.gmra.mxu0 %v9985
      %v10514 = vpop.f32.mrf.mxu0
      %v10515 = vadd.f32 %v10402, %v10514
      %10516 = vmatmul.f32.gmra.mxu0 %v9986
      %v10517 = vpop.f32.mrf.mxu0
      %v10518 = vadd.f32 %v10405, %v10517
      %10519 = vmatmul.f32.gmra.mxu0 %v9987
      %v10520 = vpop.f32.mrf.mxu0
      %v10521 = vadd.f32 %v10408, %v10520
      %10522 = vmatmul.f32.gmra.mxu0 %v9988
      %v10523 = vpop.f32.mrf.mxu0
      %v10524 = vadd.f32 %v10411, %v10523
      %10525 = vmatmul.f32.gmra.mxu0 %v9989
      %v10526 = vpop.f32.mrf.mxu0
      %v10527 = vadd.f32 %v10414, %v10526
      %10528 = vdwg.mxu0
      %10529 = vmatpush.msra.mxu0 %v10085
      %10530 = vmatpush.msra.mxu0 %v10084
      %10531 = vmatpush.msra.mxu0 %v10083
      %10532 = vmatpush.msra.mxu0 %v10082
      %10533 = vmatpush.msra.mxu0 %v10081
      %10534 = vmatpush.msra.mxu0 %v10080
      %10535 = vmatpush.msra.mxu0 %v10079
      %10536 = vmatpush.msra.mxu0 %v10078
      %10537 = vmatpush.msra.mxu0 %v10077
      %10538 = vmatpush.msra.mxu0 %v10076
      %10539 = vmatpush.msra.mxu0 %v10075
      %10540 = vmatpush.msra.mxu0 %v10074
      %10541 = vmatpush.msra.mxu0 %v10073
      %10542 = vmatpush.msra.mxu0 %v10072
      %10543 = vmatpush.msra.mxu0 %v10071
      %10544 = vmatpush.msra.mxu0 %v10070
      %10545 = vmatmul.f32.gmra.mxu0 %v9990
      %v10546 = vpop.f32.mrf.mxu0
      %v10547 = vadd.f32 %v10434, %v10546
      %10548 = vmatmul.f32.gmra.mxu0 %v9991
      %v10549 = vpop.f32.mrf.mxu0
      %v10550 = vadd.f32 %v10437, %v10549
      %10551 = vmatmul.f32.gmra.mxu0 %v9992
      %v10552 = vpop.f32.mrf.mxu0
      %v10553 = vadd.f32 %v10440, %v10552
      %10554 = vmatmul.f32.gmra.mxu0 %v9993
      %v10555 = vpop.f32.mrf.mxu0
      %v10556 = vadd.f32 %v10443, %v10555
      %10557 = vmatmul.f32.gmra.mxu0 %v9994
      %v10558 = vpop.f32.mrf.mxu0
      %v10559 = vadd.f32 %v10446, %v10558
      %10560 = vmatmul.f32.gmra.mxu0 %v9995
      %v10561 = vpop.f32.mrf.mxu0
      %v10562 = vadd.f32 %v10449, %v10561
      %10563 = vmatmul.f32.gmra.mxu0 %v9996
      %v10564 = vpop.f32.mrf.mxu0
      %v10565 = vadd.f32 %v10452, %v10564
      %10566 = vmatmul.f32.gmra.mxu0 %v9997
      %v10567 = vpop.f32.mrf.mxu0
      %v10568 = vadd.f32 %v10455, %v10567
      %10569 = vmatmul.f32.gmra.mxu0 %v9998
      %v10570 = vpop.f32.mrf.mxu0
      %v10571 = vadd.f32 %v10458, %v10570
      %10572 = vmatmul.f32.gmra.mxu0 %v9999
      %v10573 = vpop.f32.mrf.mxu0
      %v10574 = vadd.f32 %v10461, %v10573
      %10575 = vmatmul.f32.gmra.mxu0 %v10000
      %v10576 = vpop.f32.mrf.mxu0
      %v10577 = vadd.f32 %v10464, %v10576
      %10578 = vmatmul.f32.gmra.mxu0 %v10001
      %v10579 = vpop.f32.mrf.mxu0
      %v10580 = vadd.f32 %v10467, %v10579
      %10581 = vmatmul.f32.gmra.mxu0 %v10002
      %v10582 = vpop.f32.mrf.mxu0
      %v10583 = vadd.f32 %v10470, %v10582
      %10584 = vmatmul.f32.gmra.mxu0 %v10003
      %v10585 = vpop.f32.mrf.mxu0
      %v10586 = vadd.f32 %v10473, %v10585
      %10587 = vmatmul.f32.gmra.mxu0 %v10004
      %v10588 = vpop.f32.mrf.mxu0
      %v10589 = vadd.f32 %v10476, %v10588
      %10590 = vmatmul.f32.gmra.mxu0 %v10005
      %v10591 = vpop.f32.mrf.mxu0
      %v10592 = vadd.f32 %v10479, %v10591
      %10593 = vmatmul.f32.gmra.mxu0 %v10006
      %v10594 = vpop.f32.mrf.mxu0
      %v10595 = vadd.f32 %v10482, %v10594
      %10596 = vmatmul.f32.gmra.mxu0 %v10007
      %v10597 = vpop.f32.mrf.mxu0
      %v10598 = vadd.f32 %v10485, %v10597
      %10599 = vmatmul.f32.gmra.mxu0 %v10008
      %v10600 = vpop.f32.mrf.mxu0
      %v10601 = vadd.f32 %v10488, %v10600
      %10602 = vmatmul.f32.gmra.mxu0 %v10009
      %v10603 = vpop.f32.mrf.mxu0
      %v10604 = vadd.f32 %v10491, %v10603
      %10605 = vmatmul.f32.gmra.mxu0 %v10010
      %v10606 = vpop.f32.mrf.mxu0
      %v10607 = vadd.f32 %v10494, %v10606
      %10608 = vmatmul.f32.gmra.mxu0 %v10011
      %v10609 = vpop.f32.mrf.mxu0
      %v10610 = vadd.f32 %v10497, %v10609
      %10611 = vmatmul.f32.gmra.mxu0 %v10012
      %v10612 = vpop.f32.mrf.mxu0
      %v10613 = vadd.f32 %v10500, %v10612
      %10614 = vmatmul.f32.gmra.mxu0 %v10013
      %v10615 = vpop.f32.mrf.mxu0
      %v10616 = vadd.f32 %v10503, %v10615
      %10617 = vmatmul.f32.gmra.mxu0 %v10014
      %v10618 = vpop.f32.mrf.mxu0
      %v10619 = vadd.f32 %v10506, %v10618
      %10620 = vmatmul.f32.gmra.mxu0 %v10015
      %v10621 = vpop.f32.mrf.mxu0
      %v10622 = vadd.f32 %v10509, %v10621
      %10623 = vmatmul.f32.gmra.mxu0 %v10016
      %v10624 = vpop.f32.mrf.mxu0
      %v10625 = vadd.f32 %v10512, %v10624
      %10626 = vmatmul.f32.gmra.mxu0 %v10017
      %v10627 = vpop.f32.mrf.mxu0
      %v10628 = vadd.f32 %v10515, %v10627
      %10629 = vmatmul.f32.gmra.mxu0 %v10018
      %v10630 = vpop.f32.mrf.mxu0
      %v10631 = vadd.f32 %v10518, %v10630
      %10632 = vmatmul.f32.gmra.mxu0 %v10019
      %v10633 = vpop.f32.mrf.mxu0
      %v10634 = vadd.f32 %v10521, %v10633
      %10635 = vmatmul.f32.gmra.mxu0 %v10020
      %v10636 = vpop.f32.mrf.mxu0
      %v10637 = vadd.f32 %v10524, %v10636
      %10638 = vmatmul.f32.gmra.mxu0 %v10021
      %v10639 = vpop.f32.mrf.mxu0
      %v10640 = vadd.f32 %v10527, %v10639
      %10641 = vdwg.mxu0
      %10642 = vmatpush.msra.mxu0 0.0
      %10643 = vmatpush.msra.mxu0 0.0
      %10644 = vmatpush.msra.mxu0 0.0
      %10645 = vmatpush.msra.mxu0 0.0
      %10646 = vmatpush.msra.mxu0 0.0
      %10647 = vmatpush.msra.mxu0 0.0
      %10648 = vmatpush.msra.mxu0 0.0
      %10649 = vmatpush.msra.mxu0 0.0
      %10650 = vmatpush.msra.mxu0 %v10093
      %10651 = vmatpush.msra.mxu0 %v10092
      %10652 = vmatpush.msra.mxu0 %v10091
      %10653 = vmatpush.msra.mxu0 %v10090
      %10654 = vmatpush.msra.mxu0 %v10089
      %10655 = vmatpush.msra.mxu0 %v10088
      %10656 = vmatpush.msra.mxu0 %v10087
      %10657 = vmatpush.msra.mxu0 %v10086
      %10658 = vmatmul.f32.gmra.mxu0 %v10095
      %v10659 = vpop.f32.mrf.mxu0
      %v10660 = vadd.f32 %v10547, %v10659
      %10661 = vmatmul.f32.gmra.mxu0 %v10098
      %v10662 = vpop.f32.mrf.mxu0
      %v10663 = vadd.f32 %v10550, %v10662
      %10664 = vmatmul.f32.gmra.mxu0 %v10101
      %v10665 = vpop.f32.mrf.mxu0
      %v10666 = vadd.f32 %v10553, %v10665
      %10667 = vmatmul.f32.gmra.mxu0 %v10104
      %v10668 = vpop.f32.mrf.mxu0
      %v10669 = vadd.f32 %v10556, %v10668
      %10670 = vmatmul.f32.gmra.mxu0 %v10107
      %v10671 = vpop.f32.mrf.mxu0
      %v10672 = vadd.f32 %v10559, %v10671
      %10673 = vmatmul.f32.gmra.mxu0 %v10110
      %v10674 = vpop.f32.mrf.mxu0
      %v10675 = vadd.f32 %v10562, %v10674
      %10676 = vmatmul.f32.gmra.mxu0 %v10113
      %v10677 = vpop.f32.mrf.mxu0
      %v10678 = vadd.f32 %v10565, %v10677
      %10679 = vmatmul.f32.gmra.mxu0 %v10116
      %v10680 = vpop.f32.mrf.mxu0
      %v10681 = vadd.f32 %v10568, %v10680
      %10682 = vmatmul.f32.gmra.mxu0 %v10119
      %v10683 = vpop.f32.mrf.mxu0
      %v10684 = vadd.f32 %v10571, %v10683
      %10685 = vmatmul.f32.gmra.mxu0 %v10122
      %v10686 = vpop.f32.mrf.mxu0
      %v10687 = vadd.f32 %v10574, %v10686
      %10688 = vmatmul.f32.gmra.mxu0 %v10125
      %v10689 = vpop.f32.mrf.mxu0
      %v10690 = vadd.f32 %v10577, %v10689
      %10691 = vmatmul.f32.gmra.mxu0 %v10128
      %v10692 = vpop.f32.mrf.mxu0
      %v10693 = vadd.f32 %v10580, %v10692
      %10694 = vmatmul.f32.gmra.mxu0 %v10131
      %v10695 = vpop.f32.mrf.mxu0
      %v10696 = vadd.f32 %v10583, %v10695
      %10697 = vmatmul.f32.gmra.mxu0 %v10134
      %v10698 = vpop.f32.mrf.mxu0
      %v10699 = vadd.f32 %v10586, %v10698
      %10700 = vmatmul.f32.gmra.mxu0 %v10137
      %v10701 = vpop.f32.mrf.mxu0
      %v10702 = vadd.f32 %v10589, %v10701
      %10703 = vmatmul.f32.gmra.mxu0 %v10140
      %v10704 = vpop.f32.mrf.mxu0
      %v10705 = vadd.f32 %v10592, %v10704
      %10706 = vmatmul.f32.gmra.mxu0 %v10143
      %v10707 = vpop.f32.mrf.mxu0
      %v10708 = vadd.f32 %v10595, %v10707
      %10709 = vmatmul.f32.gmra.mxu0 %v10146
      %v10710 = vpop.f32.mrf.mxu0
      %v10711 = vadd.f32 %v10598, %v10710
      %10712 = vmatmul.f32.gmra.mxu0 %v10149
      %v10713 = vpop.f32.mrf.mxu0
      %v10714 = vadd.f32 %v10601, %v10713
      %10715 = vmatmul.f32.gmra.mxu0 %v10152
      %v10716 = vpop.f32.mrf.mxu0
      %v10717 = vadd.f32 %v10604, %v10716
      %10718 = vmatmul.f32.gmra.mxu0 %v10155
      %v10719 = vpop.f32.mrf.mxu0
      %v10720 = vadd.f32 %v10607, %v10719
      %10721 = vmatmul.f32.gmra.mxu0 %v10158
      %v10722 = vpop.f32.mrf.mxu0
      %v10723 = vadd.f32 %v10610, %v10722
      %10724 = vmatmul.f32.gmra.mxu0 %v10161
      %v10725 = vpop.f32.mrf.mxu0
      %v10726 = vadd.f32 %v10613, %v10725
      %10727 = vmatmul.f32.gmra.mxu0 %v10164
      %v10728 = vpop.f32.mrf.mxu0
      %v10729 = vadd.f32 %v10616, %v10728
      %10730 = vmatmul.f32.gmra.mxu0 %v10167
      %v10731 = vpop.f32.mrf.mxu0
      %v10732 = vadd.f32 %v10619, %v10731
      %10733 = vmatmul.f32.gmra.mxu0 %v10170
      %v10734 = vpop.f32.mrf.mxu0
      %v10735 = vadd.f32 %v10622, %v10734
      %10736 = vmatmul.f32.gmra.mxu0 %v10173
      %v10737 = vpop.f32.mrf.mxu0
      %v10738 = vadd.f32 %v10625, %v10737
      %10739 = vmatmul.f32.gmra.mxu0 %v10176
      %v10740 = vpop.f32.mrf.mxu0
      %v10741 = vadd.f32 %v10628, %v10740
      %10742 = vmatmul.f32.gmra.mxu0 %v10179
      %v10743 = vpop.f32.mrf.mxu0
      %v10744 = vadd.f32 %v10631, %v10743
      %10745 = vmatmul.f32.gmra.mxu0 %v10182
      %v10746 = vpop.f32.mrf.mxu0
      %v10747 = vadd.f32 %v10634, %v10746
      %10748 = vmatmul.f32.gmra.mxu0 %v10185
      %v10749 = vpop.f32.mrf.mxu0
      %v10750 = vadd.f32 %v10637, %v10749
      %10751 = vmatmul.f32.gmra.mxu0 %v10188
      %v10752 = vpop.f32.mrf.mxu0
      %v10753 = vadd.f32 %v10640, %v10752
      %10754 = vdwg.mxu0
      %v10755 = vld [vmem:[%s9] sm:$0x1]
      %v10757 = vperm.slane %v10755, 0
      %v10759 = vmul.f32 %v10660, %v10757
      %v10760 = vmul.f32 %v10663, %v10757
      %v10761 = vmul.f32 %v10666, %v10757
      %v10762 = vmul.f32 %v10669, %v10757
      %v10763 = vmul.f32 %v10672, %v10757
      %v10764 = vmul.f32 %v10675, %v10757
      %v10765 = vmul.f32 %v10678, %v10757
      %v10766 = vmul.f32 %v10681, %v10757
      %v10767 = vmul.f32 %v10684, %v10757
      %v10768 = vmul.f32 %v10687, %v10757
      %v10769 = vmul.f32 %v10690, %v10757
      %v10770 = vmul.f32 %v10693, %v10757
      %v10771 = vmul.f32 %v10696, %v10757
      %v10772 = vmul.f32 %v10699, %v10757
      %v10773 = vmul.f32 %v10702, %v10757
      %v10774 = vmul.f32 %v10705, %v10757
      %v10775 = vmul.f32 %v10708, %v10757
      %v10776 = vmul.f32 %v10711, %v10757
      %v10777 = vmul.f32 %v10714, %v10757
      %v10778 = vmul.f32 %v10717, %v10757
      %v10779 = vmul.f32 %v10720, %v10757
      %v10780 = vmul.f32 %v10723, %v10757
      %v10781 = vmul.f32 %v10726, %v10757
      %v10782 = vmul.f32 %v10729, %v10757
      %v10783 = vmul.f32 %v10732, %v10757
      %v10784 = vmul.f32 %v10735, %v10757
      %v10785 = vmul.f32 %v10738, %v10757
      %v10786 = vmul.f32 %v10741, %v10757
      %v10787 = vmul.f32 %v10744, %v10757
      %v10788 = vmul.f32 %v10747, %v10757
      %v10789 = vmul.f32 %v10750, %v10757
      %v10790 = vmul.f32 %v10753, %v10757
      %v10791 = vld [vmem:[%s10] sm:$0x1]
      %v10793 = vperm.slane %v10791, 0
      %v10795 = vadd.f32 %v10759, %v10793
      %v10796 = vadd.f32 %v10760, %v10793
      %v10797 = vadd.f32 %v10761, %v10793
      %v10798 = vadd.f32 %v10762, %v10793
      %v10799 = vadd.f32 %v10763, %v10793
      %v10800 = vadd.f32 %v10764, %v10793
      %v10801 = vadd.f32 %v10765, %v10793
      %v10802 = vadd.f32 %v10766, %v10793
      %v10803 = vadd.f32 %v10767, %v10793
      %v10804 = vadd.f32 %v10768, %v10793
      %v10805 = vadd.f32 %v10769, %v10793
      %v10806 = vadd.f32 %v10770, %v10793
      %v10807 = vadd.f32 %v10771, %v10793
      %v10808 = vadd.f32 %v10772, %v10793
      %v10809 = vadd.f32 %v10773, %v10793
      %v10810 = vadd.f32 %v10774, %v10793
      %v10811 = vadd.f32 %v10775, %v10793
      %v10812 = vadd.f32 %v10776, %v10793
      %v10813 = vadd.f32 %v10777, %v10793
      %v10814 = vadd.f32 %v10778, %v10793
      %v10815 = vadd.f32 %v10779, %v10793
      %v10816 = vadd.f32 %v10780, %v10793
      %v10817 = vadd.f32 %v10781, %v10793
      %v10818 = vadd.f32 %v10782, %v10793
      %v10819 = vadd.f32 %v10783, %v10793
      %v10820 = vadd.f32 %v10784, %v10793
      %v10821 = vadd.f32 %v10785, %v10793
      %v10822 = vadd.f32 %v10786, %v10793
      %v10823 = vadd.f32 %v10787, %v10793
      %v10824 = vadd.f32 %v10788, %v10793
      %v10825 = vadd.f32 %v10789, %v10793
      %v10826 = vadd.f32 %v10790, %v10793
      %v10827 = vmax.f32 %v10795, 0.0
      %v10828 = vmax.f32 %v10796, 0.0
      %v10829 = vmax.f32 %v10797, 0.0
      %v10830 = vmax.f32 %v10798, 0.0
      %v10831 = vmax.f32 %v10799, 0.0
      %v10832 = vmax.f32 %v10800, 0.0
      %v10833 = vmax.f32 %v10801, 0.0
      %v10834 = vmax.f32 %v10802, 0.0
      %v10835 = vmax.f32 %v10803, 0.0
      %v10836 = vmax.f32 %v10804, 0.0
      %v10837 = vmax.f32 %v10805, 0.0
      %v10838 = vmax.f32 %v10806, 0.0
      %v10839 = vmax.f32 %v10807, 0.0
      %v10840 = vmax.f32 %v10808, 0.0
      %v10841 = vmax.f32 %v10809, 0.0
      %v10842 = vmax.f32 %v10810, 0.0
      %v10843 = vmax.f32 %v10811, 0.0
      %v10844 = vmax.f32 %v10812, 0.0
      %v10845 = vmax.f32 %v10813, 0.0
      %v10846 = vmax.f32 %v10814, 0.0
      %v10847 = vmax.f32 %v10815, 0.0
      %v10848 = vmax.f32 %v10816, 0.0
      %v10849 = vmax.f32 %v10817, 0.0
      %v10850 = vmax.f32 %v10818, 0.0
      %v10851 = vmax.f32 %v10819, 0.0
      %v10852 = vmax.f32 %v10820, 0.0
      %v10853 = vmax.f32 %v10821, 0.0
      %v10854 = vmax.f32 %v10822, 0.0
      %v10855 = vmax.f32 %v10823, 0.0
      %v10856 = vmax.f32 %v10824, 0.0
      %v10857 = vmax.f32 %v10825, 0.0
      %v10858 = vmax.f32 %v10826, 0.0
      %v10859 = vld [vmem:[%s11] sm:$0x1]
      %v10860 = vld [vmem:[#allocation4] sm:$0x1]
      %10862 = vset.pattern.permute.xlu0 0
      %10863 = vperm.xlu0 %10862, %v10860
      %v10864 = vpop.permute.xlu0 %10863
      %v10866 = vperm.slane %v10864, 0
      %v10868 = vsel %vm458, %v10859, 0
      %v10871 = vsel %vm458, %v10827, 0
      %v10874 = vsel %vm458, %v10828, 0
      %v10877 = vsel %vm458, %v10829, 0
      %v10880 = vsel %vm458, %v10830, 0
      %v10883 = vsel %vm458, %v10831, 0
      %v10886 = vsel %vm458, %v10832, 0
      %v10889 = vsel %vm458, %v10833, 0
      %v10892 = vsel %vm458, %v10834, 0
      %v10895 = vsel %vm458, %v10835, 0
      %v10898 = vsel %vm458, %v10836, 0
      %v10901 = vsel %vm458, %v10837, 0
      %v10904 = vsel %vm458, %v10838, 0
      %v10907 = vsel %vm458, %v10839, 0
      %v10910 = vsel %vm458, %v10840, 0
      %v10913 = vsel %vm458, %v10841, 0
      %v10916 = vsel %vm458, %v10842, 0
      %v10919 = vsel %vm458, %v10843, 0
      %v10922 = vsel %vm458, %v10844, 0
      %v10925 = vsel %vm458, %v10845, 0
      %v10928 = vsel %vm458, %v10846, 0
      %v10931 = vsel %vm458, %v10847, 0
      %v10934 = vsel %vm458, %v10848, 0
      %v10937 = vsel %vm458, %v10849, 0
      %v10940 = vsel %vm458, %v10850, 0
      %v10943 = vsel %vm458, %v10851, 0
      %v10946 = vsel %vm458, %v10852, 0
      %v10949 = vsel %vm458, %v10853, 0
      %v10952 = vsel %vm458, %v10854, 0
      %v10955 = vsel %vm458, %v10855, 0
      %v10958 = vsel %vm458, %v10856, 0
      %v10961 = vsel %vm458, %v10857, 0
      %v10964 = vsel %vm458, %v10858, 0
      %10966 = vmatpush.xpose.msra.mxu0 %v10916
      %10967 = vmatpush.xpose.msra.mxu0 %v10913
      %10968 = vmatpush.xpose.msra.mxu0 %v10910
      %10969 = vmatpush.xpose.msra.mxu0 %v10907
      %10970 = vmatpush.xpose.msra.mxu0 %v10904
      %10971 = vmatpush.xpose.msra.mxu0 %v10901
      %10972 = vmatpush.xpose.msra.mxu0 %v10898
      %10973 = vmatpush.xpose.msra.mxu0 %v10895
      %10974 = vmatpush.xpose.msra.mxu0 %v10892
      %10975 = vmatpush.xpose.msra.mxu0 %v10889
      %10976 = vmatpush.xpose.msra.mxu0 %v10886
      %10977 = vmatpush.xpose.msra.mxu0 %v10883
      %10978 = vmatpush.xpose.msra.mxu0 %v10880
      %10979 = vmatpush.xpose.msra.mxu0 %v10877
      %10980 = vmatpush.xpose.msra.mxu0 %v10874
      %10981 = vmatpush.xpose.msra.mxu0 %v10871
      %10982 = vmatmul.f32.gmra.mxu0 %v10868
      %v10983 = vpop.f32.mrf.mxu0
      %v10984 = vadd.f32 %v10866, %v10983
      %10985 = vdwg.mxu0
      %10986 = vmatpush.xpose.msra.mxu0 %v10964
      %10987 = vmatpush.xpose.msra.mxu0 %v10961
      %10988 = vmatpush.xpose.msra.mxu0 %v10958
      %10989 = vmatpush.xpose.msra.mxu0 %v10955
      %10990 = vmatpush.xpose.msra.mxu0 %v10952
      %10991 = vmatpush.xpose.msra.mxu0 %v10949
      %10992 = vmatpush.xpose.msra.mxu0 %v10946
      %10993 = vmatpush.xpose.msra.mxu0 %v10943
      %10994 = vmatpush.xpose.msra.mxu0 %v10940
      %10995 = vmatpush.xpose.msra.mxu0 %v10937
      %10996 = vmatpush.xpose.msra.mxu0 %v10934
      %10997 = vmatpush.xpose.msra.mxu0 %v10931
      %10998 = vmatpush.xpose.msra.mxu0 %v10928
      %10999 = vmatpush.xpose.msra.mxu0 %v10925
      %11000 = vmatpush.xpose.msra.mxu0 %v10922
      %11001 = vmatpush.xpose.msra.mxu0 %v10919
      %11002 = vmatmul.f32.gmra.mxu0 %v10868
      %v11003 = vpop.f32.mrf.mxu0
      %v11004 = vadd.f32 %v10866, %v11003
      %11005 = vdwg.mxu0
      %v11006 = vtanh.pop %v10984
      %v11007 = vtanh.pop %v11004
      %v11008 = vld [vmem:[%s453] sm:$0x3]
      %v11010 = vperm.slane %v11008, 0
      %v11011 = vperm.slane %v11008, 1
      %v11014 = vadd.f32 %v11006, %v11010
      %v11015 = vadd.f32 %v11007, %v11011
      %v11018 = vrot.slane %v11015, 7
      %vm11019 = vcmask 1040384
      %v11020 = vsel %vm11019, %v11014, %v11018
      %v11022 = vlaneseq
      %vm11023 = vcmp.ge.s32.totalorder %v11022, 0
      %vm11024 = vcmp.lt.s32.totalorder %v11022, 256
      %vm11025 = vmand %vm11023, %vm11024
      %11026 = vst.msk [vmem:[%s457] sm:$0x3] %vm11025, %v11020
      %p11027 = scmp.lt.s32.totalorder %s26, 1
      %s11028 = scalar_select %p11027, %s26, 1
      %s11029 = smul.addr %s11028, 2
      %s11030 = scalar_lea.vmem %s13, %s11029
      // Predicated region
      $region73: #{simple_hic_align_pallas.1} parent=71 // pred_check
        %p11031 = pneg %p327
      $region74: #{simple_hic_align_pallas.1} parent=71 // pred_check_branch
        %11033 = sbr.rel (%p11031) target = $region76
      $region75: #{simple_hic_align_pallas.1} parent=71 // pred_region
        _
      $region76: #{simple_hic_align_pallas.1} parent=71 // pred_fallthru
        _
    $region72: #{simple_hic_align_pallas.1} parent=5 // pred_fallthru
      _
    %p11034 = scmp.le.s32.totalorder 2, %s21
    // Predicated region
    $region77: #{simple_hic_align_pallas.1} parent=5 // pred_check
      %p11035 = pneg %p11034
    $region78: #{simple_hic_align_pallas.1} parent=5 // pred_check_branch
      %11037 = sbr.rel (%p11035) target = $region80
    $region79: #{simple_hic_align_pallas.1} parent=5 // pred_region
      %s11038 = ssub.s32 %s21, 2
      // Predicated region
      $region81: #{simple_hic_align_pallas.1} parent=79 // pred_check
        %p11039 = pneg %p333
      $region82: #{simple_hic_align_pallas.1} parent=79 // pred_check_branch
        %11041 = sbr.rel (%p11039) target = $region84
      $region83: #{simple_hic_align_pallas.1} parent=79 // pred_region
        %p11042 = scmp.lt.s32.totalorder %s27, 1
        %s11043 = scalar_select %p11042, %s27, 1
        %s11044 = smul.addr %s11043, 2
        %s11045 = scalar_lea.vmem %s13, %s11044
      $region84: #{simple_hic_align_pallas.1} parent=79 // pred_fallthru
        _
    $region80: #{simple_hic_align_pallas.1} parent=5 // pred_fallthru
      _
  $region6: #{simple_hic_align_pallas.1} parent=0 // loop_footer
    %s25 = sadd.s32 1, %s21
  $region7: #{simple_hic_align_pallas.1} parent=0 // loop_footer_branch
    %20 = sbr.rel target = $region3
  $region8: #{simple_hic_align_pallas.1} parent=0 // loop_exit
    _

</llo_original>
